<compile_context>
chip_gen: v5e
topology: v5e:2x2
jax: 0.10.0
libtpu: 0.0.40
codegen_flags: <defaults>
</compile_context>

<pallas_src>
import functools

import jax
import jax.numpy as jnp
from jax.experimental import pallas as pl
from jax.experimental.pallas import tpu as pltpu


_PADL = 16  # left pad inside the conv2 scratch: the interior store starts on a
            # (16,128) bf16-tile sublane boundary; taps read columns _PADL-1.._PADL+W.


def _bottleneck_kernel(x_ref, w1_ref, w2_ref, w3_ref,
                       s1_ref, b1_ref, s2_ref, b2_ref, s3_ref, b3_ref,
                       o_ref, h1p_ref):
    """Fused TSM + conv1x1/bn1/relu + conv3x3/bn2/relu + conv1x1/bn3 + add + relu."""
    _, T, H, W, Cin = x_ref.shape
    P = w2_ref.shape[-1]                        # planes
    Cout = w3_ref.shape[-1]                     # planes * expansion (== Cin)
    Wp = h1p_ref.shape[2]
    THW = T * H * W

    # ---- stage 1: TSM + conv1 (1x1) + BN1 + ReLU, stored into the conv2 scratch ----
    # w1_ref is (Cin, 3P): columns [0:P]/[P:2P]/[2P:3P] hold w1 with rows zeroed
    # outside TSM group 0 (first C/4, value taken from t-1) / 1 (next C/4, from t+1)
    # / 2 (rest, unchanged).  conv1x1 is linear over channels, so the *partial
    # outputs* are shifted along T instead of shuffling the much larger input.
    # Relies on conv1 being 1x1/stride-1 and the grid separating clips.
    x2d = x_ref[0].reshape(THW, Cin)                                # bf16
    a = jnp.dot(x2d, w1_ref[...], preferred_element_type=jnp.float32)
    a = a.reshape(T, H, W, 3 * P)

    s1, b1 = s1_ref[0], b1_ref[0]

    def bn1_relu(v):
        return jnp.maximum(v * s1 + b1, 0.0).astype(h1p_ref.dtype)

    # Zero only the halo strips of the scratch (the interior is fully overwritten
    # below and the halo is never written by the interior store).  Done every grid
    # step so correctness never depends on scratch persistence / megacore sharding.
    zrow = jnp.zeros((T, 1, Wp, P), h1p_ref.dtype)
    h1p_ref[:, 0:1, :, :] = zrow
    h1p_ref[:, H + 1:H + 2, :, :] = zrow
    zcol = jnp.zeros((T, H + 2, 1, P), h1p_ref.dtype)
    h1p_ref[:, :, _PADL - 1:_PADL, :] = zcol
    h1p_ref[:, :, _PADL + W:_PADL + W + 1, :] = zcol

    # h1[t] = a[t, 2P:3P] + a[t-1, 0:P] + a[t+1, P:2P]  (out-of-range terms are zero).
    peri = a[:, :, :, 2 * P:]
    first = peri[0:1]
    if T > 1:
        first = first + a[1:2, :, :, P:2 * P]
    h1p_ref[0:1, 1:H + 1, _PADL:_PADL + W, :] = bn1_relu(first)
    if T > 2:
        mid = peri[1:T - 1] + a[0:T - 2, :, :, 0:P] + a[2:T, :, :, P:2 * P]
        h1p_ref[1:T - 1, 1:H + 1, _PADL:_PADL + W, :] = bn1_relu(mid)
    if T > 1:
        last = peri[T - 1:T] + a[T - 2:T - 1, :, :, 0:P]
        h1p_ref[T - 1:T, 1:H + 1, _PADL:_PADL + W, :] = bn1_relu(last)

    # ---- stage 2: conv2 (3x3, pad=1) + BN2 + ReLU --------------------------------
    # TODO(synk): fold the 9 taps into per-dy K=3P matmuls (or a single K=9P im2col)
    # once unaligned lane-axis concatenation is verified on the target toolchain; on
    # the 256-wide v6e/v7x MXU that is ~3x fewer conv2 MXU passes.
    acc2 = None
    for dy in range(3):
        for dx in range(3):
            base = _PADL - 1 + dx
            tap = h1p_ref[:, dy:dy + H, base:base + W, :].reshape(THW, P)  # bf16
            part = jnp.dot(tap, w2_ref[dy * 3 + dx],
                           preferred_element_type=jnp.float32)
            acc2 = part if acc2 is None else acc2 + part
    h2 = jnp.maximum(acc2 * s2_ref[0] + b2_ref[0], 0.0)

    # ---- stage 3: conv3 (1x1) + BN3 + residual + ReLU ----------------------------
    h3 = jnp.dot(h2.astype(jnp.bfloat16), w3_ref[...],
                 preferred_element_type=jnp.float32)
    res = x_ref[0].reshape(THW, Cin).astype(jnp.float32)  # residual, re-read from VMEM
    out = jnp.maximum(h3 * s3_ref[0] + b3_ref[0] + res, 0.0)
    o_ref[0] = out.reshape(T, H, W, Cout).astype(o_ref.dtype)


def _fold_bn(gamma, beta, mean, var, eps=1e-5):
    scale = gamma / jnp.sqrt(var + eps)
    bias = beta - mean * scale
    return (scale.reshape(1, -1).astype(jnp.float32),
            bias.reshape(1, -1).astype(jnp.float32))


def bottleneck_forward_nhwc(x_bthwc, w1_oihw, w2_oihw, w3_oihw, bn1, bn2, bn3):
    """Channels-last bf16 Pallas path: (B, T, H, W, Cin) -> (B, T, H, W, Cout) bf16.

    Preferred entry point: keeps the surrounding network channels-last/bf16 so no
    NCHW<->NHWC transpose or f32 round-trip touches HBM around the kernel.
    """
    B, T, H, W, Cin = x_bthwc.shape
    P = w1_oihw.shape[0]                  # planes
    Cout = w3_oihw.shape[0]               # planes * expansion
    assert Cin % 4 == 0
    assert Cout == Cin, "stride=1 / downsample=None requires inplanes == planes*4"
    fold = Cin // 4

    x = x_bthwc.astype(jnp.bfloat16)

    # conv1 weight (P, Cin, 1, 1) -> (Cin, P), stacked along N into three zero-masked
    # TSM channel-group copies -> (Cin, 3P): a single MXU pass on v6e/v7x.
    # TODO(synk): on v5e (128-wide MXU) per-group reduced-K matmuls are cheaper.
    w1 = jnp.transpose(w1_oihw[:, :, 0, 0], (1, 0))
    row = jnp.arange(Cin)[:, None]
    w1s = jnp.concatenate([
        jnp.where(row < fold, w1, 0.0),
        jnp.where((row >= fold) & (row < 2 * fold), w1, 0.0),
        jnp.where(row >= 2 * fold, w1, 0.0),
    ], axis=1).astype(jnp.bfloat16)                                     # (Cin, 3P)

    # conv2 OIHW (P,P,3,3) -> HWIO -> (9, Pin, Pout); conv3 (Cout,P,1,1) -> (P, Cout).
    w2 = jnp.transpose(w2_oihw, (2, 3, 1, 0)).reshape(9, P, P).astype(jnp.bfloat16)
    w3 = jnp.transpose(w3_oihw[:, :, 0, 0], (1, 0)).astype(jnp.bfloat16)

    s1, b1 = _fold_bn(*bn1)
    s2, b2 = _fold_bn(*bn2)
    s3, b3 = _fold_bn(*bn3)

    Wp = _PADL + W + 1                    # aligned left pad + valid W + 1 halo column
    flops = 2 * B * T * H * W * (Cin * 3 * P + 9 * P * P + P * Cout)
    bytes_accessed = ((x.size + B * T * H * W * Cout) * 2
                      + (w1s.size + w2.size + w3.size) * 2
                      + 2 * (3 * P + 3 * Cout) * 4)

    out = pl.pallas_call(
        _bottleneck_kernel,
        out_shape=jax.ShapeDtypeStruct((B, T, H, W, Cout), jnp.bfloat16),
        grid=(B,),
        in_specs=[
            pl.BlockSpec((1, T, H, W, Cin), lambda b: (b, 0, 0, 0, 0)),
            pl.BlockSpec((Cin, 3 * P), lambda b: (0, 0)),
            pl.BlockSpec((9, P, P), lambda b: (0, 0, 0)),
            pl.BlockSpec((P, Cout), lambda b: (0, 0)),
            pl.BlockSpec((1, P), lambda b: (0, 0)),
            pl.BlockSpec((1, P), lambda b: (0, 0)),
            pl.BlockSpec((1, P), lambda b: (0, 0)),
            pl.BlockSpec((1, P), lambda b: (0, 0)),
            pl.BlockSpec((1, Cout), lambda b: (0, 0)),
            pl.BlockSpec((1, Cout), lambda b: (0, 0)),
        ],
        out_specs=pl.BlockSpec((1, T, H, W, Cout), lambda b: (b, 0, 0, 0, 0)),
        scratch_shapes=[pltpu.VMEM((T, H + 2, Wp, P), jnp.bfloat16)],
        compiler_params=pltpu.CompilerParams(
            dimension_semantics=("parallel",),
            # Above the 32 MiB default scoped limit (v6e) but within v7x's 64 MiB
            # physical VMEM.
            vmem_limit_bytes=64 * 1024 * 1024),
        cost_estimate=pl.CostEstimate(flops=flops, transcendentals=0,
                                      bytes_accessed=bytes_accessed),
        # TODO(synk): for real TSM shapes (T=8, H=W=56, C>=256) tile the grid over
        # (B, H-blocks) with a 1-row conv2 halo (recompute conv1 for the halo rows,
        # it is 1x1) so each block fits v7x's 64 MiB VMEM and both its TensorCores
        # get a pipelined stream of steps.
    )(x, w1s, w2, w3, s1, b1, s2, b2, s3, b3)
    return out


def bottleneck_forward(x_nchw, w1_oihw, w2_oihw, w3_oihw, bn1, bn2, bn3,
                       num_segments):
    """PyTorch-layout compatibility wrapper: NCHW in/out (adds two HBM transposes)."""
    NT, Cin, H, W = x_nchw.shape
    assert NT % num_segments == 0
    B, T = NT // num_segments, num_segments
    # Cast to bf16 *before* the layout change so the transpose moves half the bytes.
    x = jnp.transpose(x_nchw.astype(jnp.bfloat16), (0, 2, 3, 1)).reshape(B, T, H, W, Cin)
    out = bottleneck_forward_nhwc(x, w1_oihw, w2_oihw, w3_oihw, bn1, bn2, bn3)
    out = out.reshape(NT, H, W, -1)
    return jnp.transpose(out, (0, 3, 1, 2)).astype(x_nchw.dtype)


def reference_forward(x_nchw, w1, w2, w3, bn1, bn2, bn3, num_segments):
    """Pure-JAX f32 reference mirroring the PyTorch forward (NCHW, eval-mode BN)."""
    NT, C, H, W = x_nchw.shape
    B, T = NT // num_segments, num_segments
    fold = C // 4
    x = x_nchw.reshape(B, T, C, H, W)
    pre = jnp.concatenate([jnp.zeros_like(x[:, :1, :fold]), x[:, :-1, :fold]], axis=1)
    post = jnp.concatenate([x[:, 1:, fold:2 * fold],
                            jnp.zeros_like(x[:, :1, fold:2 * fold])], axis=1)
    peri = x[:, :, 2 * fold:]
    xt = jnp.concatenate([pre, post, peri], axis=2).reshape(NT, C, H, W)

    def conv(z, w):
        return jax.lax.conv_general_dilated(
            z, w, (1, 1), "SAME", dimension_numbers=("NCHW", "OIHW", "NCHW"))

    def bn(z, p):
        s, b = _fold_bn(*p)
        c = z.shape[1]
        return z * s.reshape(1, c, 1, 1) + b.reshape(1, c, 1, 1)

    out = jnp.maximum(bn(conv(xt, w1), bn1), 0.0)
    out = jnp.maximum(bn(conv(out, w2), bn2), 0.0)
    out = bn(conv(out, w3), bn3)
    return jnp.maximum(out + x_nchw, 0.0)


if __name__ == "__main__":
    key = jax.random.PRNGKey(0)
    B, T = 2, 4                       # batch, num_segments
    planes, expansion = 64, 4
    Cin = planes * expansion          # inplanes = 256 (canonical bottleneck ratio)
    H = W = 8
    NT = B * T
    ks = jax.random.split(key, 7)

    def bn_params(k, c):
        k1, k2, k3, k4 = jax.random.split(k, 4)
        return (1.0 + 0.1 * jax.random.normal(k1, (c,), jnp.float32),   # gamma
                0.1 * jax.random.normal(k2, (c,), jnp.float32),         # beta
                0.1 * jax.random.normal(k3, (c,), jnp.float32),         # running_mean
                1.0 + 0.5 * jax.random.uniform(k4, (c,), jnp.float32))  # running_var

    x = jax.random.normal(ks[0], (NT, Cin, H, W), jnp.float32)
    w1 = 0.05 * jax.random.normal(ks[1], (planes, Cin, 1, 1), jnp.float32)     # conv1
    w2 = 0.05 * jax.random.normal(ks[2], (planes, planes, 3, 3), jnp.float32)  # conv2
    w3 = 0.05 * jax.random.normal(ks[3], (Cin, planes, 1, 1), jnp.float32)     # conv3
    bn1 = bn_params(ks[4], planes)
    bn2 = bn_params(ks[5], planes)
    bn3 = bn_params(ks[6], Cin)

    fwd = jax.jit(functools.partial(bottleneck_forward, num_segments=T))
    out = jax.block_until_ready(fwd(x, w1, w2, w3, bn1, bn2, bn3))

    ref = reference_forward(x, w1, w2, w3, bn1, bn2, bn3, T)
    assert out.shape == x.shape and out.dtype == x.dtype
    max_err = float(jnp.max(jnp.abs(out - ref)))
    # bf16 I/O + bf16 MXU operands vs. the f32 torch reference adds ~1e-2 abs noise.
    assert bool(jnp.allclose(out, ref, atol=8e-2, rtol=5e-2)), f"max_err={max_err}"

    print("KERNEL_OK")
</pallas_src>

<mosaic_0001>
module attributes {stable_mosaic.version = 11 : i64} {
  func.func @_bottleneck_kernel(%arg0: i32, %arg1: memref<1x4x8x8x256xbf16, #tpu.memory_space<vmem>>, %arg2: memref<256x192xbf16, #tpu.memory_space<vmem>>, %arg3: memref<9x64x64xbf16, #tpu.memory_space<vmem>>, %arg4: memref<64x256xbf16, #tpu.memory_space<vmem>>, %arg5: memref<1x64xf32, #tpu.memory_space<vmem>>, %arg6: memref<1x64xf32, #tpu.memory_space<vmem>>, %arg7: memref<1x64xf32, #tpu.memory_space<vmem>>, %arg8: memref<1x64xf32, #tpu.memory_space<vmem>>, %arg9: memref<1x256xf32, #tpu.memory_space<vmem>>, %arg10: memref<1x256xf32, #tpu.memory_space<vmem>>, %arg11: memref<1x4x8x8x256xbf16, #tpu.memory_space<vmem>>, %arg12: memref<4x10x25x64xbf16, #tpu.memory_space<vmem>>) attributes {dimension_semantics = [#tpu.dimension_semantics<parallel>], iteration_bounds = array<i64: 2>, scalar_prefetch = 0 : i64, scratch_operands = 1 : i64, tpu.core_type = #tpu.core_type<tc>, window_params = [{transform_indices = @transform_0, window_bounds = array<i64: 1, 4, 8, 8, 256>}, {pipeline_mode = #tpu.pipeline_mode<synchronous>, transform_indices = @transform_1, window_bounds = array<i64: 256, 192>}, {pipeline_mode = #tpu.pipeline_mode<synchronous>, transform_indices = @transform_2, window_bounds = array<i64: 9, 64, 64>}, {pipeline_mode = #tpu.pipeline_mode<synchronous>, transform_indices = @transform_3, window_bounds = array<i64: 64, 256>}, {pipeline_mode = #tpu.pipeline_mode<synchronous>, transform_indices = @transform_4, window_bounds = array<i64: 1, 64>}, {pipeline_mode = #tpu.pipeline_mode<synchronous>, transform_indices = @transform_5, window_bounds = array<i64: 1, 64>}, {pipeline_mode = #tpu.pipeline_mode<synchronous>, transform_indices = @transform_6, window_bounds = array<i64: 1, 64>}, {pipeline_mode = #tpu.pipeline_mode<synchronous>, transform_indices = @transform_7, window_bounds = array<i64: 1, 64>}, {pipeline_mode = #tpu.pipeline_mode<synchronous>, transform_indices = @transform_8, window_bounds = array<i64: 1, 256>}, {pipeline_mode = #tpu.pipeline_mode<synchronous>, transform_indices = @transform_9, window_bounds = array<i64: 1, 256>}, {transform_indices = @transform_10, window_bounds = array<i64: 1, 4, 8, 8, 256>}]} {
    %c0 = arith.constant 0 : index
    %c0_0 = arith.constant 0 : index
    %c0_1 = arith.constant 0 : index
    %c0_2 = arith.constant 0 : index
    %c0_3 = arith.constant 0 : index
    %0 = vector.load %arg1[%c0, %c0_0, %c0_1, %c0_2, %c0_3] : memref<1x4x8x8x256xbf16, #tpu.memory_space<vmem>>, vector<1x4x8x8x256xbf16>
    %1 = vector.shape_cast %0 : vector<1x4x8x8x256xbf16> to vector<4x8x8x256xbf16>
    %2 = vector.shape_cast %1 : vector<4x8x8x256xbf16> to vector<256x256xbf16>
    %c0_4 = arith.constant 0 : index
    %c0_5 = arith.constant 0 : index
    %3 = vector.load %arg2[%c0_4, %c0_5] : memref<256x192xbf16, #tpu.memory_space<vmem>>, vector<256x192xbf16>
    %cst = arith.constant dense<0.000000e+00> : vector<256x192xf32>
    %4 = tpu.matmul %2, %3, %cst {dimension_numbers = #tpu.dot_dimension_numbers<[1], [0], [0], [1], [0, 0, 1, 1], [], []>} : vector<256x256xbf16>, vector<256x192xbf16>, vector<256x192xf32> -> vector<256x192xf32>
    %5 = vector.shape_cast %4 : vector<256x192xf32> to vector<4x8x8x192xf32>
    %c0_6 = arith.constant 0 : index
    %c0_7 = arith.constant 0 : index
    %6 = vector.load %arg5[%c0_6, %c0_7] : memref<1x64xf32, #tpu.memory_space<vmem>>, vector<1x64xf32>
    %7 = vector.shape_cast %6 : vector<1x64xf32> to vector<64xf32>
    %c0_8 = arith.constant 0 : index
    %c0_9 = arith.constant 0 : index
    %8 = vector.load %arg6[%c0_8, %c0_9] : memref<1x64xf32, #tpu.memory_space<vmem>>, vector<1x64xf32>
    %9 = vector.shape_cast %8 : vector<1x64xf32> to vector<64xf32>
    %cst_10 = arith.constant 0.000000e+00 : bf16
    %10 = vector.broadcast %cst_10 : bf16 to vector<4x1x25x64xbf16>
    %c0_11 = arith.constant 0 : index
    %c0_12 = arith.constant 0 : index
    %c0_13 = arith.constant 0 : index
    %c0_14 = arith.constant 0 : index
    %11 = vector.load %arg12[%c0_11, %c0_12, %c0_13, %c0_14] : memref<4x10x25x64xbf16, #tpu.memory_space<vmem>>, vector<4x1x25x64xbf16>
    tpu.vector_store %arg12[%c0_11, %c0_12, %c0_13, %c0_14], %10 {strides = array<i32>} : memref<4x10x25x64xbf16, #tpu.memory_space<vmem>>, vector<4x1x25x64xbf16>,
    %c0_15 = arith.constant 0 : index
    %c9 = arith.constant 9 : index
    %c0_16 = arith.constant 0 : index
    %c0_17 = arith.constant 0 : index
    %12 = vector.load %arg12[%c0_15, %c9, %c0_16, %c0_17] : memref<4x10x25x64xbf16, #tpu.memory_space<vmem>>, vector<4x1x25x64xbf16>
    tpu.vector_store %arg12[%c0_15, %c9, %c0_16, %c0_17], %10 {strides = array<i32>} : memref<4x10x25x64xbf16, #tpu.memory_space<vmem>>, vector<4x1x25x64xbf16>,
    %cst_18 = arith.constant 0.000000e+00 : bf16
    %13 = vector.broadcast %cst_18 : bf16 to vector<4x10x1x64xbf16>
    %c0_19 = arith.constant 0 : index
    %c0_20 = arith.constant 0 : index
    %c15 = arith.constant 15 : index
    %c0_21 = arith.constant 0 : index
    %14 = vector.load %arg12[%c0_19, %c0_20, %c15, %c0_21] : memref<4x10x25x64xbf16, #tpu.memory_space<vmem>>, vector<4x10x1x64xbf16>
    tpu.vector_store %arg12[%c0_19, %c0_20, %c15, %c0_21], %13 {strides = array<i32>} : memref<4x10x25x64xbf16, #tpu.memory_space<vmem>>, vector<4x10x1x64xbf16>,
    %c0_22 = arith.constant 0 : index
    %c0_23 = arith.constant 0 : index
    %c24 = arith.constant 24 : index
    %c0_24 = arith.constant 0 : index
    %15 = vector.load %arg12[%c0_22, %c0_23, %c24, %c0_24] : memref<4x10x25x64xbf16, #tpu.memory_space<vmem>>, vector<4x10x1x64xbf16>
    tpu.vector_store %arg12[%c0_22, %c0_23, %c24, %c0_24], %13 {strides = array<i32>} : memref<4x10x25x64xbf16, #tpu.memory_space<vmem>>, vector<4x10x1x64xbf16>,
    %16 = vector.extract_strided_slice %5 {offsets = [0, 0, 0, 128], sizes = [4, 8, 8, 64], strides = [1, 1, 1, 1]} : vector<4x8x8x192xf32> to vector<4x8x8x64xf32>
    %17 = vector.extract_strided_slice %16 {offsets = [0, 0, 0, 0], sizes = [1, 8, 8, 64], strides = [1, 1, 1, 1]} : vector<4x8x8x64xf32> to vector<1x8x8x64xf32>
    %18 = vector.extract_strided_slice %5 {offsets = [1, 0, 0, 64], sizes = [1, 8, 8, 64], strides = [1, 1, 1, 1]} : vector<4x8x8x192xf32> to vector<1x8x8x64xf32>
    %19 = arith.addf %17, %18 : vector<1x8x8x64xf32>
    %20 = vector.shape_cast %7 : vector<64xf32> to vector<1x1x1x64xf32>
    %21 = vector.broadcast %20 : vector<1x1x1x64xf32> to vector<1x8x8x64xf32>
    %22 = arith.mulf %19, %21 : vector<1x8x8x64xf32>
    %23 = vector.shape_cast %9 : vector<64xf32> to vector<1x1x1x64xf32>
    %24 = vector.broadcast %23 : vector<1x1x1x64xf32> to vector<1x8x8x64xf32>
    %25 = arith.addf %22, %24 : vector<1x8x8x64xf32>
    %cst_25 = arith.constant 0.000000e+00 : f32
    %26 = vector.broadcast %cst_25 : f32 to vector<1x8x8x64xf32>
    %27 = arith.maximumf %25, %26 : vector<1x8x8x64xf32>
    %28 = arith.truncf %27 : vector<1x8x8x64xf32> to vector<1x8x8x64xbf16>
    %c0_26 = arith.constant 0 : index
    %c1 = arith.constant 1 : index
    %c16 = arith.constant 16 : index
    %c0_27 = arith.constant 0 : index
    %29 = vector.load %arg12[%c0_26, %c1, %c16, %c0_27] : memref<4x10x25x64xbf16, #tpu.memory_space<vmem>>, vector<1x8x8x64xbf16>
    tpu.vector_store %arg12[%c0_26, %c1, %c16, %c0_27], %28 {strides = array<i32>} : memref<4x10x25x64xbf16, #tpu.memory_space<vmem>>, vector<1x8x8x64xbf16>,
    %30 = vector.extract_strided_slice %16 {offsets = [1, 0, 0, 0], sizes = [2, 8, 8, 64], strides = [1, 1, 1, 1]} : vector<4x8x8x64xf32> to vector<2x8x8x64xf32>
    %31 = vector.extract_strided_slice %5 {offsets = [0, 0, 0, 0], sizes = [2, 8, 8, 64], strides = [1, 1, 1, 1]} : vector<4x8x8x192xf32> to vector<2x8x8x64xf32>
    %32 = arith.addf %30, %31 : vector<2x8x8x64xf32>
    %33 = vector.extract_strided_slice %5 {offsets = [2, 0, 0, 64], sizes = [2, 8, 8, 64], strides = [1, 1, 1, 1]} : vector<4x8x8x192xf32> to vector<2x8x8x64xf32>
    %34 = arith.addf %32, %33 : vector<2x8x8x64xf32>
    %35 = vector.shape_cast %7 : vector<64xf32> to vector<1x1x1x64xf32>
    %36 = vector.broadcast %35 : vector<1x1x1x64xf32> to vector<2x8x8x64xf32>
    %37 = arith.mulf %34, %36 : vector<2x8x8x64xf32>
    %38 = vector.shape_cast %9 : vector<64xf32> to vector<1x1x1x64xf32>
    %39 = vector.broadcast %38 : vector<1x1x1x64xf32> to vector<2x8x8x64xf32>
    %40 = arith.addf %37, %39 : vector<2x8x8x64xf32>
    %cst_28 = arith.constant 0.000000e+00 : f32
    %41 = vector.broadcast %cst_28 : f32 to vector<2x8x8x64xf32>
    %42 = arith.maximumf %40, %41 : vector<2x8x8x64xf32>
    %43 = arith.truncf %42 : vector<2x8x8x64xf32> to vector<2x8x8x64xbf16>
    %c1_29 = arith.constant 1 : index
    %c1_30 = arith.constant 1 : index
    %c16_31 = arith.constant 16 : index
    %c0_32 = arith.constant 0 : index
    %44 = vector.load %arg12[%c1_29, %c1_30, %c16_31, %c0_32] : memref<4x10x25x64xbf16, #tpu.memory_space<vmem>>, vector<2x8x8x64xbf16>
    tpu.vector_store %arg12[%c1_29, %c1_30, %c16_31, %c0_32], %43 {strides = array<i32>} : memref<4x10x25x64xbf16, #tpu.memory_space<vmem>>, vector<2x8x8x64xbf16>,
    %45 = vector.extract_strided_slice %16 {offsets = [3, 0, 0, 0], sizes = [1, 8, 8, 64], strides = [1, 1, 1, 1]} : vector<4x8x8x64xf32> to vector<1x8x8x64xf32>
    %46 = vector.extract_strided_slice %5 {offsets = [2, 0, 0, 0], sizes = [1, 8, 8, 64], strides = [1, 1, 1, 1]} : vector<4x8x8x192xf32> to vector<1x8x8x64xf32>
    %47 = arith.addf %45, %46 : vector<1x8x8x64xf32>
    %48 = vector.shape_cast %7 : vector<64xf32> to vector<1x1x1x64xf32>
    %49 = vector.broadcast %48 : vector<1x1x1x64xf32> to vector<1x8x8x64xf32>
    %50 = arith.mulf %47, %49 : vector<1x8x8x64xf32>
    %51 = vector.shape_cast %9 : vector<64xf32> to vector<1x1x1x64xf32>
    %52 = vector.broadcast %51 : vector<1x1x1x64xf32> to vector<1x8x8x64xf32>
    %53 = arith.addf %50, %52 : vector<1x8x8x64xf32>
    %cst_33 = arith.constant 0.000000e+00 : f32
    %54 = vector.broadcast %cst_33 : f32 to vector<1x8x8x64xf32>
    %55 = arith.maximumf %53, %54 : vector<1x8x8x64xf32>
    %56 = arith.truncf %55 : vector<1x8x8x64xf32> to vector<1x8x8x64xbf16>
    %c3 = arith.constant 3 : index
    %c1_34 = arith.constant 1 : index
    %c16_35 = arith.constant 16 : index
    %c0_36 = arith.constant 0 : index
    %57 = vector.load %arg12[%c3, %c1_34, %c16_35, %c0_36] : memref<4x10x25x64xbf16, #tpu.memory_space<vmem>>, vector<1x8x8x64xbf16>
    tpu.vector_store %arg12[%c3, %c1_34, %c16_35, %c0_36], %56 {strides = array<i32>} : memref<4x10x25x64xbf16, #tpu.memory_space<vmem>>, vector<1x8x8x64xbf16>,
    %c0_37 = arith.constant 0 : index
    %c0_38 = arith.constant 0 : index
    %c15_39 = arith.constant 15 : index
    %c0_40 = arith.constant 0 : index
    %58 = vector.load %arg12[%c0_37, %c0_38, %c15_39, %c0_40] : memref<4x10x25x64xbf16, #tpu.memory_space<vmem>>, vector<4x8x8x64xbf16>
    %59 = vector.shape_cast %58 : vector<4x8x8x64xbf16> to vector<256x64xbf16>
    %c0_41 = arith.constant 0 : index
    %c0_42 = arith.constant 0 : index
    %c0_43 = arith.constant 0 : index
    %60 = vector.load %arg3[%c0_41, %c0_42, %c0_43] : memref<9x64x64xbf16, #tpu.memory_space<vmem>>, vector<1x64x64xbf16>
    %61 = vector.shape_cast %60 : vector<1x64x64xbf16> to vector<64x64xbf16>
    %cst_44 = arith.constant dense<0.000000e+00> : vector<256x64xf32>
    %62 = tpu.matmul %59, %61, %cst_44 {dimension_numbers = #tpu.dot_dimension_numbers<[1], [0], [0], [1], [0, 0, 1, 1], [], []>} : vector<256x64xbf16>, vector<64x64xbf16>, vector<256x64xf32> -> vector<256x64xf32>
    %c0_45 = arith.constant 0 : index
    %c0_46 = arith.constant 0 : index
    %c16_47 = arith.constant 16 : index
    %c0_48 = arith.constant 0 : index
    %63 = vector.load %arg12[%c0_45, %c0_46, %c16_47, %c0_48] : memref<4x10x25x64xbf16, #tpu.memory_space<vmem>>, vector<4x8x8x64xbf16>
    %64 = vector.shape_cast %63 : vector<4x8x8x64xbf16> to vector<256x64xbf16>
    %c1_49 = arith.constant 1 : index
    %c0_50 = arith.constant 0 : index
    %c0_51 = arith.constant 0 : index
    %65 = vector.load %arg3[%c1_49, %c0_50, %c0_51] : memref<9x64x64xbf16, #tpu.memory_space<vmem>>, vector<1x64x64xbf16>
    %66 = vector.shape_cast %65 : vector<1x64x64xbf16> to vector<64x64xbf16>
    %cst_52 = arith.constant dense<0.000000e+00> : vector<256x64xf32>
    %67 = tpu.matmul %64, %66, %cst_52 {dimension_numbers = #tpu.dot_dimension_numbers<[1], [0], [0], [1], [0, 0, 1, 1], [], []>} : vector<256x64xbf16>, vector<64x64xbf16>, vector<256x64xf32> -> vector<256x64xf32>
    %68 = arith.addf %62, %67 : vector<256x64xf32>
    %c0_53 = arith.constant 0 : index
    %c0_54 = arith.constant 0 : index
    %c17 = arith.constant 17 : index
    %c0_55 = arith.constant 0 : index
    %69 = vector.load %arg12[%c0_53, %c0_54, %c17, %c0_55] : memref<4x10x25x64xbf16, #tpu.memory_space<vmem>>, vector<4x8x8x64xbf16>
    %70 = vector.shape_cast %69 : vector<4x8x8x64xbf16> to vector<256x64xbf16>
    %c2 = arith.constant 2 : index
    %c0_56 = arith.constant 0 : index
    %c0_57 = arith.constant 0 : index
    %71 = vector.load %arg3[%c2, %c0_56, %c0_57] : memref<9x64x64xbf16, #tpu.memory_space<vmem>>, vector<1x64x64xbf16>
    %72 = vector.shape_cast %71 : vector<1x64x64xbf16> to vector<64x64xbf16>
    %cst_58 = arith.constant dense<0.000000e+00> : vector<256x64xf32>
    %73 = tpu.matmul %70, %72, %cst_58 {dimension_numbers = #tpu.dot_dimension_numbers<[1], [0], [0], [1], [0, 0, 1, 1], [], []>} : vector<256x64xbf16>, vector<64x64xbf16>, vector<256x64xf32> -> vector<256x64xf32>
    %74 = arith.addf %68, %73 : vector<256x64xf32>
    %c0_59 = arith.constant 0 : index
    %c1_60 = arith.constant 1 : index
    %c15_61 = arith.constant 15 : index
    %c0_62 = arith.constant 0 : index
    %75 = vector.load %arg12[%c0_59, %c1_60, %c15_61, %c0_62] : memref<4x10x25x64xbf16, #tpu.memory_space<vmem>>, vector<4x8x8x64xbf16>
    %76 = vector.shape_cast %75 : vector<4x8x8x64xbf16> to vector<256x64xbf16>
    %c3_63 = arith.constant 3 : index
    %c0_64 = arith.constant 0 : index
    %c0_65 = arith.constant 0 : index
    %77 = vector.load %arg3[%c3_63, %c0_64, %c0_65] : memref<9x64x64xbf16, #tpu.memory_space<vmem>>, vector<1x64x64xbf16>
    %78 = vector.shape_cast %77 : vector<1x64x64xbf16> to vector<64x64xbf16>
    %cst_66 = arith.constant dense<0.000000e+00> : vector<256x64xf32>
    %79 = tpu.matmul %76, %78, %cst_66 {dimension_numbers = #tpu.dot_dimension_numbers<[1], [0], [0], [1], [0, 0, 1, 1], [], []>} : vector<256x64xbf16>, vector<64x64xbf16>, vector<256x64xf32> -> vector<256x64xf32>
    %80 = arith.addf %74, %79 : vector<256x64xf32>
    %c0_67 = arith.constant 0 : index
    %c1_68 = arith.constant 1 : index
    %c16_69 = arith.constant 16 : index
    %c0_70 = arith.constant 0 : index
    %81 = vector.load %arg12[%c0_67, %c1_68, %c16_69, %c0_70] : memref<4x10x25x64xbf16, #tpu.memory_space<vmem>>, vector<4x8x8x64xbf16>
    %82 = vector.shape_cast %81 : vector<4x8x8x64xbf16> to vector<256x64xbf16>
    %c4 = arith.constant 4 : index
    %c0_71 = arith.constant 0 : index
    %c0_72 = arith.constant 0 : index
    %83 = vector.load %arg3[%c4, %c0_71, %c0_72] : memref<9x64x64xbf16, #tpu.memory_space<vmem>>, vector<1x64x64xbf16>
    %84 = vector.shape_cast %83 : vector<1x64x64xbf16> to vector<64x64xbf16>
    %cst_73 = arith.constant dense<0.000000e+00> : vector<256x64xf32>
    %85 = tpu.matmul %82, %84, %cst_73 {dimension_numbers = #tpu.dot_dimension_numbers<[1], [0], [0], [1], [0, 0, 1, 1], [], []>} : vector<256x64xbf16>, vector<64x64xbf16>, vector<256x64xf32> -> vector<256x64xf32>
    %86 = arith.addf %80, %85 : vector<256x64xf32>
    %c0_74 = arith.constant 0 : index
    %c1_75 = arith.constant 1 : index
    %c17_76 = arith.constant 17 : index
    %c0_77 = arith.constant 0 : index
    %87 = vector.load %arg12[%c0_74, %c1_75, %c17_76, %c0_77] : memref<4x10x25x64xbf16, #tpu.memory_space<vmem>>, vector<4x8x8x64xbf16>
    %88 = vector.shape_cast %87 : vector<4x8x8x64xbf16> to vector<256x64xbf16>
    %c5 = arith.constant 5 : index
    %c0_78 = arith.constant 0 : index
    %c0_79 = arith.constant 0 : index
    %89 = vector.load %arg3[%c5, %c0_78, %c0_79] : memref<9x64x64xbf16, #tpu.memory_space<vmem>>, vector<1x64x64xbf16>
    %90 = vector.shape_cast %89 : vector<1x64x64xbf16> to vector<64x64xbf16>
    %cst_80 = arith.constant dense<0.000000e+00> : vector<256x64xf32>
    %91 = tpu.matmul %88, %90, %cst_80 {dimension_numbers = #tpu.dot_dimension_numbers<[1], [0], [0], [1], [0, 0, 1, 1], [], []>} : vector<256x64xbf16>, vector<64x64xbf16>, vector<256x64xf32> -> vector<256x64xf32>
    %92 = arith.addf %86, %91 : vector<256x64xf32>
    %c0_81 = arith.constant 0 : index
    %c2_82 = arith.constant 2 : index
    %c15_83 = arith.constant 15 : index
    %c0_84 = arith.constant 0 : index
    %93 = vector.load %arg12[%c0_81, %c2_82, %c15_83, %c0_84] : memref<4x10x25x64xbf16, #tpu.memory_space<vmem>>, vector<4x8x8x64xbf16>
    %94 = vector.shape_cast %93 : vector<4x8x8x64xbf16> to vector<256x64xbf16>
    %c6 = arith.constant 6 : index
    %c0_85 = arith.constant 0 : index
    %c0_86 = arith.constant 0 : index
    %95 = vector.load %arg3[%c6, %c0_85, %c0_86] : memref<9x64x64xbf16, #tpu.memory_space<vmem>>, vector<1x64x64xbf16>
    %96 = vector.shape_cast %95 : vector<1x64x64xbf16> to vector<64x64xbf16>
    %cst_87 = arith.constant dense<0.000000e+00> : vector<256x64xf32>
    %97 = tpu.matmul %94, %96, %cst_87 {dimension_numbers = #tpu.dot_dimension_numbers<[1], [0], [0], [1], [0, 0, 1, 1], [], []>} : vector<256x64xbf16>, vector<64x64xbf16>, vector<256x64xf32> -> vector<256x64xf32>
    %98 = arith.addf %92, %97 : vector<256x64xf32>
    %c0_88 = arith.constant 0 : index
    %c2_89 = arith.constant 2 : index
    %c16_90 = arith.constant 16 : index
    %c0_91 = arith.constant 0 : index
    %99 = vector.load %arg12[%c0_88, %c2_89, %c16_90, %c0_91] : memref<4x10x25x64xbf16, #tpu.memory_space<vmem>>, vector<4x8x8x64xbf16>
    %100 = vector.shape_cast %99 : vector<4x8x8x64xbf16> to vector<256x64xbf16>
    %c7 = arith.constant 7 : index
    %c0_92 = arith.constant 0 : index
    %c0_93 = arith.constant 0 : index
    %101 = vector.load %arg3[%c7, %c0_92, %c0_93] : memref<9x64x64xbf16, #tpu.memory_space<vmem>>, vector<1x64x64xbf16>
    %102 = vector.shape_cast %101 : vector<1x64x64xbf16> to vector<64x64xbf16>
    %cst_94 = arith.constant dense<0.000000e+00> : vector<256x64xf32>
    %103 = tpu.matmul %100, %102, %cst_94 {dimension_numbers = #tpu.dot_dimension_numbers<[1], [0], [0], [1], [0, 0, 1, 1], [], []>} : vector<256x64xbf16>, vector<64x64xbf16>, vector<256x64xf32> -> vector<256x64xf32>
    %104 = arith.addf %98, %103 : vector<256x64xf32>
    %c0_95 = arith.constant 0 : index
    %c2_96 = arith.constant 2 : index
    %c17_97 = arith.constant 17 : index
    %c0_98 = arith.constant 0 : index
    %105 = vector.load %arg12[%c0_95, %c2_96, %c17_97, %c0_98] : memref<4x10x25x64xbf16, #tpu.memory_space<vmem>>, vector<4x8x8x64xbf16>
    %106 = vector.shape_cast %105 : vector<4x8x8x64xbf16> to vector<256x64xbf16>
    %c8 = arith.constant 8 : index
    %c0_99 = arith.constant 0 : index
    %c0_100 = arith.constant 0 : index
    %107 = vector.load %arg3[%c8, %c0_99, %c0_100] : memref<9x64x64xbf16, #tpu.memory_space<vmem>>, vector<1x64x64xbf16>
    %108 = vector.shape_cast %107 : vector<1x64x64xbf16> to vector<64x64xbf16>
    %cst_101 = arith.constant dense<0.000000e+00> : vector<256x64xf32>
    %109 = tpu.matmul %106, %108, %cst_101 {dimension_numbers = #tpu.dot_dimension_numbers<[1], [0], [0], [1], [0, 0, 1, 1], [], []>} : vector<256x64xbf16>, vector<64x64xbf16>, vector<256x64xf32> -> vector<256x64xf32>
    %110 = arith.addf %104, %109 : vector<256x64xf32>
    %c0_102 = arith.constant 0 : index
    %c0_103 = arith.constant 0 : index
    %111 = vector.load %arg7[%c0_102, %c0_103] : memref<1x64xf32, #tpu.memory_space<vmem>>, vector<1x64xf32>
    %112 = vector.shape_cast %111 : vector<1x64xf32> to vector<64xf32>
    %113 = vector.shape_cast %112 : vector<64xf32> to vector<1x64xf32>
    %114 = vector.broadcast %113 : vector<1x64xf32> to vector<256x64xf32>
    %115 = arith.mulf %110, %114 : vector<256x64xf32>
    %c0_104 = arith.constant 0 : index
    %c0_105 = arith.constant 0 : index
    %116 = vector.load %arg8[%c0_104, %c0_105] : memref<1x64xf32, #tpu.memory_space<vmem>>, vector<1x64xf32>
    %117 = vector.shape_cast %116 : vector<1x64xf32> to vector<64xf32>
    %118 = vector.shape_cast %117 : vector<64xf32> to vector<1x64xf32>
    %119 = vector.broadcast %118 : vector<1x64xf32> to vector<256x64xf32>
    %120 = arith.addf %115, %119 : vector<256x64xf32>
    %cst_106 = arith.constant 0.000000e+00 : f32
    %121 = vector.broadcast %cst_106 : f32 to vector<256x64xf32>
    %122 = arith.maximumf %120, %121 : vector<256x64xf32>
    %123 = arith.truncf %122 : vector<256x64xf32> to vector<256x64xbf16>
    %c0_107 = arith.constant 0 : index
    %c0_108 = arith.constant 0 : index
    %124 = vector.load %arg4[%c0_107, %c0_108] : memref<64x256xbf16, #tpu.memory_space<vmem>>, vector<64x256xbf16>
    %cst_109 = arith.constant dense<0.000000e+00> : vector<256x256xf32>
    %125 = tpu.matmul %123, %124, %cst_109 {dimension_numbers = #tpu.dot_dimension_numbers<[1], [0], [0], [1], [0, 0, 1, 1], [], []>} : vector<256x64xbf16>, vector<64x256xbf16>, vector<256x256xf32> -> vector<256x256xf32>
    %c0_110 = arith.constant 0 : index
    %c0_111 = arith.constant 0 : index
    %c0_112 = arith.constant 0 : index
    %c0_113 = arith.constant 0 : index
    %c0_114 = arith.constant 0 : index
    %126 = vector.load %arg1[%c0_110, %c0_111, %c0_112, %c0_113, %c0_114] : memref<1x4x8x8x256xbf16, #tpu.memory_space<vmem>>, vector<1x4x8x8x256xbf16>
    %127 = vector.shape_cast %126 : vector<1x4x8x8x256xbf16> to vector<4x8x8x256xbf16>
    %128 = vector.shape_cast %127 : vector<4x8x8x256xbf16> to vector<256x256xbf16>
    %129 = arith.extf %128 : vector<256x256xbf16> to vector<256x256xf32>
    %c0_115 = arith.constant 0 : index
    %c0_116 = arith.constant 0 : index
    %130 = vector.load %arg9[%c0_115, %c0_116] : memref<1x256xf32, #tpu.memory_space<vmem>>, vector<1x256xf32>
    %131 = vector.shape_cast %130 : vector<1x256xf32> to vector<256xf32>
    %132 = vector.shape_cast %131 : vector<256xf32> to vector<1x256xf32>
    %133 = vector.broadcast %132 : vector<1x256xf32> to vector<256x256xf32>
    %134 = arith.mulf %125, %133 : vector<256x256xf32>
    %c0_117 = arith.constant 0 : index
    %c0_118 = arith.constant 0 : index
    %135 = vector.load %arg10[%c0_117, %c0_118] : memref<1x256xf32, #tpu.memory_space<vmem>>, vector<1x256xf32>
    %136 = vector.shape_cast %135 : vector<1x256xf32> to vector<256xf32>
    %137 = vector.shape_cast %136 : vector<256xf32> to vector<1x256xf32>
    %138 = vector.broadcast %137 : vector<1x256xf32> to vector<256x256xf32>
    %139 = arith.addf %134, %138 : vector<256x256xf32>
    %140 = arith.addf %139, %129 : vector<256x256xf32>
    %cst_119 = arith.constant 0.000000e+00 : f32
    %141 = vector.broadcast %cst_119 : f32 to vector<256x256xf32>
    %142 = arith.maximumf %140, %141 : vector<256x256xf32>
    %143 = vector.shape_cast %142 : vector<256x256xf32> to vector<4x8x8x256xf32>
    %144 = arith.truncf %143 : vector<4x8x8x256xf32> to vector<4x8x8x256xbf16>
    %c0_120 = arith.constant 0 : index
    %c0_121 = arith.constant 0 : index
    %c0_122 = arith.constant 0 : index
    %c0_123 = arith.constant 0 : index
    %c0_124 = arith.constant 0 : index
    %145 = vector.load %arg11[%c0_120, %c0_121, %c0_122, %c0_123, %c0_124] : memref<1x4x8x8x256xbf16, #tpu.memory_space<vmem>>, vector<1x4x8x8x256xbf16>
    %146 = vector.shape_cast %145 : vector<1x4x8x8x256xbf16> to vector<4x8x8x256xbf16>
    %147 = vector.shape_cast %144 : vector<4x8x8x256xbf16> to vector<1x4x8x8x256xbf16>
    tpu.vector_store %arg11[%c0_120, %c0_121, %c0_122, %c0_123, %c0_124], %147 {strides = array<i32>} : memref<1x4x8x8x256xbf16, #tpu.memory_space<vmem>>, vector<1x4x8x8x256xbf16>,
    return
  }
  func.func @transform_0(%arg0: i32) -> (i32, i32, i32, i32, i32) {
    %c0_i32 = arith.constant 0 : i32
    %c0_i32_0 = arith.constant 0 : i32
    %c0_i32_1 = arith.constant 0 : i32
    %c0_i32_2 = arith.constant 0 : i32
    %c0_i32_3 = arith.constant 0 : i32
    return %arg0, %c0_i32, %c0_i32_0, %c0_i32_1, %c0_i32_2 : i32, i32, i32, i32, i32
  }
  func.func @transform_1(%arg0: i32) -> (i32, i32) {
    %c0_i32 = arith.constant 0 : i32
    %c0_i32_0 = arith.constant 0 : i32
    %c0_i32_1 = arith.constant 0 : i32
    return %c0_i32, %c0_i32_0 : i32, i32
  }
  func.func @transform_2(%arg0: i32) -> (i32, i32, i32) {
    %c0_i32 = arith.constant 0 : i32
    %c0_i32_0 = arith.constant 0 : i32
    %c0_i32_1 = arith.constant 0 : i32
    %c0_i32_2 = arith.constant 0 : i32
    return %c0_i32, %c0_i32_0, %c0_i32_1 : i32, i32, i32
  }
  func.func @transform_3(%arg0: i32) -> (i32, i32) {
    %c0_i32 = arith.constant 0 : i32
    %c0_i32_0 = arith.constant 0 : i32
    %c0_i32_1 = arith.constant 0 : i32
    return %c0_i32, %c0_i32_0 : i32, i32
  }
  func.func @transform_4(%arg0: i32) -> (i32, i32) {
    %c0_i32 = arith.constant 0 : i32
    %c0_i32_0 = arith.constant 0 : i32
    %c0_i32_1 = arith.constant 0 : i32
    return %c0_i32, %c0_i32_0 : i32, i32
  }
  func.func @transform_5(%arg0: i32) -> (i32, i32) {
    %c0_i32 = arith.constant 0 : i32
    %c0_i32_0 = arith.constant 0 : i32
    %c0_i32_1 = arith.constant 0 : i32
    return %c0_i32, %c0_i32_0 : i32, i32
  }
  func.func @transform_6(%arg0: i32) -> (i32, i32) {
    %c0_i32 = arith.constant 0 : i32
    %c0_i32_0 = arith.constant 0 : i32
    %c0_i32_1 = arith.constant 0 : i32
    return %c0_i32, %c0_i32_0 : i32, i32
  }
  func.func @transform_7(%arg0: i32) -> (i32, i32) {
    %c0_i32 = arith.constant 0 : i32
    %c0_i32_0 = arith.constant 0 : i32
    %c0_i32_1 = arith.constant 0 : i32
    return %c0_i32, %c0_i32_0 : i32, i32
  }
  func.func @transform_8(%arg0: i32) -> (i32, i32) {
    %c0_i32 = arith.constant 0 : i32
    %c0_i32_0 = arith.constant 0 : i32
    %c0_i32_1 = arith.constant 0 : i32
    return %c0_i32, %c0_i32_0 : i32, i32
  }
  func.func @transform_9(%arg0: i32) -> (i32, i32) {
    %c0_i32 = arith.constant 0 : i32
    %c0_i32_0 = arith.constant 0 : i32
    %c0_i32_1 = arith.constant 0 : i32
    return %c0_i32, %c0_i32_0 : i32, i32
  }
  func.func @transform_10(%arg0: i32) -> (i32, i32, i32, i32, i32) {
    %c0_i32 = arith.constant 0 : i32
    %c0_i32_0 = arith.constant 0 : i32
    %c0_i32_1 = arith.constant 0 : i32
    %c0_i32_2 = arith.constant 0 : i32
    %c0_i32_3 = arith.constant 0 : i32
    return %arg0, %c0_i32, %c0_i32_0, %c0_i32_1, %c0_i32_2 : i32, i32, i32, i32, i32
  }
}

</mosaic_0001>

<llo_original>
// kernel: bottleneck_forward.1
$region0: #{bottleneck_forward.1}
  #allocation0 [shape = 'u32[]', space=smem, size = 0x4, offset = 0x4, fixed_abs, tag = 'smem constant byte address 0x4 - core index']
  #allocation1 [shape = 'u32[72,128]{1,0:T(1,128)}', space=vmem, size = 0x9000, scoped, tag = 'internal scratch']
  #allocation2 [shape = 'bf16[4,10,25,64]{3,2,1,0:T(8,128)(2,1)}', space=vmem, size = 0x50000, scoped, tag = 'scratch operand']
  %s0 = inlined_call_operand.vmem [shape: bf16[2,4,8,8,256], index: 0, kind: input, shape index: {}]
  %s1 = inlined_call_operand.vmem [shape: bf16[256,192], index: 1, kind: input, shape index: {}]
  %s2 = inlined_call_operand.vmem [shape: bf16[9,64,64], index: 2, kind: input, shape index: {}]
  %s3 = inlined_call_operand.vmem [shape: bf16[64,256], index: 3, kind: input, shape index: {}]
  %s4 = inlined_call_operand.vmem [shape: f32[1,64], index: 4, kind: input, shape index: {}]
  %s5 = inlined_call_operand.vmem [shape: f32[1,64], index: 5, kind: input, shape index: {}]
  %s6 = inlined_call_operand.vmem [shape: f32[1,64], index: 6, kind: input, shape index: {}]
  %s7 = inlined_call_operand.vmem [shape: f32[1,64], index: 7, kind: input, shape index: {}]
  %s8 = inlined_call_operand.vmem [shape: f32[1,256], index: 8, kind: input, shape index: {}]
  %s9 = inlined_call_operand.vmem [shape: f32[1,256], index: 9, kind: input, shape index: {}]
  %s10 = inlined_call_operand.vmem [shape: bf16[2,4,8,8,256], index: 10, kind: output, shape index: {}]
  %s11 = sld [smem:[#allocation0]]
  $region73: #{bottleneck_forward.1} parent=0
    _
  %s13 = ssub.s32 1, %s11
  %s14 = scalar_select 0, %s13, %s11
  loop: start=0, step=1, limit=4
  $region2: #{bottleneck_forward.1} parent=0 // loop_pre_header
    _
  $region3: #{bottleneck_forward.1} parent=0 // loop_header
    %s16 = sphi 0, %s20
    %p17 = scmp.ge.s32.totalorder %s16, 4
    %s26 = sphi 0, %s28
    %s29 = sphi 0, %s26
    %s30 = sphi 0, %s29
    %s46 = sphi 0, %s30
    %s50 = sphi 0, %s50
    %s52 = sphi 0, %s50
    %s53 = sphi 0, %s52
    %s67 = sphi 0, %s53
    %s71 = sphi 0, %s71
    %s73 = sphi 0, %s71
    %s74 = sphi 0, %s73
    %s88 = sphi 0, %s74
    %s92 = sphi 0, %s92
    %s94 = sphi 0, %s92
    %s95 = sphi 0, %s94
    %s109 = sphi 0, %s95
    %s113 = sphi 0, %s113
    %s115 = sphi 0, %s113
    %s116 = sphi 0, %s115
    %s130 = sphi 0, %s116
    %s134 = sphi 0, %s134
    %s136 = sphi 0, %s134
    %s137 = sphi 0, %s136
    %s151 = sphi 0, %s137
    %s155 = sphi 0, %s155
    %s157 = sphi 0, %s155
    %s158 = sphi 0, %s157
    %s172 = sphi 0, %s158
    %s176 = sphi 0, %s176
    %s178 = sphi 0, %s176
    %s179 = sphi 0, %s178
    %s193 = sphi 0, %s179
    %s197 = sphi 0, %s197
    %s199 = sphi 0, %s197
    %s200 = sphi 0, %s199
    %s214 = sphi 0, %s200
    %s218 = sphi 0, %s218
    %s220 = sphi 0, %s218
    %s221 = sphi 0, %s220
    %s235 = sphi 0, %s221
    %s241 = sphi 0, %s243
    %s244 = sphi 0, %s241
    %s245 = sphi 0, %s244
    %s261 = sphi 0, %s245
  $region4: #{bottleneck_forward.1} parent=0 // loop_header_branch
    %19 = sbr.rel (%p17) target = $region8
  $region5: #{bottleneck_forward.1} parent=0 // loop_body
    %s21 = ssub.s32 %s16, 1
    %s22 = ssub.s32 %s16, 2
    %s23 = sadd.s32 %s16, 1
    %s24 = ssub.s32 %s16, %s23
    %p25 = scmp.eq.s32.totalorder %s24, 0
    %s27 = sadd.s32 %s26, 1
    %s28 = scalar_select %p25, %s26, %s27
    %p31 = pneg %p25
    %p32 = scmp.eq.s32.totalorder %s16, 1
    %p33 = por %p31, %p32
    %p34 = scmp.ne.s32.totalorder %s26, %s29
    %p35 = scmp.eq.s32.totalorder %s16, 0
    %p36 = por %p34, %p35
    %p37 = scmp.ne.s32.totalorder %s26, %s29
    %p38 = scmp.eq.s32.totalorder %s21, 1
    %p39 = por %p37, %p38
    %p40 = scmp.ne.s32.totalorder %s29, %s30
    %p41 = scmp.eq.s32.totalorder %s21, 0
    %p42 = por %p40, %p41
    %p43 = scmp.ne.s32.totalorder %s29, %s30
    %p44 = scmp.eq.s32.totalorder %s22, 1
    %p45 = por %p43, %p44
    %p47 = scmp.ne.s32.totalorder %s30, %s46
    %p48 = scmp.eq.s32.totalorder %s22, 0
    %p49 = por %p47, %p48
    %s51 = sadd.s32 %s50, 1
    %p54 = scmp.eq.s32.totalorder %s16, 1
    %p55 = scmp.ne.s32.totalorder %s50, %s52
    %p56 = scmp.eq.s32.totalorder %s16, 0
    %p57 = por %p55, %p56
    %p58 = scmp.ne.s32.totalorder %s50, %s52
    %p59 = scmp.eq.s32.totalorder %s21, 1
    %p60 = por %p58, %p59
    %p61 = scmp.ne.s32.totalorder %s52, %s53
    %p62 = scmp.eq.s32.totalorder %s21, 0
    %p63 = por %p61, %p62
    %p64 = scmp.ne.s32.totalorder %s52, %s53
    %p65 = scmp.eq.s32.totalorder %s22, 1
    %p66 = por %p64, %p65
    %p68 = scmp.ne.s32.totalorder %s53, %s67
    %p69 = scmp.eq.s32.totalorder %s22, 0
    %p70 = por %p68, %p69
    %s72 = sadd.s32 %s71, 1
    %p75 = scmp.eq.s32.totalorder %s16, 1
    %p76 = scmp.ne.s32.totalorder %s71, %s73
    %p77 = scmp.eq.s32.totalorder %s16, 0
    %p78 = por %p76, %p77
    %p79 = scmp.ne.s32.totalorder %s71, %s73
    %p80 = scmp.eq.s32.totalorder %s21, 1
    %p81 = por %p79, %p80
    %p82 = scmp.ne.s32.totalorder %s73, %s74
    %p83 = scmp.eq.s32.totalorder %s21, 0
    %p84 = por %p82, %p83
    %p85 = scmp.ne.s32.totalorder %s73, %s74
    %p86 = scmp.eq.s32.totalorder %s22, 1
    %p87 = por %p85, %p86
    %p89 = scmp.ne.s32.totalorder %s74, %s88
    %p90 = scmp.eq.s32.totalorder %s22, 0
    %p91 = por %p89, %p90
    %s93 = sadd.s32 %s92, 1
    %p96 = scmp.eq.s32.totalorder %s16, 1
    %p97 = scmp.ne.s32.totalorder %s92, %s94
    %p98 = scmp.eq.s32.totalorder %s16, 0
    %p99 = por %p97, %p98
    %p100 = scmp.ne.s32.totalorder %s92, %s94
    %p101 = scmp.eq.s32.totalorder %s21, 1
    %p102 = por %p100, %p101
    %p103 = scmp.ne.s32.totalorder %s94, %s95
    %p104 = scmp.eq.s32.totalorder %s21, 0
    %p105 = por %p103, %p104
    %p106 = scmp.ne.s32.totalorder %s94, %s95
    %p107 = scmp.eq.s32.totalorder %s22, 1
    %p108 = por %p106, %p107
    %p110 = scmp.ne.s32.totalorder %s95, %s109
    %p111 = scmp.eq.s32.totalorder %s22, 0
    %p112 = por %p110, %p111
    %s114 = sadd.s32 %s113, 1
    %p117 = scmp.eq.s32.totalorder %s16, 1
    %p118 = scmp.ne.s32.totalorder %s113, %s115
    %p119 = scmp.eq.s32.totalorder %s16, 0
    %p120 = por %p118, %p119
    %p121 = scmp.ne.s32.totalorder %s113, %s115
    %p122 = scmp.eq.s32.totalorder %s21, 1
    %p123 = por %p121, %p122
    %p124 = scmp.ne.s32.totalorder %s115, %s116
    %p125 = scmp.eq.s32.totalorder %s21, 0
    %p126 = por %p124, %p125
    %p127 = scmp.ne.s32.totalorder %s115, %s116
    %p128 = scmp.eq.s32.totalorder %s22, 1
    %p129 = por %p127, %p128
    %p131 = scmp.ne.s32.totalorder %s116, %s130
    %p132 = scmp.eq.s32.totalorder %s22, 0
    %p133 = por %p131, %p132
    %s135 = sadd.s32 %s134, 1
    %p138 = scmp.eq.s32.totalorder %s16, 1
    %p139 = scmp.ne.s32.totalorder %s134, %s136
    %p140 = scmp.eq.s32.totalorder %s16, 0
    %p141 = por %p139, %p140
    %p142 = scmp.ne.s32.totalorder %s134, %s136
    %p143 = scmp.eq.s32.totalorder %s21, 1
    %p144 = por %p142, %p143
    %p145 = scmp.ne.s32.totalorder %s136, %s137
    %p146 = scmp.eq.s32.totalorder %s21, 0
    %p147 = por %p145, %p146
    %p148 = scmp.ne.s32.totalorder %s136, %s137
    %p149 = scmp.eq.s32.totalorder %s22, 1
    %p150 = por %p148, %p149
    %p152 = scmp.ne.s32.totalorder %s137, %s151
    %p153 = scmp.eq.s32.totalorder %s22, 0
    %p154 = por %p152, %p153
    %s156 = sadd.s32 %s155, 1
    %p159 = scmp.eq.s32.totalorder %s16, 1
    %p160 = scmp.ne.s32.totalorder %s155, %s157
    %p161 = scmp.eq.s32.totalorder %s16, 0
    %p162 = por %p160, %p161
    %p163 = scmp.ne.s32.totalorder %s155, %s157
    %p164 = scmp.eq.s32.totalorder %s21, 1
    %p165 = por %p163, %p164
    %p166 = scmp.ne.s32.totalorder %s157, %s158
    %p167 = scmp.eq.s32.totalorder %s21, 0
    %p168 = por %p166, %p167
    %p169 = scmp.ne.s32.totalorder %s157, %s158
    %p170 = scmp.eq.s32.totalorder %s22, 1
    %p171 = por %p169, %p170
    %p173 = scmp.ne.s32.totalorder %s158, %s172
    %p174 = scmp.eq.s32.totalorder %s22, 0
    %p175 = por %p173, %p174
    %s177 = sadd.s32 %s176, 1
    %p180 = scmp.eq.s32.totalorder %s16, 1
    %p181 = scmp.ne.s32.totalorder %s176, %s178
    %p182 = scmp.eq.s32.totalorder %s16, 0
    %p183 = por %p181, %p182
    %p184 = scmp.ne.s32.totalorder %s176, %s178
    %p185 = scmp.eq.s32.totalorder %s21, 1
    %p186 = por %p184, %p185
    %p187 = scmp.ne.s32.totalorder %s178, %s179
    %p188 = scmp.eq.s32.totalorder %s21, 0
    %p189 = por %p187, %p188
    %p190 = scmp.ne.s32.totalorder %s178, %s179
    %p191 = scmp.eq.s32.totalorder %s22, 1
    %p192 = por %p190, %p191
    %p194 = scmp.ne.s32.totalorder %s179, %s193
    %p195 = scmp.eq.s32.totalorder %s22, 0
    %p196 = por %p194, %p195
    %s198 = sadd.s32 %s197, 1
    %p201 = scmp.eq.s32.totalorder %s16, 1
    %p202 = scmp.ne.s32.totalorder %s197, %s199
    %p203 = scmp.eq.s32.totalorder %s16, 0
    %p204 = por %p202, %p203
    %p205 = scmp.ne.s32.totalorder %s197, %s199
    %p206 = scmp.eq.s32.totalorder %s21, 1
    %p207 = por %p205, %p206
    %p208 = scmp.ne.s32.totalorder %s199, %s200
    %p209 = scmp.eq.s32.totalorder %s21, 0
    %p210 = por %p208, %p209
    %p211 = scmp.ne.s32.totalorder %s199, %s200
    %p212 = scmp.eq.s32.totalorder %s22, 1
    %p213 = por %p211, %p212
    %p215 = scmp.ne.s32.totalorder %s200, %s214
    %p216 = scmp.eq.s32.totalorder %s22, 0
    %p217 = por %p215, %p216
    %s219 = sadd.s32 %s218, 1
    %p222 = scmp.eq.s32.totalorder %s16, 1
    %p223 = scmp.ne.s32.totalorder %s218, %s220
    %p224 = scmp.eq.s32.totalorder %s16, 0
    %p225 = por %p223, %p224
    %p226 = scmp.ne.s32.totalorder %s218, %s220
    %p227 = scmp.eq.s32.totalorder %s21, 1
    %p228 = por %p226, %p227
    %p229 = scmp.ne.s32.totalorder %s220, %s221
    %p230 = scmp.eq.s32.totalorder %s21, 0
    %p231 = por %p229, %p230
    %p232 = scmp.ne.s32.totalorder %s220, %s221
    %p233 = scmp.eq.s32.totalorder %s22, 1
    %p234 = por %p232, %p233
    %p236 = scmp.ne.s32.totalorder %s221, %s235
    %p237 = scmp.eq.s32.totalorder %s22, 0
    %p238 = por %p236, %p237
    %s239 = ssub.s32 %s16, %s23
    %p240 = scmp.eq.s32.totalorder %s239, 0
    %s242 = sadd.s32 %s241, 1
    %s243 = scalar_select %p240, %s241, %s242
    %p246 = pneg %p240
    %p247 = scmp.eq.s32.totalorder %s16, 1
    %p248 = por %p246, %p247
    %p249 = scmp.ne.s32.totalorder %s241, %s244
    %p250 = scmp.eq.s32.totalorder %s16, 0
    %p251 = por %p249, %p250
    %p252 = scmp.ne.s32.totalorder %s241, %s244
    %p253 = scmp.eq.s32.totalorder %s21, 1
    %p254 = por %p252, %p253
    %p255 = scmp.ne.s32.totalorder %s244, %s245
    %p256 = scmp.eq.s32.totalorder %s21, 0
    %p257 = por %p255, %p256
    %p258 = scmp.ne.s32.totalorder %s244, %s245
    %p259 = scmp.eq.s32.totalorder %s22, 1
    %p260 = por %p258, %p259
    %p262 = scmp.ne.s32.totalorder %s245, %s261
    %p263 = scmp.eq.s32.totalorder %s22, 0
    %p264 = por %p262, %p263
    %p265 = scmp.le.s32.totalorder 1, %s16
    %p266 = scmp.lt.s32.totalorder %s16, 3
    %p267 = pnand %p265, %p266
    %p268 = pneg %p267
    // Predicated region
    $region9: #{bottleneck_forward.1} parent=5 // pred_check
      _
    $region10: #{bottleneck_forward.1} parent=5 // pred_check_branch
      %270 = sbr.rel (%p267) target = $region12
    $region11: #{bottleneck_forward.1} parent=5 // pred_region
      %s271 = ssub.s32 %s16, 1
      // Predicated region
      $region13: #{bottleneck_forward.1} parent=11 // pred_check
        %p272 = pneg %p63
      $region14: #{bottleneck_forward.1} parent=11 // pred_check_branch
        %274 = sbr.rel (%p272) target = $region16
      $region15: #{bottleneck_forward.1} parent=11 // pred_region
        _
      $region16: #{bottleneck_forward.1} parent=11 // pred_fallthru
        _
      // Predicated region
      $region17: #{bottleneck_forward.1} parent=11 // pred_check
        %p275 = pneg %p84
      $region18: #{bottleneck_forward.1} parent=11 // pred_check_branch
        %277 = sbr.rel (%p275) target = $region20
      $region19: #{bottleneck_forward.1} parent=11 // pred_region
        _
      $region20: #{bottleneck_forward.1} parent=11 // pred_fallthru
        _
      // Predicated region
      $region21: #{bottleneck_forward.1} parent=11 // pred_check
        %p278 = pneg %p105
      $region22: #{bottleneck_forward.1} parent=11 // pred_check_branch
        %280 = sbr.rel (%p278) target = $region24
      $region23: #{bottleneck_forward.1} parent=11 // pred_region
        _
      $region24: #{bottleneck_forward.1} parent=11 // pred_fallthru
        _
      // Predicated region
      $region25: #{bottleneck_forward.1} parent=11 // pred_check
        %p281 = pneg %p126
      $region26: #{bottleneck_forward.1} parent=11 // pred_check_branch
        %283 = sbr.rel (%p281) target = $region28
      $region27: #{bottleneck_forward.1} parent=11 // pred_region
        _
      $region28: #{bottleneck_forward.1} parent=11 // pred_fallthru
        _
      // Predicated region
      $region29: #{bottleneck_forward.1} parent=11 // pred_check
        %p284 = pneg %p147
      $region30: #{bottleneck_forward.1} parent=11 // pred_check_branch
        %286 = sbr.rel (%p284) target = $region32
      $region31: #{bottleneck_forward.1} parent=11 // pred_region
        _
      $region32: #{bottleneck_forward.1} parent=11 // pred_fallthru
        _
      // Predicated region
      $region33: #{bottleneck_forward.1} parent=11 // pred_check
        %p287 = pneg %p168
      $region34: #{bottleneck_forward.1} parent=11 // pred_check_branch
        %289 = sbr.rel (%p287) target = $region36
      $region35: #{bottleneck_forward.1} parent=11 // pred_region
        _
      $region36: #{bottleneck_forward.1} parent=11 // pred_fallthru
        _
      // Predicated region
      $region37: #{bottleneck_forward.1} parent=11 // pred_check
        %p290 = pneg %p189
      $region38: #{bottleneck_forward.1} parent=11 // pred_check_branch
        %292 = sbr.rel (%p290) target = $region40
      $region39: #{bottleneck_forward.1} parent=11 // pred_region
        _
      $region40: #{bottleneck_forward.1} parent=11 // pred_fallthru
        _
      // Predicated region
      $region41: #{bottleneck_forward.1} parent=11 // pred_check
        %p293 = pneg %p210
      $region42: #{bottleneck_forward.1} parent=11 // pred_check_branch
        %295 = sbr.rel (%p293) target = $region44
      $region43: #{bottleneck_forward.1} parent=11 // pred_region
        _
      $region44: #{bottleneck_forward.1} parent=11 // pred_fallthru
        _
      // Predicated region
      $region45: #{bottleneck_forward.1} parent=11 // pred_check
        %p296 = pneg %p231
      $region46: #{bottleneck_forward.1} parent=11 // pred_check_branch
        %298 = sbr.rel (%p296) target = $region48
      $region47: #{bottleneck_forward.1} parent=11 // pred_region
        _
      $region48: #{bottleneck_forward.1} parent=11 // pred_fallthru
        _
    $region12: #{bottleneck_forward.1} parent=5 // pred_fallthru
      _
    %p299 = scmp.lt.s32.totalorder %s16, 2
    // Predicated region
    $region49: #{bottleneck_forward.1} parent=5 // pred_check
      %p300 = pneg %p299
    $region50: #{bottleneck_forward.1} parent=5 // pred_check_branch
      %302 = sbr.rel (%p300) target = $region52
    $region51: #{bottleneck_forward.1} parent=5 // pred_region
      // Predicated region
      $region53: #{bottleneck_forward.1} parent=51 // pred_check
        %p303 = pneg %p36
      $region54: #{bottleneck_forward.1} parent=51 // pred_check_branch
        %305 = sbr.rel (%p303) target = $region56
      $region55: #{bottleneck_forward.1} parent=51 // pred_region
        %p306 = scmp.lt.s32.totalorder %s16, 1
        %s307 = scalar_select %p306, %s16, 1
        %s308 = smul.addr %s307, 64
        %s309 = smul.addr %s308, 4
        %s310 = scalar_lea.vmem %s0, %s309
      $region56: #{bottleneck_forward.1} parent=51 // pred_fallthru
        _
    $region52: #{bottleneck_forward.1} parent=5 // pred_fallthru
      _
    %p311 = scmp.le.s32.totalorder 1, %s16
    %p312 = scmp.lt.s32.totalorder %s16, 3
    %p313 = pnand %p311, %p312
    %p314 = pneg %p313
    // Predicated region
    $region57: #{bottleneck_forward.1} parent=5 // pred_check
      _
    $region58: #{bottleneck_forward.1} parent=5 // pred_check_branch
      %316 = sbr.rel (%p313) target = $region60
    $region59: #{bottleneck_forward.1} parent=5 // pred_region
      %s317 = ssub.s32 %s16, 1
      %p318 = scmp.lt.s32.totalorder %s21, 1
      %s319 = scalar_select %p318, %s21, 1
      %s320 = smul.addr %s319, 64
      %s321 = smul.addr %s320, 4
      %s322 = scalar_lea.vmem %s0, %s321
      %p323 = pneg %p42
      %p324 = pneg %p39
      %p325 = pneg %p63
      %p326 = pneg %p60
      %p327 = pneg %p84
      %p328 = pneg %p81
      %p329 = pneg %p105
      %p330 = pneg %p102
      %p331 = pneg %p126
      %p332 = pneg %p123
      %p333 = pneg %p147
      %p334 = pneg %p144
      %p335 = pneg %p168
      %p336 = pneg %p165
      %p337 = pneg %p189
      %p338 = pneg %p186
      %p339 = pneg %p210
      %p340 = pneg %p207
      %p341 = pneg %p231
      %p342 = pneg %p228
      %p343 = pneg %p257
      %p344 = pneg %p254
      %p345 = scmp.lt.s32.totalorder %s21, 1
      %s346 = scalar_select %p345, %s21, 1
      %s347 = smul.addr %s346, 64
      %s348 = smul.addr %s347, 4
      %s349 = scalar_lea.vmem %s10, %s348
      %p350 = scmp.lt.s32.totalorder %s21, 1
      %s351 = scalar_select %p350, %s21, 1
      %s352 = smul.addr %s351, 64
      %s353 = smul.addr %s352, 4
      %s354 = scalar_lea.vmem %s0, %s353
      %p355 = scmp.lt.s32.totalorder %s21, 1
      %s356 = scalar_select %p355, %s21, 1
      %s357 = smul.addr %s356, 64
      %s358 = smul.addr %s357, 4
      %s359 = scalar_lea.vmem %s10, %s358
      %v361 = vld [vmem:[%s354] sm:$0xff]
      %v362 = vld [vmem:[%s354 + $0x8] sm:$0xff]
      %v363 = vld [vmem:[%s354 + $0x10] sm:$0xff]
      %v364 = vld [vmem:[%s354 + $0x18] sm:$0xff]
      %v365 = vld [vmem:[%s354 + $0x20] sm:$0xff]
      %v366 = vld [vmem:[%s354 + $0x28] sm:$0xff]
      %v367 = vld [vmem:[%s354 + $0x30] sm:$0xff]
      %v368 = vld [vmem:[%s354 + $0x38] sm:$0xff]
      %v369 = vld [vmem:[%s354 + $0x40] sm:$0xff]
      %v370 = vld [vmem:[%s354 + $0x48] sm:$0xff]
      %v371 = vld [vmem:[%s354 + $0x50] sm:$0xff]
      %v372 = vld [vmem:[%s354 + $0x58] sm:$0xff]
      %v373 = vld [vmem:[%s354 + $0x60] sm:$0xff]
      %v374 = vld [vmem:[%s354 + $0x68] sm:$0xff]
      %v375 = vld [vmem:[%s354 + $0x70] sm:$0xff]
      %v376 = vld [vmem:[%s354 + $0x78] sm:$0xff]
      %v377 = vld [vmem:[%s354 + $0x80] sm:$0xff]
      %v378 = vld [vmem:[%s354 + $0x88] sm:$0xff]
      %v379 = vld [vmem:[%s354 + $0x90] sm:$0xff]
      %v380 = vld [vmem:[%s354 + $0x98] sm:$0xff]
      %v381 = vld [vmem:[%s354 + $0xa0] sm:$0xff]
      %v382 = vld [vmem:[%s354 + $0xa8] sm:$0xff]
      %v383 = vld [vmem:[%s354 + $0xb0] sm:$0xff]
      %v384 = vld [vmem:[%s354 + $0xb8] sm:$0xff]
      %v385 = vld [vmem:[%s354 + $0xc0] sm:$0xff]
      %v386 = vld [vmem:[%s354 + $0xc8] sm:$0xff]
      %v387 = vld [vmem:[%s354 + $0xd0] sm:$0xff]
      %v388 = vld [vmem:[%s354 + $0xd8] sm:$0xff]
      %v389 = vld [vmem:[%s354 + $0xe0] sm:$0xff]
      %v390 = vld [vmem:[%s354 + $0xe8] sm:$0xff]
      %v391 = vld [vmem:[%s354 + $0xf0] sm:$0xff]
      %v392 = vld [vmem:[%s354 + $0xf8] sm:$0xff]
      %v393 = vld [vmem:[%s1] sm:$0xff]
      %v394 = vld [vmem:[%s1 + $0x8] sm:$0xff]
      %v395 = vld [vmem:[%s1 + $0x10] sm:$0xff]
      %v396 = vld [vmem:[%s1 + $0x18] sm:$0xff]
      %v397 = vld [vmem:[%s1 + $0x20] sm:$0xff]
      %v398 = vld [vmem:[%s1 + $0x28] sm:$0xff]
      %v399 = vld [vmem:[%s1 + $0x30] sm:$0xff]
      %v400 = vld [vmem:[%s1 + $0x38] sm:$0xff]
      %v401 = vld [vmem:[%s1 + $0x40] sm:$0xff]
      %v402 = vld [vmem:[%s1 + $0x48] sm:$0xff]
      %v403 = vld [vmem:[%s1 + $0x50] sm:$0xff]
      %v404 = vld [vmem:[%s1 + $0x58] sm:$0xff]
      %v405 = vld [vmem:[%s1 + $0x60] sm:$0xff]
      %v406 = vld [vmem:[%s1 + $0x68] sm:$0xff]
      %v407 = vld [vmem:[%s1 + $0x70] sm:$0xff]
      %v408 = vld [vmem:[%s1 + $0x78] sm:$0xff]
      %v409 = vld [vmem:[%s1 + $0x80] sm:$0xff]
      %v410 = vld [vmem:[%s1 + $0x88] sm:$0xff]
      %v411 = vld [vmem:[%s1 + $0x90] sm:$0xff]
      %v412 = vld [vmem:[%s1 + $0x98] sm:$0xff]
      %v413 = vld [vmem:[%s1 + $0xa0] sm:$0xff]
      %v414 = vld [vmem:[%s1 + $0xa8] sm:$0xff]
      %v415 = vld [vmem:[%s1 + $0xb0] sm:$0xff]
      %v416 = vld [vmem:[%s1 + $0xb8] sm:$0xff]
      %v417 = vld [vmem:[%s1 + $0xc0] sm:$0xff]
      %v418 = vld [vmem:[%s1 + $0xc8] sm:$0xff]
      %v419 = vld [vmem:[%s1 + $0xd0] sm:$0xff]
      %v420 = vld [vmem:[%s1 + $0xd8] sm:$0xff]
      %v421 = vld [vmem:[%s1 + $0xe0] sm:$0xff]
      %v422 = vld [vmem:[%s1 + $0xe8] sm:$0xff]
      %v423 = vld [vmem:[%s1 + $0xf0] sm:$0xff]
      %v424 = vld [vmem:[%s1 + $0xf8] sm:$0xff]
      %v457 = vunpack.c.l.b16 %v361
      %v458 = vunpack.c.h.b16 %v361
      %v459 = vunpack.c.l.b16 %v362
      %v460 = vunpack.c.h.b16 %v362
      %v461 = vunpack.c.l.b16 %v363
      %v462 = vunpack.c.h.b16 %v363
      %v463 = vunpack.c.l.b16 %v364
      %v464 = vunpack.c.h.b16 %v364
      %v465 = vunpack.c.l.b16 %v365
      %v466 = vunpack.c.h.b16 %v365
      %v467 = vunpack.c.l.b16 %v366
      %v468 = vunpack.c.h.b16 %v366
      %v469 = vunpack.c.l.b16 %v367
      %v470 = vunpack.c.h.b16 %v367
      %v471 = vunpack.c.l.b16 %v368
      %v472 = vunpack.c.h.b16 %v368
      %v473 = vunpack.c.l.b16 %v369
      %v474 = vunpack.c.h.b16 %v369
      %v475 = vunpack.c.l.b16 %v370
      %v476 = vunpack.c.h.b16 %v370
      %v477 = vunpack.c.l.b16 %v371
      %v478 = vunpack.c.h.b16 %v371
      %v479 = vunpack.c.l.b16 %v372
      %v480 = vunpack.c.h.b16 %v372
      %v481 = vunpack.c.l.b16 %v373
      %v482 = vunpack.c.h.b16 %v373
      %v483 = vunpack.c.l.b16 %v374
      %v484 = vunpack.c.h.b16 %v374
      %v485 = vunpack.c.l.b16 %v375
      %v486 = vunpack.c.h.b16 %v375
      %v487 = vunpack.c.l.b16 %v376
      %v488 = vunpack.c.h.b16 %v376
      %v489 = vunpack.c.l.b16 %v377
      %v490 = vunpack.c.h.b16 %v377
      %v491 = vunpack.c.l.b16 %v378
      %v492 = vunpack.c.h.b16 %v378
      %v493 = vunpack.c.l.b16 %v379
      %v494 = vunpack.c.h.b16 %v379
      %v495 = vunpack.c.l.b16 %v380
      %v496 = vunpack.c.h.b16 %v380
      %v497 = vunpack.c.l.b16 %v381
      %v498 = vunpack.c.h.b16 %v381
      %v499 = vunpack.c.l.b16 %v382
      %v500 = vunpack.c.h.b16 %v382
      %v501 = vunpack.c.l.b16 %v383
      %v502 = vunpack.c.h.b16 %v383
      %v503 = vunpack.c.l.b16 %v384
      %v504 = vunpack.c.h.b16 %v384
      %v505 = vunpack.c.l.b16 %v385
      %v506 = vunpack.c.h.b16 %v385
      %v507 = vunpack.c.l.b16 %v386
      %v508 = vunpack.c.h.b16 %v386
      %v509 = vunpack.c.l.b16 %v387
      %v510 = vunpack.c.h.b16 %v387
      %v511 = vunpack.c.l.b16 %v388
      %v512 = vunpack.c.h.b16 %v388
      %v513 = vunpack.c.l.b16 %v389
      %v514 = vunpack.c.h.b16 %v389
      %v515 = vunpack.c.l.b16 %v390
      %v516 = vunpack.c.h.b16 %v390
      %v517 = vunpack.c.l.b16 %v391
      %v518 = vunpack.c.h.b16 %v391
      %v519 = vunpack.c.l.b16 %v392
      %v520 = vunpack.c.h.b16 %v392
      %v521 = vpack.c.b16 %v459, %v457
      %v522 = vpack.c.b16 %v460, %v458
      %v523 = vpack.c.b16 %v463, %v461
      %v524 = vpack.c.b16 %v464, %v462
      %v525 = vpack.c.b16 %v467, %v465
      %v526 = vpack.c.b16 %v468, %v466
      %v527 = vpack.c.b16 %v471, %v469
      %v528 = vpack.c.b16 %v472, %v470
      %v529 = vpack.c.b16 %v475, %v473
      %v530 = vpack.c.b16 %v476, %v474
      %v531 = vpack.c.b16 %v479, %v477
      %v532 = vpack.c.b16 %v480, %v478
      %v533 = vpack.c.b16 %v483, %v481
      %v534 = vpack.c.b16 %v484, %v482
      %v535 = vpack.c.b16 %v487, %v485
      %v536 = vpack.c.b16 %v488, %v486
      %v537 = vpack.c.b16 %v491, %v489
      %v538 = vpack.c.b16 %v492, %v490
      %v539 = vpack.c.b16 %v495, %v493
      %v540 = vpack.c.b16 %v496, %v494
      %v541 = vpack.c.b16 %v499, %v497
      %v542 = vpack.c.b16 %v500, %v498
      %v543 = vpack.c.b16 %v503, %v501
      %v544 = vpack.c.b16 %v504, %v502
      %v545 = vpack.c.b16 %v507, %v505
      %v546 = vpack.c.b16 %v508, %v506
      %v547 = vpack.c.b16 %v511, %v509
      %v548 = vpack.c.b16 %v512, %v510
      %v549 = vpack.c.b16 %v515, %v513
      %v550 = vpack.c.b16 %v516, %v514
      %v551 = vpack.c.b16 %v519, %v517
      %v552 = vpack.c.b16 %v520, %v518
      %v617 = vunpack.c.l.b16 %v393
      %v618 = vunpack.c.h.b16 %v393
      %v619 = vunpack.c.l.b16 %v394
      %v620 = vunpack.c.h.b16 %v394
      %v621 = vunpack.c.l.b16 %v395
      %v622 = vunpack.c.h.b16 %v395
      %v623 = vunpack.c.l.b16 %v396
      %v624 = vunpack.c.h.b16 %v396
      %v625 = vunpack.c.l.b16 %v397
      %v626 = vunpack.c.h.b16 %v397
      %v627 = vunpack.c.l.b16 %v398
      %v628 = vunpack.c.h.b16 %v398
      %v629 = vunpack.c.l.b16 %v399
      %v630 = vunpack.c.h.b16 %v399
      %v631 = vunpack.c.l.b16 %v400
      %v632 = vunpack.c.h.b16 %v400
      %v633 = vunpack.c.l.b16 %v401
      %v634 = vunpack.c.h.b16 %v401
      %v635 = vunpack.c.l.b16 %v402
      %v636 = vunpack.c.h.b16 %v402
      %v637 = vunpack.c.l.b16 %v403
      %v638 = vunpack.c.h.b16 %v403
      %v639 = vunpack.c.l.b16 %v404
      %v640 = vunpack.c.h.b16 %v404
      %v641 = vunpack.c.l.b16 %v405
      %v642 = vunpack.c.h.b16 %v405
      %v643 = vunpack.c.l.b16 %v406
      %v644 = vunpack.c.h.b16 %v406
      %v645 = vunpack.c.l.b16 %v407
      %v646 = vunpack.c.h.b16 %v407
      %v647 = vunpack.c.l.b16 %v408
      %v648 = vunpack.c.h.b16 %v408
      %v649 = vunpack.c.l.b16 %v409
      %v650 = vunpack.c.h.b16 %v409
      %v651 = vunpack.c.l.b16 %v410
      %v652 = vunpack.c.h.b16 %v410
      %v653 = vunpack.c.l.b16 %v411
      %v654 = vunpack.c.h.b16 %v411
      %v655 = vunpack.c.l.b16 %v412
      %v656 = vunpack.c.h.b16 %v412
      %v657 = vunpack.c.l.b16 %v413
      %v658 = vunpack.c.h.b16 %v413
      %v659 = vunpack.c.l.b16 %v414
      %v660 = vunpack.c.h.b16 %v414
      %v661 = vunpack.c.l.b16 %v415
      %v662 = vunpack.c.h.b16 %v415
      %v663 = vunpack.c.l.b16 %v416
      %v664 = vunpack.c.h.b16 %v416
      %v665 = vunpack.c.l.b16 %v417
      %v666 = vunpack.c.h.b16 %v417
      %v667 = vunpack.c.l.b16 %v418
      %v668 = vunpack.c.h.b16 %v418
      %v669 = vunpack.c.l.b16 %v419
      %v670 = vunpack.c.h.b16 %v419
      %v671 = vunpack.c.l.b16 %v420
      %v672 = vunpack.c.h.b16 %v420
      %v673 = vunpack.c.l.b16 %v421
      %v674 = vunpack.c.h.b16 %v421
      %v675 = vunpack.c.l.b16 %v422
      %v676 = vunpack.c.h.b16 %v422
      %v677 = vunpack.c.l.b16 %v423
      %v678 = vunpack.c.h.b16 %v423
      %v679 = vunpack.c.l.b16 %v424
      %v680 = vunpack.c.h.b16 %v424
      %v681 = vpack.c.b16 %v619, %v617
      %v682 = vpack.c.b16 %v620, %v618
      %v683 = vpack.c.b16 %v623, %v621
      %v684 = vpack.c.b16 %v624, %v622
      %v685 = vpack.c.b16 %v627, %v625
      %v686 = vpack.c.b16 %v628, %v626
      %v687 = vpack.c.b16 %v631, %v629
      %v688 = vpack.c.b16 %v632, %v630
      %v689 = vpack.c.b16 %v635, %v633
      %v690 = vpack.c.b16 %v636, %v634
      %v691 = vpack.c.b16 %v639, %v637
      %v692 = vpack.c.b16 %v640, %v638
      %v693 = vpack.c.b16 %v643, %v641
      %v694 = vpack.c.b16 %v644, %v642
      %v695 = vpack.c.b16 %v647, %v645
      %v696 = vpack.c.b16 %v648, %v646
      %v697 = vpack.c.b16 %v651, %v649
      %v698 = vpack.c.b16 %v652, %v650
      %v699 = vpack.c.b16 %v655, %v653
      %v700 = vpack.c.b16 %v656, %v654
      %v701 = vpack.c.b16 %v659, %v657
      %v702 = vpack.c.b16 %v660, %v658
      %v703 = vpack.c.b16 %v663, %v661
      %v704 = vpack.c.b16 %v664, %v662
      %v705 = vpack.c.b16 %v667, %v665
      %v706 = vpack.c.b16 %v668, %v666
      %v707 = vpack.c.b16 %v671, %v669
      %v708 = vpack.c.b16 %v672, %v670
      %v709 = vpack.c.b16 %v675, %v673
      %v710 = vpack.c.b16 %v676, %v674
      %v711 = vpack.c.b16 %v679, %v677
      %v712 = vpack.c.b16 %v680, %v678
      %745 = vmatpush.bf16.msra.mxu0 %v695
      %746 = vmatpush.bf16.msra.mxu0 %v693
      %747 = vmatpush.bf16.msra.mxu0 %v691
      %748 = vmatpush.bf16.msra.mxu0 %v689
      %749 = vmatpush.bf16.msra.mxu0 %v687
      %750 = vmatpush.bf16.msra.mxu0 %v685
      %751 = vmatpush.bf16.msra.mxu0 %v683
      %752 = vmatpush.bf16.msra.mxu0 %v681
      %753 = vmatmul.bf16.gmra.mxu0 %v521
      %v754 = vpop.f32.mrf.mxu0
      %v755 = vadd.f32 0.0, %v754
      %v756 = vpop.f32.mrf.mxu0
      %v757 = vadd.f32 0.0, %v756
      %758 = vmatmul.bf16.gmra.mxu0 %v523
      %v759 = vpop.f32.mrf.mxu0
      %v760 = vadd.f32 0.0, %v759
      %v761 = vpop.f32.mrf.mxu0
      %v762 = vadd.f32 0.0, %v761
      %763 = vmatmul.bf16.gmra.mxu0 %v525
      %v764 = vpop.f32.mrf.mxu0
      %v765 = vadd.f32 0.0, %v764
      %v766 = vpop.f32.mrf.mxu0
      %v767 = vadd.f32 0.0, %v766
      %768 = vmatmul.bf16.gmra.mxu0 %v527
      %v769 = vpop.f32.mrf.mxu0
      %v770 = vadd.f32 0.0, %v769
      %v771 = vpop.f32.mrf.mxu0
      %v772 = vadd.f32 0.0, %v771
      %773 = vmatmul.bf16.gmra.mxu0 %v529
      %v774 = vpop.f32.mrf.mxu0
      %v775 = vadd.f32 0.0, %v774
      %v776 = vpop.f32.mrf.mxu0
      %v777 = vadd.f32 0.0, %v776
      %778 = vmatmul.bf16.gmra.mxu0 %v531
      %v779 = vpop.f32.mrf.mxu0
      %v780 = vadd.f32 0.0, %v779
      %v781 = vpop.f32.mrf.mxu0
      %v782 = vadd.f32 0.0, %v781
      %783 = vmatmul.bf16.gmra.mxu0 %v533
      %v784 = vpop.f32.mrf.mxu0
      %v785 = vadd.f32 0.0, %v784
      %v786 = vpop.f32.mrf.mxu0
      %v787 = vadd.f32 0.0, %v786
      %788 = vmatmul.bf16.gmra.mxu0 %v535
      %v789 = vpop.f32.mrf.mxu0
      %v790 = vadd.f32 0.0, %v789
      %v791 = vpop.f32.mrf.mxu0
      %v792 = vadd.f32 0.0, %v791
      %793 = vmatmul.bf16.gmra.mxu0 %v537
      %v794 = vpop.f32.mrf.mxu0
      %v795 = vadd.f32 0.0, %v794
      %v796 = vpop.f32.mrf.mxu0
      %v797 = vadd.f32 0.0, %v796
      %798 = vmatmul.bf16.gmra.mxu0 %v539
      %v799 = vpop.f32.mrf.mxu0
      %v800 = vadd.f32 0.0, %v799
      %v801 = vpop.f32.mrf.mxu0
      %v802 = vadd.f32 0.0, %v801
      %803 = vmatmul.bf16.gmra.mxu0 %v541
      %v804 = vpop.f32.mrf.mxu0
      %v805 = vadd.f32 0.0, %v804
      %v806 = vpop.f32.mrf.mxu0
      %v807 = vadd.f32 0.0, %v806
      %808 = vmatmul.bf16.gmra.mxu0 %v543
      %v809 = vpop.f32.mrf.mxu0
      %v810 = vadd.f32 0.0, %v809
      %v811 = vpop.f32.mrf.mxu0
      %v812 = vadd.f32 0.0, %v811
      %813 = vmatmul.bf16.gmra.mxu0 %v545
      %v814 = vpop.f32.mrf.mxu0
      %v815 = vadd.f32 0.0, %v814
      %v816 = vpop.f32.mrf.mxu0
      %v817 = vadd.f32 0.0, %v816
      %818 = vmatmul.bf16.gmra.mxu0 %v547
      %v819 = vpop.f32.mrf.mxu0
      %v820 = vadd.f32 0.0, %v819
      %v821 = vpop.f32.mrf.mxu0
      %v822 = vadd.f32 0.0, %v821
      %823 = vmatmul.bf16.gmra.mxu0 %v549
      %v824 = vpop.f32.mrf.mxu0
      %v825 = vadd.f32 0.0, %v824
      %v826 = vpop.f32.mrf.mxu0
      %v827 = vadd.f32 0.0, %v826
      %828 = vmatmul.bf16.gmra.mxu0 %v551
      %v829 = vpop.f32.mrf.mxu0
      %v830 = vadd.f32 0.0, %v829
      %v831 = vpop.f32.mrf.mxu0
      %v832 = vadd.f32 0.0, %v831
      %833 = vdwg.mxu0
      %834 = vmatpush.bf16.msra.mxu0 %v711
      %835 = vmatpush.bf16.msra.mxu0 %v709
      %836 = vmatpush.bf16.msra.mxu0 %v707
      %837 = vmatpush.bf16.msra.mxu0 %v705
      %838 = vmatpush.bf16.msra.mxu0 %v703
      %839 = vmatpush.bf16.msra.mxu0 %v701
      %840 = vmatpush.bf16.msra.mxu0 %v699
      %841 = vmatpush.bf16.msra.mxu0 %v697
      %842 = vmatmul.bf16.gmra.mxu0 %v522
      %v843 = vpop.f32.mrf.mxu0
      %v844 = vadd.f32 %v755, %v843
      %v845 = vpop.f32.mrf.mxu0
      %v846 = vadd.f32 %v757, %v845
      %847 = vmatmul.bf16.gmra.mxu0 %v524
      %v848 = vpop.f32.mrf.mxu0
      %v849 = vadd.f32 %v760, %v848
      %v850 = vpop.f32.mrf.mxu0
      %v851 = vadd.f32 %v762, %v850
      %852 = vmatmul.bf16.gmra.mxu0 %v526
      %v853 = vpop.f32.mrf.mxu0
      %v854 = vadd.f32 %v765, %v853
      %v855 = vpop.f32.mrf.mxu0
      %v856 = vadd.f32 %v767, %v855
      %857 = vmatmul.bf16.gmra.mxu0 %v528
      %v858 = vpop.f32.mrf.mxu0
      %v859 = vadd.f32 %v770, %v858
      %v860 = vpop.f32.mrf.mxu0
      %v861 = vadd.f32 %v772, %v860
      %862 = vmatmul.bf16.gmra.mxu0 %v530
      %v863 = vpop.f32.mrf.mxu0
      %v864 = vadd.f32 %v775, %v863
      %v865 = vpop.f32.mrf.mxu0
      %v866 = vadd.f32 %v777, %v865
      %867 = vmatmul.bf16.gmra.mxu0 %v532
      %v868 = vpop.f32.mrf.mxu0
      %v869 = vadd.f32 %v780, %v868
      %v870 = vpop.f32.mrf.mxu0
      %v871 = vadd.f32 %v782, %v870
      %872 = vmatmul.bf16.gmra.mxu0 %v534
      %v873 = vpop.f32.mrf.mxu0
      %v874 = vadd.f32 %v785, %v873
      %v875 = vpop.f32.mrf.mxu0
      %v876 = vadd.f32 %v787, %v875
      %877 = vmatmul.bf16.gmra.mxu0 %v536
      %v878 = vpop.f32.mrf.mxu0
      %v879 = vadd.f32 %v790, %v878
      %v880 = vpop.f32.mrf.mxu0
      %v881 = vadd.f32 %v792, %v880
      %882 = vmatmul.bf16.gmra.mxu0 %v538
      %v883 = vpop.f32.mrf.mxu0
      %v884 = vadd.f32 %v795, %v883
      %v885 = vpop.f32.mrf.mxu0
      %v886 = vadd.f32 %v797, %v885
      %887 = vmatmul.bf16.gmra.mxu0 %v540
      %v888 = vpop.f32.mrf.mxu0
      %v889 = vadd.f32 %v800, %v888
      %v890 = vpop.f32.mrf.mxu0
      %v891 = vadd.f32 %v802, %v890
      %892 = vmatmul.bf16.gmra.mxu0 %v542
      %v893 = vpop.f32.mrf.mxu0
      %v894 = vadd.f32 %v805, %v893
      %v895 = vpop.f32.mrf.mxu0
      %v896 = vadd.f32 %v807, %v895
      %897 = vmatmul.bf16.gmra.mxu0 %v544
      %v898 = vpop.f32.mrf.mxu0
      %v899 = vadd.f32 %v810, %v898
      %v900 = vpop.f32.mrf.mxu0
      %v901 = vadd.f32 %v812, %v900
      %902 = vmatmul.bf16.gmra.mxu0 %v546
      %v903 = vpop.f32.mrf.mxu0
      %v904 = vadd.f32 %v815, %v903
      %v905 = vpop.f32.mrf.mxu0
      %v906 = vadd.f32 %v817, %v905
      %907 = vmatmul.bf16.gmra.mxu0 %v548
      %v908 = vpop.f32.mrf.mxu0
      %v909 = vadd.f32 %v820, %v908
      %v910 = vpop.f32.mrf.mxu0
      %v911 = vadd.f32 %v822, %v910
      %912 = vmatmul.bf16.gmra.mxu0 %v550
      %v913 = vpop.f32.mrf.mxu0
      %v914 = vadd.f32 %v825, %v913
      %v915 = vpop.f32.mrf.mxu0
      %v916 = vadd.f32 %v827, %v915
      %917 = vmatmul.bf16.gmra.mxu0 %v552
      %v918 = vpop.f32.mrf.mxu0
      %v919 = vadd.f32 %v830, %v918
      %v920 = vpop.f32.mrf.mxu0
      %v921 = vadd.f32 %v832, %v920
      %922 = vdwg.mxu0
      %923 = vmatpush.bf16.msra.mxu0 %v696
      %924 = vmatpush.bf16.msra.mxu0 %v694
      %925 = vmatpush.bf16.msra.mxu0 %v692
      %926 = vmatpush.bf16.msra.mxu0 %v690
      %927 = vmatpush.bf16.msra.mxu0 %v688
      %928 = vmatpush.bf16.msra.mxu0 %v686
      %929 = vmatpush.bf16.msra.mxu0 %v684
      %930 = vmatpush.bf16.msra.mxu0 %v682
      %931 = vmatmul.bf16.gmra.mxu0 %v521
      %v932 = vpop.f32.mrf.mxu0
      %v933 = vadd.f32 0.0, %v932
      %v934 = vpop.f32.mrf.mxu0
      %v935 = vadd.f32 0.0, %v934
      %936 = vmatmul.bf16.gmra.mxu0 %v523
      %v937 = vpop.f32.mrf.mxu0
      %v938 = vadd.f32 0.0, %v937
      %v939 = vpop.f32.mrf.mxu0
      %v940 = vadd.f32 0.0, %v939
      %941 = vmatmul.bf16.gmra.mxu0 %v525
      %v942 = vpop.f32.mrf.mxu0
      %v943 = vadd.f32 0.0, %v942
      %v944 = vpop.f32.mrf.mxu0
      %v945 = vadd.f32 0.0, %v944
      %946 = vmatmul.bf16.gmra.mxu0 %v527
      %v947 = vpop.f32.mrf.mxu0
      %v948 = vadd.f32 0.0, %v947
      %v949 = vpop.f32.mrf.mxu0
      %v950 = vadd.f32 0.0, %v949
      %951 = vmatmul.bf16.gmra.mxu0 %v529
      %v952 = vpop.f32.mrf.mxu0
      %v953 = vadd.f32 0.0, %v952
      %v954 = vpop.f32.mrf.mxu0
      %v955 = vadd.f32 0.0, %v954
      %956 = vmatmul.bf16.gmra.mxu0 %v531
      %v957 = vpop.f32.mrf.mxu0
      %v958 = vadd.f32 0.0, %v957
      %v959 = vpop.f32.mrf.mxu0
      %v960 = vadd.f32 0.0, %v959
      %961 = vmatmul.bf16.gmra.mxu0 %v533
      %v962 = vpop.f32.mrf.mxu0
      %v963 = vadd.f32 0.0, %v962
      %v964 = vpop.f32.mrf.mxu0
      %v965 = vadd.f32 0.0, %v964
      %966 = vmatmul.bf16.gmra.mxu0 %v535
      %v967 = vpop.f32.mrf.mxu0
      %v968 = vadd.f32 0.0, %v967
      %v969 = vpop.f32.mrf.mxu0
      %v970 = vadd.f32 0.0, %v969
      %971 = vmatmul.bf16.gmra.mxu0 %v537
      %v972 = vpop.f32.mrf.mxu0
      %v973 = vadd.f32 0.0, %v972
      %v974 = vpop.f32.mrf.mxu0
      %v975 = vadd.f32 0.0, %v974
      %976 = vmatmul.bf16.gmra.mxu0 %v539
      %v977 = vpop.f32.mrf.mxu0
      %v978 = vadd.f32 0.0, %v977
      %v979 = vpop.f32.mrf.mxu0
      %v980 = vadd.f32 0.0, %v979
      %981 = vmatmul.bf16.gmra.mxu0 %v541
      %v982 = vpop.f32.mrf.mxu0
      %v983 = vadd.f32 0.0, %v982
      %v984 = vpop.f32.mrf.mxu0
      %v985 = vadd.f32 0.0, %v984
      %986 = vmatmul.bf16.gmra.mxu0 %v543
      %v987 = vpop.f32.mrf.mxu0
      %v988 = vadd.f32 0.0, %v987
      %v989 = vpop.f32.mrf.mxu0
      %v990 = vadd.f32 0.0, %v989
      %991 = vmatmul.bf16.gmra.mxu0 %v545
      %v992 = vpop.f32.mrf.mxu0
      %v993 = vadd.f32 0.0, %v992
      %v994 = vpop.f32.mrf.mxu0
      %v995 = vadd.f32 0.0, %v994
      %996 = vmatmul.bf16.gmra.mxu0 %v547
      %v997 = vpop.f32.mrf.mxu0
      %v998 = vadd.f32 0.0, %v997
      %v999 = vpop.f32.mrf.mxu0
      %v1000 = vadd.f32 0.0, %v999
      %1001 = vmatmul.bf16.gmra.mxu0 %v549
      %v1002 = vpop.f32.mrf.mxu0
      %v1003 = vadd.f32 0.0, %v1002
      %v1004 = vpop.f32.mrf.mxu0
      %v1005 = vadd.f32 0.0, %v1004
      %1006 = vmatmul.bf16.gmra.mxu0 %v551
      %v1007 = vpop.f32.mrf.mxu0
      %v1008 = vadd.f32 0.0, %v1007
      %v1009 = vpop.f32.mrf.mxu0
      %v1010 = vadd.f32 0.0, %v1009
      %1011 = vdwg.mxu0
      %1012 = vmatpush.bf16.msra.mxu0 %v712
      %1013 = vmatpush.bf16.msra.mxu0 %v710
      %1014 = vmatpush.bf16.msra.mxu0 %v708
      %1015 = vmatpush.bf16.msra.mxu0 %v706
      %1016 = vmatpush.bf16.msra.mxu0 %v704
      %1017 = vmatpush.bf16.msra.mxu0 %v702
      %1018 = vmatpush.bf16.msra.mxu0 %v700
      %1019 = vmatpush.bf16.msra.mxu0 %v698
      %1020 = vmatmul.bf16.gmra.mxu0 %v522
      %v1021 = vpop.f32.mrf.mxu0
      %v1022 = vadd.f32 %v933, %v1021
      %v1023 = vpop.f32.mrf.mxu0
      %v1024 = vadd.f32 %v935, %v1023
      %1025 = vmatmul.bf16.gmra.mxu0 %v524
      %v1026 = vpop.f32.mrf.mxu0
      %v1027 = vadd.f32 %v938, %v1026
      %v1028 = vpop.f32.mrf.mxu0
      %v1029 = vadd.f32 %v940, %v1028
      %1030 = vmatmul.bf16.gmra.mxu0 %v526
      %v1031 = vpop.f32.mrf.mxu0
      %v1032 = vadd.f32 %v943, %v1031
      %v1033 = vpop.f32.mrf.mxu0
      %v1034 = vadd.f32 %v945, %v1033
      %1035 = vmatmul.bf16.gmra.mxu0 %v528
      %v1036 = vpop.f32.mrf.mxu0
      %v1037 = vadd.f32 %v948, %v1036
      %v1038 = vpop.f32.mrf.mxu0
      %v1039 = vadd.f32 %v950, %v1038
      %1040 = vmatmul.bf16.gmra.mxu0 %v530
      %v1041 = vpop.f32.mrf.mxu0
      %v1042 = vadd.f32 %v953, %v1041
      %v1043 = vpop.f32.mrf.mxu0
      %v1044 = vadd.f32 %v955, %v1043
      %1045 = vmatmul.bf16.gmra.mxu0 %v532
      %v1046 = vpop.f32.mrf.mxu0
      %v1047 = vadd.f32 %v958, %v1046
      %v1048 = vpop.f32.mrf.mxu0
      %v1049 = vadd.f32 %v960, %v1048
      %1050 = vmatmul.bf16.gmra.mxu0 %v534
      %v1051 = vpop.f32.mrf.mxu0
      %v1052 = vadd.f32 %v963, %v1051
      %v1053 = vpop.f32.mrf.mxu0
      %v1054 = vadd.f32 %v965, %v1053
      %1055 = vmatmul.bf16.gmra.mxu0 %v536
      %v1056 = vpop.f32.mrf.mxu0
      %v1057 = vadd.f32 %v968, %v1056
      %v1058 = vpop.f32.mrf.mxu0
      %v1059 = vadd.f32 %v970, %v1058
      %1060 = vmatmul.bf16.gmra.mxu0 %v538
      %v1061 = vpop.f32.mrf.mxu0
      %v1062 = vadd.f32 %v973, %v1061
      %v1063 = vpop.f32.mrf.mxu0
      %v1064 = vadd.f32 %v975, %v1063
      %1065 = vmatmul.bf16.gmra.mxu0 %v540
      %v1066 = vpop.f32.mrf.mxu0
      %v1067 = vadd.f32 %v978, %v1066
      %v1068 = vpop.f32.mrf.mxu0
      %v1069 = vadd.f32 %v980, %v1068
      %1070 = vmatmul.bf16.gmra.mxu0 %v542
      %v1071 = vpop.f32.mrf.mxu0
      %v1072 = vadd.f32 %v983, %v1071
      %v1073 = vpop.f32.mrf.mxu0
      %v1074 = vadd.f32 %v985, %v1073
      %1075 = vmatmul.bf16.gmra.mxu0 %v544
      %v1076 = vpop.f32.mrf.mxu0
      %v1077 = vadd.f32 %v988, %v1076
      %v1078 = vpop.f32.mrf.mxu0
      %v1079 = vadd.f32 %v990, %v1078
      %1080 = vmatmul.bf16.gmra.mxu0 %v546
      %v1081 = vpop.f32.mrf.mxu0
      %v1082 = vadd.f32 %v993, %v1081
      %v1083 = vpop.f32.mrf.mxu0
      %v1084 = vadd.f32 %v995, %v1083
      %1085 = vmatmul.bf16.gmra.mxu0 %v548
      %v1086 = vpop.f32.mrf.mxu0
      %v1087 = vadd.f32 %v998, %v1086
      %v1088 = vpop.f32.mrf.mxu0
      %v1089 = vadd.f32 %v1000, %v1088
      %1090 = vmatmul.bf16.gmra.mxu0 %v550
      %v1091 = vpop.f32.mrf.mxu0
      %v1092 = vadd.f32 %v1003, %v1091
      %v1093 = vpop.f32.mrf.mxu0
      %v1094 = vadd.f32 %v1005, %v1093
      %1095 = vmatmul.bf16.gmra.mxu0 %v552
      %v1096 = vpop.f32.mrf.mxu0
      %v1097 = vadd.f32 %v1008, %v1096
      %v1098 = vpop.f32.mrf.mxu0
      %v1099 = vadd.f32 %v1010, %v1098
      %1100 = vdwg.mxu0
      %v1101 = vld [vmem:[%s4] sm:$0x1]
      %v1102 = vld [vmem:[%s5] sm:$0x1]
      %vm1103 = vcmask 519168
      %1104 = vst.msk [vmem:[#allocation2] sm:$0xf] %vm1103, 0
      %1105 = vst.msk [vmem:[#allocation2 + $0x4] sm:$0xf] %vm1103, 0
      %1106 = vst.msk [vmem:[#allocation2 + $0x8] sm:$0xf] %vm1103, 0
      %vm1107 = vcmask 516096
      %vm1108 = vsmask.f32 256
      %vm1109 = vmand %vm1107, %vm1108
      %v1110 = vld [vmem:[#allocation2 + $0xc] sm:$0x1]
      %v1111 = vsel %vm1109, 0, %v1110
      %1112 = vst [vmem:[#allocation2 + $0xc] sm:$0x1] %v1111
      %1113 = vst.msk [vmem:[#allocation2 + $0xa0] sm:$0xf] %vm1103, 0
      %1114 = vst.msk [vmem:[#allocation2 + $0xa4] sm:$0xf] %vm1103, 0
      %1115 = vst.msk [vmem:[#allocation2 + $0xa8] sm:$0xf] %vm1103, 0
      %v1116 = vld [vmem:[#allocation2 + $0xac] sm:$0x1]
      %v1117 = vsel %vm1109, 0, %v1116
      %1118 = vst [vmem:[#allocation2 + $0xac] sm:$0x1] %v1117
      %1119 = vst.msk [vmem:[#allocation2 + $0x140] sm:$0xf] %vm1103, 0
      %1120 = vst.msk [vmem:[#allocation2 + $0x144] sm:$0xf] %vm1103, 0
      %1121 = vst.msk [vmem:[#allocation2 + $0x148] sm:$0xf] %vm1103, 0
      %v1122 = vld [vmem:[#allocation2 + $0x14c] sm:$0x1]
      %v1123 = vsel %vm1109, 0, %v1122
      %1124 = vst [vmem:[#allocation2 + $0x14c] sm:$0x1] %v1123
      %1125 = vst.msk [vmem:[#allocation2 + $0x1e0] sm:$0xf] %vm1103, 0
      %1126 = vst.msk [vmem:[#allocation2 + $0x1e4] sm:$0xf] %vm1103, 0
      %1127 = vst.msk [vmem:[#allocation2 + $0x1e8] sm:$0xf] %vm1103, 0
      %v1128 = vld [vmem:[#allocation2 + $0x1ec] sm:$0x1]
      %v1129 = vsel %vm1109, 0, %v1128
      %1130 = vst [vmem:[#allocation2 + $0x1ec] sm:$0x1] %v1129
      %s1131 = scalar_lea.vmem [#allocation2], 144
      %1132 = vst.msk [vmem:[%s1131] sm:$0xf] %vm1103, 0
      %1133 = vst.msk [vmem:[%s1131 + $0x4] sm:$0xf] %vm1103, 0
      %1134 = vst.msk [vmem:[%s1131 + $0x8] sm:$0xf] %vm1103, 0
      %v1135 = vld [vmem:[%s1131 + $0xc] sm:$0x1]
      %v1136 = vsel %vm1109, 0, %v1135
      %1137 = vst [vmem:[%s1131 + $0xc] sm:$0x1] %v1136
      %1138 = vst.msk [vmem:[%s1131 + $0xa0] sm:$0xf] %vm1103, 0
      %1139 = vst.msk [vmem:[%s1131 + $0xa4] sm:$0xf] %vm1103, 0
      %1140 = vst.msk [vmem:[%s1131 + $0xa8] sm:$0xf] %vm1103, 0
      %v1141 = vld [vmem:[%s1131 + $0xac] sm:$0x1]
      %v1142 = vsel %vm1109, 0, %v1141
      %1143 = vst [vmem:[%s1131 + $0xac] sm:$0x1] %v1142
      %1144 = vst.msk [vmem:[%s1131 + $0x140] sm:$0xf] %vm1103, 0
      %1145 = vst.msk [vmem:[%s1131 + $0x144] sm:$0xf] %vm1103, 0
      %1146 = vst.msk [vmem:[%s1131 + $0x148] sm:$0xf] %vm1103, 0
      %v1147 = vld [vmem:[%s1131 + $0x14c] sm:$0x1]
      %v1148 = vsel %vm1109, 0, %v1147
      %1149 = vst [vmem:[%s1131 + $0x14c] sm:$0x1] %v1148
      %1150 = vst.msk [vmem:[%s1131 + $0x1e0] sm:$0xf] %vm1103, 0
      %1151 = vst.msk [vmem:[%s1131 + $0x1e4] sm:$0xf] %vm1103, 0
      %1152 = vst.msk [vmem:[%s1131 + $0x1e8] sm:$0xf] %vm1103, 0
      %v1153 = vld [vmem:[%s1131 + $0x1ec] sm:$0x1]
      %v1154 = vsel %vm1109, 0, %v1153
      %1155 = vst [vmem:[%s1131 + $0x1ec] sm:$0x1] %v1154
      %vm1156 = vcmask 519171
      %vm1157 = vsmask.f32 7950
      %vm1158 = vmand %vm1156, %vm1157
      %v1159 = vld [vmem:[#allocation2 + $0x4] sm:$0x8]
      %v1160 = vsel %vm1158, 0, %v1159
      %1161 = vst [vmem:[#allocation2 + $0x4] sm:$0x8] %v1160
      %v1162 = vld [vmem:[#allocation2 + $0x14] sm:$0x8]
      %v1163 = vsel %vm1158, 0, %v1162
      %1164 = vst [vmem:[#allocation2 + $0x14] sm:$0x8] %v1163
      %v1165 = vld [vmem:[#allocation2 + $0x24] sm:$0x8]
      %v1166 = vsel %vm1158, 0, %v1165
      %1167 = vst [vmem:[#allocation2 + $0x24] sm:$0x8] %v1166
      %v1168 = vld [vmem:[#allocation2 + $0x34] sm:$0x8]
      %v1169 = vsel %vm1158, 0, %v1168
      %1170 = vst [vmem:[#allocation2 + $0x34] sm:$0x8] %v1169
      %v1171 = vld [vmem:[#allocation2 + $0x44] sm:$0x8]
      %v1172 = vsel %vm1158, 0, %v1171
      %1173 = vst [vmem:[#allocation2 + $0x44] sm:$0x8] %v1172
      %v1174 = vld [vmem:[#allocation2 + $0x54] sm:$0x8]
      %v1175 = vsel %vm1158, 0, %v1174
      %1176 = vst [vmem:[#allocation2 + $0x54] sm:$0x8] %v1175
      %v1177 = vld [vmem:[#allocation2 + $0x64] sm:$0x8]
      %v1178 = vsel %vm1158, 0, %v1177
      %1179 = vst [vmem:[#allocation2 + $0x64] sm:$0x8] %v1178
      %v1180 = vld [vmem:[#allocation2 + $0x74] sm:$0x8]
      %v1181 = vsel %vm1158, 0, %v1180
      %1182 = vst [vmem:[#allocation2 + $0x74] sm:$0x8] %v1181
      %v1183 = vld [vmem:[#allocation2 + $0x84] sm:$0x8]
      %v1184 = vsel %vm1158, 0, %v1183
      %1185 = vst [vmem:[#allocation2 + $0x84] sm:$0x8] %v1184
      %v1186 = vld [vmem:[#allocation2 + $0x94] sm:$0x8]
      %v1187 = vsel %vm1158, 0, %v1186
      %1188 = vst [vmem:[#allocation2 + $0x94] sm:$0x8] %v1187
      %v1189 = vld [vmem:[#allocation2 + $0xa4] sm:$0x8]
      %v1190 = vsel %vm1158, 0, %v1189
      %1191 = vst [vmem:[#allocation2 + $0xa4] sm:$0x8] %v1190
      %v1192 = vld [vmem:[#allocation2 + $0xb4] sm:$0x8]
      %v1193 = vsel %vm1158, 0, %v1192
      %1194 = vst [vmem:[#allocation2 + $0xb4] sm:$0x8] %v1193
      %v1195 = vld [vmem:[#allocation2 + $0xc4] sm:$0x8]
      %v1196 = vsel %vm1158, 0, %v1195
      %1197 = vst [vmem:[#allocation2 + $0xc4] sm:$0x8] %v1196
      %v1198 = vld [vmem:[#allocation2 + $0xd4] sm:$0x8]
      %v1199 = vsel %vm1158, 0, %v1198
      %1200 = vst [vmem:[#allocation2 + $0xd4] sm:$0x8] %v1199
      %v1201 = vld [vmem:[#allocation2 + $0xe4] sm:$0x8]
      %v1202 = vsel %vm1158, 0, %v1201
      %1203 = vst [vmem:[#allocation2 + $0xe4] sm:$0x8] %v1202
      %v1204 = vld [vmem:[#allocation2 + $0xf4] sm:$0x8]
      %v1205 = vsel %vm1158, 0, %v1204
      %1206 = vst [vmem:[#allocation2 + $0xf4] sm:$0x8] %v1205
      %v1207 = vld [vmem:[#allocation2 + $0x104] sm:$0x8]
      %v1208 = vsel %vm1158, 0, %v1207
      %1209 = vst [vmem:[#allocation2 + $0x104] sm:$0x8] %v1208
      %v1210 = vld [vmem:[#allocation2 + $0x114] sm:$0x8]
      %v1211 = vsel %vm1158, 0, %v1210
      %1212 = vst [vmem:[#allocation2 + $0x114] sm:$0x8] %v1211
      %v1213 = vld [vmem:[#allocation2 + $0x124] sm:$0x8]
      %v1214 = vsel %vm1158, 0, %v1213
      %1215 = vst [vmem:[#allocation2 + $0x124] sm:$0x8] %v1214
      %v1216 = vld [vmem:[#allocation2 + $0x134] sm:$0x8]
      %v1217 = vsel %vm1158, 0, %v1216
      %1218 = vst [vmem:[#allocation2 + $0x134] sm:$0x8] %v1217
      %v1219 = vld [vmem:[#allocation2 + $0x144] sm:$0x8]
      %v1220 = vsel %vm1158, 0, %v1219
      %1221 = vst [vmem:[#allocation2 + $0x144] sm:$0x8] %v1220
      %v1222 = vld [vmem:[#allocation2 + $0x154] sm:$0x8]
      %v1223 = vsel %vm1158, 0, %v1222
      %1224 = vst [vmem:[#allocation2 + $0x154] sm:$0x8] %v1223
      %v1225 = vld [vmem:[#allocation2 + $0x164] sm:$0x8]
      %v1226 = vsel %vm1158, 0, %v1225
      %1227 = vst [vmem:[#allocation2 + $0x164] sm:$0x8] %v1226
      %v1228 = vld [vmem:[#allocation2 + $0x174] sm:$0x8]
      %v1229 = vsel %vm1158, 0, %v1228
      %1230 = vst [vmem:[#allocation2 + $0x174] sm:$0x8] %v1229
      %v1231 = vld [vmem:[#allocation2 + $0x184] sm:$0x8]
      %v1232 = vsel %vm1158, 0, %v1231
      %1233 = vst [vmem:[#allocation2 + $0x184] sm:$0x8] %v1232
      %v1234 = vld [vmem:[#allocation2 + $0x194] sm:$0x8]
      %v1235 = vsel %vm1158, 0, %v1234
      %1236 = vst [vmem:[#allocation2 + $0x194] sm:$0x8] %v1235
      %v1237 = vld [vmem:[#allocation2 + $0x1a4] sm:$0x8]
      %v1238 = vsel %vm1158, 0, %v1237
      %1239 = vst [vmem:[#allocation2 + $0x1a4] sm:$0x8] %v1238
      %v1240 = vld [vmem:[#allocation2 + $0x1b4] sm:$0x8]
      %v1241 = vsel %vm1158, 0, %v1240
      %1242 = vst [vmem:[#allocation2 + $0x1b4] sm:$0x8] %v1241
      %v1243 = vld [vmem:[#allocation2 + $0x1c4] sm:$0x8]
      %v1244 = vsel %vm1158, 0, %v1243
      %1245 = vst [vmem:[#allocation2 + $0x1c4] sm:$0x8] %v1244
      %v1246 = vld [vmem:[#allocation2 + $0x1d4] sm:$0x8]
      %v1247 = vsel %vm1158, 0, %v1246
      %1248 = vst [vmem:[#allocation2 + $0x1d4] sm:$0x8] %v1247
      %v1249 = vld [vmem:[#allocation2 + $0x1e4] sm:$0x8]
      %v1250 = vsel %vm1158, 0, %v1249
      %1251 = vst [vmem:[#allocation2 + $0x1e4] sm:$0x8] %v1250
      %v1252 = vld [vmem:[#allocation2 + $0x1f4] sm:$0x8]
      %v1253 = vsel %vm1158, 0, %v1252
      %1254 = vst [vmem:[#allocation2 + $0x1f4] sm:$0x8] %v1253
      %v1255 = vld [vmem:[#allocation2 + $0x204] sm:$0x8]
      %v1256 = vsel %vm1158, 0, %v1255
      %1257 = vst [vmem:[#allocation2 + $0x204] sm:$0x8] %v1256
      %v1258 = vld [vmem:[#allocation2 + $0x214] sm:$0x8]
      %v1259 = vsel %vm1158, 0, %v1258
      %1260 = vst [vmem:[#allocation2 + $0x214] sm:$0x8] %v1259
      %v1261 = vld [vmem:[#allocation2 + $0x224] sm:$0x8]
      %v1262 = vsel %vm1158, 0, %v1261
      %1263 = vst [vmem:[#allocation2 + $0x224] sm:$0x8] %v1262
      %v1264 = vld [vmem:[#allocation2 + $0x234] sm:$0x8]
      %v1265 = vsel %vm1158, 0, %v1264
      %1266 = vst [vmem:[#allocation2 + $0x234] sm:$0x8] %v1265
      %v1267 = vld [vmem:[#allocation2 + $0x244] sm:$0x8]
      %v1268 = vsel %vm1158, 0, %v1267
      %1269 = vst [vmem:[#allocation2 + $0x244] sm:$0x8] %v1268
      %v1270 = vld [vmem:[#allocation2 + $0x254] sm:$0x8]
      %v1271 = vsel %vm1158, 0, %v1270
      %1272 = vst [vmem:[#allocation2 + $0x254] sm:$0x8] %v1271
      %v1273 = vld [vmem:[#allocation2 + $0x264] sm:$0x8]
      %v1274 = vsel %vm1158, 0, %v1273
      %1275 = vst [vmem:[#allocation2 + $0x264] sm:$0x8] %v1274
      %v1276 = vld [vmem:[#allocation2 + $0x274] sm:$0x8]
      %v1277 = vsel %vm1158, 0, %v1276
      %1278 = vst [vmem:[#allocation2 + $0x274] sm:$0x8] %v1277
      %v1279 = vld [vmem:[#allocation2 + $0xc] sm:$0x1]
      %v1280 = vsel %vm1109, 0, %v1279
      %1281 = vst [vmem:[#allocation2 + $0xc] sm:$0x1] %v1280
      %v1282 = vld [vmem:[#allocation2 + $0x1c] sm:$0x1]
      %v1283 = vsel %vm1109, 0, %v1282
      %1284 = vst [vmem:[#allocation2 + $0x1c] sm:$0x1] %v1283
      %v1285 = vld [vmem:[#allocation2 + $0x2c] sm:$0x1]
      %v1286 = vsel %vm1109, 0, %v1285
      %1287 = vst [vmem:[#allocation2 + $0x2c] sm:$0x1] %v1286
      %v1288 = vld [vmem:[#allocation2 + $0x3c] sm:$0x1]
      %v1289 = vsel %vm1109, 0, %v1288
      %1290 = vst [vmem:[#allocation2 + $0x3c] sm:$0x1] %v1289
      %v1291 = vld [vmem:[#allocation2 + $0x4c] sm:$0x1]
      %v1292 = vsel %vm1109, 0, %v1291
      %1293 = vst [vmem:[#allocation2 + $0x4c] sm:$0x1] %v1292
      %v1294 = vld [vmem:[#allocation2 + $0x5c] sm:$0x1]
      %v1295 = vsel %vm1109, 0, %v1294
      %1296 = vst [vmem:[#allocation2 + $0x5c] sm:$0x1] %v1295
      %v1297 = vld [vmem:[#allocation2 + $0x6c] sm:$0x1]
      %v1298 = vsel %vm1109, 0, %v1297
      %1299 = vst [vmem:[#allocation2 + $0x6c] sm:$0x1] %v1298
      %v1300 = vld [vmem:[#allocation2 + $0x7c] sm:$0x1]
      %v1301 = vsel %vm1109, 0, %v1300
      %1302 = vst [vmem:[#allocation2 + $0x7c] sm:$0x1] %v1301
      %v1303 = vld [vmem:[#allocation2 + $0x8c] sm:$0x1]
      %v1304 = vsel %vm1109, 0, %v1303
      %1305 = vst [vmem:[#allocation2 + $0x8c] sm:$0x1] %v1304
      %v1306 = vld [vmem:[#allocation2 + $0x9c] sm:$0x1]
      %v1307 = vsel %vm1109, 0, %v1306
      %1308 = vst [vmem:[#allocation2 + $0x9c] sm:$0x1] %v1307
      %v1309 = vld [vmem:[#allocation2 + $0xac] sm:$0x1]
      %v1310 = vsel %vm1109, 0, %v1309
      %1311 = vst [vmem:[#allocation2 + $0xac] sm:$0x1] %v1310
      %v1312 = vld [vmem:[#allocation2 + $0xbc] sm:$0x1]
      %v1313 = vsel %vm1109, 0, %v1312
      %1314 = vst [vmem:[#allocation2 + $0xbc] sm:$0x1] %v1313
      %v1315 = vld [vmem:[#allocation2 + $0xcc] sm:$0x1]
      %v1316 = vsel %vm1109, 0, %v1315
      %1317 = vst [vmem:[#allocation2 + $0xcc] sm:$0x1] %v1316
      %v1318 = vld [vmem:[#allocation2 + $0xdc] sm:$0x1]
      %v1319 = vsel %vm1109, 0, %v1318
      %1320 = vst [vmem:[#allocation2 + $0xdc] sm:$0x1] %v1319
      %v1321 = vld [vmem:[#allocation2 + $0xec] sm:$0x1]
      %v1322 = vsel %vm1109, 0, %v1321
      %1323 = vst [vmem:[#allocation2 + $0xec] sm:$0x1] %v1322
      %v1324 = vld [vmem:[#allocation2 + $0xfc] sm:$0x1]
      %v1325 = vsel %vm1109, 0, %v1324
      %1326 = vst [vmem:[#allocation2 + $0xfc] sm:$0x1] %v1325
      %v1327 = vld [vmem:[#allocation2 + $0x10c] sm:$0x1]
      %v1328 = vsel %vm1109, 0, %v1327
      %1329 = vst [vmem:[#allocation2 + $0x10c] sm:$0x1] %v1328
      %v1330 = vld [vmem:[#allocation2 + $0x11c] sm:$0x1]
      %v1331 = vsel %vm1109, 0, %v1330
      %1332 = vst [vmem:[#allocation2 + $0x11c] sm:$0x1] %v1331
      %v1333 = vld [vmem:[#allocation2 + $0x12c] sm:$0x1]
      %v1334 = vsel %vm1109, 0, %v1333
      %1335 = vst [vmem:[#allocation2 + $0x12c] sm:$0x1] %v1334
      %v1336 = vld [vmem:[#allocation2 + $0x13c] sm:$0x1]
      %v1337 = vsel %vm1109, 0, %v1336
      %1338 = vst [vmem:[#allocation2 + $0x13c] sm:$0x1] %v1337
      %v1339 = vld [vmem:[#allocation2 + $0x14c] sm:$0x1]
      %v1340 = vsel %vm1109, 0, %v1339
      %1341 = vst [vmem:[#allocation2 + $0x14c] sm:$0x1] %v1340
      %v1342 = vld [vmem:[#allocation2 + $0x15c] sm:$0x1]
      %v1343 = vsel %vm1109, 0, %v1342
      %1344 = vst [vmem:[#allocation2 + $0x15c] sm:$0x1] %v1343
      %v1345 = vld [vmem:[#allocation2 + $0x16c] sm:$0x1]
      %v1346 = vsel %vm1109, 0, %v1345
      %1347 = vst [vmem:[#allocation2 + $0x16c] sm:$0x1] %v1346
      %v1348 = vld [vmem:[#allocation2 + $0x17c] sm:$0x1]
      %v1349 = vsel %vm1109, 0, %v1348
      %1350 = vst [vmem:[#allocation2 + $0x17c] sm:$0x1] %v1349
      %v1351 = vld [vmem:[#allocation2 + $0x18c] sm:$0x1]
      %v1352 = vsel %vm1109, 0, %v1351
      %1353 = vst [vmem:[#allocation2 + $0x18c] sm:$0x1] %v1352
      %v1354 = vld [vmem:[#allocation2 + $0x19c] sm:$0x1]
      %v1355 = vsel %vm1109, 0, %v1354
      %1356 = vst [vmem:[#allocation2 + $0x19c] sm:$0x1] %v1355
      %v1357 = vld [vmem:[#allocation2 + $0x1ac] sm:$0x1]
      %v1358 = vsel %vm1109, 0, %v1357
      %1359 = vst [vmem:[#allocation2 + $0x1ac] sm:$0x1] %v1358
      %v1360 = vld [vmem:[#allocation2 + $0x1bc] sm:$0x1]
      %v1361 = vsel %vm1109, 0, %v1360
      %1362 = vst [vmem:[#allocation2 + $0x1bc] sm:$0x1] %v1361
      %v1363 = vld [vmem:[#allocation2 + $0x1cc] sm:$0x1]
      %v1364 = vsel %vm1109, 0, %v1363
      %1365 = vst [vmem:[#allocation2 + $0x1cc] sm:$0x1] %v1364
      %v1366 = vld [vmem:[#allocation2 + $0x1dc] sm:$0x1]
      %v1367 = vsel %vm1109, 0, %v1366
      %1368 = vst [vmem:[#allocation2 + $0x1dc] sm:$0x1] %v1367
      %v1369 = vld [vmem:[#allocation2 + $0x1ec] sm:$0x1]
      %v1370 = vsel %vm1109, 0, %v1369
      %1371 = vst [vmem:[#allocation2 + $0x1ec] sm:$0x1] %v1370
      %v1372 = vld [vmem:[#allocation2 + $0x1fc] sm:$0x1]
      %v1373 = vsel %vm1109, 0, %v1372
      %1374 = vst [vmem:[#allocation2 + $0x1fc] sm:$0x1] %v1373
      %v1375 = vld [vmem:[#allocation2 + $0x20c] sm:$0x1]
      %v1376 = vsel %vm1109, 0, %v1375
      %1377 = vst [vmem:[#allocation2 + $0x20c] sm:$0x1] %v1376
      %v1378 = vld [vmem:[#allocation2 + $0x21c] sm:$0x1]
      %v1379 = vsel %vm1109, 0, %v1378
      %1380 = vst [vmem:[#allocation2 + $0x21c] sm:$0x1] %v1379
      %v1381 = vld [vmem:[#allocation2 + $0x22c] sm:$0x1]
      %v1382 = vsel %vm1109, 0, %v1381
      %1383 = vst [vmem:[#allocation2 + $0x22c] sm:$0x1] %v1382
      %v1384 = vld [vmem:[#allocation2 + $0x23c] sm:$0x1]
      %v1385 = vsel %vm1109, 0, %v1384
      %1386 = vst [vmem:[#allocation2 + $0x23c] sm:$0x1] %v1385
      %v1387 = vld [vmem:[#allocation2 + $0x24c] sm:$0x1]
      %v1388 = vsel %vm1109, 0, %v1387
      %1389 = vst [vmem:[#allocation2 + $0x24c] sm:$0x1] %v1388
      %v1390 = vld [vmem:[#allocation2 + $0x25c] sm:$0x1]
      %v1391 = vsel %vm1109, 0, %v1390
      %1392 = vst [vmem:[#allocation2 + $0x25c] sm:$0x1] %v1391
      %v1393 = vld [vmem:[#allocation2 + $0x26c] sm:$0x1]
      %v1394 = vsel %vm1109, 0, %v1393
      %1395 = vst [vmem:[#allocation2 + $0x26c] sm:$0x1] %v1394
      %v1396 = vld [vmem:[#allocation2 + $0x27c] sm:$0x1]
      %v1397 = vsel %vm1109, 0, %v1396
      %1398 = vst [vmem:[#allocation2 + $0x27c] sm:$0x1] %v1397
      %1407 = vrot.lane.b32.xlu0 %v864, 64
      %v1408 = vpop.permute.xlu0 %1407
      %1409 = vrot.lane.b32.xlu0 %v866, 64
      %v1410 = vpop.permute.xlu0 %1409
      %1411 = vrot.lane.b32.xlu0 %v869, 64
      %v1412 = vpop.permute.xlu0 %1411
      %1413 = vrot.lane.b32.xlu0 %v871, 64
      %v1414 = vpop.permute.xlu0 %1413
      %1415 = vrot.lane.b32.xlu0 %v874, 64
      %v1416 = vpop.permute.xlu0 %1415
      %1417 = vrot.lane.b32.xlu0 %v876, 64
      %v1418 = vpop.permute.xlu0 %1417
      %1419 = vrot.lane.b32.xlu0 %v879, 64
      %v1420 = vpop.permute.xlu0 %1419
      %1421 = vrot.lane.b32.xlu0 %v881, 64
      %v1422 = vpop.permute.xlu0 %1421
      %v1431 = vadd.f32 %v1022, %v1408
      %v1432 = vadd.f32 %v1024, %v1410
      %v1433 = vadd.f32 %v1027, %v1412
      %v1434 = vadd.f32 %v1029, %v1414
      %v1435 = vadd.f32 %v1032, %v1416
      %v1436 = vadd.f32 %v1034, %v1418
      %v1437 = vadd.f32 %v1037, %v1420
      %v1438 = vadd.f32 %v1039, %v1422
      %v1440 = vperm.slane %v1101, 0
      %v1442 = vmul.f32 %v1431, %v1440
      %v1443 = vmul.f32 %v1432, %v1440
      %v1444 = vmul.f32 %v1433, %v1440
      %v1445 = vmul.f32 %v1434, %v1440
      %v1446 = vmul.f32 %v1435, %v1440
      %v1447 = vmul.f32 %v1436, %v1440
      %v1448 = vmul.f32 %v1437, %v1440
      %v1449 = vmul.f32 %v1438, %v1440
      %v1451 = vperm.slane %v1102, 0
      %v1453 = vadd.f32 %v1442, %v1451
      %v1454 = vadd.f32 %v1443, %v1451
      %v1455 = vadd.f32 %v1444, %v1451
      %v1456 = vadd.f32 %v1445, %v1451
      %v1457 = vadd.f32 %v1446, %v1451
      %v1458 = vadd.f32 %v1447, %v1451
      %v1459 = vadd.f32 %v1448, %v1451
      %v1460 = vadd.f32 %v1449, %v1451
      %v1461 = vmax.f32 %v1453, 0.0
      %v1462 = vmax.f32 %v1454, 0.0
      %v1463 = vmax.f32 %v1455, 0.0
      %v1464 = vmax.f32 %v1456, 0.0
      %v1465 = vmax.f32 %v1457, 0.0
      %v1466 = vmax.f32 %v1458, 0.0
      %v1467 = vmax.f32 %v1459, 0.0
      %v1468 = vmax.f32 %v1460, 0.0
      %v1469 = vpack.c.bf16 %v1461, %v1461
      %v1470 = vpack.c.bf16 %v1462, %v1462
      %v1471 = vpack.c.bf16 %v1463, %v1463
      %v1472 = vpack.c.bf16 %v1464, %v1464
      %v1473 = vpack.c.bf16 %v1465, %v1465
      %v1474 = vpack.c.bf16 %v1466, %v1466
      %v1475 = vpack.c.bf16 %v1467, %v1467
      %v1476 = vpack.c.bf16 %v1468, %v1468
      %s1477 = scalar_lea.vmem [#allocation2], 16
      %1478 = vst.msk [vmem:[%s1477 + $0x8] sm:$0xf] %vm1103, %v1469
      %1479 = vst.msk [vmem:[%s1477 + $0x18] sm:$0xf] %vm1103, %v1470
      %1480 = vst.msk [vmem:[%s1477 + $0x28] sm:$0xf] %vm1103, %v1471
      %1481 = vst.msk [vmem:[%s1477 + $0x38] sm:$0xf] %vm1103, %v1472
      %1482 = vst.msk [vmem:[%s1477 + $0x48] sm:$0xf] %vm1103, %v1473
      %1483 = vst.msk [vmem:[%s1477 + $0x58] sm:$0xf] %vm1103, %v1474
      %1484 = vst.msk [vmem:[%s1477 + $0x68] sm:$0xf] %vm1103, %v1475
      %1485 = vst.msk [vmem:[%s1477 + $0x78] sm:$0xf] %vm1103, %v1476
      %v1486 = vadd.f32 %v1042, %v844
      %v1487 = vadd.f32 %v1044, %v846
      %v1488 = vadd.f32 %v1047, %v849
      %v1489 = vadd.f32 %v1049, %v851
      %v1490 = vadd.f32 %v1052, %v854
      %v1491 = vadd.f32 %v1054, %v856
      %v1492 = vadd.f32 %v1057, %v859
      %v1493 = vadd.f32 %v1059, %v861
      %v1494 = vadd.f32 %v1062, %v864
      %v1495 = vadd.f32 %v1064, %v866
      %v1496 = vadd.f32 %v1067, %v869
      %v1497 = vadd.f32 %v1069, %v871
      %v1498 = vadd.f32 %v1072, %v874
      %v1499 = vadd.f32 %v1074, %v876
      %v1500 = vadd.f32 %v1077, %v879
      %v1501 = vadd.f32 %v1079, %v881
      %1518 = vrot.lane.b32.xlu0 %v884, 64
      %v1519 = vpop.permute.xlu0 %1518
      %1520 = vrot.lane.b32.xlu0 %v886, 64
      %v1521 = vpop.permute.xlu0 %1520
      %1522 = vrot.lane.b32.xlu0 %v889, 64
      %v1523 = vpop.permute.xlu0 %1522
      %1524 = vrot.lane.b32.xlu0 %v891, 64
      %v1525 = vpop.permute.xlu0 %1524
      %1526 = vrot.lane.b32.xlu0 %v894, 64
      %v1527 = vpop.permute.xlu0 %1526
      %1528 = vrot.lane.b32.xlu0 %v896, 64
      %v1529 = vpop.permute.xlu0 %1528
      %1530 = vrot.lane.b32.xlu0 %v899, 64
      %v1531 = vpop.permute.xlu0 %1530
      %1532 = vrot.lane.b32.xlu0 %v901, 64
      %v1533 = vpop.permute.xlu0 %1532
      %1534 = vrot.lane.b32.xlu0 %v904, 64
      %v1535 = vpop.permute.xlu0 %1534
      %1536 = vrot.lane.b32.xlu0 %v906, 64
      %v1537 = vpop.permute.xlu0 %1536
      %1538 = vrot.lane.b32.xlu0 %v909, 64
      %v1539 = vpop.permute.xlu0 %1538
      %1540 = vrot.lane.b32.xlu0 %v911, 64
      %v1541 = vpop.permute.xlu0 %1540
      %1542 = vrot.lane.b32.xlu0 %v914, 64
      %v1543 = vpop.permute.xlu0 %1542
      %1544 = vrot.lane.b32.xlu0 %v916, 64
      %v1545 = vpop.permute.xlu0 %1544
      %1546 = vrot.lane.b32.xlu0 %v919, 64
      %v1547 = vpop.permute.xlu0 %1546
      %1548 = vrot.lane.b32.xlu0 %v921, 64
      %v1549 = vpop.permute.xlu0 %1548
      %v1566 = vadd.f32 %v1486, %v1519
      %v1567 = vadd.f32 %v1487, %v1521
      %v1568 = vadd.f32 %v1488, %v1523
      %v1569 = vadd.f32 %v1489, %v1525
      %v1570 = vadd.f32 %v1490, %v1527
      %v1571 = vadd.f32 %v1491, %v1529
      %v1572 = vadd.f32 %v1492, %v1531
      %v1573 = vadd.f32 %v1493, %v1533
      %v1574 = vadd.f32 %v1494, %v1535
      %v1575 = vadd.f32 %v1495, %v1537
      %v1576 = vadd.f32 %v1496, %v1539
      %v1577 = vadd.f32 %v1497, %v1541
      %v1578 = vadd.f32 %v1498, %v1543
      %v1579 = vadd.f32 %v1499, %v1545
      %v1580 = vadd.f32 %v1500, %v1547
      %v1581 = vadd.f32 %v1501, %v1549
      %v1582 = vmul.f32 %v1566, %v1440
      %v1583 = vmul.f32 %v1567, %v1440
      %v1584 = vmul.f32 %v1568, %v1440
      %v1585 = vmul.f32 %v1569, %v1440
      %v1586 = vmul.f32 %v1570, %v1440
      %v1587 = vmul.f32 %v1571, %v1440
      %v1588 = vmul.f32 %v1572, %v1440
      %v1589 = vmul.f32 %v1573, %v1440
      %v1590 = vmul.f32 %v1574, %v1440
      %v1591 = vmul.f32 %v1575, %v1440
      %v1592 = vmul.f32 %v1576, %v1440
      %v1593 = vmul.f32 %v1577, %v1440
      %v1594 = vmul.f32 %v1578, %v1440
      %v1595 = vmul.f32 %v1579, %v1440
      %v1596 = vmul.f32 %v1580, %v1440
      %v1597 = vmul.f32 %v1581, %v1440
      %v1598 = vadd.f32 %v1582, %v1451
      %v1599 = vadd.f32 %v1583, %v1451
      %v1600 = vadd.f32 %v1584, %v1451
      %v1601 = vadd.f32 %v1585, %v1451
      %v1602 = vadd.f32 %v1586, %v1451
      %v1603 = vadd.f32 %v1587, %v1451
      %v1604 = vadd.f32 %v1588, %v1451
      %v1605 = vadd.f32 %v1589, %v1451
      %v1606 = vadd.f32 %v1590, %v1451
      %v1607 = vadd.f32 %v1591, %v1451
      %v1608 = vadd.f32 %v1592, %v1451
      %v1609 = vadd.f32 %v1593, %v1451
      %v1610 = vadd.f32 %v1594, %v1451
      %v1611 = vadd.f32 %v1595, %v1451
      %v1612 = vadd.f32 %v1596, %v1451
      %v1613 = vadd.f32 %v1597, %v1451
      %v1614 = vmax.f32 %v1598, 0.0
      %v1615 = vmax.f32 %v1599, 0.0
      %v1616 = vmax.f32 %v1600, 0.0
      %v1617 = vmax.f32 %v1601, 0.0
      %v1618 = vmax.f32 %v1602, 0.0
      %v1619 = vmax.f32 %v1603, 0.0
      %v1620 = vmax.f32 %v1604, 0.0
      %v1621 = vmax.f32 %v1605, 0.0
      %v1622 = vmax.f32 %v1606, 0.0
      %v1623 = vmax.f32 %v1607, 0.0
      %v1624 = vmax.f32 %v1608, 0.0
      %v1625 = vmax.f32 %v1609, 0.0
      %v1626 = vmax.f32 %v1610, 0.0
      %v1627 = vmax.f32 %v1611, 0.0
      %v1628 = vmax.f32 %v1612, 0.0
      %v1629 = vmax.f32 %v1613, 0.0
      %v1630 = vpack.c.bf16 %v1614, %v1614
      %v1631 = vpack.c.bf16 %v1615, %v1615
      %v1632 = vpack.c.bf16 %v1616, %v1616
      %v1633 = vpack.c.bf16 %v1617, %v1617
      %v1634 = vpack.c.bf16 %v1618, %v1618
      %v1635 = vpack.c.bf16 %v1619, %v1619
      %v1636 = vpack.c.bf16 %v1620, %v1620
      %v1637 = vpack.c.bf16 %v1621, %v1621
      %v1638 = vpack.c.bf16 %v1622, %v1622
      %v1639 = vpack.c.bf16 %v1623, %v1623
      %v1640 = vpack.c.bf16 %v1624, %v1624
      %v1641 = vpack.c.bf16 %v1625, %v1625
      %v1642 = vpack.c.bf16 %v1626, %v1626
      %v1643 = vpack.c.bf16 %v1627, %v1627
      %v1644 = vpack.c.bf16 %v1628, %v1628
      %v1645 = vpack.c.bf16 %v1629, %v1629
      %s1646 = scalar_lea.vmem [#allocation2], 176
      %1647 = vst.msk [vmem:[%s1646 + $0x8] sm:$0xf] %vm1103, %v1630
      %1648 = vst.msk [vmem:[%s1646 + $0x18] sm:$0xf] %vm1103, %v1631
      %1649 = vst.msk [vmem:[%s1646 + $0x28] sm:$0xf] %vm1103, %v1632
      %1650 = vst.msk [vmem:[%s1646 + $0x38] sm:$0xf] %vm1103, %v1633
      %1651 = vst.msk [vmem:[%s1646 + $0x48] sm:$0xf] %vm1103, %v1634
      %1652 = vst.msk [vmem:[%s1646 + $0x58] sm:$0xf] %vm1103, %v1635
      %1653 = vst.msk [vmem:[%s1646 + $0x68] sm:$0xf] %vm1103, %v1636
      %1654 = vst.msk [vmem:[%s1646 + $0x78] sm:$0xf] %vm1103, %v1637
      %1655 = vst.msk [vmem:[%s1646 + $0xa8] sm:$0xf] %vm1103, %v1638
      %1656 = vst.msk [vmem:[%s1646 + $0xb8] sm:$0xf] %vm1103, %v1639
      %1657 = vst.msk [vmem:[%s1646 + $0xc8] sm:$0xf] %vm1103, %v1640
      %1658 = vst.msk [vmem:[%s1646 + $0xd8] sm:$0xf] %vm1103, %v1641
      %1659 = vst.msk [vmem:[%s1646 + $0xe8] sm:$0xf] %vm1103, %v1642
      %1660 = vst.msk [vmem:[%s1646 + $0xf8] sm:$0xf] %vm1103, %v1643
      %1661 = vst.msk [vmem:[%s1646 + $0x108] sm:$0xf] %vm1103, %v1644
      %1662 = vst.msk [vmem:[%s1646 + $0x118] sm:$0xf] %vm1103, %v1645
      %v1663 = vadd.f32 %v1082, %v884
      %v1664 = vadd.f32 %v1084, %v886
      %v1665 = vadd.f32 %v1087, %v889
      %v1666 = vadd.f32 %v1089, %v891
      %v1667 = vadd.f32 %v1092, %v894
      %v1668 = vadd.f32 %v1094, %v896
      %v1669 = vadd.f32 %v1097, %v899
      %v1670 = vadd.f32 %v1099, %v901
      %v1671 = vmul.f32 %v1663, %v1440
      %v1672 = vmul.f32 %v1664, %v1440
      %v1673 = vmul.f32 %v1665, %v1440
      %v1674 = vmul.f32 %v1666, %v1440
      %v1675 = vmul.f32 %v1667, %v1440
      %v1676 = vmul.f32 %v1668, %v1440
      %v1677 = vmul.f32 %v1669, %v1440
      %v1678 = vmul.f32 %v1670, %v1440
      %v1679 = vadd.f32 %v1671, %v1451
      %v1680 = vadd.f32 %v1672, %v1451
      %v1681 = vadd.f32 %v1673, %v1451
      %v1682 = vadd.f32 %v1674, %v1451
      %v1683 = vadd.f32 %v1675, %v1451
      %v1684 = vadd.f32 %v1676, %v1451
      %v1685 = vadd.f32 %v1677, %v1451
      %v1686 = vadd.f32 %v1678, %v1451
      %v1687 = vmax.f32 %v1679, 0.0
      %v1688 = vmax.f32 %v1680, 0.0
      %v1689 = vmax.f32 %v1681, 0.0
      %v1690 = vmax.f32 %v1682, 0.0
      %v1691 = vmax.f32 %v1683, 0.0
      %v1692 = vmax.f32 %v1684, 0.0
      %v1693 = vmax.f32 %v1685, 0.0
      %v1694 = vmax.f32 %v1686, 0.0
      %v1695 = vpack.c.bf16 %v1687, %v1687
      %v1696 = vpack.c.bf16 %v1688, %v1688
      %v1697 = vpack.c.bf16 %v1689, %v1689
      %v1698 = vpack.c.bf16 %v1690, %v1690
      %v1699 = vpack.c.bf16 %v1691, %v1691
      %v1700 = vpack.c.bf16 %v1692, %v1692
      %v1701 = vpack.c.bf16 %v1693, %v1693
      %v1702 = vpack.c.bf16 %v1694, %v1694
      %s1703 = scalar_lea.vmem [#allocation2], 496
      %1704 = vst.msk [vmem:[%s1703 + $0x8] sm:$0xf] %vm1103, %v1695
      %1705 = vst.msk [vmem:[%s1703 + $0x18] sm:$0xf] %vm1103, %v1696
      %1706 = vst.msk [vmem:[%s1703 + $0x28] sm:$0xf] %vm1103, %v1697
      %1707 = vst.msk [vmem:[%s1703 + $0x38] sm:$0xf] %vm1103, %v1698
      %1708 = vst.msk [vmem:[%s1703 + $0x48] sm:$0xf] %vm1103, %v1699
      %1709 = vst.msk [vmem:[%s1703 + $0x58] sm:$0xf] %vm1103, %v1700
      %1710 = vst.msk [vmem:[%s1703 + $0x68] sm:$0xf] %vm1103, %v1701
      %1711 = vst.msk [vmem:[%s1703 + $0x78] sm:$0xf] %vm1103, %v1702
      %v1712 = vld [vmem:[#allocation2 + $0x4] sm:$0x8]
      %v1713 = vld [vmem:[#allocation2 + $0x8] sm:$0xf]
      %v1714 = vld [vmem:[#allocation2 + $0x14] sm:$0x8]
      %v1715 = vld [vmem:[#allocation2 + $0x18] sm:$0xf]
      %v1716 = vld [vmem:[#allocation2 + $0x24] sm:$0x8]
      %v1717 = vld [vmem:[#allocation2 + $0x28] sm:$0xf]
      %v1718 = vld [vmem:[#allocation2 + $0x34] sm:$0x8]
      %v1719 = vld [vmem:[#allocation2 + $0x38] sm:$0xf]
      %v1720 = vld [vmem:[#allocation2 + $0x44] sm:$0x8]
      %v1721 = vld [vmem:[#allocation2 + $0x48] sm:$0xf]
      %v1722 = vld [vmem:[#allocation2 + $0x54] sm:$0x8]
      %v1723 = vld [vmem:[#allocation2 + $0x58] sm:$0xf]
      %v1724 = vld [vmem:[#allocation2 + $0x64] sm:$0x8]
      %v1725 = vld [vmem:[#allocation2 + $0x68] sm:$0xf]
      %v1726 = vld [vmem:[#allocation2 + $0x74] sm:$0x8]
      %v1727 = vld [vmem:[#allocation2 + $0x78] sm:$0xf]
      %v1728 = vld [vmem:[#allocation2 + $0xa4] sm:$0x8]
      %v1729 = vld [vmem:[#allocation2 + $0xa8] sm:$0xf]
      %v1730 = vld [vmem:[#allocation2 + $0xb4] sm:$0x8]
      %v1731 = vld [vmem:[#allocation2 + $0xb8] sm:$0xf]
      %v1732 = vld [vmem:[#allocation2 + $0xc4] sm:$0x8]
      %v1733 = vld [vmem:[#allocation2 + $0xc8] sm:$0xf]
      %v1734 = vld [vmem:[#allocation2 + $0xd4] sm:$0x8]
      %v1735 = vld [vmem:[#allocation2 + $0xd8] sm:$0xf]
      %v1736 = vld [vmem:[#allocation2 + $0xe4] sm:$0x8]
      %v1737 = vld [vmem:[#allocation2 + $0xe8] sm:$0xf]
      %v1738 = vld [vmem:[#allocation2 + $0xf4] sm:$0x8]
      %v1739 = vld [vmem:[#allocation2 + $0xf8] sm:$0xf]
      %v1740 = vld [vmem:[#allocation2 + $0x104] sm:$0x8]
      %v1741 = vld [vmem:[#allocation2 + $0x108] sm:$0xf]
      %v1742 = vld [vmem:[#allocation2 + $0x114] sm:$0x8]
      %v1743 = vld [vmem:[#allocation2 + $0x118] sm:$0xf]
      %v1744 = vld [vmem:[#allocation2 + $0x144] sm:$0x8]
      %v1745 = vld [vmem:[#allocation2 + $0x148] sm:$0xf]
      %v1746 = vld [vmem:[#allocation2 + $0x154] sm:$0x8]
      %v1747 = vld [vmem:[#allocation2 + $0x158] sm:$0xf]
      %v1748 = vld [vmem:[#allocation2 + $0x164] sm:$0x8]
      %v1749 = vld [vmem:[#allocation2 + $0x168] sm:$0xf]
      %v1750 = vld [vmem:[#allocation2 + $0x174] sm:$0x8]
      %v1751 = vld [vmem:[#allocation2 + $0x178] sm:$0xf]
      %v1752 = vld [vmem:[#allocation2 + $0x184] sm:$0x8]
      %v1753 = vld [vmem:[#allocation2 + $0x188] sm:$0xf]
      %v1754 = vld [vmem:[#allocation2 + $0x194] sm:$0x8]
      %v1755 = vld [vmem:[#allocation2 + $0x198] sm:$0xf]
      %v1756 = vld [vmem:[#allocation2 + $0x1a4] sm:$0x8]
      %v1757 = vld [vmem:[#allocation2 + $0x1a8] sm:$0xf]
      %v1758 = vld [vmem:[#allocation2 + $0x1b4] sm:$0x8]
      %v1759 = vld [vmem:[#allocation2 + $0x1b8] sm:$0xf]
      %v1760 = vld [vmem:[#allocation2 + $0x1e4] sm:$0x8]
      %v1761 = vld [vmem:[#allocation2 + $0x1e8] sm:$0xf]
      %v1762 = vld [vmem:[#allocation2 + $0x1f4] sm:$0x8]
      %v1763 = vld [vmem:[#allocation2 + $0x1f8] sm:$0xf]
      %v1764 = vld [vmem:[#allocation2 + $0x204] sm:$0x8]
      %v1765 = vld [vmem:[#allocation2 + $0x208] sm:$0xf]
      %v1766 = vld [vmem:[#allocation2 + $0x214] sm:$0x8]
      %v1767 = vld [vmem:[#allocation2 + $0x218] sm:$0xf]
      %v1768 = vld [vmem:[#allocation2 + $0x224] sm:$0x8]
      %v1769 = vld [vmem:[#allocation2 + $0x228] sm:$0xf]
      %v1770 = vld [vmem:[#allocation2 + $0x234] sm:$0x8]
      %v1771 = vld [vmem:[#allocation2 + $0x238] sm:$0xf]
      %v1772 = vld [vmem:[#allocation2 + $0x244] sm:$0x8]
      %v1773 = vld [vmem:[#allocation2 + $0x248] sm:$0xf]
      %v1774 = vld [vmem:[#allocation2 + $0x254] sm:$0x8]
      %v1775 = vld [vmem:[#allocation2 + $0x258] sm:$0xf]
      %vm1776 = vsmask.f32 4368
      %vm1777 = vmor %vm1108, %vm1776
      %v1779 = vshrl.u32 %v1712, 16
      %v1781 = vrot.slane %v1779, 7
      %v1782 = vrot.slane %v1781, 4
      %v1784 = vshrl.u32 %v1713, 16
      %v1786 = vrot.slane %v1784, 7
      %v1787 = vshll.u32 %v1713, 16
      %v1789 = vor.u32 %v1786, %v1787
      %v1790 = vsel %vm1777, %v1782, %v1789
      %v1792 = vshrl.u32 %v1714, 16
      %v1794 = vrot.slane %v1792, 7
      %v1795 = vrot.slane %v1794, 4
      %v1797 = vshrl.u32 %v1715, 16
      %v1799 = vrot.slane %v1797, 7
      %v1800 = vshll.u32 %v1715, 16
      %v1802 = vor.u32 %v1799, %v1800
      %v1803 = vsel %vm1777, %v1795, %v1802
      %v1805 = vshrl.u32 %v1716, 16
      %v1807 = vrot.slane %v1805, 7
      %v1808 = vrot.slane %v1807, 4
      %v1810 = vshrl.u32 %v1717, 16
      %v1812 = vrot.slane %v1810, 7
      %v1813 = vshll.u32 %v1717, 16
      %v1815 = vor.u32 %v1812, %v1813
      %v1816 = vsel %vm1777, %v1808, %v1815
      %v1818 = vshrl.u32 %v1718, 16
      %v1820 = vrot.slane %v1818, 7
      %v1821 = vrot.slane %v1820, 4
      %v1823 = vshrl.u32 %v1719, 16
      %v1825 = vrot.slane %v1823, 7
      %v1826 = vshll.u32 %v1719, 16
      %v1828 = vor.u32 %v1825, %v1826
      %v1829 = vsel %vm1777, %v1821, %v1828
      %v1831 = vshrl.u32 %v1720, 16
      %v1833 = vrot.slane %v1831, 7
      %v1834 = vrot.slane %v1833, 4
      %v1836 = vshrl.u32 %v1721, 16
      %v1838 = vrot.slane %v1836, 7
      %v1839 = vshll.u32 %v1721, 16
      %v1841 = vor.u32 %v1838, %v1839
      %v1842 = vsel %vm1777, %v1834, %v1841
      %v1844 = vshrl.u32 %v1722, 16
      %v1846 = vrot.slane %v1844, 7
      %v1847 = vrot.slane %v1846, 4
      %v1849 = vshrl.u32 %v1723, 16
      %v1851 = vrot.slane %v1849, 7
      %v1852 = vshll.u32 %v1723, 16
      %v1854 = vor.u32 %v1851, %v1852
      %v1855 = vsel %vm1777, %v1847, %v1854
      %v1857 = vshrl.u32 %v1724, 16
      %v1859 = vrot.slane %v1857, 7
      %v1860 = vrot.slane %v1859, 4
      %v1862 = vshrl.u32 %v1725, 16
      %v1864 = vrot.slane %v1862, 7
      %v1865 = vshll.u32 %v1725, 16
      %v1867 = vor.u32 %v1864, %v1865
      %v1868 = vsel %vm1777, %v1860, %v1867
      %v1870 = vshrl.u32 %v1726, 16
      %v1872 = vrot.slane %v1870, 7
      %v1873 = vrot.slane %v1872, 4
      %v1875 = vshrl.u32 %v1727, 16
      %v1877 = vrot.slane %v1875, 7
      %v1878 = vshll.u32 %v1727, 16
      %v1880 = vor.u32 %v1877, %v1878
      %v1881 = vsel %vm1777, %v1873, %v1880
      %v1883 = vshrl.u32 %v1728, 16
      %v1885 = vrot.slane %v1883, 7
      %v1886 = vrot.slane %v1885, 4
      %v1888 = vshrl.u32 %v1729, 16
      %v1890 = vrot.slane %v1888, 7
      %v1891 = vshll.u32 %v1729, 16
      %v1893 = vor.u32 %v1890, %v1891
      %v1894 = vsel %vm1777, %v1886, %v1893
      %v1896 = vshrl.u32 %v1730, 16
      %v1898 = vrot.slane %v1896, 7
      %v1899 = vrot.slane %v1898, 4
      %v1901 = vshrl.u32 %v1731, 16
      %v1903 = vrot.slane %v1901, 7
      %v1904 = vshll.u32 %v1731, 16
      %v1906 = vor.u32 %v1903, %v1904
      %v1907 = vsel %vm1777, %v1899, %v1906
      %v1909 = vshrl.u32 %v1732, 16
      %v1911 = vrot.slane %v1909, 7
      %v1912 = vrot.slane %v1911, 4
      %v1914 = vshrl.u32 %v1733, 16
      %v1916 = vrot.slane %v1914, 7
      %v1917 = vshll.u32 %v1733, 16
      %v1919 = vor.u32 %v1916, %v1917
      %v1920 = vsel %vm1777, %v1912, %v1919
      %v1922 = vshrl.u32 %v1734, 16
      %v1924 = vrot.slane %v1922, 7
      %v1925 = vrot.slane %v1924, 4
      %v1927 = vshrl.u32 %v1735, 16
      %v1929 = vrot.slane %v1927, 7
      %v1930 = vshll.u32 %v1735, 16
      %v1932 = vor.u32 %v1929, %v1930
      %v1933 = vsel %vm1777, %v1925, %v1932
      %v1935 = vshrl.u32 %v1736, 16
      %v1937 = vrot.slane %v1935, 7
      %v1938 = vrot.slane %v1937, 4
      %v1940 = vshrl.u32 %v1737, 16
      %v1942 = vrot.slane %v1940, 7
      %v1943 = vshll.u32 %v1737, 16
      %v1945 = vor.u32 %v1942, %v1943
      %v1946 = vsel %vm1777, %v1938, %v1945
      %v1948 = vshrl.u32 %v1738, 16
      %v1950 = vrot.slane %v1948, 7
      %v1951 = vrot.slane %v1950, 4
      %v1953 = vshrl.u32 %v1739, 16
      %v1955 = vrot.slane %v1953, 7
      %v1956 = vshll.u32 %v1739, 16
      %v1958 = vor.u32 %v1955, %v1956
      %v1959 = vsel %vm1777, %v1951, %v1958
      %v1961 = vshrl.u32 %v1740, 16
      %v1963 = vrot.slane %v1961, 7
      %v1964 = vrot.slane %v1963, 4
      %v1966 = vshrl.u32 %v1741, 16
      %v1968 = vrot.slane %v1966, 7
      %v1969 = vshll.u32 %v1741, 16
      %v1971 = vor.u32 %v1968, %v1969
      %v1972 = vsel %vm1777, %v1964, %v1971
      %v1974 = vshrl.u32 %v1742, 16
      %v1976 = vrot.slane %v1974, 7
      %v1977 = vrot.slane %v1976, 4
      %v1979 = vshrl.u32 %v1743, 16
      %v1981 = vrot.slane %v1979, 7
      %v1982 = vshll.u32 %v1743, 16
      %v1984 = vor.u32 %v1981, %v1982
      %v1985 = vsel %vm1777, %v1977, %v1984
      %v1987 = vshrl.u32 %v1744, 16
      %v1989 = vrot.slane %v1987, 7
      %v1990 = vrot.slane %v1989, 4
      %v1992 = vshrl.u32 %v1745, 16
      %v1994 = vrot.slane %v1992, 7
      %v1995 = vshll.u32 %v1745, 16
      %v1997 = vor.u32 %v1994, %v1995
      %v1998 = vsel %vm1777, %v1990, %v1997
      %v2000 = vshrl.u32 %v1746, 16
      %v2002 = vrot.slane %v2000, 7
      %v2003 = vrot.slane %v2002, 4
      %v2005 = vshrl.u32 %v1747, 16
      %v2007 = vrot.slane %v2005, 7
      %v2008 = vshll.u32 %v1747, 16
      %v2010 = vor.u32 %v2007, %v2008
      %v2011 = vsel %vm1777, %v2003, %v2010
      %v2013 = vshrl.u32 %v1748, 16
      %v2015 = vrot.slane %v2013, 7
      %v2016 = vrot.slane %v2015, 4
      %v2018 = vshrl.u32 %v1749, 16
      %v2020 = vrot.slane %v2018, 7
      %v2021 = vshll.u32 %v1749, 16
      %v2023 = vor.u32 %v2020, %v2021
      %v2024 = vsel %vm1777, %v2016, %v2023
      %v2026 = vshrl.u32 %v1750, 16
      %v2028 = vrot.slane %v2026, 7
      %v2029 = vrot.slane %v2028, 4
      %v2031 = vshrl.u32 %v1751, 16
      %v2033 = vrot.slane %v2031, 7
      %v2034 = vshll.u32 %v1751, 16
      %v2036 = vor.u32 %v2033, %v2034
      %v2037 = vsel %vm1777, %v2029, %v2036
      %v2039 = vshrl.u32 %v1752, 16
      %v2041 = vrot.slane %v2039, 7
      %v2042 = vrot.slane %v2041, 4
      %v2044 = vshrl.u32 %v1753, 16
      %v2046 = vrot.slane %v2044, 7
      %v2047 = vshll.u32 %v1753, 16
      %v2049 = vor.u32 %v2046, %v2047
      %v2050 = vsel %vm1777, %v2042, %v2049
      %v2052 = vshrl.u32 %v1754, 16
      %v2054 = vrot.slane %v2052, 7
      %v2055 = vrot.slane %v2054, 4
      %v2057 = vshrl.u32 %v1755, 16
      %v2059 = vrot.slane %v2057, 7
      %v2060 = vshll.u32 %v1755, 16
      %v2062 = vor.u32 %v2059, %v2060
      %v2063 = vsel %vm1777, %v2055, %v2062
      %v2065 = vshrl.u32 %v1756, 16
      %v2067 = vrot.slane %v2065, 7
      %v2068 = vrot.slane %v2067, 4
      %v2070 = vshrl.u32 %v1757, 16
      %v2072 = vrot.slane %v2070, 7
      %v2073 = vshll.u32 %v1757, 16
      %v2075 = vor.u32 %v2072, %v2073
      %v2076 = vsel %vm1777, %v2068, %v2075
      %v2078 = vshrl.u32 %v1758, 16
      %v2080 = vrot.slane %v2078, 7
      %v2081 = vrot.slane %v2080, 4
      %v2083 = vshrl.u32 %v1759, 16
      %v2085 = vrot.slane %v2083, 7
      %v2086 = vshll.u32 %v1759, 16
      %v2088 = vor.u32 %v2085, %v2086
      %v2089 = vsel %vm1777, %v2081, %v2088
      %v2091 = vshrl.u32 %v1760, 16
      %v2093 = vrot.slane %v2091, 7
      %v2094 = vrot.slane %v2093, 4
      %v2096 = vshrl.u32 %v1761, 16
      %v2098 = vrot.slane %v2096, 7
      %v2099 = vshll.u32 %v1761, 16
      %v2101 = vor.u32 %v2098, %v2099
      %v2102 = vsel %vm1777, %v2094, %v2101
      %v2104 = vshrl.u32 %v1762, 16
      %v2106 = vrot.slane %v2104, 7
      %v2107 = vrot.slane %v2106, 4
      %v2109 = vshrl.u32 %v1763, 16
      %v2111 = vrot.slane %v2109, 7
      %v2112 = vshll.u32 %v1763, 16
      %v2114 = vor.u32 %v2111, %v2112
      %v2115 = vsel %vm1777, %v2107, %v2114
      %v2117 = vshrl.u32 %v1764, 16
      %v2119 = vrot.slane %v2117, 7
      %v2120 = vrot.slane %v2119, 4
      %v2122 = vshrl.u32 %v1765, 16
      %v2124 = vrot.slane %v2122, 7
      %v2125 = vshll.u32 %v1765, 16
      %v2127 = vor.u32 %v2124, %v2125
      %v2128 = vsel %vm1777, %v2120, %v2127
      %v2130 = vshrl.u32 %v1766, 16
      %v2132 = vrot.slane %v2130, 7
      %v2133 = vrot.slane %v2132, 4
      %v2135 = vshrl.u32 %v1767, 16
      %v2137 = vrot.slane %v2135, 7
      %v2138 = vshll.u32 %v1767, 16
      %v2140 = vor.u32 %v2137, %v2138
      %v2141 = vsel %vm1777, %v2133, %v2140
      %v2143 = vshrl.u32 %v1768, 16
      %v2145 = vrot.slane %v2143, 7
      %v2146 = vrot.slane %v2145, 4
      %v2148 = vshrl.u32 %v1769, 16
      %v2150 = vrot.slane %v2148, 7
      %v2151 = vshll.u32 %v1769, 16
      %v2153 = vor.u32 %v2150, %v2151
      %v2154 = vsel %vm1777, %v2146, %v2153
      %v2156 = vshrl.u32 %v1770, 16
      %v2158 = vrot.slane %v2156, 7
      %v2159 = vrot.slane %v2158, 4
      %v2161 = vshrl.u32 %v1771, 16
      %v2163 = vrot.slane %v2161, 7
      %v2164 = vshll.u32 %v1771, 16
      %v2166 = vor.u32 %v2163, %v2164
      %v2167 = vsel %vm1777, %v2159, %v2166
      %v2169 = vshrl.u32 %v1772, 16
      %v2171 = vrot.slane %v2169, 7
      %v2172 = vrot.slane %v2171, 4
      %v2174 = vshrl.u32 %v1773, 16
      %v2176 = vrot.slane %v2174, 7
      %v2177 = vshll.u32 %v1773, 16
      %v2179 = vor.u32 %v2176, %v2177
      %v2180 = vsel %vm1777, %v2172, %v2179
      %v2182 = vshrl.u32 %v1774, 16
      %v2184 = vrot.slane %v2182, 7
      %v2185 = vrot.slane %v2184, 4
      %v2187 = vshrl.u32 %v1775, 16
      %v2189 = vrot.slane %v2187, 7
      %v2190 = vshll.u32 %v1775, 16
      %v2192 = vor.u32 %v2189, %v2190
      %v2193 = vsel %vm1777, %v2185, %v2192
      %v2194 = vld [vmem:[%s2] sm:$0xf]
      %v2195 = vld [vmem:[%s2 + $0x4] sm:$0xf]
      %v2196 = vld [vmem:[%s2 + $0x8] sm:$0xf]
      %v2197 = vld [vmem:[%s2 + $0xc] sm:$0xf]
      %v2198 = vld [vmem:[%s2 + $0x10] sm:$0xf]
      %v2199 = vld [vmem:[%s2 + $0x14] sm:$0xf]
      %v2200 = vld [vmem:[%s2 + $0x18] sm:$0xf]
      %v2201 = vld [vmem:[%s2 + $0x1c] sm:$0xf]
      %s2202 = scalar_lea.vmem %s2, 32
      %v2203 = vld [vmem:[%s2202] sm:$0xf]
      %v2204 = vld [vmem:[%s2202 + $0x4] sm:$0xf]
      %v2205 = vld [vmem:[%s2202 + $0x8] sm:$0xf]
      %v2206 = vld [vmem:[%s2202 + $0xc] sm:$0xf]
      %v2207 = vld [vmem:[%s2202 + $0x10] sm:$0xf]
      %v2208 = vld [vmem:[%s2202 + $0x14] sm:$0xf]
      %v2209 = vld [vmem:[%s2202 + $0x18] sm:$0xf]
      %v2210 = vld [vmem:[%s2202 + $0x1c] sm:$0xf]
      %v2243 = vunpack.c.l.b16 %v1713
      %v2244 = vunpack.c.l.b16 %v1715
      %v2245 = vunpack.c.l.b16 %v1717
      %v2246 = vunpack.c.l.b16 %v1719
      %v2247 = vunpack.c.l.b16 %v1721
      %v2248 = vunpack.c.l.b16 %v1723
      %v2249 = vunpack.c.l.b16 %v1725
      %v2250 = vunpack.c.l.b16 %v1727
      %v2251 = vunpack.c.l.b16 %v1729
      %v2252 = vunpack.c.l.b16 %v1731
      %v2253 = vunpack.c.l.b16 %v1733
      %v2254 = vunpack.c.l.b16 %v1735
      %v2255 = vunpack.c.l.b16 %v1737
      %v2256 = vunpack.c.l.b16 %v1739
      %v2257 = vunpack.c.l.b16 %v1741
      %v2258 = vunpack.c.l.b16 %v1743
      %v2259 = vunpack.c.l.b16 %v1745
      %v2260 = vunpack.c.l.b16 %v1747
      %v2261 = vunpack.c.l.b16 %v1749
      %v2262 = vunpack.c.l.b16 %v1751
      %v2263 = vunpack.c.l.b16 %v1753
      %v2264 = vunpack.c.l.b16 %v1755
      %v2265 = vunpack.c.l.b16 %v1757
      %v2266 = vunpack.c.l.b16 %v1759
      %v2267 = vunpack.c.l.b16 %v1761
      %v2268 = vunpack.c.l.b16 %v1763
      %v2269 = vunpack.c.l.b16 %v1765
      %v2270 = vunpack.c.l.b16 %v1767
      %v2271 = vunpack.c.l.b16 %v1769
      %v2272 = vunpack.c.l.b16 %v1771
      %v2273 = vunpack.c.l.b16 %v1773
      %v2274 = vunpack.c.l.b16 %v1775
      %v2275 = vpack.c.b16 %v2244, %v2243
      %v2276 = vpack.c.b16 %v2246, %v2245
      %v2277 = vpack.c.b16 %v2248, %v2247
      %v2278 = vpack.c.b16 %v2250, %v2249
      %v2279 = vpack.c.b16 %v2252, %v2251
      %v2280 = vpack.c.b16 %v2254, %v2253
      %v2281 = vpack.c.b16 %v2256, %v2255
      %v2282 = vpack.c.b16 %v2258, %v2257
      %v2283 = vpack.c.b16 %v2260, %v2259
      %v2284 = vpack.c.b16 %v2262, %v2261
      %v2285 = vpack.c.b16 %v2264, %v2263
      %v2286 = vpack.c.b16 %v2266, %v2265
      %v2287 = vpack.c.b16 %v2268, %v2267
      %v2288 = vpack.c.b16 %v2270, %v2269
      %v2289 = vpack.c.b16 %v2272, %v2271
      %v2290 = vpack.c.b16 %v2274, %v2273
      %v2299 = vunpack.c.l.b16 %v2203
      %v2300 = vunpack.c.l.b16 %v2204
      %v2301 = vunpack.c.l.b16 %v2205
      %v2302 = vunpack.c.l.b16 %v2206
      %v2303 = vunpack.c.l.b16 %v2207
      %v2304 = vunpack.c.l.b16 %v2208
      %v2305 = vunpack.c.l.b16 %v2209
      %v2306 = vunpack.c.l.b16 %v2210
      %v2307 = vpack.c.b16 %v2300, %v2299
      %v2308 = vpack.c.b16 %v2302, %v2301
      %v2309 = vpack.c.b16 %v2304, %v2303
      %v2310 = vpack.c.b16 %v2306, %v2305
      %vm2315 = vcmask 523264
      %v2317 = vsel %vm2315, %v2275, 0
      %v2320 = vsel %vm2315, %v2276, 0
      %v2323 = vsel %vm2315, %v2277, 0
      %v2326 = vsel %vm2315, %v2278, 0
      %v2329 = vsel %vm2315, %v2279, 0
      %v2332 = vsel %vm2315, %v2280, 0
      %v2335 = vsel %vm2315, %v2281, 0
      %v2338 = vsel %vm2315, %v2282, 0
      %v2341 = vsel %vm2315, %v2283, 0
      %v2344 = vsel %vm2315, %v2284, 0
      %v2347 = vsel %vm2315, %v2285, 0
      %v2350 = vsel %vm2315, %v2286, 0
      %v2353 = vsel %vm2315, %v2287, 0
      %v2356 = vsel %vm2315, %v2288, 0
      %v2359 = vsel %vm2315, %v2289, 0
      %v2362 = vsel %vm2315, %v2290, 0
      %2364 = vmatpush.bf16.msra.mxu0 0
      %2365 = vmatpush.bf16.msra.mxu0 0
      %2366 = vmatpush.bf16.msra.mxu0 0
      %2367 = vmatpush.bf16.msra.mxu0 0
      %2368 = vmatpush.bf16.msra.mxu0 %v2310
      %2369 = vmatpush.bf16.msra.mxu0 %v2309
      %2370 = vmatpush.bf16.msra.mxu0 %v2308
      %2371 = vmatpush.bf16.msra.mxu0 %v2307
      %2372 = vmatmul.bf16.gmra.mxu0 %v2317
      %v2373 = vpop.f32.mrf.mxu0
      %v2374 = vadd.f32 0.0, %v2373
      %v2375 = vpop.f32.mrf.mxu0
      %v2376 = vadd.f32 0.0, %v2375
      %2377 = vmatmul.bf16.gmra.mxu0 %v2320
      %v2378 = vpop.f32.mrf.mxu0
      %v2379 = vadd.f32 0.0, %v2378
      %v2380 = vpop.f32.mrf.mxu0
      %v2381 = vadd.f32 0.0, %v2380
      %2382 = vmatmul.bf16.gmra.mxu0 %v2323
      %v2383 = vpop.f32.mrf.mxu0
      %v2384 = vadd.f32 0.0, %v2383
      %v2385 = vpop.f32.mrf.mxu0
      %v2386 = vadd.f32 0.0, %v2385
      %2387 = vmatmul.bf16.gmra.mxu0 %v2326
      %v2388 = vpop.f32.mrf.mxu0
      %v2389 = vadd.f32 0.0, %v2388
      %v2390 = vpop.f32.mrf.mxu0
      %v2391 = vadd.f32 0.0, %v2390
      %2392 = vmatmul.bf16.gmra.mxu0 %v2329
      %v2393 = vpop.f32.mrf.mxu0
      %v2394 = vadd.f32 0.0, %v2393
      %v2395 = vpop.f32.mrf.mxu0
      %v2396 = vadd.f32 0.0, %v2395
      %2397 = vmatmul.bf16.gmra.mxu0 %v2332
      %v2398 = vpop.f32.mrf.mxu0
      %v2399 = vadd.f32 0.0, %v2398
      %v2400 = vpop.f32.mrf.mxu0
      %v2401 = vadd.f32 0.0, %v2400
      %2402 = vmatmul.bf16.gmra.mxu0 %v2335
      %v2403 = vpop.f32.mrf.mxu0
      %v2404 = vadd.f32 0.0, %v2403
      %v2405 = vpop.f32.mrf.mxu0
      %v2406 = vadd.f32 0.0, %v2405
      %2407 = vmatmul.bf16.gmra.mxu0 %v2338
      %v2408 = vpop.f32.mrf.mxu0
      %v2409 = vadd.f32 0.0, %v2408
      %v2410 = vpop.f32.mrf.mxu0
      %v2411 = vadd.f32 0.0, %v2410
      %2412 = vmatmul.bf16.gmra.mxu0 %v2341
      %v2413 = vpop.f32.mrf.mxu0
      %v2414 = vadd.f32 0.0, %v2413
      %v2415 = vpop.f32.mrf.mxu0
      %v2416 = vadd.f32 0.0, %v2415
      %2417 = vmatmul.bf16.gmra.mxu0 %v2344
      %v2418 = vpop.f32.mrf.mxu0
      %v2419 = vadd.f32 0.0, %v2418
      %v2420 = vpop.f32.mrf.mxu0
      %v2421 = vadd.f32 0.0, %v2420
      %2422 = vmatmul.bf16.gmra.mxu0 %v2347
      %v2423 = vpop.f32.mrf.mxu0
      %v2424 = vadd.f32 0.0, %v2423
      %v2425 = vpop.f32.mrf.mxu0
      %v2426 = vadd.f32 0.0, %v2425
      %2427 = vmatmul.bf16.gmra.mxu0 %v2350
      %v2428 = vpop.f32.mrf.mxu0
      %v2429 = vadd.f32 0.0, %v2428
      %v2430 = vpop.f32.mrf.mxu0
      %v2431 = vadd.f32 0.0, %v2430
      %2432 = vmatmul.bf16.gmra.mxu0 %v2353
      %v2433 = vpop.f32.mrf.mxu0
      %v2434 = vadd.f32 0.0, %v2433
      %v2435 = vpop.f32.mrf.mxu0
      %v2436 = vadd.f32 0.0, %v2435
      %2437 = vmatmul.bf16.gmra.mxu0 %v2356
      %v2438 = vpop.f32.mrf.mxu0
      %v2439 = vadd.f32 0.0, %v2438
      %v2440 = vpop.f32.mrf.mxu0
      %v2441 = vadd.f32 0.0, %v2440
      %2442 = vmatmul.bf16.gmra.mxu0 %v2359
      %v2443 = vpop.f32.mrf.mxu0
      %v2444 = vadd.f32 0.0, %v2443
      %v2445 = vpop.f32.mrf.mxu0
      %v2446 = vadd.f32 0.0, %v2445
      %2447 = vmatmul.bf16.gmra.mxu0 %v2362
      %v2448 = vpop.f32.mrf.mxu0
      %v2449 = vadd.f32 0.0, %v2448
      %v2450 = vpop.f32.mrf.mxu0
      %v2451 = vadd.f32 0.0, %v2450
      %2452 = vdwg.mxu0
      %v2453 = vunpack.c.l.b16 %v1790
      %v2454 = vunpack.c.l.b16 %v1803
      %v2455 = vunpack.c.l.b16 %v1816
      %v2456 = vunpack.c.l.b16 %v1829
      %v2457 = vunpack.c.l.b16 %v1842
      %v2458 = vunpack.c.l.b16 %v1855
      %v2459 = vunpack.c.l.b16 %v1868
      %v2460 = vunpack.c.l.b16 %v1881
      %v2461 = vunpack.c.l.b16 %v1894
      %v2462 = vunpack.c.l.b16 %v1907
      %v2463 = vunpack.c.l.b16 %v1920
      %v2464 = vunpack.c.l.b16 %v1933
      %v2465 = vunpack.c.l.b16 %v1946
      %v2466 = vunpack.c.l.b16 %v1959
      %v2467 = vunpack.c.l.b16 %v1972
      %v2468 = vunpack.c.l.b16 %v1985
      %v2469 = vunpack.c.l.b16 %v1998
      %v2470 = vunpack.c.l.b16 %v2011
      %v2471 = vunpack.c.l.b16 %v2024
      %v2472 = vunpack.c.l.b16 %v2037
      %v2473 = vunpack.c.l.b16 %v2050
      %v2474 = vunpack.c.l.b16 %v2063
      %v2475 = vunpack.c.l.b16 %v2076
      %v2476 = vunpack.c.l.b16 %v2089
      %v2477 = vunpack.c.l.b16 %v2102
      %v2478 = vunpack.c.l.b16 %v2115
      %v2479 = vunpack.c.l.b16 %v2128
      %v2480 = vunpack.c.l.b16 %v2141
      %v2481 = vunpack.c.l.b16 %v2154
      %v2482 = vunpack.c.l.b16 %v2167
      %v2483 = vunpack.c.l.b16 %v2180
      %v2484 = vunpack.c.l.b16 %v2193
      %v2485 = vpack.c.b16 %v2454, %v2453
      %v2486 = vpack.c.b16 %v2456, %v2455
      %v2487 = vpack.c.b16 %v2458, %v2457
      %v2488 = vpack.c.b16 %v2460, %v2459
      %v2489 = vpack.c.b16 %v2462, %v2461
      %v2490 = vpack.c.b16 %v2464, %v2463
      %v2491 = vpack.c.b16 %v2466, %v2465
      %v2492 = vpack.c.b16 %v2468, %v2467
      %v2493 = vpack.c.b16 %v2470, %v2469
      %v2494 = vpack.c.b16 %v2472, %v2471
      %v2495 = vpack.c.b16 %v2474, %v2473
      %v2496 = vpack.c.b16 %v2476, %v2475
      %v2497 = vpack.c.b16 %v2478, %v2477
      %v2498 = vpack.c.b16 %v2480, %v2479
      %v2499 = vpack.c.b16 %v2482, %v2481
      %v2500 = vpack.c.b16 %v2484, %v2483
      %v2509 = vunpack.c.l.b16 %v2194
      %v2510 = vunpack.c.l.b16 %v2195
      %v2511 = vunpack.c.l.b16 %v2196
      %v2512 = vunpack.c.l.b16 %v2197
      %v2513 = vunpack.c.l.b16 %v2198
      %v2514 = vunpack.c.l.b16 %v2199
      %v2515 = vunpack.c.l.b16 %v2200
      %v2516 = vunpack.c.l.b16 %v2201
      %v2517 = vpack.c.b16 %v2510, %v2509
      %v2518 = vpack.c.b16 %v2512, %v2511
      %v2519 = vpack.c.b16 %v2514, %v2513
      %v2520 = vpack.c.b16 %v2516, %v2515
      %v2526 = vsel %vm2315, %v2485, 0
      %v2529 = vsel %vm2315, %v2486, 0
      %v2532 = vsel %vm2315, %v2487, 0
      %v2535 = vsel %vm2315, %v2488, 0
      %v2538 = vsel %vm2315, %v2489, 0
      %v2541 = vsel %vm2315, %v2490, 0
      %v2544 = vsel %vm2315, %v2491, 0
      %v2547 = vsel %vm2315, %v2492, 0
      %v2550 = vsel %vm2315, %v2493, 0
      %v2553 = vsel %vm2315, %v2494, 0
      %v2556 = vsel %vm2315, %v2495, 0
      %v2559 = vsel %vm2315, %v2496, 0
      %v2562 = vsel %vm2315, %v2497, 0
      %v2565 = vsel %vm2315, %v2498, 0
      %v2568 = vsel %vm2315, %v2499, 0
      %v2571 = vsel %vm2315, %v2500, 0
      %2573 = vmatpush.bf16.msra.mxu0 0
      %2574 = vmatpush.bf16.msra.mxu0 0
      %2575 = vmatpush.bf16.msra.mxu0 0
      %2576 = vmatpush.bf16.msra.mxu0 0
      %2577 = vmatpush.bf16.msra.mxu0 %v2520
      %2578 = vmatpush.bf16.msra.mxu0 %v2519
      %2579 = vmatpush.bf16.msra.mxu0 %v2518
      %2580 = vmatpush.bf16.msra.mxu0 %v2517
      %2581 = vmatmul.bf16.gmra.mxu0 %v2526
      %v2582 = vpop.f32.mrf.mxu0
      %v2583 = vadd.f32 %v2374, %v2582
      %v2584 = vpop.f32.mrf.mxu0
      %v2585 = vadd.f32 %v2376, %v2584
      %2586 = vmatmul.bf16.gmra.mxu0 %v2529
      %v2587 = vpop.f32.mrf.mxu0
      %v2588 = vadd.f32 %v2379, %v2587
      %v2589 = vpop.f32.mrf.mxu0
      %v2590 = vadd.f32 %v2381, %v2589
      %2591 = vmatmul.bf16.gmra.mxu0 %v2532
      %v2592 = vpop.f32.mrf.mxu0
      %v2593 = vadd.f32 %v2384, %v2592
      %v2594 = vpop.f32.mrf.mxu0
      %v2595 = vadd.f32 %v2386, %v2594
      %2596 = vmatmul.bf16.gmra.mxu0 %v2535
      %v2597 = vpop.f32.mrf.mxu0
      %v2598 = vadd.f32 %v2389, %v2597
      %v2599 = vpop.f32.mrf.mxu0
      %v2600 = vadd.f32 %v2391, %v2599
      %2601 = vmatmul.bf16.gmra.mxu0 %v2538
      %v2602 = vpop.f32.mrf.mxu0
      %v2603 = vadd.f32 %v2394, %v2602
      %v2604 = vpop.f32.mrf.mxu0
      %v2605 = vadd.f32 %v2396, %v2604
      %2606 = vmatmul.bf16.gmra.mxu0 %v2541
      %v2607 = vpop.f32.mrf.mxu0
      %v2608 = vadd.f32 %v2399, %v2607
      %v2609 = vpop.f32.mrf.mxu0
      %v2610 = vadd.f32 %v2401, %v2609
      %2611 = vmatmul.bf16.gmra.mxu0 %v2544
      %v2612 = vpop.f32.mrf.mxu0
      %v2613 = vadd.f32 %v2404, %v2612
      %v2614 = vpop.f32.mrf.mxu0
      %v2615 = vadd.f32 %v2406, %v2614
      %2616 = vmatmul.bf16.gmra.mxu0 %v2547
      %v2617 = vpop.f32.mrf.mxu0
      %v2618 = vadd.f32 %v2409, %v2617
      %v2619 = vpop.f32.mrf.mxu0
      %v2620 = vadd.f32 %v2411, %v2619
      %2621 = vmatmul.bf16.gmra.mxu0 %v2550
      %v2622 = vpop.f32.mrf.mxu0
      %v2623 = vadd.f32 %v2414, %v2622
      %v2624 = vpop.f32.mrf.mxu0
      %v2625 = vadd.f32 %v2416, %v2624
      %2626 = vmatmul.bf16.gmra.mxu0 %v2553
      %v2627 = vpop.f32.mrf.mxu0
      %v2628 = vadd.f32 %v2419, %v2627
      %v2629 = vpop.f32.mrf.mxu0
      %v2630 = vadd.f32 %v2421, %v2629
      %2631 = vmatmul.bf16.gmra.mxu0 %v2556
      %v2632 = vpop.f32.mrf.mxu0
      %v2633 = vadd.f32 %v2424, %v2632
      %v2634 = vpop.f32.mrf.mxu0
      %v2635 = vadd.f32 %v2426, %v2634
      %2636 = vmatmul.bf16.gmra.mxu0 %v2559
      %v2637 = vpop.f32.mrf.mxu0
      %v2638 = vadd.f32 %v2429, %v2637
      %v2639 = vpop.f32.mrf.mxu0
      %v2640 = vadd.f32 %v2431, %v2639
      %2641 = vmatmul.bf16.gmra.mxu0 %v2562
      %v2642 = vpop.f32.mrf.mxu0
      %v2643 = vadd.f32 %v2434, %v2642
      %v2644 = vpop.f32.mrf.mxu0
      %v2645 = vadd.f32 %v2436, %v2644
      %2646 = vmatmul.bf16.gmra.mxu0 %v2565
      %v2647 = vpop.f32.mrf.mxu0
      %v2648 = vadd.f32 %v2439, %v2647
      %v2649 = vpop.f32.mrf.mxu0
      %v2650 = vadd.f32 %v2441, %v2649
      %2651 = vmatmul.bf16.gmra.mxu0 %v2568
      %v2652 = vpop.f32.mrf.mxu0
      %v2653 = vadd.f32 %v2444, %v2652
      %v2654 = vpop.f32.mrf.mxu0
      %v2655 = vadd.f32 %v2446, %v2654
      %2656 = vmatmul.bf16.gmra.mxu0 %v2571
      %v2657 = vpop.f32.mrf.mxu0
      %v2658 = vadd.f32 %v2449, %v2657
      %v2659 = vpop.f32.mrf.mxu0
      %v2660 = vadd.f32 %v2451, %v2659
      %2661 = vdwg.mxu0
      %v2662 = vld [vmem:[#allocation2 + $0x8] sm:$0xf]
      %v2663 = vld [vmem:[#allocation2 + $0xc] sm:$0x1]
      %v2664 = vld [vmem:[#allocation2 + $0x18] sm:$0xf]
      %v2665 = vld [vmem:[#allocation2 + $0x1c] sm:$0x1]
      %v2666 = vld [vmem:[#allocation2 + $0x28] sm:$0xf]
      %v2667 = vld [vmem:[#allocation2 + $0x2c] sm:$0x1]
      %v2668 = vld [vmem:[#allocation2 + $0x38] sm:$0xf]
      %v2669 = vld [vmem:[#allocation2 + $0x3c] sm:$0x1]
      %v2670 = vld [vmem:[#allocation2 + $0x48] sm:$0xf]
      %v2671 = vld [vmem:[#allocation2 + $0x4c] sm:$0x1]
      %v2672 = vld [vmem:[#allocation2 + $0x58] sm:$0xf]
      %v2673 = vld [vmem:[#allocation2 + $0x5c] sm:$0x1]
      %v2674 = vld [vmem:[#allocation2 + $0x68] sm:$0xf]
      %v2675 = vld [vmem:[#allocation2 + $0x6c] sm:$0x1]
      %v2676 = vld [vmem:[#allocation2 + $0x78] sm:$0xf]
      %v2677 = vld [vmem:[#allocation2 + $0x7c] sm:$0x1]
      %v2678 = vld [vmem:[#allocation2 + $0xa8] sm:$0xf]
      %v2679 = vld [vmem:[#allocation2 + $0xac] sm:$0x1]
      %v2680 = vld [vmem:[#allocation2 + $0xb8] sm:$0xf]
      %v2681 = vld [vmem:[#allocation2 + $0xbc] sm:$0x1]
      %v2682 = vld [vmem:[#allocation2 + $0xc8] sm:$0xf]
      %v2683 = vld [vmem:[#allocation2 + $0xcc] sm:$0x1]
      %v2684 = vld [vmem:[#allocation2 + $0xd8] sm:$0xf]
      %v2685 = vld [vmem:[#allocation2 + $0xdc] sm:$0x1]
      %v2686 = vld [vmem:[#allocation2 + $0xe8] sm:$0xf]
      %v2687 = vld [vmem:[#allocation2 + $0xec] sm:$0x1]
      %v2688 = vld [vmem:[#allocation2 + $0xf8] sm:$0xf]
      %v2689 = vld [vmem:[#allocation2 + $0xfc] sm:$0x1]
      %v2690 = vld [vmem:[#allocation2 + $0x108] sm:$0xf]
      %v2691 = vld [vmem:[#allocation2 + $0x10c] sm:$0x1]
      %v2692 = vld [vmem:[#allocation2 + $0x118] sm:$0xf]
      %v2693 = vld [vmem:[#allocation2 + $0x11c] sm:$0x1]
      %v2694 = vld [vmem:[#allocation2 + $0x148] sm:$0xf]
      %v2695 = vld [vmem:[#allocation2 + $0x14c] sm:$0x1]
      %v2696 = vld [vmem:[#allocation2 + $0x158] sm:$0xf]
      %v2697 = vld [vmem:[#allocation2 + $0x15c] sm:$0x1]
      %v2698 = vld [vmem:[#allocation2 + $0x168] sm:$0xf]
      %v2699 = vld [vmem:[#allocation2 + $0x16c] sm:$0x1]
      %v2700 = vld [vmem:[#allocation2 + $0x178] sm:$0xf]
      %v2701 = vld [vmem:[#allocation2 + $0x17c] sm:$0x1]
      %v2702 = vld [vmem:[#allocation2 + $0x188] sm:$0xf]
      %v2703 = vld [vmem:[#allocation2 + $0x18c] sm:$0x1]
      %v2704 = vld [vmem:[#allocation2 + $0x198] sm:$0xf]
      %v2705 = vld [vmem:[#allocation2 + $0x19c] sm:$0x1]
      %v2706 = vld [vmem:[#allocation2 + $0x1a8] sm:$0xf]
      %v2707 = vld [vmem:[#allocation2 + $0x1ac] sm:$0x1]
      %v2708 = vld [vmem:[#allocation2 + $0x1b8] sm:$0xf]
      %v2709 = vld [vmem:[#allocation2 + $0x1bc] sm:$0x1]
      %v2710 = vld [vmem:[#allocation2 + $0x1e8] sm:$0xf]
      %v2711 = vld [vmem:[#allocation2 + $0x1ec] sm:$0x1]
      %v2712 = vld [vmem:[#allocation2 + $0x1f8] sm:$0xf]
      %v2713 = vld [vmem:[#allocation2 + $0x1fc] sm:$0x1]
      %v2714 = vld [vmem:[#allocation2 + $0x208] sm:$0xf]
      %v2715 = vld [vmem:[#allocation2 + $0x20c] sm:$0x1]
      %v2716 = vld [vmem:[#allocation2 + $0x218] sm:$0xf]
      %v2717 = vld [vmem:[#allocation2 + $0x21c] sm:$0x1]
      %v2718 = vld [vmem:[#allocation2 + $0x228] sm:$0xf]
      %v2719 = vld [vmem:[#allocation2 + $0x22c] sm:$0x1]
      %v2720 = vld [vmem:[#allocation2 + $0x238] sm:$0xf]
      %v2721 = vld [vmem:[#allocation2 + $0x23c] sm:$0x1]
      %v2722 = vld [vmem:[#allocation2 + $0x248] sm:$0xf]
      %v2723 = vld [vmem:[#allocation2 + $0x24c] sm:$0x1]
      %v2724 = vld [vmem:[#allocation2 + $0x258] sm:$0xf]
      %v2725 = vld [vmem:[#allocation2 + $0x25c] sm:$0x1]
      %vm2726 = vsmask.f32 3328
      %vm2727 = vsmask.f32 7440
      %vm2728 = vmor %vm2726, %vm2727
      %v2730 = vshrl.u32 %v2662, 16
      %v2732 = vrot.slane %v2730, 4
      %v2733 = vshll.u32 %v2662, 16
      %v2735 = vrot.slane %v2733, 5
      %v2736 = vor.u32 %v2732, %v2735
      %v2737 = vrot.slane %v2736, 4
      %v2739 = vshll.u32 %v2663, 16
      %v2741 = vrot.slane %v2739, 5
      %v2742 = vsel %vm2728, %v2737, %v2741
      %v2744 = vshrl.u32 %v2664, 16
      %v2746 = vrot.slane %v2744, 4
      %v2747 = vshll.u32 %v2664, 16
      %v2749 = vrot.slane %v2747, 5
      %v2750 = vor.u32 %v2746, %v2749
      %v2751 = vrot.slane %v2750, 4
      %v2753 = vshll.u32 %v2665, 16
      %v2755 = vrot.slane %v2753, 5
      %v2756 = vsel %vm2728, %v2751, %v2755
      %v2758 = vshrl.u32 %v2666, 16
      %v2760 = vrot.slane %v2758, 4
      %v2761 = vshll.u32 %v2666, 16
      %v2763 = vrot.slane %v2761, 5
      %v2764 = vor.u32 %v2760, %v2763
      %v2765 = vrot.slane %v2764, 4
      %v2767 = vshll.u32 %v2667, 16
      %v2769 = vrot.slane %v2767, 5
      %v2770 = vsel %vm2728, %v2765, %v2769
      %v2772 = vshrl.u32 %v2668, 16
      %v2774 = vrot.slane %v2772, 4
      %v2775 = vshll.u32 %v2668, 16
      %v2777 = vrot.slane %v2775, 5
      %v2778 = vor.u32 %v2774, %v2777
      %v2779 = vrot.slane %v2778, 4
      %v2781 = vshll.u32 %v2669, 16
      %v2783 = vrot.slane %v2781, 5
      %v2784 = vsel %vm2728, %v2779, %v2783
      %v2786 = vshrl.u32 %v2670, 16
      %v2788 = vrot.slane %v2786, 4
      %v2789 = vshll.u32 %v2670, 16
      %v2791 = vrot.slane %v2789, 5
      %v2792 = vor.u32 %v2788, %v2791
      %v2793 = vrot.slane %v2792, 4
      %v2795 = vshll.u32 %v2671, 16
      %v2797 = vrot.slane %v2795, 5
      %v2798 = vsel %vm2728, %v2793, %v2797
      %v2800 = vshrl.u32 %v2672, 16
      %v2802 = vrot.slane %v2800, 4
      %v2803 = vshll.u32 %v2672, 16
      %v2805 = vrot.slane %v2803, 5
      %v2806 = vor.u32 %v2802, %v2805
      %v2807 = vrot.slane %v2806, 4
      %v2809 = vshll.u32 %v2673, 16
      %v2811 = vrot.slane %v2809, 5
      %v2812 = vsel %vm2728, %v2807, %v2811
      %v2814 = vshrl.u32 %v2674, 16
      %v2816 = vrot.slane %v2814, 4
      %v2817 = vshll.u32 %v2674, 16
      %v2819 = vrot.slane %v2817, 5
      %v2820 = vor.u32 %v2816, %v2819
      %v2821 = vrot.slane %v2820, 4
      %v2823 = vshll.u32 %v2675, 16
      %v2825 = vrot.slane %v2823, 5
      %v2826 = vsel %vm2728, %v2821, %v2825
      %v2828 = vshrl.u32 %v2676, 16
      %v2830 = vrot.slane %v2828, 4
      %v2831 = vshll.u32 %v2676, 16
      %v2833 = vrot.slane %v2831, 5
      %v2834 = vor.u32 %v2830, %v2833
      %v2835 = vrot.slane %v2834, 4
      %v2837 = vshll.u32 %v2677, 16
      %v2839 = vrot.slane %v2837, 5
      %v2840 = vsel %vm2728, %v2835, %v2839
      %v2842 = vshrl.u32 %v2678, 16
      %v2844 = vrot.slane %v2842, 4
      %v2845 = vshll.u32 %v2678, 16
      %v2847 = vrot.slane %v2845, 5
      %v2848 = vor.u32 %v2844, %v2847
      %v2849 = vrot.slane %v2848, 4
      %v2851 = vshll.u32 %v2679, 16
      %v2853 = vrot.slane %v2851, 5
      %v2854 = vsel %vm2728, %v2849, %v2853
      %v2856 = vshrl.u32 %v2680, 16
      %v2858 = vrot.slane %v2856, 4
      %v2859 = vshll.u32 %v2680, 16
      %v2861 = vrot.slane %v2859, 5
      %v2862 = vor.u32 %v2858, %v2861
      %v2863 = vrot.slane %v2862, 4
      %v2865 = vshll.u32 %v2681, 16
      %v2867 = vrot.slane %v2865, 5
      %v2868 = vsel %vm2728, %v2863, %v2867
      %v2870 = vshrl.u32 %v2682, 16
      %v2872 = vrot.slane %v2870, 4
      %v2873 = vshll.u32 %v2682, 16
      %v2875 = vrot.slane %v2873, 5
      %v2876 = vor.u32 %v2872, %v2875
      %v2877 = vrot.slane %v2876, 4
      %v2879 = vshll.u32 %v2683, 16
      %v2881 = vrot.slane %v2879, 5
      %v2882 = vsel %vm2728, %v2877, %v2881
      %v2884 = vshrl.u32 %v2684, 16
      %v2886 = vrot.slane %v2884, 4
      %v2887 = vshll.u32 %v2684, 16
      %v2889 = vrot.slane %v2887, 5
      %v2890 = vor.u32 %v2886, %v2889
      %v2891 = vrot.slane %v2890, 4
      %v2893 = vshll.u32 %v2685, 16
      %v2895 = vrot.slane %v2893, 5
      %v2896 = vsel %vm2728, %v2891, %v2895
      %v2898 = vshrl.u32 %v2686, 16
      %v2900 = vrot.slane %v2898, 4
      %v2901 = vshll.u32 %v2686, 16
      %v2903 = vrot.slane %v2901, 5
      %v2904 = vor.u32 %v2900, %v2903
      %v2905 = vrot.slane %v2904, 4
      %v2907 = vshll.u32 %v2687, 16
      %v2909 = vrot.slane %v2907, 5
      %v2910 = vsel %vm2728, %v2905, %v2909
      %v2912 = vshrl.u32 %v2688, 16
      %v2914 = vrot.slane %v2912, 4
      %v2915 = vshll.u32 %v2688, 16
      %v2917 = vrot.slane %v2915, 5
      %v2918 = vor.u32 %v2914, %v2917
      %v2919 = vrot.slane %v2918, 4
      %v2921 = vshll.u32 %v2689, 16
      %v2923 = vrot.slane %v2921, 5
      %v2924 = vsel %vm2728, %v2919, %v2923
      %v2926 = vshrl.u32 %v2690, 16
      %v2928 = vrot.slane %v2926, 4
      %v2929 = vshll.u32 %v2690, 16
      %v2931 = vrot.slane %v2929, 5
      %v2932 = vor.u32 %v2928, %v2931
      %v2933 = vrot.slane %v2932, 4
      %v2935 = vshll.u32 %v2691, 16
      %v2937 = vrot.slane %v2935, 5
      %v2938 = vsel %vm2728, %v2933, %v2937
      %v2940 = vshrl.u32 %v2692, 16
      %v2942 = vrot.slane %v2940, 4
      %v2943 = vshll.u32 %v2692, 16
      %v2945 = vrot.slane %v2943, 5
      %v2946 = vor.u32 %v2942, %v2945
      %v2947 = vrot.slane %v2946, 4
      %v2949 = vshll.u32 %v2693, 16
      %v2951 = vrot.slane %v2949, 5
      %v2952 = vsel %vm2728, %v2947, %v2951
      %v2954 = vshrl.u32 %v2694, 16
      %v2956 = vrot.slane %v2954, 4
      %v2957 = vshll.u32 %v2694, 16
      %v2959 = vrot.slane %v2957, 5
      %v2960 = vor.u32 %v2956, %v2959
      %v2961 = vrot.slane %v2960, 4
      %v2963 = vshll.u32 %v2695, 16
      %v2965 = vrot.slane %v2963, 5
      %v2966 = vsel %vm2728, %v2961, %v2965
      %v2968 = vshrl.u32 %v2696, 16
      %v2970 = vrot.slane %v2968, 4
      %v2971 = vshll.u32 %v2696, 16
      %v2973 = vrot.slane %v2971, 5
      %v2974 = vor.u32 %v2970, %v2973
      %v2975 = vrot.slane %v2974, 4
      %v2977 = vshll.u32 %v2697, 16
      %v2979 = vrot.slane %v2977, 5
      %v2980 = vsel %vm2728, %v2975, %v2979
      %v2982 = vshrl.u32 %v2698, 16
      %v2984 = vrot.slane %v2982, 4
      %v2985 = vshll.u32 %v2698, 16
      %v2987 = vrot.slane %v2985, 5
      %v2988 = vor.u32 %v2984, %v2987
      %v2989 = vrot.slane %v2988, 4
      %v2991 = vshll.u32 %v2699, 16
      %v2993 = vrot.slane %v2991, 5
      %v2994 = vsel %vm2728, %v2989, %v2993
      %v2996 = vshrl.u32 %v2700, 16
      %v2998 = vrot.slane %v2996, 4
      %v2999 = vshll.u32 %v2700, 16
      %v3001 = vrot.slane %v2999, 5
      %v3002 = vor.u32 %v2998, %v3001
      %v3003 = vrot.slane %v3002, 4
      %v3005 = vshll.u32 %v2701, 16
      %v3007 = vrot.slane %v3005, 5
      %v3008 = vsel %vm2728, %v3003, %v3007
      %v3010 = vshrl.u32 %v2702, 16
      %v3012 = vrot.slane %v3010, 4
      %v3013 = vshll.u32 %v2702, 16
      %v3015 = vrot.slane %v3013, 5
      %v3016 = vor.u32 %v3012, %v3015
      %v3017 = vrot.slane %v3016, 4
      %v3019 = vshll.u32 %v2703, 16
      %v3021 = vrot.slane %v3019, 5
      %v3022 = vsel %vm2728, %v3017, %v3021
      %v3024 = vshrl.u32 %v2704, 16
      %v3026 = vrot.slane %v3024, 4
      %v3027 = vshll.u32 %v2704, 16
      %v3029 = vrot.slane %v3027, 5
      %v3030 = vor.u32 %v3026, %v3029
      %v3031 = vrot.slane %v3030, 4
      %v3033 = vshll.u32 %v2705, 16
      %v3035 = vrot.slane %v3033, 5
      %v3036 = vsel %vm2728, %v3031, %v3035
      %v3038 = vshrl.u32 %v2706, 16
      %v3040 = vrot.slane %v3038, 4
      %v3041 = vshll.u32 %v2706, 16
      %v3043 = vrot.slane %v3041, 5
      %v3044 = vor.u32 %v3040, %v3043
      %v3045 = vrot.slane %v3044, 4
      %v3047 = vshll.u32 %v2707, 16
      %v3049 = vrot.slane %v3047, 5
      %v3050 = vsel %vm2728, %v3045, %v3049
      %v3052 = vshrl.u32 %v2708, 16
      %v3054 = vrot.slane %v3052, 4
      %v3055 = vshll.u32 %v2708, 16
      %v3057 = vrot.slane %v3055, 5
      %v3058 = vor.u32 %v3054, %v3057
      %v3059 = vrot.slane %v3058, 4
      %v3061 = vshll.u32 %v2709, 16
      %v3063 = vrot.slane %v3061, 5
      %v3064 = vsel %vm2728, %v3059, %v3063
      %v3066 = vshrl.u32 %v2710, 16
      %v3068 = vrot.slane %v3066, 4
      %v3069 = vshll.u32 %v2710, 16
      %v3071 = vrot.slane %v3069, 5
      %v3072 = vor.u32 %v3068, %v3071
      %v3073 = vrot.slane %v3072, 4
      %v3075 = vshll.u32 %v2711, 16
      %v3077 = vrot.slane %v3075, 5
      %v3078 = vsel %vm2728, %v3073, %v3077
      %v3080 = vshrl.u32 %v2712, 16
      %v3082 = vrot.slane %v3080, 4
      %v3083 = vshll.u32 %v2712, 16
      %v3085 = vrot.slane %v3083, 5
      %v3086 = vor.u32 %v3082, %v3085
      %v3087 = vrot.slane %v3086, 4
      %v3089 = vshll.u32 %v2713, 16
      %v3091 = vrot.slane %v3089, 5
      %v3092 = vsel %vm2728, %v3087, %v3091
      %v3094 = vshrl.u32 %v2714, 16
      %v3096 = vrot.slane %v3094, 4
      %v3097 = vshll.u32 %v2714, 16
      %v3099 = vrot.slane %v3097, 5
      %v3100 = vor.u32 %v3096, %v3099
      %v3101 = vrot.slane %v3100, 4
      %v3103 = vshll.u32 %v2715, 16
      %v3105 = vrot.slane %v3103, 5
      %v3106 = vsel %vm2728, %v3101, %v3105
      %v3108 = vshrl.u32 %v2716, 16
      %v3110 = vrot.slane %v3108, 4
      %v3111 = vshll.u32 %v2716, 16
      %v3113 = vrot.slane %v3111, 5
      %v3114 = vor.u32 %v3110, %v3113
      %v3115 = vrot.slane %v3114, 4
      %v3117 = vshll.u32 %v2717, 16
      %v3119 = vrot.slane %v3117, 5
      %v3120 = vsel %vm2728, %v3115, %v3119
      %v3122 = vshrl.u32 %v2718, 16
      %v3124 = vrot.slane %v3122, 4
      %v3125 = vshll.u32 %v2718, 16
      %v3127 = vrot.slane %v3125, 5
      %v3128 = vor.u32 %v3124, %v3127
      %v3129 = vrot.slane %v3128, 4
      %v3131 = vshll.u32 %v2719, 16
      %v3133 = vrot.slane %v3131, 5
      %v3134 = vsel %vm2728, %v3129, %v3133
      %v3136 = vshrl.u32 %v2720, 16
      %v3138 = vrot.slane %v3136, 4
      %v3139 = vshll.u32 %v2720, 16
      %v3141 = vrot.slane %v3139, 5
      %v3142 = vor.u32 %v3138, %v3141
      %v3143 = vrot.slane %v3142, 4
      %v3145 = vshll.u32 %v2721, 16
      %v3147 = vrot.slane %v3145, 5
      %v3148 = vsel %vm2728, %v3143, %v3147
      %v3150 = vshrl.u32 %v2722, 16
      %v3152 = vrot.slane %v3150, 4
      %v3153 = vshll.u32 %v2722, 16
      %v3155 = vrot.slane %v3153, 5
      %v3156 = vor.u32 %v3152, %v3155
      %v3157 = vrot.slane %v3156, 4
      %v3159 = vshll.u32 %v2723, 16
      %v3161 = vrot.slane %v3159, 5
      %v3162 = vsel %vm2728, %v3157, %v3161
      %v3164 = vshrl.u32 %v2724, 16
      %v3166 = vrot.slane %v3164, 4
      %v3167 = vshll.u32 %v2724, 16
      %v3169 = vrot.slane %v3167, 5
      %v3170 = vor.u32 %v3166, %v3169
      %v3171 = vrot.slane %v3170, 4
      %v3173 = vshll.u32 %v2725, 16
      %v3175 = vrot.slane %v3173, 5
      %v3176 = vsel %vm2728, %v3171, %v3175
      %s3177 = scalar_lea.vmem %s2, 64
      %v3178 = vld [vmem:[%s3177] sm:$0xf]
      %v3179 = vld [vmem:[%s3177 + $0x4] sm:$0xf]
      %v3180 = vld [vmem:[%s3177 + $0x8] sm:$0xf]
      %v3181 = vld [vmem:[%s3177 + $0xc] sm:$0xf]
      %v3182 = vld [vmem:[%s3177 + $0x10] sm:$0xf]
      %v3183 = vld [vmem:[%s3177 + $0x14] sm:$0xf]
      %v3184 = vld [vmem:[%s3177 + $0x18] sm:$0xf]
      %v3185 = vld [vmem:[%s3177 + $0x1c] sm:$0xf]
      %v3186 = vunpack.c.l.b16 %v2742
      %v3187 = vunpack.c.l.b16 %v2756
      %v3188 = vunpack.c.l.b16 %v2770
      %v3189 = vunpack.c.l.b16 %v2784
      %v3190 = vunpack.c.l.b16 %v2798
      %v3191 = vunpack.c.l.b16 %v2812
      %v3192 = vunpack.c.l.b16 %v2826
      %v3193 = vunpack.c.l.b16 %v2840
      %v3194 = vunpack.c.l.b16 %v2854
      %v3195 = vunpack.c.l.b16 %v2868
      %v3196 = vunpack.c.l.b16 %v2882
      %v3197 = vunpack.c.l.b16 %v2896
      %v3198 = vunpack.c.l.b16 %v2910
      %v3199 = vunpack.c.l.b16 %v2924
      %v3200 = vunpack.c.l.b16 %v2938
      %v3201 = vunpack.c.l.b16 %v2952
      %v3202 = vunpack.c.l.b16 %v2966
      %v3203 = vunpack.c.l.b16 %v2980
      %v3204 = vunpack.c.l.b16 %v2994
      %v3205 = vunpack.c.l.b16 %v3008
      %v3206 = vunpack.c.l.b16 %v3022
      %v3207 = vunpack.c.l.b16 %v3036
      %v3208 = vunpack.c.l.b16 %v3050
      %v3209 = vunpack.c.l.b16 %v3064
      %v3210 = vunpack.c.l.b16 %v3078
      %v3211 = vunpack.c.l.b16 %v3092
      %v3212 = vunpack.c.l.b16 %v3106
      %v3213 = vunpack.c.l.b16 %v3120
      %v3214 = vunpack.c.l.b16 %v3134
      %v3215 = vunpack.c.l.b16 %v3148
      %v3216 = vunpack.c.l.b16 %v3162
      %v3217 = vunpack.c.l.b16 %v3176
      %v3218 = vpack.c.b16 %v3187, %v3186
      %v3219 = vpack.c.b16 %v3189, %v3188
      %v3220 = vpack.c.b16 %v3191, %v3190
      %v3221 = vpack.c.b16 %v3193, %v3192
      %v3222 = vpack.c.b16 %v3195, %v3194
      %v3223 = vpack.c.b16 %v3197, %v3196
      %v3224 = vpack.c.b16 %v3199, %v3198
      %v3225 = vpack.c.b16 %v3201, %v3200
      %v3226 = vpack.c.b16 %v3203, %v3202
      %v3227 = vpack.c.b16 %v3205, %v3204
      %v3228 = vpack.c.b16 %v3207, %v3206
      %v3229 = vpack.c.b16 %v3209, %v3208
      %v3230 = vpack.c.b16 %v3211, %v3210
      %v3231 = vpack.c.b16 %v3213, %v3212
      %v3232 = vpack.c.b16 %v3215, %v3214
      %v3233 = vpack.c.b16 %v3217, %v3216
      %v3242 = vunpack.c.l.b16 %v3178
      %v3243 = vunpack.c.l.b16 %v3179
      %v3244 = vunpack.c.l.b16 %v3180
      %v3245 = vunpack.c.l.b16 %v3181
      %v3246 = vunpack.c.l.b16 %v3182
      %v3247 = vunpack.c.l.b16 %v3183
      %v3248 = vunpack.c.l.b16 %v3184
      %v3249 = vunpack.c.l.b16 %v3185
      %v3250 = vpack.c.b16 %v3243, %v3242
      %v3251 = vpack.c.b16 %v3245, %v3244
      %v3252 = vpack.c.b16 %v3247, %v3246
      %v3253 = vpack.c.b16 %v3249, %v3248
      %v3259 = vsel %vm2315, %v3218, 0
      %v3262 = vsel %vm2315, %v3219, 0
      %v3265 = vsel %vm2315, %v3220, 0
      %v3268 = vsel %vm2315, %v3221, 0
      %v3271 = vsel %vm2315, %v3222, 0
      %v3274 = vsel %vm2315, %v3223, 0
      %v3277 = vsel %vm2315, %v3224, 0
      %v3280 = vsel %vm2315, %v3225, 0
      %v3283 = vsel %vm2315, %v3226, 0
      %v3286 = vsel %vm2315, %v3227, 0
      %v3289 = vsel %vm2315, %v3228, 0
      %v3292 = vsel %vm2315, %v3229, 0
      %v3295 = vsel %vm2315, %v3230, 0
      %v3298 = vsel %vm2315, %v3231, 0
      %v3301 = vsel %vm2315, %v3232, 0
      %v3304 = vsel %vm2315, %v3233, 0
      %3306 = vmatpush.bf16.msra.mxu0 0
      %3307 = vmatpush.bf16.msra.mxu0 0
      %3308 = vmatpush.bf16.msra.mxu0 0
      %3309 = vmatpush.bf16.msra.mxu0 0
      %3310 = vmatpush.bf16.msra.mxu0 %v3253
      %3311 = vmatpush.bf16.msra.mxu0 %v3252
      %3312 = vmatpush.bf16.msra.mxu0 %v3251
      %3313 = vmatpush.bf16.msra.mxu0 %v3250
      %3314 = vmatmul.bf16.gmra.mxu0 %v3259
      %v3315 = vpop.f32.mrf.mxu0
      %v3316 = vadd.f32 0.0, %v3315
      %v3317 = vpop.f32.mrf.mxu0
      %v3318 = vadd.f32 0.0, %v3317
      %3319 = vmatmul.bf16.gmra.mxu0 %v3262
      %v3320 = vpop.f32.mrf.mxu0
      %v3321 = vadd.f32 0.0, %v3320
      %v3322 = vpop.f32.mrf.mxu0
      %v3323 = vadd.f32 0.0, %v3322
      %3324 = vmatmul.bf16.gmra.mxu0 %v3265
      %v3325 = vpop.f32.mrf.mxu0
      %v3326 = vadd.f32 0.0, %v3325
      %v3327 = vpop.f32.mrf.mxu0
      %v3328 = vadd.f32 0.0, %v3327
      %3329 = vmatmul.bf16.gmra.mxu0 %v3268
      %v3330 = vpop.f32.mrf.mxu0
      %v3331 = vadd.f32 0.0, %v3330
      %v3332 = vpop.f32.mrf.mxu0
      %v3333 = vadd.f32 0.0, %v3332
      %3334 = vmatmul.bf16.gmra.mxu0 %v3271
      %v3335 = vpop.f32.mrf.mxu0
      %v3336 = vadd.f32 0.0, %v3335
      %v3337 = vpop.f32.mrf.mxu0
      %v3338 = vadd.f32 0.0, %v3337
      %3339 = vmatmul.bf16.gmra.mxu0 %v3274
      %v3340 = vpop.f32.mrf.mxu0
      %v3341 = vadd.f32 0.0, %v3340
      %v3342 = vpop.f32.mrf.mxu0
      %v3343 = vadd.f32 0.0, %v3342
      %3344 = vmatmul.bf16.gmra.mxu0 %v3277
      %v3345 = vpop.f32.mrf.mxu0
      %v3346 = vadd.f32 0.0, %v3345
      %v3347 = vpop.f32.mrf.mxu0
      %v3348 = vadd.f32 0.0, %v3347
      %3349 = vmatmul.bf16.gmra.mxu0 %v3280
      %v3350 = vpop.f32.mrf.mxu0
      %v3351 = vadd.f32 0.0, %v3350
      %v3352 = vpop.f32.mrf.mxu0
      %v3353 = vadd.f32 0.0, %v3352
      %3354 = vmatmul.bf16.gmra.mxu0 %v3283
      %v3355 = vpop.f32.mrf.mxu0
      %v3356 = vadd.f32 0.0, %v3355
      %v3357 = vpop.f32.mrf.mxu0
      %v3358 = vadd.f32 0.0, %v3357
      %3359 = vmatmul.bf16.gmra.mxu0 %v3286
      %v3360 = vpop.f32.mrf.mxu0
      %v3361 = vadd.f32 0.0, %v3360
      %v3362 = vpop.f32.mrf.mxu0
      %v3363 = vadd.f32 0.0, %v3362
      %3364 = vmatmul.bf16.gmra.mxu0 %v3289
      %v3365 = vpop.f32.mrf.mxu0
      %v3366 = vadd.f32 0.0, %v3365
      %v3367 = vpop.f32.mrf.mxu0
      %v3368 = vadd.f32 0.0, %v3367
      %3369 = vmatmul.bf16.gmra.mxu0 %v3292
      %v3370 = vpop.f32.mrf.mxu0
      %v3371 = vadd.f32 0.0, %v3370
      %v3372 = vpop.f32.mrf.mxu0
      %v3373 = vadd.f32 0.0, %v3372
      %3374 = vmatmul.bf16.gmra.mxu0 %v3295
      %v3375 = vpop.f32.mrf.mxu0
      %v3376 = vadd.f32 0.0, %v3375
      %v3377 = vpop.f32.mrf.mxu0
      %v3378 = vadd.f32 0.0, %v3377
      %3379 = vmatmul.bf16.gmra.mxu0 %v3298
      %v3380 = vpop.f32.mrf.mxu0
      %v3381 = vadd.f32 0.0, %v3380
      %v3382 = vpop.f32.mrf.mxu0
      %v3383 = vadd.f32 0.0, %v3382
      %3384 = vmatmul.bf16.gmra.mxu0 %v3301
      %v3385 = vpop.f32.mrf.mxu0
      %v3386 = vadd.f32 0.0, %v3385
      %v3387 = vpop.f32.mrf.mxu0
      %v3388 = vadd.f32 0.0, %v3387
      %3389 = vmatmul.bf16.gmra.mxu0 %v3304
      %v3390 = vpop.f32.mrf.mxu0
      %v3391 = vadd.f32 0.0, %v3390
      %v3392 = vpop.f32.mrf.mxu0
      %v3393 = vadd.f32 0.0, %v3392
      %3394 = vdwg.mxu0
      %v3395 = vadd.f32 %v2583, %v3316
      %v3396 = vadd.f32 %v2585, %v3318
      %v3397 = vadd.f32 %v2588, %v3321
      %v3398 = vadd.f32 %v2590, %v3323
      %v3399 = vadd.f32 %v2593, %v3326
      %v3400 = vadd.f32 %v2595, %v3328
      %v3401 = vadd.f32 %v2598, %v3331
      %v3402 = vadd.f32 %v2600, %v3333
      %v3403 = vadd.f32 %v2603, %v3336
      %v3404 = vadd.f32 %v2605, %v3338
      %v3405 = vadd.f32 %v2608, %v3341
      %v3406 = vadd.f32 %v2610, %v3343
      %v3407 = vadd.f32 %v2613, %v3346
      %v3408 = vadd.f32 %v2615, %v3348
      %v3409 = vadd.f32 %v2618, %v3351
      %v3410 = vadd.f32 %v2620, %v3353
      %v3411 = vadd.f32 %v2623, %v3356
      %v3412 = vadd.f32 %v2625, %v3358
      %v3413 = vadd.f32 %v2628, %v3361
      %v3414 = vadd.f32 %v2630, %v3363
      %v3415 = vadd.f32 %v2633, %v3366
      %v3416 = vadd.f32 %v2635, %v3368
      %v3417 = vadd.f32 %v2638, %v3371
      %v3418 = vadd.f32 %v2640, %v3373
      %v3419 = vadd.f32 %v2643, %v3376
      %v3420 = vadd.f32 %v2645, %v3378
      %v3421 = vadd.f32 %v2648, %v3381
      %v3422 = vadd.f32 %v2650, %v3383
      %v3423 = vadd.f32 %v2653, %v3386
      %v3424 = vadd.f32 %v2655, %v3388
      %v3425 = vadd.f32 %v2658, %v3391
      %v3426 = vadd.f32 %v2660, %v3393
      %v3427 = vld [vmem:[%s1477 + $0x4] sm:$0x8]
      %v3428 = vld [vmem:[%s1477 + $0x8] sm:$0xf]
      %v3429 = vld [vmem:[%s1477 + $0x14] sm:$0x8]
      %v3430 = vld [vmem:[%s1477 + $0x18] sm:$0xf]
      %v3431 = vld [vmem:[%s1477 + $0x24] sm:$0x8]
      %v3432 = vld [vmem:[%s1477 + $0x28] sm:$0xf]
      %v3433 = vld [vmem:[%s1477 + $0x34] sm:$0x8]
      %v3434 = vld [vmem:[%s1477 + $0x38] sm:$0xf]
      %v3435 = vld [vmem:[%s1477 + $0x44] sm:$0x8]
      %v3436 = vld [vmem:[%s1477 + $0x48] sm:$0xf]
      %v3437 = vld [vmem:[%s1477 + $0x54] sm:$0x8]
      %v3438 = vld [vmem:[%s1477 + $0x58] sm:$0xf]
      %v3439 = vld [vmem:[%s1477 + $0x64] sm:$0x8]
      %v3440 = vld [vmem:[%s1477 + $0x68] sm:$0xf]
      %v3441 = vld [vmem:[%s1477 + $0x74] sm:$0x8]
      %v3442 = vld [vmem:[%s1477 + $0x78] sm:$0xf]
      %v3443 = vld [vmem:[%s1477 + $0xa4] sm:$0x8]
      %v3444 = vld [vmem:[%s1477 + $0xa8] sm:$0xf]
      %v3445 = vld [vmem:[%s1477 + $0xb4] sm:$0x8]
      %v3446 = vld [vmem:[%s1477 + $0xb8] sm:$0xf]
      %v3447 = vld [vmem:[%s1477 + $0xc4] sm:$0x8]
      %v3448 = vld [vmem:[%s1477 + $0xc8] sm:$0xf]
      %v3449 = vld [vmem:[%s1477 + $0xd4] sm:$0x8]
      %v3450 = vld [vmem:[%s1477 + $0xd8] sm:$0xf]
      %v3451 = vld [vmem:[%s1477 + $0xe4] sm:$0x8]
      %v3452 = vld [vmem:[%s1477 + $0xe8] sm:$0xf]
      %v3453 = vld [vmem:[%s1477 + $0xf4] sm:$0x8]
      %v3454 = vld [vmem:[%s1477 + $0xf8] sm:$0xf]
      %v3455 = vld [vmem:[%s1477 + $0x104] sm:$0x8]
      %v3456 = vld [vmem:[%s1477 + $0x108] sm:$0xf]
      %v3457 = vld [vmem:[%s1477 + $0x114] sm:$0x8]
      %v3458 = vld [vmem:[%s1477 + $0x118] sm:$0xf]
      %v3459 = vld [vmem:[%s1477 + $0x144] sm:$0x8]
      %v3460 = vld [vmem:[%s1477 + $0x148] sm:$0xf]
      %v3461 = vld [vmem:[%s1477 + $0x154] sm:$0x8]
      %v3462 = vld [vmem:[%s1477 + $0x158] sm:$0xf]
      %v3463 = vld [vmem:[%s1477 + $0x164] sm:$0x8]
      %v3464 = vld [vmem:[%s1477 + $0x168] sm:$0xf]
      %v3465 = vld [vmem:[%s1477 + $0x174] sm:$0x8]
      %v3466 = vld [vmem:[%s1477 + $0x178] sm:$0xf]
      %v3467 = vld [vmem:[%s1477 + $0x184] sm:$0x8]
      %v3468 = vld [vmem:[%s1477 + $0x188] sm:$0xf]
      %v3469 = vld [vmem:[%s1477 + $0x194] sm:$0x8]
      %v3470 = vld [vmem:[%s1477 + $0x198] sm:$0xf]
      %v3471 = vld [vmem:[%s1477 + $0x1a4] sm:$0x8]
      %v3472 = vld [vmem:[%s1477 + $0x1a8] sm:$0xf]
      %v3473 = vld [vmem:[%s1477 + $0x1b4] sm:$0x8]
      %v3474 = vld [vmem:[%s1477 + $0x1b8] sm:$0xf]
      %v3475 = vld [vmem:[%s1477 + $0x1e4] sm:$0x8]
      %v3476 = vld [vmem:[%s1477 + $0x1e8] sm:$0xf]
      %v3477 = vld [vmem:[%s1477 + $0x1f4] sm:$0x8]
      %v3478 = vld [vmem:[%s1477 + $0x1f8] sm:$0xf]
      %v3479 = vld [vmem:[%s1477 + $0x204] sm:$0x8]
      %v3480 = vld [vmem:[%s1477 + $0x208] sm:$0xf]
      %v3481 = vld [vmem:[%s1477 + $0x214] sm:$0x8]
      %v3482 = vld [vmem:[%s1477 + $0x218] sm:$0xf]
      %v3483 = vld [vmem:[%s1477 + $0x224] sm:$0x8]
      %v3484 = vld [vmem:[%s1477 + $0x228] sm:$0xf]
      %v3485 = vld [vmem:[%s1477 + $0x234] sm:$0x8]
      %v3486 = vld [vmem:[%s1477 + $0x238] sm:$0xf]
      %v3487 = vld [vmem:[%s1477 + $0x244] sm:$0x8]
      %v3488 = vld [vmem:[%s1477 + $0x248] sm:$0xf]
      %v3489 = vld [vmem:[%s1477 + $0x254] sm:$0x8]
      %v3490 = vld [vmem:[%s1477 + $0x258] sm:$0xf]
      %v3492 = vshrl.u32 %v3427, 16
      %v3494 = vrot.slane %v3492, 7
      %v3495 = vrot.slane %v3494, 4
      %v3497 = vshrl.u32 %v3428, 16
      %v3499 = vrot.slane %v3497, 7
      %v3500 = vshll.u32 %v3428, 16
      %v3502 = vor.u32 %v3499, %v3500
      %v3503 = vsel %vm1777, %v3495, %v3502
      %v3505 = vshrl.u32 %v3429, 16
      %v3507 = vrot.slane %v3505, 7
      %v3508 = vrot.slane %v3507, 4
      %v3510 = vshrl.u32 %v3430, 16
      %v3512 = vrot.slane %v3510, 7
      %v3513 = vshll.u32 %v3430, 16
      %v3515 = vor.u32 %v3512, %v3513
      %v3516 = vsel %vm1777, %v3508, %v3515
      %v3518 = vshrl.u32 %v3431, 16
      %v3520 = vrot.slane %v3518, 7
      %v3521 = vrot.slane %v3520, 4
      %v3523 = vshrl.u32 %v3432, 16
      %v3525 = vrot.slane %v3523, 7
      %v3526 = vshll.u32 %v3432, 16
      %v3528 = vor.u32 %v3525, %v3526
      %v3529 = vsel %vm1777, %v3521, %v3528
      %v3531 = vshrl.u32 %v3433, 16
      %v3533 = vrot.slane %v3531, 7
      %v3534 = vrot.slane %v3533, 4
      %v3536 = vshrl.u32 %v3434, 16
      %v3538 = vrot.slane %v3536, 7
      %v3539 = vshll.u32 %v3434, 16
      %v3541 = vor.u32 %v3538, %v3539
      %v3542 = vsel %vm1777, %v3534, %v3541
      %v3544 = vshrl.u32 %v3435, 16
      %v3546 = vrot.slane %v3544, 7
      %v3547 = vrot.slane %v3546, 4
      %v3549 = vshrl.u32 %v3436, 16
      %v3551 = vrot.slane %v3549, 7
      %v3552 = vshll.u32 %v3436, 16
      %v3554 = vor.u32 %v3551, %v3552
      %v3555 = vsel %vm1777, %v3547, %v3554
      %v3557 = vshrl.u32 %v3437, 16
      %v3559 = vrot.slane %v3557, 7
      %v3560 = vrot.slane %v3559, 4
      %v3562 = vshrl.u32 %v3438, 16
      %v3564 = vrot.slane %v3562, 7
      %v3565 = vshll.u32 %v3438, 16
      %v3567 = vor.u32 %v3564, %v3565
      %v3568 = vsel %vm1777, %v3560, %v3567
      %v3570 = vshrl.u32 %v3439, 16
      %v3572 = vrot.slane %v3570, 7
      %v3573 = vrot.slane %v3572, 4
      %v3575 = vshrl.u32 %v3440, 16
      %v3577 = vrot.slane %v3575, 7
      %v3578 = vshll.u32 %v3440, 16
      %v3580 = vor.u32 %v3577, %v3578
      %v3581 = vsel %vm1777, %v3573, %v3580
      %v3583 = vshrl.u32 %v3441, 16
      %v3585 = vrot.slane %v3583, 7
      %v3586 = vrot.slane %v3585, 4
      %v3588 = vshrl.u32 %v3442, 16
      %v3590 = vrot.slane %v3588, 7
      %v3591 = vshll.u32 %v3442, 16
      %v3593 = vor.u32 %v3590, %v3591
      %v3594 = vsel %vm1777, %v3586, %v3593
      %v3596 = vshrl.u32 %v3443, 16
      %v3598 = vrot.slane %v3596, 7
      %v3599 = vrot.slane %v3598, 4
      %v3601 = vshrl.u32 %v3444, 16
      %v3603 = vrot.slane %v3601, 7
      %v3604 = vshll.u32 %v3444, 16
      %v3606 = vor.u32 %v3603, %v3604
      %v3607 = vsel %vm1777, %v3599, %v3606
      %v3609 = vshrl.u32 %v3445, 16
      %v3611 = vrot.slane %v3609, 7
      %v3612 = vrot.slane %v3611, 4
      %v3614 = vshrl.u32 %v3446, 16
      %v3616 = vrot.slane %v3614, 7
      %v3617 = vshll.u32 %v3446, 16
      %v3619 = vor.u32 %v3616, %v3617
      %v3620 = vsel %vm1777, %v3612, %v3619
      %v3622 = vshrl.u32 %v3447, 16
      %v3624 = vrot.slane %v3622, 7
      %v3625 = vrot.slane %v3624, 4
      %v3627 = vshrl.u32 %v3448, 16
      %v3629 = vrot.slane %v3627, 7
      %v3630 = vshll.u32 %v3448, 16
      %v3632 = vor.u32 %v3629, %v3630
      %v3633 = vsel %vm1777, %v3625, %v3632
      %v3635 = vshrl.u32 %v3449, 16
      %v3637 = vrot.slane %v3635, 7
      %v3638 = vrot.slane %v3637, 4
      %v3640 = vshrl.u32 %v3450, 16
      %v3642 = vrot.slane %v3640, 7
      %v3643 = vshll.u32 %v3450, 16
      %v3645 = vor.u32 %v3642, %v3643
      %v3646 = vsel %vm1777, %v3638, %v3645
      %v3648 = vshrl.u32 %v3451, 16
      %v3650 = vrot.slane %v3648, 7
      %v3651 = vrot.slane %v3650, 4
      %v3653 = vshrl.u32 %v3452, 16
      %v3655 = vrot.slane %v3653, 7
      %v3656 = vshll.u32 %v3452, 16
      %v3658 = vor.u32 %v3655, %v3656
      %v3659 = vsel %vm1777, %v3651, %v3658
      %v3661 = vshrl.u32 %v3453, 16
      %v3663 = vrot.slane %v3661, 7
      %v3664 = vrot.slane %v3663, 4
      %v3666 = vshrl.u32 %v3454, 16
      %v3668 = vrot.slane %v3666, 7
      %v3669 = vshll.u32 %v3454, 16
      %v3671 = vor.u32 %v3668, %v3669
      %v3672 = vsel %vm1777, %v3664, %v3671
      %v3674 = vshrl.u32 %v3455, 16
      %v3676 = vrot.slane %v3674, 7
      %v3677 = vrot.slane %v3676, 4
      %v3679 = vshrl.u32 %v3456, 16
      %v3681 = vrot.slane %v3679, 7
      %v3682 = vshll.u32 %v3456, 16
      %v3684 = vor.u32 %v3681, %v3682
      %v3685 = vsel %vm1777, %v3677, %v3684
      %v3687 = vshrl.u32 %v3457, 16
      %v3689 = vrot.slane %v3687, 7
      %v3690 = vrot.slane %v3689, 4
      %v3692 = vshrl.u32 %v3458, 16
      %v3694 = vrot.slane %v3692, 7
      %v3695 = vshll.u32 %v3458, 16
      %v3697 = vor.u32 %v3694, %v3695
      %v3698 = vsel %vm1777, %v3690, %v3697
      %v3700 = vshrl.u32 %v3459, 16
      %v3702 = vrot.slane %v3700, 7
      %v3703 = vrot.slane %v3702, 4
      %v3705 = vshrl.u32 %v3460, 16
      %v3707 = vrot.slane %v3705, 7
      %v3708 = vshll.u32 %v3460, 16
      %v3710 = vor.u32 %v3707, %v3708
      %v3711 = vsel %vm1777, %v3703, %v3710
      %v3713 = vshrl.u32 %v3461, 16
      %v3715 = vrot.slane %v3713, 7
      %v3716 = vrot.slane %v3715, 4
      %v3718 = vshrl.u32 %v3462, 16
      %v3720 = vrot.slane %v3718, 7
      %v3721 = vshll.u32 %v3462, 16
      %v3723 = vor.u32 %v3720, %v3721
      %v3724 = vsel %vm1777, %v3716, %v3723
      %v3726 = vshrl.u32 %v3463, 16
      %v3728 = vrot.slane %v3726, 7
      %v3729 = vrot.slane %v3728, 4
      %v3731 = vshrl.u32 %v3464, 16
      %v3733 = vrot.slane %v3731, 7
      %v3734 = vshll.u32 %v3464, 16
      %v3736 = vor.u32 %v3733, %v3734
      %v3737 = vsel %vm1777, %v3729, %v3736
      %v3739 = vshrl.u32 %v3465, 16
      %v3741 = vrot.slane %v3739, 7
      %v3742 = vrot.slane %v3741, 4
      %v3744 = vshrl.u32 %v3466, 16
      %v3746 = vrot.slane %v3744, 7
      %v3747 = vshll.u32 %v3466, 16
      %v3749 = vor.u32 %v3746, %v3747
      %v3750 = vsel %vm1777, %v3742, %v3749
      %v3752 = vshrl.u32 %v3467, 16
      %v3754 = vrot.slane %v3752, 7
      %v3755 = vrot.slane %v3754, 4
      %v3757 = vshrl.u32 %v3468, 16
      %v3759 = vrot.slane %v3757, 7
      %v3760 = vshll.u32 %v3468, 16
      %v3762 = vor.u32 %v3759, %v3760
      %v3763 = vsel %vm1777, %v3755, %v3762
      %v3765 = vshrl.u32 %v3469, 16
      %v3767 = vrot.slane %v3765, 7
      %v3768 = vrot.slane %v3767, 4
      %v3770 = vshrl.u32 %v3470, 16
      %v3772 = vrot.slane %v3770, 7
      %v3773 = vshll.u32 %v3470, 16
      %v3775 = vor.u32 %v3772, %v3773
      %v3776 = vsel %vm1777, %v3768, %v3775
      %v3778 = vshrl.u32 %v3471, 16
      %v3780 = vrot.slane %v3778, 7
      %v3781 = vrot.slane %v3780, 4
      %v3783 = vshrl.u32 %v3472, 16
      %v3785 = vrot.slane %v3783, 7
      %v3786 = vshll.u32 %v3472, 16
      %v3788 = vor.u32 %v3785, %v3786
      %v3789 = vsel %vm1777, %v3781, %v3788
      %v3791 = vshrl.u32 %v3473, 16
      %v3793 = vrot.slane %v3791, 7
      %v3794 = vrot.slane %v3793, 4
      %v3796 = vshrl.u32 %v3474, 16
      %v3798 = vrot.slane %v3796, 7
      %v3799 = vshll.u32 %v3474, 16
      %v3801 = vor.u32 %v3798, %v3799
      %v3802 = vsel %vm1777, %v3794, %v3801
      %v3804 = vshrl.u32 %v3475, 16
      %v3806 = vrot.slane %v3804, 7
      %v3807 = vrot.slane %v3806, 4
      %v3809 = vshrl.u32 %v3476, 16
      %v3811 = vrot.slane %v3809, 7
      %v3812 = vshll.u32 %v3476, 16
      %v3814 = vor.u32 %v3811, %v3812
      %v3815 = vsel %vm1777, %v3807, %v3814
      %v3817 = vshrl.u32 %v3477, 16
      %v3819 = vrot.slane %v3817, 7
      %v3820 = vrot.slane %v3819, 4
      %v3822 = vshrl.u32 %v3478, 16
      %v3824 = vrot.slane %v3822, 7
      %v3825 = vshll.u32 %v3478, 16
      %v3827 = vor.u32 %v3824, %v3825
      %v3828 = vsel %vm1777, %v3820, %v3827
      %v3830 = vshrl.u32 %v3479, 16
      %v3832 = vrot.slane %v3830, 7
      %v3833 = vrot.slane %v3832, 4
      %v3835 = vshrl.u32 %v3480, 16
      %v3837 = vrot.slane %v3835, 7
      %v3838 = vshll.u32 %v3480, 16
      %v3840 = vor.u32 %v3837, %v3838
      %v3841 = vsel %vm1777, %v3833, %v3840
      %v3843 = vshrl.u32 %v3481, 16
      %v3845 = vrot.slane %v3843, 7
      %v3846 = vrot.slane %v3845, 4
      %v3848 = vshrl.u32 %v3482, 16
      %v3850 = vrot.slane %v3848, 7
      %v3851 = vshll.u32 %v3482, 16
      %v3853 = vor.u32 %v3850, %v3851
      %v3854 = vsel %vm1777, %v3846, %v3853
      %v3856 = vshrl.u32 %v3483, 16
      %v3858 = vrot.slane %v3856, 7
      %v3859 = vrot.slane %v3858, 4
      %v3861 = vshrl.u32 %v3484, 16
      %v3863 = vrot.slane %v3861, 7
      %v3864 = vshll.u32 %v3484, 16
      %v3866 = vor.u32 %v3863, %v3864
      %v3867 = vsel %vm1777, %v3859, %v3866
      %v3869 = vshrl.u32 %v3485, 16
      %v3871 = vrot.slane %v3869, 7
      %v3872 = vrot.slane %v3871, 4
      %v3874 = vshrl.u32 %v3486, 16
      %v3876 = vrot.slane %v3874, 7
      %v3877 = vshll.u32 %v3486, 16
      %v3879 = vor.u32 %v3876, %v3877
      %v3880 = vsel %vm1777, %v3872, %v3879
      %v3882 = vshrl.u32 %v3487, 16
      %v3884 = vrot.slane %v3882, 7
      %v3885 = vrot.slane %v3884, 4
      %v3887 = vshrl.u32 %v3488, 16
      %v3889 = vrot.slane %v3887, 7
      %v3890 = vshll.u32 %v3488, 16
      %v3892 = vor.u32 %v3889, %v3890
      %v3893 = vsel %vm1777, %v3885, %v3892
      %v3895 = vshrl.u32 %v3489, 16
      %v3897 = vrot.slane %v3895, 7
      %v3898 = vrot.slane %v3897, 4
      %v3900 = vshrl.u32 %v3490, 16
      %v3902 = vrot.slane %v3900, 7
      %v3903 = vshll.u32 %v3490, 16
      %v3905 = vor.u32 %v3902, %v3903
      %v3906 = vsel %vm1777, %v3898, %v3905
      %s3907 = scalar_lea.vmem %s2, 96
      %v3908 = vld [vmem:[%s3907] sm:$0xf]
      %v3909 = vld [vmem:[%s3907 + $0x4] sm:$0xf]
      %v3910 = vld [vmem:[%s3907 + $0x8] sm:$0xf]
      %v3911 = vld [vmem:[%s3907 + $0xc] sm:$0xf]
      %v3912 = vld [vmem:[%s3907 + $0x10] sm:$0xf]
      %v3913 = vld [vmem:[%s3907 + $0x14] sm:$0xf]
      %v3914 = vld [vmem:[%s3907 + $0x18] sm:$0xf]
      %v3915 = vld [vmem:[%s3907 + $0x1c] sm:$0xf]
      %v3916 = vunpack.c.l.b16 %v3503
      %v3917 = vunpack.c.l.b16 %v3516
      %v3918 = vunpack.c.l.b16 %v3529
      %v3919 = vunpack.c.l.b16 %v3542
      %v3920 = vunpack.c.l.b16 %v3555
      %v3921 = vunpack.c.l.b16 %v3568
      %v3922 = vunpack.c.l.b16 %v3581
      %v3923 = vunpack.c.l.b16 %v3594
      %v3924 = vunpack.c.l.b16 %v3607
      %v3925 = vunpack.c.l.b16 %v3620
      %v3926 = vunpack.c.l.b16 %v3633
      %v3927 = vunpack.c.l.b16 %v3646
      %v3928 = vunpack.c.l.b16 %v3659
      %v3929 = vunpack.c.l.b16 %v3672
      %v3930 = vunpack.c.l.b16 %v3685
      %v3931 = vunpack.c.l.b16 %v3698
      %v3932 = vunpack.c.l.b16 %v3711
      %v3933 = vunpack.c.l.b16 %v3724
      %v3934 = vunpack.c.l.b16 %v3737
      %v3935 = vunpack.c.l.b16 %v3750
      %v3936 = vunpack.c.l.b16 %v3763
      %v3937 = vunpack.c.l.b16 %v3776
      %v3938 = vunpack.c.l.b16 %v3789
      %v3939 = vunpack.c.l.b16 %v3802
      %v3940 = vunpack.c.l.b16 %v3815
      %v3941 = vunpack.c.l.b16 %v3828
      %v3942 = vunpack.c.l.b16 %v3841
      %v3943 = vunpack.c.l.b16 %v3854
      %v3944 = vunpack.c.l.b16 %v3867
      %v3945 = vunpack.c.l.b16 %v3880
      %v3946 = vunpack.c.l.b16 %v3893
      %v3947 = vunpack.c.l.b16 %v3906
      %v3948 = vpack.c.b16 %v3917, %v3916
      %v3949 = vpack.c.b16 %v3919, %v3918
      %v3950 = vpack.c.b16 %v3921, %v3920
      %v3951 = vpack.c.b16 %v3923, %v3922
      %v3952 = vpack.c.b16 %v3925, %v3924
      %v3953 = vpack.c.b16 %v3927, %v3926
      %v3954 = vpack.c.b16 %v3929, %v3928
      %v3955 = vpack.c.b16 %v3931, %v3930
      %v3956 = vpack.c.b16 %v3933, %v3932
      %v3957 = vpack.c.b16 %v3935, %v3934
      %v3958 = vpack.c.b16 %v3937, %v3936
      %v3959 = vpack.c.b16 %v3939, %v3938
      %v3960 = vpack.c.b16 %v3941, %v3940
      %v3961 = vpack.c.b16 %v3943, %v3942
      %v3962 = vpack.c.b16 %v3945, %v3944
      %v3963 = vpack.c.b16 %v3947, %v3946
      %v3972 = vunpack.c.l.b16 %v3908
      %v3973 = vunpack.c.l.b16 %v3909
      %v3974 = vunpack.c.l.b16 %v3910
      %v3975 = vunpack.c.l.b16 %v3911
      %v3976 = vunpack.c.l.b16 %v3912
      %v3977 = vunpack.c.l.b16 %v3913
      %v3978 = vunpack.c.l.b16 %v3914
      %v3979 = vunpack.c.l.b16 %v3915
      %v3980 = vpack.c.b16 %v3973, %v3972
      %v3981 = vpack.c.b16 %v3975, %v3974
      %v3982 = vpack.c.b16 %v3977, %v3976
      %v3983 = vpack.c.b16 %v3979, %v3978
      %v3989 = vsel %vm2315, %v3948, 0
      %v3992 = vsel %vm2315, %v3949, 0
      %v3995 = vsel %vm2315, %v3950, 0
      %v3998 = vsel %vm2315, %v3951, 0
      %v4001 = vsel %vm2315, %v3952, 0
      %v4004 = vsel %vm2315, %v3953, 0
      %v4007 = vsel %vm2315, %v3954, 0
      %v4010 = vsel %vm2315, %v3955, 0
      %v4013 = vsel %vm2315, %v3956, 0
      %v4016 = vsel %vm2315, %v3957, 0
      %v4019 = vsel %vm2315, %v3958, 0
      %v4022 = vsel %vm2315, %v3959, 0
      %v4025 = vsel %vm2315, %v3960, 0
      %v4028 = vsel %vm2315, %v3961, 0
      %v4031 = vsel %vm2315, %v3962, 0
      %v4034 = vsel %vm2315, %v3963, 0
      %4036 = vmatpush.bf16.msra.mxu0 0
      %4037 = vmatpush.bf16.msra.mxu0 0
      %4038 = vmatpush.bf16.msra.mxu0 0
      %4039 = vmatpush.bf16.msra.mxu0 0
      %4040 = vmatpush.bf16.msra.mxu0 %v3983
      %4041 = vmatpush.bf16.msra.mxu0 %v3982
      %4042 = vmatpush.bf16.msra.mxu0 %v3981
      %4043 = vmatpush.bf16.msra.mxu0 %v3980
      %4044 = vmatmul.bf16.gmra.mxu0 %v3989
      %v4045 = vpop.f32.mrf.mxu0
      %v4046 = vadd.f32 0.0, %v4045
      %v4047 = vpop.f32.mrf.mxu0
      %v4048 = vadd.f32 0.0, %v4047
      %4049 = vmatmul.bf16.gmra.mxu0 %v3992
      %v4050 = vpop.f32.mrf.mxu0
      %v4051 = vadd.f32 0.0, %v4050
      %v4052 = vpop.f32.mrf.mxu0
      %v4053 = vadd.f32 0.0, %v4052
      %4054 = vmatmul.bf16.gmra.mxu0 %v3995
      %v4055 = vpop.f32.mrf.mxu0
      %v4056 = vadd.f32 0.0, %v4055
      %v4057 = vpop.f32.mrf.mxu0
      %v4058 = vadd.f32 0.0, %v4057
      %4059 = vmatmul.bf16.gmra.mxu0 %v3998
      %v4060 = vpop.f32.mrf.mxu0
      %v4061 = vadd.f32 0.0, %v4060
      %v4062 = vpop.f32.mrf.mxu0
      %v4063 = vadd.f32 0.0, %v4062
      %4064 = vmatmul.bf16.gmra.mxu0 %v4001
      %v4065 = vpop.f32.mrf.mxu0
      %v4066 = vadd.f32 0.0, %v4065
      %v4067 = vpop.f32.mrf.mxu0
      %v4068 = vadd.f32 0.0, %v4067
      %4069 = vmatmul.bf16.gmra.mxu0 %v4004
      %v4070 = vpop.f32.mrf.mxu0
      %v4071 = vadd.f32 0.0, %v4070
      %v4072 = vpop.f32.mrf.mxu0
      %v4073 = vadd.f32 0.0, %v4072
      %4074 = vmatmul.bf16.gmra.mxu0 %v4007
      %v4075 = vpop.f32.mrf.mxu0
      %v4076 = vadd.f32 0.0, %v4075
      %v4077 = vpop.f32.mrf.mxu0
      %v4078 = vadd.f32 0.0, %v4077
      %4079 = vmatmul.bf16.gmra.mxu0 %v4010
      %v4080 = vpop.f32.mrf.mxu0
      %v4081 = vadd.f32 0.0, %v4080
      %v4082 = vpop.f32.mrf.mxu0
      %v4083 = vadd.f32 0.0, %v4082
      %4084 = vmatmul.bf16.gmra.mxu0 %v4013
      %v4085 = vpop.f32.mrf.mxu0
      %v4086 = vadd.f32 0.0, %v4085
      %v4087 = vpop.f32.mrf.mxu0
      %v4088 = vadd.f32 0.0, %v4087
      %4089 = vmatmul.bf16.gmra.mxu0 %v4016
      %v4090 = vpop.f32.mrf.mxu0
      %v4091 = vadd.f32 0.0, %v4090
      %v4092 = vpop.f32.mrf.mxu0
      %v4093 = vadd.f32 0.0, %v4092
      %4094 = vmatmul.bf16.gmra.mxu0 %v4019
      %v4095 = vpop.f32.mrf.mxu0
      %v4096 = vadd.f32 0.0, %v4095
      %v4097 = vpop.f32.mrf.mxu0
      %v4098 = vadd.f32 0.0, %v4097
      %4099 = vmatmul.bf16.gmra.mxu0 %v4022
      %v4100 = vpop.f32.mrf.mxu0
      %v4101 = vadd.f32 0.0, %v4100
      %v4102 = vpop.f32.mrf.mxu0
      %v4103 = vadd.f32 0.0, %v4102
      %4104 = vmatmul.bf16.gmra.mxu0 %v4025
      %v4105 = vpop.f32.mrf.mxu0
      %v4106 = vadd.f32 0.0, %v4105
      %v4107 = vpop.f32.mrf.mxu0
      %v4108 = vadd.f32 0.0, %v4107
      %4109 = vmatmul.bf16.gmra.mxu0 %v4028
      %v4110 = vpop.f32.mrf.mxu0
      %v4111 = vadd.f32 0.0, %v4110
      %v4112 = vpop.f32.mrf.mxu0
      %v4113 = vadd.f32 0.0, %v4112
      %4114 = vmatmul.bf16.gmra.mxu0 %v4031
      %v4115 = vpop.f32.mrf.mxu0
      %v4116 = vadd.f32 0.0, %v4115
      %v4117 = vpop.f32.mrf.mxu0
      %v4118 = vadd.f32 0.0, %v4117
      %4119 = vmatmul.bf16.gmra.mxu0 %v4034
      %v4120 = vpop.f32.mrf.mxu0
      %v4121 = vadd.f32 0.0, %v4120
      %v4122 = vpop.f32.mrf.mxu0
      %v4123 = vadd.f32 0.0, %v4122
      %4124 = vdwg.mxu0
      %v4125 = vadd.f32 %v3395, %v4046
      %v4126 = vadd.f32 %v3396, %v4048
      %v4127 = vadd.f32 %v3397, %v4051
      %v4128 = vadd.f32 %v3398, %v4053
      %v4129 = vadd.f32 %v3399, %v4056
      %v4130 = vadd.f32 %v3400, %v4058
      %v4131 = vadd.f32 %v3401, %v4061
      %v4132 = vadd.f32 %v3402, %v4063
      %v4133 = vadd.f32 %v3403, %v4066
      %v4134 = vadd.f32 %v3404, %v4068
      %v4135 = vadd.f32 %v3405, %v4071
      %v4136 = vadd.f32 %v3406, %v4073
      %v4137 = vadd.f32 %v3407, %v4076
      %v4138 = vadd.f32 %v3408, %v4078
      %v4139 = vadd.f32 %v3409, %v4081
      %v4140 = vadd.f32 %v3410, %v4083
      %v4141 = vadd.f32 %v3411, %v4086
      %v4142 = vadd.f32 %v3412, %v4088
      %v4143 = vadd.f32 %v3413, %v4091
      %v4144 = vadd.f32 %v3414, %v4093
      %v4145 = vadd.f32 %v3415, %v4096
      %v4146 = vadd.f32 %v3416, %v4098
      %v4147 = vadd.f32 %v3417, %v4101
      %v4148 = vadd.f32 %v3418, %v4103
      %v4149 = vadd.f32 %v3419, %v4106
      %v4150 = vadd.f32 %v3420, %v4108
      %v4151 = vadd.f32 %v3421, %v4111
      %v4152 = vadd.f32 %v3422, %v4113
      %v4153 = vadd.f32 %v3423, %v4116
      %v4154 = vadd.f32 %v3424, %v4118
      %v4155 = vadd.f32 %v3425, %v4121
      %v4156 = vadd.f32 %v3426, %v4123
      %s4157 = scalar_lea.vmem %s2, 128
      %v4158 = vld [vmem:[%s4157] sm:$0xf]
      %v4159 = vld [vmem:[%s4157 + $0x4] sm:$0xf]
      %v4160 = vld [vmem:[%s4157 + $0x8] sm:$0xf]
      %v4161 = vld [vmem:[%s4157 + $0xc] sm:$0xf]
      %v4162 = vld [vmem:[%s4157 + $0x10] sm:$0xf]
      %v4163 = vld [vmem:[%s4157 + $0x14] sm:$0xf]
      %v4164 = vld [vmem:[%s4157 + $0x18] sm:$0xf]
      %v4165 = vld [vmem:[%s4157 + $0x1c] sm:$0xf]
      %v4198 = vunpack.c.l.b16 %v3428
      %v4199 = vunpack.c.l.b16 %v3430
      %v4200 = vunpack.c.l.b16 %v3432
      %v4201 = vunpack.c.l.b16 %v3434
      %v4202 = vunpack.c.l.b16 %v3436
      %v4203 = vunpack.c.l.b16 %v3438
      %v4204 = vunpack.c.l.b16 %v3440
      %v4205 = vunpack.c.l.b16 %v3442
      %v4206 = vunpack.c.l.b16 %v3444
      %v4207 = vunpack.c.l.b16 %v3446
      %v4208 = vunpack.c.l.b16 %v3448
      %v4209 = vunpack.c.l.b16 %v3450
      %v4210 = vunpack.c.l.b16 %v3452
      %v4211 = vunpack.c.l.b16 %v3454
      %v4212 = vunpack.c.l.b16 %v3456
      %v4213 = vunpack.c.l.b16 %v3458
      %v4214 = vunpack.c.l.b16 %v3460
      %v4215 = vunpack.c.l.b16 %v3462
      %v4216 = vunpack.c.l.b16 %v3464
      %v4217 = vunpack.c.l.b16 %v3466
      %v4218 = vunpack.c.l.b16 %v3468
      %v4219 = vunpack.c.l.b16 %v3470
      %v4220 = vunpack.c.l.b16 %v3472
      %v4221 = vunpack.c.l.b16 %v3474
      %v4222 = vunpack.c.l.b16 %v3476
      %v4223 = vunpack.c.l.b16 %v3478
      %v4224 = vunpack.c.l.b16 %v3480
      %v4225 = vunpack.c.l.b16 %v3482
      %v4226 = vunpack.c.l.b16 %v3484
      %v4227 = vunpack.c.l.b16 %v3486
      %v4228 = vunpack.c.l.b16 %v3488
      %v4229 = vunpack.c.l.b16 %v3490
      %v4230 = vpack.c.b16 %v4199, %v4198
      %v4231 = vpack.c.b16 %v4201, %v4200
      %v4232 = vpack.c.b16 %v4203, %v4202
      %v4233 = vpack.c.b16 %v4205, %v4204
      %v4234 = vpack.c.b16 %v4207, %v4206
      %v4235 = vpack.c.b16 %v4209, %v4208
      %v4236 = vpack.c.b16 %v4211, %v4210
      %v4237 = vpack.c.b16 %v4213, %v4212
      %v4238 = vpack.c.b16 %v4215, %v4214
      %v4239 = vpack.c.b16 %v4217, %v4216
      %v4240 = vpack.c.b16 %v4219, %v4218
      %v4241 = vpack.c.b16 %v4221, %v4220
      %v4242 = vpack.c.b16 %v4223, %v4222
      %v4243 = vpack.c.b16 %v4225, %v4224
      %v4244 = vpack.c.b16 %v4227, %v4226
      %v4245 = vpack.c.b16 %v4229, %v4228
      %v4254 = vunpack.c.l.b16 %v4158
      %v4255 = vunpack.c.l.b16 %v4159
      %v4256 = vunpack.c.l.b16 %v4160
      %v4257 = vunpack.c.l.b16 %v4161
      %v4258 = vunpack.c.l.b16 %v4162
      %v4259 = vunpack.c.l.b16 %v4163
      %v4260 = vunpack.c.l.b16 %v4164
      %v4261 = vunpack.c.l.b16 %v4165
      %v4262 = vpack.c.b16 %v4255, %v4254
      %v4263 = vpack.c.b16 %v4257, %v4256
      %v4264 = vpack.c.b16 %v4259, %v4258
      %v4265 = vpack.c.b16 %v4261, %v4260
      %v4271 = vsel %vm2315, %v4230, 0
      %v4274 = vsel %vm2315, %v4231, 0
      %v4277 = vsel %vm2315, %v4232, 0
      %v4280 = vsel %vm2315, %v4233, 0
      %v4283 = vsel %vm2315, %v4234, 0
      %v4286 = vsel %vm2315, %v4235, 0
      %v4289 = vsel %vm2315, %v4236, 0
      %v4292 = vsel %vm2315, %v4237, 0
      %v4295 = vsel %vm2315, %v4238, 0
      %v4298 = vsel %vm2315, %v4239, 0
      %v4301 = vsel %vm2315, %v4240, 0
      %v4304 = vsel %vm2315, %v4241, 0
      %v4307 = vsel %vm2315, %v4242, 0
      %v4310 = vsel %vm2315, %v4243, 0
      %v4313 = vsel %vm2315, %v4244, 0
      %v4316 = vsel %vm2315, %v4245, 0
      %4318 = vmatpush.bf16.msra.mxu0 0
      %4319 = vmatpush.bf16.msra.mxu0 0
      %4320 = vmatpush.bf16.msra.mxu0 0
      %4321 = vmatpush.bf16.msra.mxu0 0
      %4322 = vmatpush.bf16.msra.mxu0 %v4265
      %4323 = vmatpush.bf16.msra.mxu0 %v4264
      %4324 = vmatpush.bf16.msra.mxu0 %v4263
      %4325 = vmatpush.bf16.msra.mxu0 %v4262
      %4326 = vmatmul.bf16.gmra.mxu0 %v4271
      %v4327 = vpop.f32.mrf.mxu0
      %v4328 = vadd.f32 0.0, %v4327
      %v4329 = vpop.f32.mrf.mxu0
      %v4330 = vadd.f32 0.0, %v4329
      %4331 = vmatmul.bf16.gmra.mxu0 %v4274
      %v4332 = vpop.f32.mrf.mxu0
      %v4333 = vadd.f32 0.0, %v4332
      %v4334 = vpop.f32.mrf.mxu0
      %v4335 = vadd.f32 0.0, %v4334
      %4336 = vmatmul.bf16.gmra.mxu0 %v4277
      %v4337 = vpop.f32.mrf.mxu0
      %v4338 = vadd.f32 0.0, %v4337
      %v4339 = vpop.f32.mrf.mxu0
      %v4340 = vadd.f32 0.0, %v4339
      %4341 = vmatmul.bf16.gmra.mxu0 %v4280
      %v4342 = vpop.f32.mrf.mxu0
      %v4343 = vadd.f32 0.0, %v4342
      %v4344 = vpop.f32.mrf.mxu0
      %v4345 = vadd.f32 0.0, %v4344
      %4346 = vmatmul.bf16.gmra.mxu0 %v4283
      %v4347 = vpop.f32.mrf.mxu0
      %v4348 = vadd.f32 0.0, %v4347
      %v4349 = vpop.f32.mrf.mxu0
      %v4350 = vadd.f32 0.0, %v4349
      %4351 = vmatmul.bf16.gmra.mxu0 %v4286
      %v4352 = vpop.f32.mrf.mxu0
      %v4353 = vadd.f32 0.0, %v4352
      %v4354 = vpop.f32.mrf.mxu0
      %v4355 = vadd.f32 0.0, %v4354
      %4356 = vmatmul.bf16.gmra.mxu0 %v4289
      %v4357 = vpop.f32.mrf.mxu0
      %v4358 = vadd.f32 0.0, %v4357
      %v4359 = vpop.f32.mrf.mxu0
      %v4360 = vadd.f32 0.0, %v4359
      %4361 = vmatmul.bf16.gmra.mxu0 %v4292
      %v4362 = vpop.f32.mrf.mxu0
      %v4363 = vadd.f32 0.0, %v4362
      %v4364 = vpop.f32.mrf.mxu0
      %v4365 = vadd.f32 0.0, %v4364
      %4366 = vmatmul.bf16.gmra.mxu0 %v4295
      %v4367 = vpop.f32.mrf.mxu0
      %v4368 = vadd.f32 0.0, %v4367
      %v4369 = vpop.f32.mrf.mxu0
      %v4370 = vadd.f32 0.0, %v4369
      %4371 = vmatmul.bf16.gmra.mxu0 %v4298
      %v4372 = vpop.f32.mrf.mxu0
      %v4373 = vadd.f32 0.0, %v4372
      %v4374 = vpop.f32.mrf.mxu0
      %v4375 = vadd.f32 0.0, %v4374
      %4376 = vmatmul.bf16.gmra.mxu0 %v4301
      %v4377 = vpop.f32.mrf.mxu0
      %v4378 = vadd.f32 0.0, %v4377
      %v4379 = vpop.f32.mrf.mxu0
      %v4380 = vadd.f32 0.0, %v4379
      %4381 = vmatmul.bf16.gmra.mxu0 %v4304
      %v4382 = vpop.f32.mrf.mxu0
      %v4383 = vadd.f32 0.0, %v4382
      %v4384 = vpop.f32.mrf.mxu0
      %v4385 = vadd.f32 0.0, %v4384
      %4386 = vmatmul.bf16.gmra.mxu0 %v4307
      %v4387 = vpop.f32.mrf.mxu0
      %v4388 = vadd.f32 0.0, %v4387
      %v4389 = vpop.f32.mrf.mxu0
      %v4390 = vadd.f32 0.0, %v4389
      %4391 = vmatmul.bf16.gmra.mxu0 %v4310
      %v4392 = vpop.f32.mrf.mxu0
      %v4393 = vadd.f32 0.0, %v4392
      %v4394 = vpop.f32.mrf.mxu0
      %v4395 = vadd.f32 0.0, %v4394
      %4396 = vmatmul.bf16.gmra.mxu0 %v4313
      %v4397 = vpop.f32.mrf.mxu0
      %v4398 = vadd.f32 0.0, %v4397
      %v4399 = vpop.f32.mrf.mxu0
      %v4400 = vadd.f32 0.0, %v4399
      %4401 = vmatmul.bf16.gmra.mxu0 %v4316
      %v4402 = vpop.f32.mrf.mxu0
      %v4403 = vadd.f32 0.0, %v4402
      %v4404 = vpop.f32.mrf.mxu0
      %v4405 = vadd.f32 0.0, %v4404
      %4406 = vdwg.mxu0
      %v4407 = vadd.f32 %v4125, %v4328
      %v4408 = vadd.f32 %v4126, %v4330
      %v4409 = vadd.f32 %v4127, %v4333
      %v4410 = vadd.f32 %v4128, %v4335
      %v4411 = vadd.f32 %v4129, %v4338
      %v4412 = vadd.f32 %v4130, %v4340
      %v4413 = vadd.f32 %v4131, %v4343
      %v4414 = vadd.f32 %v4132, %v4345
      %v4415 = vadd.f32 %v4133, %v4348
      %v4416 = vadd.f32 %v4134, %v4350
      %v4417 = vadd.f32 %v4135, %v4353
      %v4418 = vadd.f32 %v4136, %v4355
      %v4419 = vadd.f32 %v4137, %v4358
      %v4420 = vadd.f32 %v4138, %v4360
      %v4421 = vadd.f32 %v4139, %v4363
      %v4422 = vadd.f32 %v4140, %v4365
      %v4423 = vadd.f32 %v4141, %v4368
      %v4424 = vadd.f32 %v4142, %v4370
      %v4425 = vadd.f32 %v4143, %v4373
      %v4426 = vadd.f32 %v4144, %v4375
      %v4427 = vadd.f32 %v4145, %v4378
      %v4428 = vadd.f32 %v4146, %v4380
      %v4429 = vadd.f32 %v4147, %v4383
      %v4430 = vadd.f32 %v4148, %v4385
      %v4431 = vadd.f32 %v4149, %v4388
      %v4432 = vadd.f32 %v4150, %v4390
      %v4433 = vadd.f32 %v4151, %v4393
      %v4434 = vadd.f32 %v4152, %v4395
      %v4435 = vadd.f32 %v4153, %v4398
      %v4436 = vadd.f32 %v4154, %v4400
      %v4437 = vadd.f32 %v4155, %v4403
      %v4438 = vadd.f32 %v4156, %v4405
      %v4439 = vld [vmem:[%s1477 + $0x8] sm:$0xf]
      %v4440 = vld [vmem:[%s1477 + $0xc] sm:$0x1]
      %v4441 = vld [vmem:[%s1477 + $0x18] sm:$0xf]
      %v4442 = vld [vmem:[%s1477 + $0x1c] sm:$0x1]
      %v4443 = vld [vmem:[%s1477 + $0x28] sm:$0xf]
      %v4444 = vld [vmem:[%s1477 + $0x2c] sm:$0x1]
      %v4445 = vld [vmem:[%s1477 + $0x38] sm:$0xf]
      %v4446 = vld [vmem:[%s1477 + $0x3c] sm:$0x1]
      %v4447 = vld [vmem:[%s1477 + $0x48] sm:$0xf]
      %v4448 = vld [vmem:[%s1477 + $0x4c] sm:$0x1]
      %v4449 = vld [vmem:[%s1477 + $0x58] sm:$0xf]
      %v4450 = vld [vmem:[%s1477 + $0x5c] sm:$0x1]
      %v4451 = vld [vmem:[%s1477 + $0x68] sm:$0xf]
      %v4452 = vld [vmem:[%s1477 + $0x6c] sm:$0x1]
      %v4453 = vld [vmem:[%s1477 + $0x78] sm:$0xf]
      %v4454 = vld [vmem:[%s1477 + $0x7c] sm:$0x1]
      %v4455 = vld [vmem:[%s1477 + $0xa8] sm:$0xf]
      %v4456 = vld [vmem:[%s1477 + $0xac] sm:$0x1]
      %v4457 = vld [vmem:[%s1477 + $0xb8] sm:$0xf]
      %v4458 = vld [vmem:[%s1477 + $0xbc] sm:$0x1]
      %v4459 = vld [vmem:[%s1477 + $0xc8] sm:$0xf]
      %v4460 = vld [vmem:[%s1477 + $0xcc] sm:$0x1]
      %v4461 = vld [vmem:[%s1477 + $0xd8] sm:$0xf]
      %v4462 = vld [vmem:[%s1477 + $0xdc] sm:$0x1]
      %v4463 = vld [vmem:[%s1477 + $0xe8] sm:$0xf]
      %v4464 = vld [vmem:[%s1477 + $0xec] sm:$0x1]
      %v4465 = vld [vmem:[%s1477 + $0xf8] sm:$0xf]
      %v4466 = vld [vmem:[%s1477 + $0xfc] sm:$0x1]
      %v4467 = vld [vmem:[%s1477 + $0x108] sm:$0xf]
      %v4468 = vld [vmem:[%s1477 + $0x10c] sm:$0x1]
      %v4469 = vld [vmem:[%s1477 + $0x118] sm:$0xf]
      %v4470 = vld [vmem:[%s1477 + $0x11c] sm:$0x1]
      %v4471 = vld [vmem:[%s1477 + $0x148] sm:$0xf]
      %v4472 = vld [vmem:[%s1477 + $0x14c] sm:$0x1]
      %v4473 = vld [vmem:[%s1477 + $0x158] sm:$0xf]
      %v4474 = vld [vmem:[%s1477 + $0x15c] sm:$0x1]
      %v4475 = vld [vmem:[%s1477 + $0x168] sm:$0xf]
      %v4476 = vld [vmem:[%s1477 + $0x16c] sm:$0x1]
      %v4477 = vld [vmem:[%s1477 + $0x178] sm:$0xf]
      %v4478 = vld [vmem:[%s1477 + $0x17c] sm:$0x1]
      %v4479 = vld [vmem:[%s1477 + $0x188] sm:$0xf]
      %v4480 = vld [vmem:[%s1477 + $0x18c] sm:$0x1]
      %v4481 = vld [vmem:[%s1477 + $0x198] sm:$0xf]
      %v4482 = vld [vmem:[%s1477 + $0x19c] sm:$0x1]
      %v4483 = vld [vmem:[%s1477 + $0x1a8] sm:$0xf]
      %v4484 = vld [vmem:[%s1477 + $0x1ac] sm:$0x1]
      %v4485 = vld [vmem:[%s1477 + $0x1b8] sm:$0xf]
      %v4486 = vld [vmem:[%s1477 + $0x1bc] sm:$0x1]
      %v4487 = vld [vmem:[%s1477 + $0x1e8] sm:$0xf]
      %v4488 = vld [vmem:[%s1477 + $0x1ec] sm:$0x1]
      %v4489 = vld [vmem:[%s1477 + $0x1f8] sm:$0xf]
      %v4490 = vld [vmem:[%s1477 + $0x1fc] sm:$0x1]
      %v4491 = vld [vmem:[%s1477 + $0x208] sm:$0xf]
      %v4492 = vld [vmem:[%s1477 + $0x20c] sm:$0x1]
      %v4493 = vld [vmem:[%s1477 + $0x218] sm:$0xf]
      %v4494 = vld [vmem:[%s1477 + $0x21c] sm:$0x1]
      %v4495 = vld [vmem:[%s1477 + $0x228] sm:$0xf]
      %v4496 = vld [vmem:[%s1477 + $0x22c] sm:$0x1]
      %v4497 = vld [vmem:[%s1477 + $0x238] sm:$0xf]
      %v4498 = vld [vmem:[%s1477 + $0x23c] sm:$0x1]
      %v4499 = vld [vmem:[%s1477 + $0x248] sm:$0xf]
      %v4500 = vld [vmem:[%s1477 + $0x24c] sm:$0x1]
      %v4501 = vld [vmem:[%s1477 + $0x258] sm:$0xf]
      %v4502 = vld [vmem:[%s1477 + $0x25c] sm:$0x1]
      %v4504 = vshrl.u32 %v4439, 16
      %v4506 = vrot.slane %v4504, 4
      %v4507 = vshll.u32 %v4439, 16
      %v4509 = vrot.slane %v4507, 5
      %v4510 = vor.u32 %v4506, %v4509
      %v4511 = vrot.slane %v4510, 4
      %v4513 = vshll.u32 %v4440, 16
      %v4515 = vrot.slane %v4513, 5
      %v4516 = vsel %vm2728, %v4511, %v4515
      %v4518 = vshrl.u32 %v4441, 16
      %v4520 = vrot.slane %v4518, 4
      %v4521 = vshll.u32 %v4441, 16
      %v4523 = vrot.slane %v4521, 5
      %v4524 = vor.u32 %v4520, %v4523
      %v4525 = vrot.slane %v4524, 4
      %v4527 = vshll.u32 %v4442, 16
      %v4529 = vrot.slane %v4527, 5
      %v4530 = vsel %vm2728, %v4525, %v4529
      %v4532 = vshrl.u32 %v4443, 16
      %v4534 = vrot.slane %v4532, 4
      %v4535 = vshll.u32 %v4443, 16
      %v4537 = vrot.slane %v4535, 5
      %v4538 = vor.u32 %v4534, %v4537
      %v4539 = vrot.slane %v4538, 4
      %v4541 = vshll.u32 %v4444, 16
      %v4543 = vrot.slane %v4541, 5
      %v4544 = vsel %vm2728, %v4539, %v4543
      %v4546 = vshrl.u32 %v4445, 16
      %v4548 = vrot.slane %v4546, 4
      %v4549 = vshll.u32 %v4445, 16
      %v4551 = vrot.slane %v4549, 5
      %v4552 = vor.u32 %v4548, %v4551
      %v4553 = vrot.slane %v4552, 4
      %v4555 = vshll.u32 %v4446, 16
      %v4557 = vrot.slane %v4555, 5
      %v4558 = vsel %vm2728, %v4553, %v4557
      %v4560 = vshrl.u32 %v4447, 16
      %v4562 = vrot.slane %v4560, 4
      %v4563 = vshll.u32 %v4447, 16
      %v4565 = vrot.slane %v4563, 5
      %v4566 = vor.u32 %v4562, %v4565
      %v4567 = vrot.slane %v4566, 4
      %v4569 = vshll.u32 %v4448, 16
      %v4571 = vrot.slane %v4569, 5
      %v4572 = vsel %vm2728, %v4567, %v4571
      %v4574 = vshrl.u32 %v4449, 16
      %v4576 = vrot.slane %v4574, 4
      %v4577 = vshll.u32 %v4449, 16
      %v4579 = vrot.slane %v4577, 5
      %v4580 = vor.u32 %v4576, %v4579
      %v4581 = vrot.slane %v4580, 4
      %v4583 = vshll.u32 %v4450, 16
      %v4585 = vrot.slane %v4583, 5
      %v4586 = vsel %vm2728, %v4581, %v4585
      %v4588 = vshrl.u32 %v4451, 16
      %v4590 = vrot.slane %v4588, 4
      %v4591 = vshll.u32 %v4451, 16
      %v4593 = vrot.slane %v4591, 5
      %v4594 = vor.u32 %v4590, %v4593
      %v4595 = vrot.slane %v4594, 4
      %v4597 = vshll.u32 %v4452, 16
      %v4599 = vrot.slane %v4597, 5
      %v4600 = vsel %vm2728, %v4595, %v4599
      %v4602 = vshrl.u32 %v4453, 16
      %v4604 = vrot.slane %v4602, 4
      %v4605 = vshll.u32 %v4453, 16
      %v4607 = vrot.slane %v4605, 5
      %v4608 = vor.u32 %v4604, %v4607
      %v4609 = vrot.slane %v4608, 4
      %v4611 = vshll.u32 %v4454, 16
      %v4613 = vrot.slane %v4611, 5
      %v4614 = vsel %vm2728, %v4609, %v4613
      %v4616 = vshrl.u32 %v4455, 16
      %v4618 = vrot.slane %v4616, 4
      %v4619 = vshll.u32 %v4455, 16
      %v4621 = vrot.slane %v4619, 5
      %v4622 = vor.u32 %v4618, %v4621
      %v4623 = vrot.slane %v4622, 4
      %v4625 = vshll.u32 %v4456, 16
      %v4627 = vrot.slane %v4625, 5
      %v4628 = vsel %vm2728, %v4623, %v4627
      %v4630 = vshrl.u32 %v4457, 16
      %v4632 = vrot.slane %v4630, 4
      %v4633 = vshll.u32 %v4457, 16
      %v4635 = vrot.slane %v4633, 5
      %v4636 = vor.u32 %v4632, %v4635
      %v4637 = vrot.slane %v4636, 4
      %v4639 = vshll.u32 %v4458, 16
      %v4641 = vrot.slane %v4639, 5
      %v4642 = vsel %vm2728, %v4637, %v4641
      %v4644 = vshrl.u32 %v4459, 16
      %v4646 = vrot.slane %v4644, 4
      %v4647 = vshll.u32 %v4459, 16
      %v4649 = vrot.slane %v4647, 5
      %v4650 = vor.u32 %v4646, %v4649
      %v4651 = vrot.slane %v4650, 4
      %v4653 = vshll.u32 %v4460, 16
      %v4655 = vrot.slane %v4653, 5
      %v4656 = vsel %vm2728, %v4651, %v4655
      %v4658 = vshrl.u32 %v4461, 16
      %v4660 = vrot.slane %v4658, 4
      %v4661 = vshll.u32 %v4461, 16
      %v4663 = vrot.slane %v4661, 5
      %v4664 = vor.u32 %v4660, %v4663
      %v4665 = vrot.slane %v4664, 4
      %v4667 = vshll.u32 %v4462, 16
      %v4669 = vrot.slane %v4667, 5
      %v4670 = vsel %vm2728, %v4665, %v4669
      %v4672 = vshrl.u32 %v4463, 16
      %v4674 = vrot.slane %v4672, 4
      %v4675 = vshll.u32 %v4463, 16
      %v4677 = vrot.slane %v4675, 5
      %v4678 = vor.u32 %v4674, %v4677
      %v4679 = vrot.slane %v4678, 4
      %v4681 = vshll.u32 %v4464, 16
      %v4683 = vrot.slane %v4681, 5
      %v4684 = vsel %vm2728, %v4679, %v4683
      %v4686 = vshrl.u32 %v4465, 16
      %v4688 = vrot.slane %v4686, 4
      %v4689 = vshll.u32 %v4465, 16
      %v4691 = vrot.slane %v4689, 5
      %v4692 = vor.u32 %v4688, %v4691
      %v4693 = vrot.slane %v4692, 4
      %v4695 = vshll.u32 %v4466, 16
      %v4697 = vrot.slane %v4695, 5
      %v4698 = vsel %vm2728, %v4693, %v4697
      %v4700 = vshrl.u32 %v4467, 16
      %v4702 = vrot.slane %v4700, 4
      %v4703 = vshll.u32 %v4467, 16
      %v4705 = vrot.slane %v4703, 5
      %v4706 = vor.u32 %v4702, %v4705
      %v4707 = vrot.slane %v4706, 4
      %v4709 = vshll.u32 %v4468, 16
      %v4711 = vrot.slane %v4709, 5
      %v4712 = vsel %vm2728, %v4707, %v4711
      %v4714 = vshrl.u32 %v4469, 16
      %v4716 = vrot.slane %v4714, 4
      %v4717 = vshll.u32 %v4469, 16
      %v4719 = vrot.slane %v4717, 5
      %v4720 = vor.u32 %v4716, %v4719
      %v4721 = vrot.slane %v4720, 4
      %v4723 = vshll.u32 %v4470, 16
      %v4725 = vrot.slane %v4723, 5
      %v4726 = vsel %vm2728, %v4721, %v4725
      %v4728 = vshrl.u32 %v4471, 16
      %v4730 = vrot.slane %v4728, 4
      %v4731 = vshll.u32 %v4471, 16
      %v4733 = vrot.slane %v4731, 5
      %v4734 = vor.u32 %v4730, %v4733
      %v4735 = vrot.slane %v4734, 4
      %v4737 = vshll.u32 %v4472, 16
      %v4739 = vrot.slane %v4737, 5
      %v4740 = vsel %vm2728, %v4735, %v4739
      %v4742 = vshrl.u32 %v4473, 16
      %v4744 = vrot.slane %v4742, 4
      %v4745 = vshll.u32 %v4473, 16
      %v4747 = vrot.slane %v4745, 5
      %v4748 = vor.u32 %v4744, %v4747
      %v4749 = vrot.slane %v4748, 4
      %v4751 = vshll.u32 %v4474, 16
      %v4753 = vrot.slane %v4751, 5
      %v4754 = vsel %vm2728, %v4749, %v4753
      %v4756 = vshrl.u32 %v4475, 16
      %v4758 = vrot.slane %v4756, 4
      %v4759 = vshll.u32 %v4475, 16
      %v4761 = vrot.slane %v4759, 5
      %v4762 = vor.u32 %v4758, %v4761
      %v4763 = vrot.slane %v4762, 4
      %v4765 = vshll.u32 %v4476, 16
      %v4767 = vrot.slane %v4765, 5
      %v4768 = vsel %vm2728, %v4763, %v4767
      %v4770 = vshrl.u32 %v4477, 16
      %v4772 = vrot.slane %v4770, 4
      %v4773 = vshll.u32 %v4477, 16
      %v4775 = vrot.slane %v4773, 5
      %v4776 = vor.u32 %v4772, %v4775
      %v4777 = vrot.slane %v4776, 4
      %v4779 = vshll.u32 %v4478, 16
      %v4781 = vrot.slane %v4779, 5
      %v4782 = vsel %vm2728, %v4777, %v4781
      %v4784 = vshrl.u32 %v4479, 16
      %v4786 = vrot.slane %v4784, 4
      %v4787 = vshll.u32 %v4479, 16
      %v4789 = vrot.slane %v4787, 5
      %v4790 = vor.u32 %v4786, %v4789
      %v4791 = vrot.slane %v4790, 4
      %v4793 = vshll.u32 %v4480, 16
      %v4795 = vrot.slane %v4793, 5
      %v4796 = vsel %vm2728, %v4791, %v4795
      %v4798 = vshrl.u32 %v4481, 16
      %v4800 = vrot.slane %v4798, 4
      %v4801 = vshll.u32 %v4481, 16
      %v4803 = vrot.slane %v4801, 5
      %v4804 = vor.u32 %v4800, %v4803
      %v4805 = vrot.slane %v4804, 4
      %v4807 = vshll.u32 %v4482, 16
      %v4809 = vrot.slane %v4807, 5
      %v4810 = vsel %vm2728, %v4805, %v4809
      %v4812 = vshrl.u32 %v4483, 16
      %v4814 = vrot.slane %v4812, 4
      %v4815 = vshll.u32 %v4483, 16
      %v4817 = vrot.slane %v4815, 5
      %v4818 = vor.u32 %v4814, %v4817
      %v4819 = vrot.slane %v4818, 4
      %v4821 = vshll.u32 %v4484, 16
      %v4823 = vrot.slane %v4821, 5
      %v4824 = vsel %vm2728, %v4819, %v4823
      %v4826 = vshrl.u32 %v4485, 16
      %v4828 = vrot.slane %v4826, 4
      %v4829 = vshll.u32 %v4485, 16
      %v4831 = vrot.slane %v4829, 5
      %v4832 = vor.u32 %v4828, %v4831
      %v4833 = vrot.slane %v4832, 4
      %v4835 = vshll.u32 %v4486, 16
      %v4837 = vrot.slane %v4835, 5
      %v4838 = vsel %vm2728, %v4833, %v4837
      %v4840 = vshrl.u32 %v4487, 16
      %v4842 = vrot.slane %v4840, 4
      %v4843 = vshll.u32 %v4487, 16
      %v4845 = vrot.slane %v4843, 5
      %v4846 = vor.u32 %v4842, %v4845
      %v4847 = vrot.slane %v4846, 4
      %v4849 = vshll.u32 %v4488, 16
      %v4851 = vrot.slane %v4849, 5
      %v4852 = vsel %vm2728, %v4847, %v4851
      %v4854 = vshrl.u32 %v4489, 16
      %v4856 = vrot.slane %v4854, 4
      %v4857 = vshll.u32 %v4489, 16
      %v4859 = vrot.slane %v4857, 5
      %v4860 = vor.u32 %v4856, %v4859
      %v4861 = vrot.slane %v4860, 4
      %v4863 = vshll.u32 %v4490, 16
      %v4865 = vrot.slane %v4863, 5
      %v4866 = vsel %vm2728, %v4861, %v4865
      %v4868 = vshrl.u32 %v4491, 16
      %v4870 = vrot.slane %v4868, 4
      %v4871 = vshll.u32 %v4491, 16
      %v4873 = vrot.slane %v4871, 5
      %v4874 = vor.u32 %v4870, %v4873
      %v4875 = vrot.slane %v4874, 4
      %v4877 = vshll.u32 %v4492, 16
      %v4879 = vrot.slane %v4877, 5
      %v4880 = vsel %vm2728, %v4875, %v4879
      %v4882 = vshrl.u32 %v4493, 16
      %v4884 = vrot.slane %v4882, 4
      %v4885 = vshll.u32 %v4493, 16
      %v4887 = vrot.slane %v4885, 5
      %v4888 = vor.u32 %v4884, %v4887
      %v4889 = vrot.slane %v4888, 4
      %v4891 = vshll.u32 %v4494, 16
      %v4893 = vrot.slane %v4891, 5
      %v4894 = vsel %vm2728, %v4889, %v4893
      %v4896 = vshrl.u32 %v4495, 16
      %v4898 = vrot.slane %v4896, 4
      %v4899 = vshll.u32 %v4495, 16
      %v4901 = vrot.slane %v4899, 5
      %v4902 = vor.u32 %v4898, %v4901
      %v4903 = vrot.slane %v4902, 4
      %v4905 = vshll.u32 %v4496, 16
      %v4907 = vrot.slane %v4905, 5
      %v4908 = vsel %vm2728, %v4903, %v4907
      %v4910 = vshrl.u32 %v4497, 16
      %v4912 = vrot.slane %v4910, 4
      %v4913 = vshll.u32 %v4497, 16
      %v4915 = vrot.slane %v4913, 5
      %v4916 = vor.u32 %v4912, %v4915
      %v4917 = vrot.slane %v4916, 4
      %v4919 = vshll.u32 %v4498, 16
      %v4921 = vrot.slane %v4919, 5
      %v4922 = vsel %vm2728, %v4917, %v4921
      %v4924 = vshrl.u32 %v4499, 16
      %v4926 = vrot.slane %v4924, 4
      %v4927 = vshll.u32 %v4499, 16
      %v4929 = vrot.slane %v4927, 5
      %v4930 = vor.u32 %v4926, %v4929
      %v4931 = vrot.slane %v4930, 4
      %v4933 = vshll.u32 %v4500, 16
      %v4935 = vrot.slane %v4933, 5
      %v4936 = vsel %vm2728, %v4931, %v4935
      %v4938 = vshrl.u32 %v4501, 16
      %v4940 = vrot.slane %v4938, 4
      %v4941 = vshll.u32 %v4501, 16
      %v4943 = vrot.slane %v4941, 5
      %v4944 = vor.u32 %v4940, %v4943
      %v4945 = vrot.slane %v4944, 4
      %v4947 = vshll.u32 %v4502, 16
      %v4949 = vrot.slane %v4947, 5
      %v4950 = vsel %vm2728, %v4945, %v4949
      %s4951 = scalar_lea.vmem %s2, 160
      %v4952 = vld [vmem:[%s4951] sm:$0xf]
      %v4953 = vld [vmem:[%s4951 + $0x4] sm:$0xf]
      %v4954 = vld [vmem:[%s4951 + $0x8] sm:$0xf]
      %v4955 = vld [vmem:[%s4951 + $0xc] sm:$0xf]
      %v4956 = vld [vmem:[%s4951 + $0x10] sm:$0xf]
      %v4957 = vld [vmem:[%s4951 + $0x14] sm:$0xf]
      %v4958 = vld [vmem:[%s4951 + $0x18] sm:$0xf]
      %v4959 = vld [vmem:[%s4951 + $0x1c] sm:$0xf]
      %v4960 = vunpack.c.l.b16 %v4516
      %v4961 = vunpack.c.l.b16 %v4530
      %v4962 = vunpack.c.l.b16 %v4544
      %v4963 = vunpack.c.l.b16 %v4558
      %v4964 = vunpack.c.l.b16 %v4572
      %v4965 = vunpack.c.l.b16 %v4586
      %v4966 = vunpack.c.l.b16 %v4600
      %v4967 = vunpack.c.l.b16 %v4614
      %v4968 = vunpack.c.l.b16 %v4628
      %v4969 = vunpack.c.l.b16 %v4642
      %v4970 = vunpack.c.l.b16 %v4656
      %v4971 = vunpack.c.l.b16 %v4670
      %v4972 = vunpack.c.l.b16 %v4684
      %v4973 = vunpack.c.l.b16 %v4698
      %v4974 = vunpack.c.l.b16 %v4712
      %v4975 = vunpack.c.l.b16 %v4726
      %v4976 = vunpack.c.l.b16 %v4740
      %v4977 = vunpack.c.l.b16 %v4754
      %v4978 = vunpack.c.l.b16 %v4768
      %v4979 = vunpack.c.l.b16 %v4782
      %v4980 = vunpack.c.l.b16 %v4796
      %v4981 = vunpack.c.l.b16 %v4810
      %v4982 = vunpack.c.l.b16 %v4824
      %v4983 = vunpack.c.l.b16 %v4838
      %v4984 = vunpack.c.l.b16 %v4852
      %v4985 = vunpack.c.l.b16 %v4866
      %v4986 = vunpack.c.l.b16 %v4880
      %v4987 = vunpack.c.l.b16 %v4894
      %v4988 = vunpack.c.l.b16 %v4908
      %v4989 = vunpack.c.l.b16 %v4922
      %v4990 = vunpack.c.l.b16 %v4936
      %v4991 = vunpack.c.l.b16 %v4950
      %v4992 = vpack.c.b16 %v4961, %v4960
      %v4993 = vpack.c.b16 %v4963, %v4962
      %v4994 = vpack.c.b16 %v4965, %v4964
      %v4995 = vpack.c.b16 %v4967, %v4966
      %v4996 = vpack.c.b16 %v4969, %v4968
      %v4997 = vpack.c.b16 %v4971, %v4970
      %v4998 = vpack.c.b16 %v4973, %v4972
      %v4999 = vpack.c.b16 %v4975, %v4974
      %v5000 = vpack.c.b16 %v4977, %v4976
      %v5001 = vpack.c.b16 %v4979, %v4978
      %v5002 = vpack.c.b16 %v4981, %v4980
      %v5003 = vpack.c.b16 %v4983, %v4982
      %v5004 = vpack.c.b16 %v4985, %v4984
      %v5005 = vpack.c.b16 %v4987, %v4986
      %v5006 = vpack.c.b16 %v4989, %v4988
      %v5007 = vpack.c.b16 %v4991, %v4990
      %v5016 = vunpack.c.l.b16 %v4952
      %v5017 = vunpack.c.l.b16 %v4953
      %v5018 = vunpack.c.l.b16 %v4954
      %v5019 = vunpack.c.l.b16 %v4955
      %v5020 = vunpack.c.l.b16 %v4956
      %v5021 = vunpack.c.l.b16 %v4957
      %v5022 = vunpack.c.l.b16 %v4958
      %v5023 = vunpack.c.l.b16 %v4959
      %v5024 = vpack.c.b16 %v5017, %v5016
      %v5025 = vpack.c.b16 %v5019, %v5018
      %v5026 = vpack.c.b16 %v5021, %v5020
      %v5027 = vpack.c.b16 %v5023, %v5022
      %v5033 = vsel %vm2315, %v4992, 0
      %v5036 = vsel %vm2315, %v4993, 0
      %v5039 = vsel %vm2315, %v4994, 0
      %v5042 = vsel %vm2315, %v4995, 0
      %v5045 = vsel %vm2315, %v4996, 0
      %v5048 = vsel %vm2315, %v4997, 0
      %v5051 = vsel %vm2315, %v4998, 0
      %v5054 = vsel %vm2315, %v4999, 0
      %v5057 = vsel %vm2315, %v5000, 0
      %v5060 = vsel %vm2315, %v5001, 0
      %v5063 = vsel %vm2315, %v5002, 0
      %v5066 = vsel %vm2315, %v5003, 0
      %v5069 = vsel %vm2315, %v5004, 0
      %v5072 = vsel %vm2315, %v5005, 0
      %v5075 = vsel %vm2315, %v5006, 0
      %v5078 = vsel %vm2315, %v5007, 0
      %5080 = vmatpush.bf16.msra.mxu0 0
      %5081 = vmatpush.bf16.msra.mxu0 0
      %5082 = vmatpush.bf16.msra.mxu0 0
      %5083 = vmatpush.bf16.msra.mxu0 0
      %5084 = vmatpush.bf16.msra.mxu0 %v5027
      %5085 = vmatpush.bf16.msra.mxu0 %v5026
      %5086 = vmatpush.bf16.msra.mxu0 %v5025
      %5087 = vmatpush.bf16.msra.mxu0 %v5024
      %5088 = vmatmul.bf16.gmra.mxu0 %v5033
      %v5089 = vpop.f32.mrf.mxu0
      %v5090 = vadd.f32 0.0, %v5089
      %v5091 = vpop.f32.mrf.mxu0
      %v5092 = vadd.f32 0.0, %v5091
      %5093 = vmatmul.bf16.gmra.mxu0 %v5036
      %v5094 = vpop.f32.mrf.mxu0
      %v5095 = vadd.f32 0.0, %v5094
      %v5096 = vpop.f32.mrf.mxu0
      %v5097 = vadd.f32 0.0, %v5096
      %5098 = vmatmul.bf16.gmra.mxu0 %v5039
      %v5099 = vpop.f32.mrf.mxu0
      %v5100 = vadd.f32 0.0, %v5099
      %v5101 = vpop.f32.mrf.mxu0
      %v5102 = vadd.f32 0.0, %v5101
      %5103 = vmatmul.bf16.gmra.mxu0 %v5042
      %v5104 = vpop.f32.mrf.mxu0
      %v5105 = vadd.f32 0.0, %v5104
      %v5106 = vpop.f32.mrf.mxu0
      %v5107 = vadd.f32 0.0, %v5106
      %5108 = vmatmul.bf16.gmra.mxu0 %v5045
      %v5109 = vpop.f32.mrf.mxu0
      %v5110 = vadd.f32 0.0, %v5109
      %v5111 = vpop.f32.mrf.mxu0
      %v5112 = vadd.f32 0.0, %v5111
      %5113 = vmatmul.bf16.gmra.mxu0 %v5048
      %v5114 = vpop.f32.mrf.mxu0
      %v5115 = vadd.f32 0.0, %v5114
      %v5116 = vpop.f32.mrf.mxu0
      %v5117 = vadd.f32 0.0, %v5116
      %5118 = vmatmul.bf16.gmra.mxu0 %v5051
      %v5119 = vpop.f32.mrf.mxu0
      %v5120 = vadd.f32 0.0, %v5119
      %v5121 = vpop.f32.mrf.mxu0
      %v5122 = vadd.f32 0.0, %v5121
      %5123 = vmatmul.bf16.gmra.mxu0 %v5054
      %v5124 = vpop.f32.mrf.mxu0
      %v5125 = vadd.f32 0.0, %v5124
      %v5126 = vpop.f32.mrf.mxu0
      %v5127 = vadd.f32 0.0, %v5126
      %5128 = vmatmul.bf16.gmra.mxu0 %v5057
      %v5129 = vpop.f32.mrf.mxu0
      %v5130 = vadd.f32 0.0, %v5129
      %v5131 = vpop.f32.mrf.mxu0
      %v5132 = vadd.f32 0.0, %v5131
      %5133 = vmatmul.bf16.gmra.mxu0 %v5060
      %v5134 = vpop.f32.mrf.mxu0
      %v5135 = vadd.f32 0.0, %v5134
      %v5136 = vpop.f32.mrf.mxu0
      %v5137 = vadd.f32 0.0, %v5136
      %5138 = vmatmul.bf16.gmra.mxu0 %v5063
      %v5139 = vpop.f32.mrf.mxu0
      %v5140 = vadd.f32 0.0, %v5139
      %v5141 = vpop.f32.mrf.mxu0
      %v5142 = vadd.f32 0.0, %v5141
      %5143 = vmatmul.bf16.gmra.mxu0 %v5066
      %v5144 = vpop.f32.mrf.mxu0
      %v5145 = vadd.f32 0.0, %v5144
      %v5146 = vpop.f32.mrf.mxu0
      %v5147 = vadd.f32 0.0, %v5146
      %5148 = vmatmul.bf16.gmra.mxu0 %v5069
      %v5149 = vpop.f32.mrf.mxu0
      %v5150 = vadd.f32 0.0, %v5149
      %v5151 = vpop.f32.mrf.mxu0
      %v5152 = vadd.f32 0.0, %v5151
      %5153 = vmatmul.bf16.gmra.mxu0 %v5072
      %v5154 = vpop.f32.mrf.mxu0
      %v5155 = vadd.f32 0.0, %v5154
      %v5156 = vpop.f32.mrf.mxu0
      %v5157 = vadd.f32 0.0, %v5156
      %5158 = vmatmul.bf16.gmra.mxu0 %v5075
      %v5159 = vpop.f32.mrf.mxu0
      %v5160 = vadd.f32 0.0, %v5159
      %v5161 = vpop.f32.mrf.mxu0
      %v5162 = vadd.f32 0.0, %v5161
      %5163 = vmatmul.bf16.gmra.mxu0 %v5078
      %v5164 = vpop.f32.mrf.mxu0
      %v5165 = vadd.f32 0.0, %v5164
      %v5166 = vpop.f32.mrf.mxu0
      %v5167 = vadd.f32 0.0, %v5166
      %5168 = vdwg.mxu0
      %v5169 = vadd.f32 %v4407, %v5090
      %v5170 = vadd.f32 %v4408, %v5092
      %v5171 = vadd.f32 %v4409, %v5095
      %v5172 = vadd.f32 %v4410, %v5097
      %v5173 = vadd.f32 %v4411, %v5100
      %v5174 = vadd.f32 %v4412, %v5102
      %v5175 = vadd.f32 %v4413, %v5105
      %v5176 = vadd.f32 %v4414, %v5107
      %v5177 = vadd.f32 %v4415, %v5110
      %v5178 = vadd.f32 %v4416, %v5112
      %v5179 = vadd.f32 %v4417, %v5115
      %v5180 = vadd.f32 %v4418, %v5117
      %v5181 = vadd.f32 %v4419, %v5120
      %v5182 = vadd.f32 %v4420, %v5122
      %v5183 = vadd.f32 %v4421, %v5125
      %v5184 = vadd.f32 %v4422, %v5127
      %v5185 = vadd.f32 %v4423, %v5130
      %v5186 = vadd.f32 %v4424, %v5132
      %v5187 = vadd.f32 %v4425, %v5135
      %v5188 = vadd.f32 %v4426, %v5137
      %v5189 = vadd.f32 %v4427, %v5140
      %v5190 = vadd.f32 %v4428, %v5142
      %v5191 = vadd.f32 %v4429, %v5145
      %v5192 = vadd.f32 %v4430, %v5147
      %v5193 = vadd.f32 %v4431, %v5150
      %v5194 = vadd.f32 %v4432, %v5152
      %v5195 = vadd.f32 %v4433, %v5155
      %v5196 = vadd.f32 %v4434, %v5157
      %v5197 = vadd.f32 %v4435, %v5160
      %v5198 = vadd.f32 %v4436, %v5162
      %v5199 = vadd.f32 %v4437, %v5165
      %v5200 = vadd.f32 %v4438, %v5167
      %s5201 = scalar_lea.vmem [#allocation2], 32
      %v5202 = vld [vmem:[%s5201 + $0x4] sm:$0x8]
      %v5203 = vld [vmem:[%s5201 + $0x8] sm:$0xf]
      %v5204 = vld [vmem:[%s5201 + $0x14] sm:$0x8]
      %v5205 = vld [vmem:[%s5201 + $0x18] sm:$0xf]
      %v5206 = vld [vmem:[%s5201 + $0x24] sm:$0x8]
      %v5207 = vld [vmem:[%s5201 + $0x28] sm:$0xf]
      %v5208 = vld [vmem:[%s5201 + $0x34] sm:$0x8]
      %v5209 = vld [vmem:[%s5201 + $0x38] sm:$0xf]
      %v5210 = vld [vmem:[%s5201 + $0x44] sm:$0x8]
      %v5211 = vld [vmem:[%s5201 + $0x48] sm:$0xf]
      %v5212 = vld [vmem:[%s5201 + $0x54] sm:$0x8]
      %v5213 = vld [vmem:[%s5201 + $0x58] sm:$0xf]
      %v5214 = vld [vmem:[%s5201 + $0x64] sm:$0x8]
      %v5215 = vld [vmem:[%s5201 + $0x68] sm:$0xf]
      %v5216 = vld [vmem:[%s5201 + $0x74] sm:$0x8]
      %v5217 = vld [vmem:[%s5201 + $0x78] sm:$0xf]
      %v5218 = vld [vmem:[%s5201 + $0xa4] sm:$0x8]
      %v5219 = vld [vmem:[%s5201 + $0xa8] sm:$0xf]
      %v5220 = vld [vmem:[%s5201 + $0xb4] sm:$0x8]
      %v5221 = vld [vmem:[%s5201 + $0xb8] sm:$0xf]
      %v5222 = vld [vmem:[%s5201 + $0xc4] sm:$0x8]
      %v5223 = vld [vmem:[%s5201 + $0xc8] sm:$0xf]
      %v5224 = vld [vmem:[%s5201 + $0xd4] sm:$0x8]
      %v5225 = vld [vmem:[%s5201 + $0xd8] sm:$0xf]
      %v5226 = vld [vmem:[%s5201 + $0xe4] sm:$0x8]
      %v5227 = vld [vmem:[%s5201 + $0xe8] sm:$0xf]
      %v5228 = vld [vmem:[%s5201 + $0xf4] sm:$0x8]
      %v5229 = vld [vmem:[%s5201 + $0xf8] sm:$0xf]
      %v5230 = vld [vmem:[%s5201 + $0x104] sm:$0x8]
      %v5231 = vld [vmem:[%s5201 + $0x108] sm:$0xf]
      %v5232 = vld [vmem:[%s5201 + $0x114] sm:$0x8]
      %v5233 = vld [vmem:[%s5201 + $0x118] sm:$0xf]
      %v5234 = vld [vmem:[%s5201 + $0x144] sm:$0x8]
      %v5235 = vld [vmem:[%s5201 + $0x148] sm:$0xf]
      %v5236 = vld [vmem:[%s5201 + $0x154] sm:$0x8]
      %v5237 = vld [vmem:[%s5201 + $0x158] sm:$0xf]
      %v5238 = vld [vmem:[%s5201 + $0x164] sm:$0x8]
      %v5239 = vld [vmem:[%s5201 + $0x168] sm:$0xf]
      %v5240 = vld [vmem:[%s5201 + $0x174] sm:$0x8]
      %v5241 = vld [vmem:[%s5201 + $0x178] sm:$0xf]
      %v5242 = vld [vmem:[%s5201 + $0x184] sm:$0x8]
      %v5243 = vld [vmem:[%s5201 + $0x188] sm:$0xf]
      %v5244 = vld [vmem:[%s5201 + $0x194] sm:$0x8]
      %v5245 = vld [vmem:[%s5201 + $0x198] sm:$0xf]
      %v5246 = vld [vmem:[%s5201 + $0x1a4] sm:$0x8]
      %v5247 = vld [vmem:[%s5201 + $0x1a8] sm:$0xf]
      %v5248 = vld [vmem:[%s5201 + $0x1b4] sm:$0x8]
      %v5249 = vld [vmem:[%s5201 + $0x1b8] sm:$0xf]
      %v5250 = vld [vmem:[%s5201 + $0x1e4] sm:$0x8]
      %v5251 = vld [vmem:[%s5201 + $0x1e8] sm:$0xf]
      %v5252 = vld [vmem:[%s5201 + $0x1f4] sm:$0x8]
      %v5253 = vld [vmem:[%s5201 + $0x1f8] sm:$0xf]
      %v5254 = vld [vmem:[%s5201 + $0x204] sm:$0x8]
      %v5255 = vld [vmem:[%s5201 + $0x208] sm:$0xf]
      %v5256 = vld [vmem:[%s5201 + $0x214] sm:$0x8]
      %v5257 = vld [vmem:[%s5201 + $0x218] sm:$0xf]
      %v5258 = vld [vmem:[%s5201 + $0x224] sm:$0x8]
      %v5259 = vld [vmem:[%s5201 + $0x228] sm:$0xf]
      %v5260 = vld [vmem:[%s5201 + $0x234] sm:$0x8]
      %v5261 = vld [vmem:[%s5201 + $0x238] sm:$0xf]
      %v5262 = vld [vmem:[%s5201 + $0x244] sm:$0x8]
      %v5263 = vld [vmem:[%s5201 + $0x248] sm:$0xf]
      %v5264 = vld [vmem:[%s5201 + $0x254] sm:$0x8]
      %v5265 = vld [vmem:[%s5201 + $0x258] sm:$0xf]
      %v5267 = vshrl.u32 %v5202, 16
      %v5269 = vrot.slane %v5267, 7
      %v5270 = vrot.slane %v5269, 4
      %v5272 = vshrl.u32 %v5203, 16
      %v5274 = vrot.slane %v5272, 7
      %v5275 = vshll.u32 %v5203, 16
      %v5277 = vor.u32 %v5274, %v5275
      %v5278 = vsel %vm1777, %v5270, %v5277
      %v5280 = vshrl.u32 %v5204, 16
      %v5282 = vrot.slane %v5280, 7
      %v5283 = vrot.slane %v5282, 4
      %v5285 = vshrl.u32 %v5205, 16
      %v5287 = vrot.slane %v5285, 7
      %v5288 = vshll.u32 %v5205, 16
      %v5290 = vor.u32 %v5287, %v5288
      %v5291 = vsel %vm1777, %v5283, %v5290
      %v5293 = vshrl.u32 %v5206, 16
      %v5295 = vrot.slane %v5293, 7
      %v5296 = vrot.slane %v5295, 4
      %v5298 = vshrl.u32 %v5207, 16
      %v5300 = vrot.slane %v5298, 7
      %v5301 = vshll.u32 %v5207, 16
      %v5303 = vor.u32 %v5300, %v5301
      %v5304 = vsel %vm1777, %v5296, %v5303
      %v5306 = vshrl.u32 %v5208, 16
      %v5308 = vrot.slane %v5306, 7
      %v5309 = vrot.slane %v5308, 4
      %v5311 = vshrl.u32 %v5209, 16
      %v5313 = vrot.slane %v5311, 7
      %v5314 = vshll.u32 %v5209, 16
      %v5316 = vor.u32 %v5313, %v5314
      %v5317 = vsel %vm1777, %v5309, %v5316
      %v5319 = vshrl.u32 %v5210, 16
      %v5321 = vrot.slane %v5319, 7
      %v5322 = vrot.slane %v5321, 4
      %v5324 = vshrl.u32 %v5211, 16
      %v5326 = vrot.slane %v5324, 7
      %v5327 = vshll.u32 %v5211, 16
      %v5329 = vor.u32 %v5326, %v5327
      %v5330 = vsel %vm1777, %v5322, %v5329
      %v5332 = vshrl.u32 %v5212, 16
      %v5334 = vrot.slane %v5332, 7
      %v5335 = vrot.slane %v5334, 4
      %v5337 = vshrl.u32 %v5213, 16
      %v5339 = vrot.slane %v5337, 7
      %v5340 = vshll.u32 %v5213, 16
      %v5342 = vor.u32 %v5339, %v5340
      %v5343 = vsel %vm1777, %v5335, %v5342
      %v5345 = vshrl.u32 %v5214, 16
      %v5347 = vrot.slane %v5345, 7
      %v5348 = vrot.slane %v5347, 4
      %v5350 = vshrl.u32 %v5215, 16
      %v5352 = vrot.slane %v5350, 7
      %v5353 = vshll.u32 %v5215, 16
      %v5355 = vor.u32 %v5352, %v5353
      %v5356 = vsel %vm1777, %v5348, %v5355
      %v5358 = vshrl.u32 %v5216, 16
      %v5360 = vrot.slane %v5358, 7
      %v5361 = vrot.slane %v5360, 4
      %v5363 = vshrl.u32 %v5217, 16
      %v5365 = vrot.slane %v5363, 7
      %v5366 = vshll.u32 %v5217, 16
      %v5368 = vor.u32 %v5365, %v5366
      %v5369 = vsel %vm1777, %v5361, %v5368
      %v5371 = vshrl.u32 %v5218, 16
      %v5373 = vrot.slane %v5371, 7
      %v5374 = vrot.slane %v5373, 4
      %v5376 = vshrl.u32 %v5219, 16
      %v5378 = vrot.slane %v5376, 7
      %v5379 = vshll.u32 %v5219, 16
      %v5381 = vor.u32 %v5378, %v5379
      %v5382 = vsel %vm1777, %v5374, %v5381
      %v5384 = vshrl.u32 %v5220, 16
      %v5386 = vrot.slane %v5384, 7
      %v5387 = vrot.slane %v5386, 4
      %v5389 = vshrl.u32 %v5221, 16
      %v5391 = vrot.slane %v5389, 7
      %v5392 = vshll.u32 %v5221, 16
      %v5394 = vor.u32 %v5391, %v5392
      %v5395 = vsel %vm1777, %v5387, %v5394
      %v5397 = vshrl.u32 %v5222, 16
      %v5399 = vrot.slane %v5397, 7
      %v5400 = vrot.slane %v5399, 4
      %v5402 = vshrl.u32 %v5223, 16
      %v5404 = vrot.slane %v5402, 7
      %v5405 = vshll.u32 %v5223, 16
      %v5407 = vor.u32 %v5404, %v5405
      %v5408 = vsel %vm1777, %v5400, %v5407
      %v5410 = vshrl.u32 %v5224, 16
      %v5412 = vrot.slane %v5410, 7
      %v5413 = vrot.slane %v5412, 4
      %v5415 = vshrl.u32 %v5225, 16
      %v5417 = vrot.slane %v5415, 7
      %v5418 = vshll.u32 %v5225, 16
      %v5420 = vor.u32 %v5417, %v5418
      %v5421 = vsel %vm1777, %v5413, %v5420
      %v5423 = vshrl.u32 %v5226, 16
      %v5425 = vrot.slane %v5423, 7
      %v5426 = vrot.slane %v5425, 4
      %v5428 = vshrl.u32 %v5227, 16
      %v5430 = vrot.slane %v5428, 7
      %v5431 = vshll.u32 %v5227, 16
      %v5433 = vor.u32 %v5430, %v5431
      %v5434 = vsel %vm1777, %v5426, %v5433
      %v5436 = vshrl.u32 %v5228, 16
      %v5438 = vrot.slane %v5436, 7
      %v5439 = vrot.slane %v5438, 4
      %v5441 = vshrl.u32 %v5229, 16
      %v5443 = vrot.slane %v5441, 7
      %v5444 = vshll.u32 %v5229, 16
      %v5446 = vor.u32 %v5443, %v5444
      %v5447 = vsel %vm1777, %v5439, %v5446
      %v5449 = vshrl.u32 %v5230, 16
      %v5451 = vrot.slane %v5449, 7
      %v5452 = vrot.slane %v5451, 4
      %v5454 = vshrl.u32 %v5231, 16
      %v5456 = vrot.slane %v5454, 7
      %v5457 = vshll.u32 %v5231, 16
      %v5459 = vor.u32 %v5456, %v5457
      %v5460 = vsel %vm1777, %v5452, %v5459
      %v5462 = vshrl.u32 %v5232, 16
      %v5464 = vrot.slane %v5462, 7
      %v5465 = vrot.slane %v5464, 4
      %v5467 = vshrl.u32 %v5233, 16
      %v5469 = vrot.slane %v5467, 7
      %v5470 = vshll.u32 %v5233, 16
      %v5472 = vor.u32 %v5469, %v5470
      %v5473 = vsel %vm1777, %v5465, %v5472
      %v5475 = vshrl.u32 %v5234, 16
      %v5477 = vrot.slane %v5475, 7
      %v5478 = vrot.slane %v5477, 4
      %v5480 = vshrl.u32 %v5235, 16
      %v5482 = vrot.slane %v5480, 7
      %v5483 = vshll.u32 %v5235, 16
      %v5485 = vor.u32 %v5482, %v5483
      %v5486 = vsel %vm1777, %v5478, %v5485
      %v5488 = vshrl.u32 %v5236, 16
      %v5490 = vrot.slane %v5488, 7
      %v5491 = vrot.slane %v5490, 4
      %v5493 = vshrl.u32 %v5237, 16
      %v5495 = vrot.slane %v5493, 7
      %v5496 = vshll.u32 %v5237, 16
      %v5498 = vor.u32 %v5495, %v5496
      %v5499 = vsel %vm1777, %v5491, %v5498
      %v5501 = vshrl.u32 %v5238, 16
      %v5503 = vrot.slane %v5501, 7
      %v5504 = vrot.slane %v5503, 4
      %v5506 = vshrl.u32 %v5239, 16
      %v5508 = vrot.slane %v5506, 7
      %v5509 = vshll.u32 %v5239, 16
      %v5511 = vor.u32 %v5508, %v5509
      %v5512 = vsel %vm1777, %v5504, %v5511
      %v5514 = vshrl.u32 %v5240, 16
      %v5516 = vrot.slane %v5514, 7
      %v5517 = vrot.slane %v5516, 4
      %v5519 = vshrl.u32 %v5241, 16
      %v5521 = vrot.slane %v5519, 7
      %v5522 = vshll.u32 %v5241, 16
      %v5524 = vor.u32 %v5521, %v5522
      %v5525 = vsel %vm1777, %v5517, %v5524
      %v5527 = vshrl.u32 %v5242, 16
      %v5529 = vrot.slane %v5527, 7
      %v5530 = vrot.slane %v5529, 4
      %v5532 = vshrl.u32 %v5243, 16
      %v5534 = vrot.slane %v5532, 7
      %v5535 = vshll.u32 %v5243, 16
      %v5537 = vor.u32 %v5534, %v5535
      %v5538 = vsel %vm1777, %v5530, %v5537
      %v5540 = vshrl.u32 %v5244, 16
      %v5542 = vrot.slane %v5540, 7
      %v5543 = vrot.slane %v5542, 4
      %v5545 = vshrl.u32 %v5245, 16
      %v5547 = vrot.slane %v5545, 7
      %v5548 = vshll.u32 %v5245, 16
      %v5550 = vor.u32 %v5547, %v5548
      %v5551 = vsel %vm1777, %v5543, %v5550
      %v5553 = vshrl.u32 %v5246, 16
      %v5555 = vrot.slane %v5553, 7
      %v5556 = vrot.slane %v5555, 4
      %v5558 = vshrl.u32 %v5247, 16
      %v5560 = vrot.slane %v5558, 7
      %v5561 = vshll.u32 %v5247, 16
      %v5563 = vor.u32 %v5560, %v5561
      %v5564 = vsel %vm1777, %v5556, %v5563
      %v5566 = vshrl.u32 %v5248, 16
      %v5568 = vrot.slane %v5566, 7
      %v5569 = vrot.slane %v5568, 4
      %v5571 = vshrl.u32 %v5249, 16
      %v5573 = vrot.slane %v5571, 7
      %v5574 = vshll.u32 %v5249, 16
      %v5576 = vor.u32 %v5573, %v5574
      %v5577 = vsel %vm1777, %v5569, %v5576
      %v5579 = vshrl.u32 %v5250, 16
      %v5581 = vrot.slane %v5579, 7
      %v5582 = vrot.slane %v5581, 4
      %v5584 = vshrl.u32 %v5251, 16
      %v5586 = vrot.slane %v5584, 7
      %v5587 = vshll.u32 %v5251, 16
      %v5589 = vor.u32 %v5586, %v5587
      %v5590 = vsel %vm1777, %v5582, %v5589
      %v5592 = vshrl.u32 %v5252, 16
      %v5594 = vrot.slane %v5592, 7
      %v5595 = vrot.slane %v5594, 4
      %v5597 = vshrl.u32 %v5253, 16
      %v5599 = vrot.slane %v5597, 7
      %v5600 = vshll.u32 %v5253, 16
      %v5602 = vor.u32 %v5599, %v5600
      %v5603 = vsel %vm1777, %v5595, %v5602
      %v5605 = vshrl.u32 %v5254, 16
      %v5607 = vrot.slane %v5605, 7
      %v5608 = vrot.slane %v5607, 4
      %v5610 = vshrl.u32 %v5255, 16
      %v5612 = vrot.slane %v5610, 7
      %v5613 = vshll.u32 %v5255, 16
      %v5615 = vor.u32 %v5612, %v5613
      %v5616 = vsel %vm1777, %v5608, %v5615
      %v5618 = vshrl.u32 %v5256, 16
      %v5620 = vrot.slane %v5618, 7
      %v5621 = vrot.slane %v5620, 4
      %v5623 = vshrl.u32 %v5257, 16
      %v5625 = vrot.slane %v5623, 7
      %v5626 = vshll.u32 %v5257, 16
      %v5628 = vor.u32 %v5625, %v5626
      %v5629 = vsel %vm1777, %v5621, %v5628
      %v5631 = vshrl.u32 %v5258, 16
      %v5633 = vrot.slane %v5631, 7
      %v5634 = vrot.slane %v5633, 4
      %v5636 = vshrl.u32 %v5259, 16
      %v5638 = vrot.slane %v5636, 7
      %v5639 = vshll.u32 %v5259, 16
      %v5641 = vor.u32 %v5638, %v5639
      %v5642 = vsel %vm1777, %v5634, %v5641
      %v5644 = vshrl.u32 %v5260, 16
      %v5646 = vrot.slane %v5644, 7
      %v5647 = vrot.slane %v5646, 4
      %v5649 = vshrl.u32 %v5261, 16
      %v5651 = vrot.slane %v5649, 7
      %v5652 = vshll.u32 %v5261, 16
      %v5654 = vor.u32 %v5651, %v5652
      %v5655 = vsel %vm1777, %v5647, %v5654
      %v5657 = vshrl.u32 %v5262, 16
      %v5659 = vrot.slane %v5657, 7
      %v5660 = vrot.slane %v5659, 4
      %v5662 = vshrl.u32 %v5263, 16
      %v5664 = vrot.slane %v5662, 7
      %v5665 = vshll.u32 %v5263, 16
      %v5667 = vor.u32 %v5664, %v5665
      %v5668 = vsel %vm1777, %v5660, %v5667
      %v5670 = vshrl.u32 %v5264, 16
      %v5672 = vrot.slane %v5670, 7
      %v5673 = vrot.slane %v5672, 4
      %v5675 = vshrl.u32 %v5265, 16
      %v5677 = vrot.slane %v5675, 7
      %v5678 = vshll.u32 %v5265, 16
      %v5680 = vor.u32 %v5677, %v5678
      %v5681 = vsel %vm1777, %v5673, %v5680
      %s5682 = scalar_lea.vmem %s2, 192
      %v5683 = vld [vmem:[%s5682] sm:$0xf]
      %v5684 = vld [vmem:[%s5682 + $0x4] sm:$0xf]
      %v5685 = vld [vmem:[%s5682 + $0x8] sm:$0xf]
      %v5686 = vld [vmem:[%s5682 + $0xc] sm:$0xf]
      %v5687 = vld [vmem:[%s5682 + $0x10] sm:$0xf]
      %v5688 = vld [vmem:[%s5682 + $0x14] sm:$0xf]
      %v5689 = vld [vmem:[%s5682 + $0x18] sm:$0xf]
      %v5690 = vld [vmem:[%s5682 + $0x1c] sm:$0xf]
      %v5691 = vunpack.c.l.b16 %v5278
      %v5692 = vunpack.c.l.b16 %v5291
      %v5693 = vunpack.c.l.b16 %v5304
      %v5694 = vunpack.c.l.b16 %v5317
      %v5695 = vunpack.c.l.b16 %v5330
      %v5696 = vunpack.c.l.b16 %v5343
      %v5697 = vunpack.c.l.b16 %v5356
      %v5698 = vunpack.c.l.b16 %v5369
      %v5699 = vunpack.c.l.b16 %v5382
      %v5700 = vunpack.c.l.b16 %v5395
      %v5701 = vunpack.c.l.b16 %v5408
      %v5702 = vunpack.c.l.b16 %v5421
      %v5703 = vunpack.c.l.b16 %v5434
      %v5704 = vunpack.c.l.b16 %v5447
      %v5705 = vunpack.c.l.b16 %v5460
      %v5706 = vunpack.c.l.b16 %v5473
      %v5707 = vunpack.c.l.b16 %v5486
      %v5708 = vunpack.c.l.b16 %v5499
      %v5709 = vunpack.c.l.b16 %v5512
      %v5710 = vunpack.c.l.b16 %v5525
      %v5711 = vunpack.c.l.b16 %v5538
      %v5712 = vunpack.c.l.b16 %v5551
      %v5713 = vunpack.c.l.b16 %v5564
      %v5714 = vunpack.c.l.b16 %v5577
      %v5715 = vunpack.c.l.b16 %v5590
      %v5716 = vunpack.c.l.b16 %v5603
      %v5717 = vunpack.c.l.b16 %v5616
      %v5718 = vunpack.c.l.b16 %v5629
      %v5719 = vunpack.c.l.b16 %v5642
      %v5720 = vunpack.c.l.b16 %v5655
      %v5721 = vunpack.c.l.b16 %v5668
      %v5722 = vunpack.c.l.b16 %v5681
      %v5723 = vpack.c.b16 %v5692, %v5691
      %v5724 = vpack.c.b16 %v5694, %v5693
      %v5725 = vpack.c.b16 %v5696, %v5695
      %v5726 = vpack.c.b16 %v5698, %v5697
      %v5727 = vpack.c.b16 %v5700, %v5699
      %v5728 = vpack.c.b16 %v5702, %v5701
      %v5729 = vpack.c.b16 %v5704, %v5703
      %v5730 = vpack.c.b16 %v5706, %v5705
      %v5731 = vpack.c.b16 %v5708, %v5707
      %v5732 = vpack.c.b16 %v5710, %v5709
      %v5733 = vpack.c.b16 %v5712, %v5711
      %v5734 = vpack.c.b16 %v5714, %v5713
      %v5735 = vpack.c.b16 %v5716, %v5715
      %v5736 = vpack.c.b16 %v5718, %v5717
      %v5737 = vpack.c.b16 %v5720, %v5719
      %v5738 = vpack.c.b16 %v5722, %v5721
      %v5747 = vunpack.c.l.b16 %v5683
      %v5748 = vunpack.c.l.b16 %v5684
      %v5749 = vunpack.c.l.b16 %v5685
      %v5750 = vunpack.c.l.b16 %v5686
      %v5751 = vunpack.c.l.b16 %v5687
      %v5752 = vunpack.c.l.b16 %v5688
      %v5753 = vunpack.c.l.b16 %v5689
      %v5754 = vunpack.c.l.b16 %v5690
      %v5755 = vpack.c.b16 %v5748, %v5747
      %v5756 = vpack.c.b16 %v5750, %v5749
      %v5757 = vpack.c.b16 %v5752, %v5751
      %v5758 = vpack.c.b16 %v5754, %v5753
      %v5764 = vsel %vm2315, %v5723, 0
      %v5767 = vsel %vm2315, %v5724, 0
      %v5770 = vsel %vm2315, %v5725, 0
      %v5773 = vsel %vm2315, %v5726, 0
      %v5776 = vsel %vm2315, %v5727, 0
      %v5779 = vsel %vm2315, %v5728, 0
      %v5782 = vsel %vm2315, %v5729, 0
      %v5785 = vsel %vm2315, %v5730, 0
      %v5788 = vsel %vm2315, %v5731, 0
      %v5791 = vsel %vm2315, %v5732, 0
      %v5794 = vsel %vm2315, %v5733, 0
      %v5797 = vsel %vm2315, %v5734, 0
      %v5800 = vsel %vm2315, %v5735, 0
      %v5803 = vsel %vm2315, %v5736, 0
      %v5806 = vsel %vm2315, %v5737, 0
      %v5809 = vsel %vm2315, %v5738, 0
      %5811 = vmatpush.bf16.msra.mxu0 0
      %5812 = vmatpush.bf16.msra.mxu0 0
      %5813 = vmatpush.bf16.msra.mxu0 0
      %5814 = vmatpush.bf16.msra.mxu0 0
      %5815 = vmatpush.bf16.msra.mxu0 %v5758
      %5816 = vmatpush.bf16.msra.mxu0 %v5757
      %5817 = vmatpush.bf16.msra.mxu0 %v5756
      %5818 = vmatpush.bf16.msra.mxu0 %v5755
      %5819 = vmatmul.bf16.gmra.mxu0 %v5764
      %v5820 = vpop.f32.mrf.mxu0
      %v5821 = vadd.f32 0.0, %v5820
      %v5822 = vpop.f32.mrf.mxu0
      %v5823 = vadd.f32 0.0, %v5822
      %5824 = vmatmul.bf16.gmra.mxu0 %v5767
      %v5825 = vpop.f32.mrf.mxu0
      %v5826 = vadd.f32 0.0, %v5825
      %v5827 = vpop.f32.mrf.mxu0
      %v5828 = vadd.f32 0.0, %v5827
      %5829 = vmatmul.bf16.gmra.mxu0 %v5770
      %v5830 = vpop.f32.mrf.mxu0
      %v5831 = vadd.f32 0.0, %v5830
      %v5832 = vpop.f32.mrf.mxu0
      %v5833 = vadd.f32 0.0, %v5832
      %5834 = vmatmul.bf16.gmra.mxu0 %v5773
      %v5835 = vpop.f32.mrf.mxu0
      %v5836 = vadd.f32 0.0, %v5835
      %v5837 = vpop.f32.mrf.mxu0
      %v5838 = vadd.f32 0.0, %v5837
      %5839 = vmatmul.bf16.gmra.mxu0 %v5776
      %v5840 = vpop.f32.mrf.mxu0
      %v5841 = vadd.f32 0.0, %v5840
      %v5842 = vpop.f32.mrf.mxu0
      %v5843 = vadd.f32 0.0, %v5842
      %5844 = vmatmul.bf16.gmra.mxu0 %v5779
      %v5845 = vpop.f32.mrf.mxu0
      %v5846 = vadd.f32 0.0, %v5845
      %v5847 = vpop.f32.mrf.mxu0
      %v5848 = vadd.f32 0.0, %v5847
      %5849 = vmatmul.bf16.gmra.mxu0 %v5782
      %v5850 = vpop.f32.mrf.mxu0
      %v5851 = vadd.f32 0.0, %v5850
      %v5852 = vpop.f32.mrf.mxu0
      %v5853 = vadd.f32 0.0, %v5852
      %5854 = vmatmul.bf16.gmra.mxu0 %v5785
      %v5855 = vpop.f32.mrf.mxu0
      %v5856 = vadd.f32 0.0, %v5855
      %v5857 = vpop.f32.mrf.mxu0
      %v5858 = vadd.f32 0.0, %v5857
      %5859 = vmatmul.bf16.gmra.mxu0 %v5788
      %v5860 = vpop.f32.mrf.mxu0
      %v5861 = vadd.f32 0.0, %v5860
      %v5862 = vpop.f32.mrf.mxu0
      %v5863 = vadd.f32 0.0, %v5862
      %5864 = vmatmul.bf16.gmra.mxu0 %v5791
      %v5865 = vpop.f32.mrf.mxu0
      %v5866 = vadd.f32 0.0, %v5865
      %v5867 = vpop.f32.mrf.mxu0
      %v5868 = vadd.f32 0.0, %v5867
      %5869 = vmatmul.bf16.gmra.mxu0 %v5794
      %v5870 = vpop.f32.mrf.mxu0
      %v5871 = vadd.f32 0.0, %v5870
      %v5872 = vpop.f32.mrf.mxu0
      %v5873 = vadd.f32 0.0, %v5872
      %5874 = vmatmul.bf16.gmra.mxu0 %v5797
      %v5875 = vpop.f32.mrf.mxu0
      %v5876 = vadd.f32 0.0, %v5875
      %v5877 = vpop.f32.mrf.mxu0
      %v5878 = vadd.f32 0.0, %v5877
      %5879 = vmatmul.bf16.gmra.mxu0 %v5800
      %v5880 = vpop.f32.mrf.mxu0
      %v5881 = vadd.f32 0.0, %v5880
      %v5882 = vpop.f32.mrf.mxu0
      %v5883 = vadd.f32 0.0, %v5882
      %5884 = vmatmul.bf16.gmra.mxu0 %v5803
      %v5885 = vpop.f32.mrf.mxu0
      %v5886 = vadd.f32 0.0, %v5885
      %v5887 = vpop.f32.mrf.mxu0
      %v5888 = vadd.f32 0.0, %v5887
      %5889 = vmatmul.bf16.gmra.mxu0 %v5806
      %v5890 = vpop.f32.mrf.mxu0
      %v5891 = vadd.f32 0.0, %v5890
      %v5892 = vpop.f32.mrf.mxu0
      %v5893 = vadd.f32 0.0, %v5892
      %5894 = vmatmul.bf16.gmra.mxu0 %v5809
      %v5895 = vpop.f32.mrf.mxu0
      %v5896 = vadd.f32 0.0, %v5895
      %v5897 = vpop.f32.mrf.mxu0
      %v5898 = vadd.f32 0.0, %v5897
      %5899 = vdwg.mxu0
      %v5900 = vadd.f32 %v5169, %v5821
      %v5901 = vadd.f32 %v5170, %v5823
      %v5902 = vadd.f32 %v5171, %v5826
      %v5903 = vadd.f32 %v5172, %v5828
      %v5904 = vadd.f32 %v5173, %v5831
      %v5905 = vadd.f32 %v5174, %v5833
      %v5906 = vadd.f32 %v5175, %v5836
      %v5907 = vadd.f32 %v5176, %v5838
      %v5908 = vadd.f32 %v5177, %v5841
      %v5909 = vadd.f32 %v5178, %v5843
      %v5910 = vadd.f32 %v5179, %v5846
      %v5911 = vadd.f32 %v5180, %v5848
      %v5912 = vadd.f32 %v5181, %v5851
      %v5913 = vadd.f32 %v5182, %v5853
      %v5914 = vadd.f32 %v5183, %v5856
      %v5915 = vadd.f32 %v5184, %v5858
      %v5916 = vadd.f32 %v5185, %v5861
      %v5917 = vadd.f32 %v5186, %v5863
      %v5918 = vadd.f32 %v5187, %v5866
      %v5919 = vadd.f32 %v5188, %v5868
      %v5920 = vadd.f32 %v5189, %v5871
      %v5921 = vadd.f32 %v5190, %v5873
      %v5922 = vadd.f32 %v5191, %v5876
      %v5923 = vadd.f32 %v5192, %v5878
      %v5924 = vadd.f32 %v5193, %v5881
      %v5925 = vadd.f32 %v5194, %v5883
      %v5926 = vadd.f32 %v5195, %v5886
      %v5927 = vadd.f32 %v5196, %v5888
      %v5928 = vadd.f32 %v5197, %v5891
      %v5929 = vadd.f32 %v5198, %v5893
      %v5930 = vadd.f32 %v5199, %v5896
      %v5931 = vadd.f32 %v5200, %v5898
      %s5932 = scalar_lea.vmem %s2, 224
      %v5933 = vld [vmem:[%s5932] sm:$0xf]
      %v5934 = vld [vmem:[%s5932 + $0x4] sm:$0xf]
      %v5935 = vld [vmem:[%s5932 + $0x8] sm:$0xf]
      %v5936 = vld [vmem:[%s5932 + $0xc] sm:$0xf]
      %v5937 = vld [vmem:[%s5932 + $0x10] sm:$0xf]
      %v5938 = vld [vmem:[%s5932 + $0x14] sm:$0xf]
      %v5939 = vld [vmem:[%s5932 + $0x18] sm:$0xf]
      %v5940 = vld [vmem:[%s5932 + $0x1c] sm:$0xf]
      %v5973 = vunpack.c.l.b16 %v5203
      %v5974 = vunpack.c.l.b16 %v5205
      %v5975 = vunpack.c.l.b16 %v5207
      %v5976 = vunpack.c.l.b16 %v5209
      %v5977 = vunpack.c.l.b16 %v5211
      %v5978 = vunpack.c.l.b16 %v5213
      %v5979 = vunpack.c.l.b16 %v5215
      %v5980 = vunpack.c.l.b16 %v5217
      %v5981 = vunpack.c.l.b16 %v5219
      %v5982 = vunpack.c.l.b16 %v5221
      %v5983 = vunpack.c.l.b16 %v5223
      %v5984 = vunpack.c.l.b16 %v5225
      %v5985 = vunpack.c.l.b16 %v5227
      %v5986 = vunpack.c.l.b16 %v5229
      %v5987 = vunpack.c.l.b16 %v5231
      %v5988 = vunpack.c.l.b16 %v5233
      %v5989 = vunpack.c.l.b16 %v5235
      %v5990 = vunpack.c.l.b16 %v5237
      %v5991 = vunpack.c.l.b16 %v5239
      %v5992 = vunpack.c.l.b16 %v5241
      %v5993 = vunpack.c.l.b16 %v5243
      %v5994 = vunpack.c.l.b16 %v5245
      %v5995 = vunpack.c.l.b16 %v5247
      %v5996 = vunpack.c.l.b16 %v5249
      %v5997 = vunpack.c.l.b16 %v5251
      %v5998 = vunpack.c.l.b16 %v5253
      %v5999 = vunpack.c.l.b16 %v5255
      %v6000 = vunpack.c.l.b16 %v5257
      %v6001 = vunpack.c.l.b16 %v5259
      %v6002 = vunpack.c.l.b16 %v5261
      %v6003 = vunpack.c.l.b16 %v5263
      %v6004 = vunpack.c.l.b16 %v5265
      %v6005 = vpack.c.b16 %v5974, %v5973
      %v6006 = vpack.c.b16 %v5976, %v5975
      %v6007 = vpack.c.b16 %v5978, %v5977
      %v6008 = vpack.c.b16 %v5980, %v5979
      %v6009 = vpack.c.b16 %v5982, %v5981
      %v6010 = vpack.c.b16 %v5984, %v5983
      %v6011 = vpack.c.b16 %v5986, %v5985
      %v6012 = vpack.c.b16 %v5988, %v5987
      %v6013 = vpack.c.b16 %v5990, %v5989
      %v6014 = vpack.c.b16 %v5992, %v5991
      %v6015 = vpack.c.b16 %v5994, %v5993
      %v6016 = vpack.c.b16 %v5996, %v5995
      %v6017 = vpack.c.b16 %v5998, %v5997
      %v6018 = vpack.c.b16 %v6000, %v5999
      %v6019 = vpack.c.b16 %v6002, %v6001
      %v6020 = vpack.c.b16 %v6004, %v6003
      %v6029 = vunpack.c.l.b16 %v5933
      %v6030 = vunpack.c.l.b16 %v5934
      %v6031 = vunpack.c.l.b16 %v5935
      %v6032 = vunpack.c.l.b16 %v5936
      %v6033 = vunpack.c.l.b16 %v5937
      %v6034 = vunpack.c.l.b16 %v5938
      %v6035 = vunpack.c.l.b16 %v5939
      %v6036 = vunpack.c.l.b16 %v5940
      %v6037 = vpack.c.b16 %v6030, %v6029
      %v6038 = vpack.c.b16 %v6032, %v6031
      %v6039 = vpack.c.b16 %v6034, %v6033
      %v6040 = vpack.c.b16 %v6036, %v6035
      %v6046 = vsel %vm2315, %v6005, 0
      %v6049 = vsel %vm2315, %v6006, 0
      %v6052 = vsel %vm2315, %v6007, 0
      %v6055 = vsel %vm2315, %v6008, 0
      %v6058 = vsel %vm2315, %v6009, 0
      %v6061 = vsel %vm2315, %v6010, 0
      %v6064 = vsel %vm2315, %v6011, 0
      %v6067 = vsel %vm2315, %v6012, 0
      %v6070 = vsel %vm2315, %v6013, 0
      %v6073 = vsel %vm2315, %v6014, 0
      %v6076 = vsel %vm2315, %v6015, 0
      %v6079 = vsel %vm2315, %v6016, 0
      %v6082 = vsel %vm2315, %v6017, 0
      %v6085 = vsel %vm2315, %v6018, 0
      %v6088 = vsel %vm2315, %v6019, 0
      %v6091 = vsel %vm2315, %v6020, 0
      %6093 = vmatpush.bf16.msra.mxu0 0
      %6094 = vmatpush.bf16.msra.mxu0 0
      %6095 = vmatpush.bf16.msra.mxu0 0
      %6096 = vmatpush.bf16.msra.mxu0 0
      %6097 = vmatpush.bf16.msra.mxu0 %v6040
      %6098 = vmatpush.bf16.msra.mxu0 %v6039
      %6099 = vmatpush.bf16.msra.mxu0 %v6038
      %6100 = vmatpush.bf16.msra.mxu0 %v6037
      %6101 = vmatmul.bf16.gmra.mxu0 %v6046
      %v6102 = vpop.f32.mrf.mxu0
      %v6103 = vadd.f32 0.0, %v6102
      %v6104 = vpop.f32.mrf.mxu0
      %v6105 = vadd.f32 0.0, %v6104
      %6106 = vmatmul.bf16.gmra.mxu0 %v6049
      %v6107 = vpop.f32.mrf.mxu0
      %v6108 = vadd.f32 0.0, %v6107
      %v6109 = vpop.f32.mrf.mxu0
      %v6110 = vadd.f32 0.0, %v6109
      %6111 = vmatmul.bf16.gmra.mxu0 %v6052
      %v6112 = vpop.f32.mrf.mxu0
      %v6113 = vadd.f32 0.0, %v6112
      %v6114 = vpop.f32.mrf.mxu0
      %v6115 = vadd.f32 0.0, %v6114
      %6116 = vmatmul.bf16.gmra.mxu0 %v6055
      %v6117 = vpop.f32.mrf.mxu0
      %v6118 = vadd.f32 0.0, %v6117
      %v6119 = vpop.f32.mrf.mxu0
      %v6120 = vadd.f32 0.0, %v6119
      %6121 = vmatmul.bf16.gmra.mxu0 %v6058
      %v6122 = vpop.f32.mrf.mxu0
      %v6123 = vadd.f32 0.0, %v6122
      %v6124 = vpop.f32.mrf.mxu0
      %v6125 = vadd.f32 0.0, %v6124
      %6126 = vmatmul.bf16.gmra.mxu0 %v6061
      %v6127 = vpop.f32.mrf.mxu0
      %v6128 = vadd.f32 0.0, %v6127
      %v6129 = vpop.f32.mrf.mxu0
      %v6130 = vadd.f32 0.0, %v6129
      %6131 = vmatmul.bf16.gmra.mxu0 %v6064
      %v6132 = vpop.f32.mrf.mxu0
      %v6133 = vadd.f32 0.0, %v6132
      %v6134 = vpop.f32.mrf.mxu0
      %v6135 = vadd.f32 0.0, %v6134
      %6136 = vmatmul.bf16.gmra.mxu0 %v6067
      %v6137 = vpop.f32.mrf.mxu0
      %v6138 = vadd.f32 0.0, %v6137
      %v6139 = vpop.f32.mrf.mxu0
      %v6140 = vadd.f32 0.0, %v6139
      %6141 = vmatmul.bf16.gmra.mxu0 %v6070
      %v6142 = vpop.f32.mrf.mxu0
      %v6143 = vadd.f32 0.0, %v6142
      %v6144 = vpop.f32.mrf.mxu0
      %v6145 = vadd.f32 0.0, %v6144
      %6146 = vmatmul.bf16.gmra.mxu0 %v6073
      %v6147 = vpop.f32.mrf.mxu0
      %v6148 = vadd.f32 0.0, %v6147
      %v6149 = vpop.f32.mrf.mxu0
      %v6150 = vadd.f32 0.0, %v6149
      %6151 = vmatmul.bf16.gmra.mxu0 %v6076
      %v6152 = vpop.f32.mrf.mxu0
      %v6153 = vadd.f32 0.0, %v6152
      %v6154 = vpop.f32.mrf.mxu0
      %v6155 = vadd.f32 0.0, %v6154
      %6156 = vmatmul.bf16.gmra.mxu0 %v6079
      %v6157 = vpop.f32.mrf.mxu0
      %v6158 = vadd.f32 0.0, %v6157
      %v6159 = vpop.f32.mrf.mxu0
      %v6160 = vadd.f32 0.0, %v6159
      %6161 = vmatmul.bf16.gmra.mxu0 %v6082
      %v6162 = vpop.f32.mrf.mxu0
      %v6163 = vadd.f32 0.0, %v6162
      %v6164 = vpop.f32.mrf.mxu0
      %v6165 = vadd.f32 0.0, %v6164
      %6166 = vmatmul.bf16.gmra.mxu0 %v6085
      %v6167 = vpop.f32.mrf.mxu0
      %v6168 = vadd.f32 0.0, %v6167
      %v6169 = vpop.f32.mrf.mxu0
      %v6170 = vadd.f32 0.0, %v6169
      %6171 = vmatmul.bf16.gmra.mxu0 %v6088
      %v6172 = vpop.f32.mrf.mxu0
      %v6173 = vadd.f32 0.0, %v6172
      %v6174 = vpop.f32.mrf.mxu0
      %v6175 = vadd.f32 0.0, %v6174
      %6176 = vmatmul.bf16.gmra.mxu0 %v6091
      %v6177 = vpop.f32.mrf.mxu0
      %v6178 = vadd.f32 0.0, %v6177
      %v6179 = vpop.f32.mrf.mxu0
      %v6180 = vadd.f32 0.0, %v6179
      %6181 = vdwg.mxu0
      %v6182 = vadd.f32 %v5900, %v6103
      %v6183 = vadd.f32 %v5901, %v6105
      %v6184 = vadd.f32 %v5902, %v6108
      %v6185 = vadd.f32 %v5903, %v6110
      %v6186 = vadd.f32 %v5904, %v6113
      %v6187 = vadd.f32 %v5905, %v6115
      %v6188 = vadd.f32 %v5906, %v6118
      %v6189 = vadd.f32 %v5907, %v6120
      %v6190 = vadd.f32 %v5908, %v6123
      %v6191 = vadd.f32 %v5909, %v6125
      %v6192 = vadd.f32 %v5910, %v6128
      %v6193 = vadd.f32 %v5911, %v6130
      %v6194 = vadd.f32 %v5912, %v6133
      %v6195 = vadd.f32 %v5913, %v6135
      %v6196 = vadd.f32 %v5914, %v6138
      %v6197 = vadd.f32 %v5915, %v6140
      %v6198 = vadd.f32 %v5916, %v6143
      %v6199 = vadd.f32 %v5917, %v6145
      %v6200 = vadd.f32 %v5918, %v6148
      %v6201 = vadd.f32 %v5919, %v6150
      %v6202 = vadd.f32 %v5920, %v6153
      %v6203 = vadd.f32 %v5921, %v6155
      %v6204 = vadd.f32 %v5922, %v6158
      %v6205 = vadd.f32 %v5923, %v6160
      %v6206 = vadd.f32 %v5924, %v6163
      %v6207 = vadd.f32 %v5925, %v6165
      %v6208 = vadd.f32 %v5926, %v6168
      %v6209 = vadd.f32 %v5927, %v6170
      %v6210 = vadd.f32 %v5928, %v6173
      %v6211 = vadd.f32 %v5929, %v6175
      %v6212 = vadd.f32 %v5930, %v6178
      %v6213 = vadd.f32 %v5931, %v6180
      %v6214 = vld [vmem:[%s5201 + $0x8] sm:$0xf]
      %v6215 = vld [vmem:[%s5201 + $0xc] sm:$0x1]
      %v6216 = vld [vmem:[%s5201 + $0x18] sm:$0xf]
      %v6217 = vld [vmem:[%s5201 + $0x1c] sm:$0x1]
      %v6218 = vld [vmem:[%s5201 + $0x28] sm:$0xf]
      %v6219 = vld [vmem:[%s5201 + $0x2c] sm:$0x1]
      %v6220 = vld [vmem:[%s5201 + $0x38] sm:$0xf]
      %v6221 = vld [vmem:[%s5201 + $0x3c] sm:$0x1]
      %v6222 = vld [vmem:[%s5201 + $0x48] sm:$0xf]
      %v6223 = vld [vmem:[%s5201 + $0x4c] sm:$0x1]
      %v6224 = vld [vmem:[%s5201 + $0x58] sm:$0xf]
      %v6225 = vld [vmem:[%s5201 + $0x5c] sm:$0x1]
      %v6226 = vld [vmem:[%s5201 + $0x68] sm:$0xf]
      %v6227 = vld [vmem:[%s5201 + $0x6c] sm:$0x1]
      %v6228 = vld [vmem:[%s5201 + $0x78] sm:$0xf]
      %v6229 = vld [vmem:[%s5201 + $0x7c] sm:$0x1]
      %v6230 = vld [vmem:[%s5201 + $0xa8] sm:$0xf]
      %v6231 = vld [vmem:[%s5201 + $0xac] sm:$0x1]
      %v6232 = vld [vmem:[%s5201 + $0xb8] sm:$0xf]
      %v6233 = vld [vmem:[%s5201 + $0xbc] sm:$0x1]
      %v6234 = vld [vmem:[%s5201 + $0xc8] sm:$0xf]
      %v6235 = vld [vmem:[%s5201 + $0xcc] sm:$0x1]
      %v6236 = vld [vmem:[%s5201 + $0xd8] sm:$0xf]
      %v6237 = vld [vmem:[%s5201 + $0xdc] sm:$0x1]
      %v6238 = vld [vmem:[%s5201 + $0xe8] sm:$0xf]
      %v6239 = vld [vmem:[%s5201 + $0xec] sm:$0x1]
      %v6240 = vld [vmem:[%s5201 + $0xf8] sm:$0xf]
      %v6241 = vld [vmem:[%s5201 + $0xfc] sm:$0x1]
      %v6242 = vld [vmem:[%s5201 + $0x108] sm:$0xf]
      %v6243 = vld [vmem:[%s5201 + $0x10c] sm:$0x1]
      %v6244 = vld [vmem:[%s5201 + $0x118] sm:$0xf]
      %v6245 = vld [vmem:[%s5201 + $0x11c] sm:$0x1]
      %v6246 = vld [vmem:[%s5201 + $0x148] sm:$0xf]
      %v6247 = vld [vmem:[%s5201 + $0x14c] sm:$0x1]
      %v6248 = vld [vmem:[%s5201 + $0x158] sm:$0xf]
      %v6249 = vld [vmem:[%s5201 + $0x15c] sm:$0x1]
      %v6250 = vld [vmem:[%s5201 + $0x168] sm:$0xf]
      %v6251 = vld [vmem:[%s5201 + $0x16c] sm:$0x1]
      %v6252 = vld [vmem:[%s5201 + $0x178] sm:$0xf]
      %v6253 = vld [vmem:[%s5201 + $0x17c] sm:$0x1]
      %v6254 = vld [vmem:[%s5201 + $0x188] sm:$0xf]
      %v6255 = vld [vmem:[%s5201 + $0x18c] sm:$0x1]
      %v6256 = vld [vmem:[%s5201 + $0x198] sm:$0xf]
      %v6257 = vld [vmem:[%s5201 + $0x19c] sm:$0x1]
      %v6258 = vld [vmem:[%s5201 + $0x1a8] sm:$0xf]
      %v6259 = vld [vmem:[%s5201 + $0x1ac] sm:$0x1]
      %v6260 = vld [vmem:[%s5201 + $0x1b8] sm:$0xf]
      %v6261 = vld [vmem:[%s5201 + $0x1bc] sm:$0x1]
      %v6262 = vld [vmem:[%s5201 + $0x1e8] sm:$0xf]
      %v6263 = vld [vmem:[%s5201 + $0x1ec] sm:$0x1]
      %v6264 = vld [vmem:[%s5201 + $0x1f8] sm:$0xf]
      %v6265 = vld [vmem:[%s5201 + $0x1fc] sm:$0x1]
      %v6266 = vld [vmem:[%s5201 + $0x208] sm:$0xf]
      %v6267 = vld [vmem:[%s5201 + $0x20c] sm:$0x1]
      %v6268 = vld [vmem:[%s5201 + $0x218] sm:$0xf]
      %v6269 = vld [vmem:[%s5201 + $0x21c] sm:$0x1]
      %v6270 = vld [vmem:[%s5201 + $0x228] sm:$0xf]
      %v6271 = vld [vmem:[%s5201 + $0x22c] sm:$0x1]
      %v6272 = vld [vmem:[%s5201 + $0x238] sm:$0xf]
      %v6273 = vld [vmem:[%s5201 + $0x23c] sm:$0x1]
      %v6274 = vld [vmem:[%s5201 + $0x248] sm:$0xf]
      %v6275 = vld [vmem:[%s5201 + $0x24c] sm:$0x1]
      %v6276 = vld [vmem:[%s5201 + $0x258] sm:$0xf]
      %v6277 = vld [vmem:[%s5201 + $0x25c] sm:$0x1]
      %v6279 = vshrl.u32 %v6214, 16
      %v6281 = vrot.slane %v6279, 4
      %v6282 = vshll.u32 %v6214, 16
      %v6284 = vrot.slane %v6282, 5
      %v6285 = vor.u32 %v6281, %v6284
      %v6286 = vrot.slane %v6285, 4
      %v6288 = vshll.u32 %v6215, 16
      %v6290 = vrot.slane %v6288, 5
      %v6291 = vsel %vm2728, %v6286, %v6290
      %v6293 = vshrl.u32 %v6216, 16
      %v6295 = vrot.slane %v6293, 4
      %v6296 = vshll.u32 %v6216, 16
      %v6298 = vrot.slane %v6296, 5
      %v6299 = vor.u32 %v6295, %v6298
      %v6300 = vrot.slane %v6299, 4
      %v6302 = vshll.u32 %v6217, 16
      %v6304 = vrot.slane %v6302, 5
      %v6305 = vsel %vm2728, %v6300, %v6304
      %v6307 = vshrl.u32 %v6218, 16
      %v6309 = vrot.slane %v6307, 4
      %v6310 = vshll.u32 %v6218, 16
      %v6312 = vrot.slane %v6310, 5
      %v6313 = vor.u32 %v6309, %v6312
      %v6314 = vrot.slane %v6313, 4
      %v6316 = vshll.u32 %v6219, 16
      %v6318 = vrot.slane %v6316, 5
      %v6319 = vsel %vm2728, %v6314, %v6318
      %v6321 = vshrl.u32 %v6220, 16
      %v6323 = vrot.slane %v6321, 4
      %v6324 = vshll.u32 %v6220, 16
      %v6326 = vrot.slane %v6324, 5
      %v6327 = vor.u32 %v6323, %v6326
      %v6328 = vrot.slane %v6327, 4
      %v6330 = vshll.u32 %v6221, 16
      %v6332 = vrot.slane %v6330, 5
      %v6333 = vsel %vm2728, %v6328, %v6332
      %v6335 = vshrl.u32 %v6222, 16
      %v6337 = vrot.slane %v6335, 4
      %v6338 = vshll.u32 %v6222, 16
      %v6340 = vrot.slane %v6338, 5
      %v6341 = vor.u32 %v6337, %v6340
      %v6342 = vrot.slane %v6341, 4
      %v6344 = vshll.u32 %v6223, 16
      %v6346 = vrot.slane %v6344, 5
      %v6347 = vsel %vm2728, %v6342, %v6346
      %v6349 = vshrl.u32 %v6224, 16
      %v6351 = vrot.slane %v6349, 4
      %v6352 = vshll.u32 %v6224, 16
      %v6354 = vrot.slane %v6352, 5
      %v6355 = vor.u32 %v6351, %v6354
      %v6356 = vrot.slane %v6355, 4
      %v6358 = vshll.u32 %v6225, 16
      %v6360 = vrot.slane %v6358, 5
      %v6361 = vsel %vm2728, %v6356, %v6360
      %v6363 = vshrl.u32 %v6226, 16
      %v6365 = vrot.slane %v6363, 4
      %v6366 = vshll.u32 %v6226, 16
      %v6368 = vrot.slane %v6366, 5
      %v6369 = vor.u32 %v6365, %v6368
      %v6370 = vrot.slane %v6369, 4
      %v6372 = vshll.u32 %v6227, 16
      %v6374 = vrot.slane %v6372, 5
      %v6375 = vsel %vm2728, %v6370, %v6374
      %v6377 = vshrl.u32 %v6228, 16
      %v6379 = vrot.slane %v6377, 4
      %v6380 = vshll.u32 %v6228, 16
      %v6382 = vrot.slane %v6380, 5
      %v6383 = vor.u32 %v6379, %v6382
      %v6384 = vrot.slane %v6383, 4
      %v6386 = vshll.u32 %v6229, 16
      %v6388 = vrot.slane %v6386, 5
      %v6389 = vsel %vm2728, %v6384, %v6388
      %v6391 = vshrl.u32 %v6230, 16
      %v6393 = vrot.slane %v6391, 4
      %v6394 = vshll.u32 %v6230, 16
      %v6396 = vrot.slane %v6394, 5
      %v6397 = vor.u32 %v6393, %v6396
      %v6398 = vrot.slane %v6397, 4
      %v6400 = vshll.u32 %v6231, 16
      %v6402 = vrot.slane %v6400, 5
      %v6403 = vsel %vm2728, %v6398, %v6402
      %v6405 = vshrl.u32 %v6232, 16
      %v6407 = vrot.slane %v6405, 4
      %v6408 = vshll.u32 %v6232, 16
      %v6410 = vrot.slane %v6408, 5
      %v6411 = vor.u32 %v6407, %v6410
      %v6412 = vrot.slane %v6411, 4
      %v6414 = vshll.u32 %v6233, 16
      %v6416 = vrot.slane %v6414, 5
      %v6417 = vsel %vm2728, %v6412, %v6416
      %v6419 = vshrl.u32 %v6234, 16
      %v6421 = vrot.slane %v6419, 4
      %v6422 = vshll.u32 %v6234, 16
      %v6424 = vrot.slane %v6422, 5
      %v6425 = vor.u32 %v6421, %v6424
      %v6426 = vrot.slane %v6425, 4
      %v6428 = vshll.u32 %v6235, 16
      %v6430 = vrot.slane %v6428, 5
      %v6431 = vsel %vm2728, %v6426, %v6430
      %v6433 = vshrl.u32 %v6236, 16
      %v6435 = vrot.slane %v6433, 4
      %v6436 = vshll.u32 %v6236, 16
      %v6438 = vrot.slane %v6436, 5
      %v6439 = vor.u32 %v6435, %v6438
      %v6440 = vrot.slane %v6439, 4
      %v6442 = vshll.u32 %v6237, 16
      %v6444 = vrot.slane %v6442, 5
      %v6445 = vsel %vm2728, %v6440, %v6444
      %v6447 = vshrl.u32 %v6238, 16
      %v6449 = vrot.slane %v6447, 4
      %v6450 = vshll.u32 %v6238, 16
      %v6452 = vrot.slane %v6450, 5
      %v6453 = vor.u32 %v6449, %v6452
      %v6454 = vrot.slane %v6453, 4
      %v6456 = vshll.u32 %v6239, 16
      %v6458 = vrot.slane %v6456, 5
      %v6459 = vsel %vm2728, %v6454, %v6458
      %v6461 = vshrl.u32 %v6240, 16
      %v6463 = vrot.slane %v6461, 4
      %v6464 = vshll.u32 %v6240, 16
      %v6466 = vrot.slane %v6464, 5
      %v6467 = vor.u32 %v6463, %v6466
      %v6468 = vrot.slane %v6467, 4
      %v6470 = vshll.u32 %v6241, 16
      %v6472 = vrot.slane %v6470, 5
      %v6473 = vsel %vm2728, %v6468, %v6472
      %v6475 = vshrl.u32 %v6242, 16
      %v6477 = vrot.slane %v6475, 4
      %v6478 = vshll.u32 %v6242, 16
      %v6480 = vrot.slane %v6478, 5
      %v6481 = vor.u32 %v6477, %v6480
      %v6482 = vrot.slane %v6481, 4
      %v6484 = vshll.u32 %v6243, 16
      %v6486 = vrot.slane %v6484, 5
      %v6487 = vsel %vm2728, %v6482, %v6486
      %v6489 = vshrl.u32 %v6244, 16
      %v6491 = vrot.slane %v6489, 4
      %v6492 = vshll.u32 %v6244, 16
      %v6494 = vrot.slane %v6492, 5
      %v6495 = vor.u32 %v6491, %v6494
      %v6496 = vrot.slane %v6495, 4
      %v6498 = vshll.u32 %v6245, 16
      %v6500 = vrot.slane %v6498, 5
      %v6501 = vsel %vm2728, %v6496, %v6500
      %v6503 = vshrl.u32 %v6246, 16
      %v6505 = vrot.slane %v6503, 4
      %v6506 = vshll.u32 %v6246, 16
      %v6508 = vrot.slane %v6506, 5
      %v6509 = vor.u32 %v6505, %v6508
      %v6510 = vrot.slane %v6509, 4
      %v6512 = vshll.u32 %v6247, 16
      %v6514 = vrot.slane %v6512, 5
      %v6515 = vsel %vm2728, %v6510, %v6514
      %v6517 = vshrl.u32 %v6248, 16
      %v6519 = vrot.slane %v6517, 4
      %v6520 = vshll.u32 %v6248, 16
      %v6522 = vrot.slane %v6520, 5
      %v6523 = vor.u32 %v6519, %v6522
      %v6524 = vrot.slane %v6523, 4
      %v6526 = vshll.u32 %v6249, 16
      %v6528 = vrot.slane %v6526, 5
      %v6529 = vsel %vm2728, %v6524, %v6528
      %v6531 = vshrl.u32 %v6250, 16
      %v6533 = vrot.slane %v6531, 4
      %v6534 = vshll.u32 %v6250, 16
      %v6536 = vrot.slane %v6534, 5
      %v6537 = vor.u32 %v6533, %v6536
      %v6538 = vrot.slane %v6537, 4
      %v6540 = vshll.u32 %v6251, 16
      %v6542 = vrot.slane %v6540, 5
      %v6543 = vsel %vm2728, %v6538, %v6542
      %v6545 = vshrl.u32 %v6252, 16
      %v6547 = vrot.slane %v6545, 4
      %v6548 = vshll.u32 %v6252, 16
      %v6550 = vrot.slane %v6548, 5
      %v6551 = vor.u32 %v6547, %v6550
      %v6552 = vrot.slane %v6551, 4
      %v6554 = vshll.u32 %v6253, 16
      %v6556 = vrot.slane %v6554, 5
      %v6557 = vsel %vm2728, %v6552, %v6556
      %v6559 = vshrl.u32 %v6254, 16
      %v6561 = vrot.slane %v6559, 4
      %v6562 = vshll.u32 %v6254, 16
      %v6564 = vrot.slane %v6562, 5
      %v6565 = vor.u32 %v6561, %v6564
      %v6566 = vrot.slane %v6565, 4
      %v6568 = vshll.u32 %v6255, 16
      %v6570 = vrot.slane %v6568, 5
      %v6571 = vsel %vm2728, %v6566, %v6570
      %v6573 = vshrl.u32 %v6256, 16
      %v6575 = vrot.slane %v6573, 4
      %v6576 = vshll.u32 %v6256, 16
      %v6578 = vrot.slane %v6576, 5
      %v6579 = vor.u32 %v6575, %v6578
      %v6580 = vrot.slane %v6579, 4
      %v6582 = vshll.u32 %v6257, 16
      %v6584 = vrot.slane %v6582, 5
      %v6585 = vsel %vm2728, %v6580, %v6584
      %v6587 = vshrl.u32 %v6258, 16
      %v6589 = vrot.slane %v6587, 4
      %v6590 = vshll.u32 %v6258, 16
      %v6592 = vrot.slane %v6590, 5
      %v6593 = vor.u32 %v6589, %v6592
      %v6594 = vrot.slane %v6593, 4
      %v6596 = vshll.u32 %v6259, 16
      %v6598 = vrot.slane %v6596, 5
      %v6599 = vsel %vm2728, %v6594, %v6598
      %v6601 = vshrl.u32 %v6260, 16
      %v6603 = vrot.slane %v6601, 4
      %v6604 = vshll.u32 %v6260, 16
      %v6606 = vrot.slane %v6604, 5
      %v6607 = vor.u32 %v6603, %v6606
      %v6608 = vrot.slane %v6607, 4
      %v6610 = vshll.u32 %v6261, 16
      %v6612 = vrot.slane %v6610, 5
      %v6613 = vsel %vm2728, %v6608, %v6612
      %v6615 = vshrl.u32 %v6262, 16
      %v6617 = vrot.slane %v6615, 4
      %v6618 = vshll.u32 %v6262, 16
      %v6620 = vrot.slane %v6618, 5
      %v6621 = vor.u32 %v6617, %v6620
      %v6622 = vrot.slane %v6621, 4
      %v6624 = vshll.u32 %v6263, 16
      %v6626 = vrot.slane %v6624, 5
      %v6627 = vsel %vm2728, %v6622, %v6626
      %v6629 = vshrl.u32 %v6264, 16
      %v6631 = vrot.slane %v6629, 4
      %v6632 = vshll.u32 %v6264, 16
      %v6634 = vrot.slane %v6632, 5
      %v6635 = vor.u32 %v6631, %v6634
      %v6636 = vrot.slane %v6635, 4
      %v6638 = vshll.u32 %v6265, 16
      %v6640 = vrot.slane %v6638, 5
      %v6641 = vsel %vm2728, %v6636, %v6640
      %v6643 = vshrl.u32 %v6266, 16
      %v6645 = vrot.slane %v6643, 4
      %v6646 = vshll.u32 %v6266, 16
      %v6648 = vrot.slane %v6646, 5
      %v6649 = vor.u32 %v6645, %v6648
      %v6650 = vrot.slane %v6649, 4
      %v6652 = vshll.u32 %v6267, 16
      %v6654 = vrot.slane %v6652, 5
      %v6655 = vsel %vm2728, %v6650, %v6654
      %v6657 = vshrl.u32 %v6268, 16
      %v6659 = vrot.slane %v6657, 4
      %v6660 = vshll.u32 %v6268, 16
      %v6662 = vrot.slane %v6660, 5
      %v6663 = vor.u32 %v6659, %v6662
      %v6664 = vrot.slane %v6663, 4
      %v6666 = vshll.u32 %v6269, 16
      %v6668 = vrot.slane %v6666, 5
      %v6669 = vsel %vm2728, %v6664, %v6668
      %v6671 = vshrl.u32 %v6270, 16
      %v6673 = vrot.slane %v6671, 4
      %v6674 = vshll.u32 %v6270, 16
      %v6676 = vrot.slane %v6674, 5
      %v6677 = vor.u32 %v6673, %v6676
      %v6678 = vrot.slane %v6677, 4
      %v6680 = vshll.u32 %v6271, 16
      %v6682 = vrot.slane %v6680, 5
      %v6683 = vsel %vm2728, %v6678, %v6682
      %v6685 = vshrl.u32 %v6272, 16
      %v6687 = vrot.slane %v6685, 4
      %v6688 = vshll.u32 %v6272, 16
      %v6690 = vrot.slane %v6688, 5
      %v6691 = vor.u32 %v6687, %v6690
      %v6692 = vrot.slane %v6691, 4
      %v6694 = vshll.u32 %v6273, 16
      %v6696 = vrot.slane %v6694, 5
      %v6697 = vsel %vm2728, %v6692, %v6696
      %v6699 = vshrl.u32 %v6274, 16
      %v6701 = vrot.slane %v6699, 4
      %v6702 = vshll.u32 %v6274, 16
      %v6704 = vrot.slane %v6702, 5
      %v6705 = vor.u32 %v6701, %v6704
      %v6706 = vrot.slane %v6705, 4
      %v6708 = vshll.u32 %v6275, 16
      %v6710 = vrot.slane %v6708, 5
      %v6711 = vsel %vm2728, %v6706, %v6710
      %v6713 = vshrl.u32 %v6276, 16
      %v6715 = vrot.slane %v6713, 4
      %v6716 = vshll.u32 %v6276, 16
      %v6718 = vrot.slane %v6716, 5
      %v6719 = vor.u32 %v6715, %v6718
      %v6720 = vrot.slane %v6719, 4
      %v6722 = vshll.u32 %v6277, 16
      %v6724 = vrot.slane %v6722, 5
      %v6725 = vsel %vm2728, %v6720, %v6724
      %s6726 = scalar_lea.vmem %s2, 256
      %v6727 = vld [vmem:[%s6726] sm:$0xf]
      %v6728 = vld [vmem:[%s6726 + $0x4] sm:$0xf]
      %v6729 = vld [vmem:[%s6726 + $0x8] sm:$0xf]
      %v6730 = vld [vmem:[%s6726 + $0xc] sm:$0xf]
      %v6731 = vld [vmem:[%s6726 + $0x10] sm:$0xf]
      %v6732 = vld [vmem:[%s6726 + $0x14] sm:$0xf]
      %v6733 = vld [vmem:[%s6726 + $0x18] sm:$0xf]
      %v6734 = vld [vmem:[%s6726 + $0x1c] sm:$0xf]
      %v6735 = vunpack.c.l.b16 %v6291
      %v6736 = vunpack.c.l.b16 %v6305
      %v6737 = vunpack.c.l.b16 %v6319
      %v6738 = vunpack.c.l.b16 %v6333
      %v6739 = vunpack.c.l.b16 %v6347
      %v6740 = vunpack.c.l.b16 %v6361
      %v6741 = vunpack.c.l.b16 %v6375
      %v6742 = vunpack.c.l.b16 %v6389
      %v6743 = vunpack.c.l.b16 %v6403
      %v6744 = vunpack.c.l.b16 %v6417
      %v6745 = vunpack.c.l.b16 %v6431
      %v6746 = vunpack.c.l.b16 %v6445
      %v6747 = vunpack.c.l.b16 %v6459
      %v6748 = vunpack.c.l.b16 %v6473
      %v6749 = vunpack.c.l.b16 %v6487
      %v6750 = vunpack.c.l.b16 %v6501
      %v6751 = vunpack.c.l.b16 %v6515
      %v6752 = vunpack.c.l.b16 %v6529
      %v6753 = vunpack.c.l.b16 %v6543
      %v6754 = vunpack.c.l.b16 %v6557
      %v6755 = vunpack.c.l.b16 %v6571
      %v6756 = vunpack.c.l.b16 %v6585
      %v6757 = vunpack.c.l.b16 %v6599
      %v6758 = vunpack.c.l.b16 %v6613
      %v6759 = vunpack.c.l.b16 %v6627
      %v6760 = vunpack.c.l.b16 %v6641
      %v6761 = vunpack.c.l.b16 %v6655
      %v6762 = vunpack.c.l.b16 %v6669
      %v6763 = vunpack.c.l.b16 %v6683
      %v6764 = vunpack.c.l.b16 %v6697
      %v6765 = vunpack.c.l.b16 %v6711
      %v6766 = vunpack.c.l.b16 %v6725
      %v6767 = vpack.c.b16 %v6736, %v6735
      %v6768 = vpack.c.b16 %v6738, %v6737
      %v6769 = vpack.c.b16 %v6740, %v6739
      %v6770 = vpack.c.b16 %v6742, %v6741
      %v6771 = vpack.c.b16 %v6744, %v6743
      %v6772 = vpack.c.b16 %v6746, %v6745
      %v6773 = vpack.c.b16 %v6748, %v6747
      %v6774 = vpack.c.b16 %v6750, %v6749
      %v6775 = vpack.c.b16 %v6752, %v6751
      %v6776 = vpack.c.b16 %v6754, %v6753
      %v6777 = vpack.c.b16 %v6756, %v6755
      %v6778 = vpack.c.b16 %v6758, %v6757
      %v6779 = vpack.c.b16 %v6760, %v6759
      %v6780 = vpack.c.b16 %v6762, %v6761
      %v6781 = vpack.c.b16 %v6764, %v6763
      %v6782 = vpack.c.b16 %v6766, %v6765
      %v6791 = vunpack.c.l.b16 %v6727
      %v6792 = vunpack.c.l.b16 %v6728
      %v6793 = vunpack.c.l.b16 %v6729
      %v6794 = vunpack.c.l.b16 %v6730
      %v6795 = vunpack.c.l.b16 %v6731
      %v6796 = vunpack.c.l.b16 %v6732
      %v6797 = vunpack.c.l.b16 %v6733
      %v6798 = vunpack.c.l.b16 %v6734
      %v6799 = vpack.c.b16 %v6792, %v6791
      %v6800 = vpack.c.b16 %v6794, %v6793
      %v6801 = vpack.c.b16 %v6796, %v6795
      %v6802 = vpack.c.b16 %v6798, %v6797
      %v6808 = vsel %vm2315, %v6767, 0
      %v6811 = vsel %vm2315, %v6768, 0
      %v6814 = vsel %vm2315, %v6769, 0
      %v6817 = vsel %vm2315, %v6770, 0
      %v6820 = vsel %vm2315, %v6771, 0
      %v6823 = vsel %vm2315, %v6772, 0
      %v6826 = vsel %vm2315, %v6773, 0
      %v6829 = vsel %vm2315, %v6774, 0
      %v6832 = vsel %vm2315, %v6775, 0
      %v6835 = vsel %vm2315, %v6776, 0
      %v6838 = vsel %vm2315, %v6777, 0
      %v6841 = vsel %vm2315, %v6778, 0
      %v6844 = vsel %vm2315, %v6779, 0
      %v6847 = vsel %vm2315, %v6780, 0
      %v6850 = vsel %vm2315, %v6781, 0
      %v6853 = vsel %vm2315, %v6782, 0
      %6855 = vmatpush.bf16.msra.mxu0 0
      %6856 = vmatpush.bf16.msra.mxu0 0
      %6857 = vmatpush.bf16.msra.mxu0 0
      %6858 = vmatpush.bf16.msra.mxu0 0
      %6859 = vmatpush.bf16.msra.mxu0 %v6802
      %6860 = vmatpush.bf16.msra.mxu0 %v6801
      %6861 = vmatpush.bf16.msra.mxu0 %v6800
      %6862 = vmatpush.bf16.msra.mxu0 %v6799
      %6863 = vmatmul.bf16.gmra.mxu0 %v6808
      %v6864 = vpop.f32.mrf.mxu0
      %v6865 = vadd.f32 0.0, %v6864
      %v6866 = vpop.f32.mrf.mxu0
      %v6867 = vadd.f32 0.0, %v6866
      %6868 = vmatmul.bf16.gmra.mxu0 %v6811
      %v6869 = vpop.f32.mrf.mxu0
      %v6870 = vadd.f32 0.0, %v6869
      %v6871 = vpop.f32.mrf.mxu0
      %v6872 = vadd.f32 0.0, %v6871
      %6873 = vmatmul.bf16.gmra.mxu0 %v6814
      %v6874 = vpop.f32.mrf.mxu0
      %v6875 = vadd.f32 0.0, %v6874
      %v6876 = vpop.f32.mrf.mxu0
      %v6877 = vadd.f32 0.0, %v6876
      %6878 = vmatmul.bf16.gmra.mxu0 %v6817
      %v6879 = vpop.f32.mrf.mxu0
      %v6880 = vadd.f32 0.0, %v6879
      %v6881 = vpop.f32.mrf.mxu0
      %v6882 = vadd.f32 0.0, %v6881
      %6883 = vmatmul.bf16.gmra.mxu0 %v6820
      %v6884 = vpop.f32.mrf.mxu0
      %v6885 = vadd.f32 0.0, %v6884
      %v6886 = vpop.f32.mrf.mxu0
      %v6887 = vadd.f32 0.0, %v6886
      %6888 = vmatmul.bf16.gmra.mxu0 %v6823
      %v6889 = vpop.f32.mrf.mxu0
      %v6890 = vadd.f32 0.0, %v6889
      %v6891 = vpop.f32.mrf.mxu0
      %v6892 = vadd.f32 0.0, %v6891
      %6893 = vmatmul.bf16.gmra.mxu0 %v6826
      %v6894 = vpop.f32.mrf.mxu0
      %v6895 = vadd.f32 0.0, %v6894
      %v6896 = vpop.f32.mrf.mxu0
      %v6897 = vadd.f32 0.0, %v6896
      %6898 = vmatmul.bf16.gmra.mxu0 %v6829
      %v6899 = vpop.f32.mrf.mxu0
      %v6900 = vadd.f32 0.0, %v6899
      %v6901 = vpop.f32.mrf.mxu0
      %v6902 = vadd.f32 0.0, %v6901
      %6903 = vmatmul.bf16.gmra.mxu0 %v6832
      %v6904 = vpop.f32.mrf.mxu0
      %v6905 = vadd.f32 0.0, %v6904
      %v6906 = vpop.f32.mrf.mxu0
      %v6907 = vadd.f32 0.0, %v6906
      %6908 = vmatmul.bf16.gmra.mxu0 %v6835
      %v6909 = vpop.f32.mrf.mxu0
      %v6910 = vadd.f32 0.0, %v6909
      %v6911 = vpop.f32.mrf.mxu0
      %v6912 = vadd.f32 0.0, %v6911
      %6913 = vmatmul.bf16.gmra.mxu0 %v6838
      %v6914 = vpop.f32.mrf.mxu0
      %v6915 = vadd.f32 0.0, %v6914
      %v6916 = vpop.f32.mrf.mxu0
      %v6917 = vadd.f32 0.0, %v6916
      %6918 = vmatmul.bf16.gmra.mxu0 %v6841
      %v6919 = vpop.f32.mrf.mxu0
      %v6920 = vadd.f32 0.0, %v6919
      %v6921 = vpop.f32.mrf.mxu0
      %v6922 = vadd.f32 0.0, %v6921
      %6923 = vmatmul.bf16.gmra.mxu0 %v6844
      %v6924 = vpop.f32.mrf.mxu0
      %v6925 = vadd.f32 0.0, %v6924
      %v6926 = vpop.f32.mrf.mxu0
      %v6927 = vadd.f32 0.0, %v6926
      %6928 = vmatmul.bf16.gmra.mxu0 %v6847
      %v6929 = vpop.f32.mrf.mxu0
      %v6930 = vadd.f32 0.0, %v6929
      %v6931 = vpop.f32.mrf.mxu0
      %v6932 = vadd.f32 0.0, %v6931
      %6933 = vmatmul.bf16.gmra.mxu0 %v6850
      %v6934 = vpop.f32.mrf.mxu0
      %v6935 = vadd.f32 0.0, %v6934
      %v6936 = vpop.f32.mrf.mxu0
      %v6937 = vadd.f32 0.0, %v6936
      %6938 = vmatmul.bf16.gmra.mxu0 %v6853
      %v6939 = vpop.f32.mrf.mxu0
      %v6940 = vadd.f32 0.0, %v6939
      %v6941 = vpop.f32.mrf.mxu0
      %v6942 = vadd.f32 0.0, %v6941
      %6943 = vdwg.mxu0
      %v6944 = vadd.f32 %v6182, %v6865
      %v6945 = vadd.f32 %v6183, %v6867
      %v6946 = vadd.f32 %v6184, %v6870
      %v6947 = vadd.f32 %v6185, %v6872
      %v6948 = vadd.f32 %v6186, %v6875
      %v6949 = vadd.f32 %v6187, %v6877
      %v6950 = vadd.f32 %v6188, %v6880
      %v6951 = vadd.f32 %v6189, %v6882
      %v6952 = vadd.f32 %v6190, %v6885
      %v6953 = vadd.f32 %v6191, %v6887
      %v6954 = vadd.f32 %v6192, %v6890
      %v6955 = vadd.f32 %v6193, %v6892
      %v6956 = vadd.f32 %v6194, %v6895
      %v6957 = vadd.f32 %v6195, %v6897
      %v6958 = vadd.f32 %v6196, %v6900
      %v6959 = vadd.f32 %v6197, %v6902
      %v6960 = vadd.f32 %v6198, %v6905
      %v6961 = vadd.f32 %v6199, %v6907
      %v6962 = vadd.f32 %v6200, %v6910
      %v6963 = vadd.f32 %v6201, %v6912
      %v6964 = vadd.f32 %v6202, %v6915
      %v6965 = vadd.f32 %v6203, %v6917
      %v6966 = vadd.f32 %v6204, %v6920
      %v6967 = vadd.f32 %v6205, %v6922
      %v6968 = vadd.f32 %v6206, %v6925
      %v6969 = vadd.f32 %v6207, %v6927
      %v6970 = vadd.f32 %v6208, %v6930
      %v6971 = vadd.f32 %v6209, %v6932
      %v6972 = vadd.f32 %v6210, %v6935
      %v6973 = vadd.f32 %v6211, %v6937
      %v6974 = vadd.f32 %v6212, %v6940
      %v6975 = vadd.f32 %v6213, %v6942
      %v6976 = vld [vmem:[%s6] sm:$0x1]
      %v6978 = vperm.slane %v6976, 0
      %v6980 = vmul.f32 %v6944, %v6978
      %v6981 = vmul.f32 %v6945, %v6978
      %v6982 = vmul.f32 %v6946, %v6978
      %v6983 = vmul.f32 %v6947, %v6978
      %v6984 = vmul.f32 %v6948, %v6978
      %v6985 = vmul.f32 %v6949, %v6978
      %v6986 = vmul.f32 %v6950, %v6978
      %v6987 = vmul.f32 %v6951, %v6978
      %v6988 = vmul.f32 %v6952, %v6978
      %v6989 = vmul.f32 %v6953, %v6978
      %v6990 = vmul.f32 %v6954, %v6978
      %v6991 = vmul.f32 %v6955, %v6978
      %v6992 = vmul.f32 %v6956, %v6978
      %v6993 = vmul.f32 %v6957, %v6978
      %v6994 = vmul.f32 %v6958, %v6978
      %v6995 = vmul.f32 %v6959, %v6978
      %v6996 = vmul.f32 %v6960, %v6978
      %v6997 = vmul.f32 %v6961, %v6978
      %v6998 = vmul.f32 %v6962, %v6978
      %v6999 = vmul.f32 %v6963, %v6978
      %v7000 = vmul.f32 %v6964, %v6978
      %v7001 = vmul.f32 %v6965, %v6978
      %v7002 = vmul.f32 %v6966, %v6978
      %v7003 = vmul.f32 %v6967, %v6978
      %v7004 = vmul.f32 %v6968, %v6978
      %v7005 = vmul.f32 %v6969, %v6978
      %v7006 = vmul.f32 %v6970, %v6978
      %v7007 = vmul.f32 %v6971, %v6978
      %v7008 = vmul.f32 %v6972, %v6978
      %v7009 = vmul.f32 %v6973, %v6978
      %v7010 = vmul.f32 %v6974, %v6978
      %v7011 = vmul.f32 %v6975, %v6978
      %v7012 = vld [vmem:[%s7] sm:$0x1]
      %v7014 = vperm.slane %v7012, 0
      %v7016 = vadd.f32 %v6980, %v7014
      %v7017 = vadd.f32 %v6981, %v7014
      %v7018 = vadd.f32 %v6982, %v7014
      %v7019 = vadd.f32 %v6983, %v7014
      %v7020 = vadd.f32 %v6984, %v7014
      %v7021 = vadd.f32 %v6985, %v7014
      %v7022 = vadd.f32 %v6986, %v7014
      %v7023 = vadd.f32 %v6987, %v7014
      %v7024 = vadd.f32 %v6988, %v7014
      %v7025 = vadd.f32 %v6989, %v7014
      %v7026 = vadd.f32 %v6990, %v7014
      %v7027 = vadd.f32 %v6991, %v7014
      %v7028 = vadd.f32 %v6992, %v7014
      %v7029 = vadd.f32 %v6993, %v7014
      %v7030 = vadd.f32 %v6994, %v7014
      %v7031 = vadd.f32 %v6995, %v7014
      %v7032 = vadd.f32 %v6996, %v7014
      %v7033 = vadd.f32 %v6997, %v7014
      %v7034 = vadd.f32 %v6998, %v7014
      %v7035 = vadd.f32 %v6999, %v7014
      %v7036 = vadd.f32 %v7000, %v7014
      %v7037 = vadd.f32 %v7001, %v7014
      %v7038 = vadd.f32 %v7002, %v7014
      %v7039 = vadd.f32 %v7003, %v7014
      %v7040 = vadd.f32 %v7004, %v7014
      %v7041 = vadd.f32 %v7005, %v7014
      %v7042 = vadd.f32 %v7006, %v7014
      %v7043 = vadd.f32 %v7007, %v7014
      %v7044 = vadd.f32 %v7008, %v7014
      %v7045 = vadd.f32 %v7009, %v7014
      %v7046 = vadd.f32 %v7010, %v7014
      %v7047 = vadd.f32 %v7011, %v7014
      %v7048 = vmax.f32 %v7016, 0.0
      %v7049 = vmax.f32 %v7017, 0.0
      %v7050 = vmax.f32 %v7018, 0.0
      %v7051 = vmax.f32 %v7019, 0.0
      %v7052 = vmax.f32 %v7020, 0.0
      %v7053 = vmax.f32 %v7021, 0.0
      %v7054 = vmax.f32 %v7022, 0.0
      %v7055 = vmax.f32 %v7023, 0.0
      %v7056 = vmax.f32 %v7024, 0.0
      %v7057 = vmax.f32 %v7025, 0.0
      %v7058 = vmax.f32 %v7026, 0.0
      %v7059 = vmax.f32 %v7027, 0.0
      %v7060 = vmax.f32 %v7028, 0.0
      %v7061 = vmax.f32 %v7029, 0.0
      %v7062 = vmax.f32 %v7030, 0.0
      %v7063 = vmax.f32 %v7031, 0.0
      %v7064 = vmax.f32 %v7032, 0.0
      %v7065 = vmax.f32 %v7033, 0.0
      %v7066 = vmax.f32 %v7034, 0.0
      %v7067 = vmax.f32 %v7035, 0.0
      %v7068 = vmax.f32 %v7036, 0.0
      %v7069 = vmax.f32 %v7037, 0.0
      %v7070 = vmax.f32 %v7038, 0.0
      %v7071 = vmax.f32 %v7039, 0.0
      %v7072 = vmax.f32 %v7040, 0.0
      %v7073 = vmax.f32 %v7041, 0.0
      %v7074 = vmax.f32 %v7042, 0.0
      %v7075 = vmax.f32 %v7043, 0.0
      %v7076 = vmax.f32 %v7044, 0.0
      %v7077 = vmax.f32 %v7045, 0.0
      %v7078 = vmax.f32 %v7046, 0.0
      %v7079 = vmax.f32 %v7047, 0.0
      %v7080 = vpack.c.bf16 %v7049, %v7048
      %v7081 = vpack.c.bf16 %v7051, %v7050
      %v7082 = vpack.c.bf16 %v7053, %v7052
      %v7083 = vpack.c.bf16 %v7055, %v7054
      %v7084 = vpack.c.bf16 %v7057, %v7056
      %v7085 = vpack.c.bf16 %v7059, %v7058
      %v7086 = vpack.c.bf16 %v7061, %v7060
      %v7087 = vpack.c.bf16 %v7063, %v7062
      %v7088 = vpack.c.bf16 %v7065, %v7064
      %v7089 = vpack.c.bf16 %v7067, %v7066
      %v7090 = vpack.c.bf16 %v7069, %v7068
      %v7091 = vpack.c.bf16 %v7071, %v7070
      %v7092 = vpack.c.bf16 %v7073, %v7072
      %v7093 = vpack.c.bf16 %v7075, %v7074
      %v7094 = vpack.c.bf16 %v7077, %v7076
      %v7095 = vpack.c.bf16 %v7079, %v7078
      %v7096 = vld [vmem:[%s3] sm:$0xff]
      %v7097 = vld [vmem:[%s3 + $0x8] sm:$0xff]
      %v7098 = vld [vmem:[%s3 + $0x10] sm:$0xff]
      %v7099 = vld [vmem:[%s3 + $0x18] sm:$0xff]
      %v7100 = vld [vmem:[%s3 + $0x20] sm:$0xff]
      %v7101 = vld [vmem:[%s3 + $0x28] sm:$0xff]
      %v7102 = vld [vmem:[%s3 + $0x30] sm:$0xff]
      %v7103 = vld [vmem:[%s3 + $0x38] sm:$0xff]
      %v7112 = vunpack.c.l.b16 %v7096
      %v7113 = vunpack.c.h.b16 %v7096
      %v7114 = vunpack.c.l.b16 %v7097
      %v7115 = vunpack.c.h.b16 %v7097
      %v7116 = vunpack.c.l.b16 %v7098
      %v7117 = vunpack.c.h.b16 %v7098
      %v7118 = vunpack.c.l.b16 %v7099
      %v7119 = vunpack.c.h.b16 %v7099
      %v7120 = vunpack.c.l.b16 %v7100
      %v7121 = vunpack.c.h.b16 %v7100
      %v7122 = vunpack.c.l.b16 %v7101
      %v7123 = vunpack.c.h.b16 %v7101
      %v7124 = vunpack.c.l.b16 %v7102
      %v7125 = vunpack.c.h.b16 %v7102
      %v7126 = vunpack.c.l.b16 %v7103
      %v7127 = vunpack.c.h.b16 %v7103
      %v7128 = vpack.c.b16 %v7114, %v7112
      %v7129 = vpack.c.b16 %v7115, %v7113
      %v7130 = vpack.c.b16 %v7118, %v7116
      %v7131 = vpack.c.b16 %v7119, %v7117
      %v7132 = vpack.c.b16 %v7122, %v7120
      %v7133 = vpack.c.b16 %v7123, %v7121
      %v7134 = vpack.c.b16 %v7126, %v7124
      %v7135 = vpack.c.b16 %v7127, %v7125
      %v7145 = vsel %vm2315, %v7080, 0
      %v7148 = vsel %vm2315, %v7081, 0
      %v7151 = vsel %vm2315, %v7082, 0
      %v7154 = vsel %vm2315, %v7083, 0
      %v7157 = vsel %vm2315, %v7084, 0
      %v7160 = vsel %vm2315, %v7085, 0
      %v7163 = vsel %vm2315, %v7086, 0
      %v7166 = vsel %vm2315, %v7087, 0
      %v7169 = vsel %vm2315, %v7088, 0
      %v7172 = vsel %vm2315, %v7089, 0
      %v7175 = vsel %vm2315, %v7090, 0
      %v7178 = vsel %vm2315, %v7091, 0
      %v7181 = vsel %vm2315, %v7092, 0
      %v7184 = vsel %vm2315, %v7093, 0
      %v7187 = vsel %vm2315, %v7094, 0
      %v7190 = vsel %vm2315, %v7095, 0
      %7192 = vmatpush.bf16.msra.mxu0 0
      %7193 = vmatpush.bf16.msra.mxu0 0
      %7194 = vmatpush.bf16.msra.mxu0 0
      %7195 = vmatpush.bf16.msra.mxu0 0
      %7196 = vmatpush.bf16.msra.mxu0 %v7134
      %7197 = vmatpush.bf16.msra.mxu0 %v7132
      %7198 = vmatpush.bf16.msra.mxu0 %v7130
      %7199 = vmatpush.bf16.msra.mxu0 %v7128
      %7200 = vmatmul.bf16.gmra.mxu0 %v7145
      %v7201 = vpop.f32.mrf.mxu0
      %v7202 = vadd.f32 0.0, %v7201
      %v7203 = vpop.f32.mrf.mxu0
      %v7204 = vadd.f32 0.0, %v7203
      %7205 = vmatmul.bf16.gmra.mxu0 %v7148
      %v7206 = vpop.f32.mrf.mxu0
      %v7207 = vadd.f32 0.0, %v7206
      %v7208 = vpop.f32.mrf.mxu0
      %v7209 = vadd.f32 0.0, %v7208
      %7210 = vmatmul.bf16.gmra.mxu0 %v7151
      %v7211 = vpop.f32.mrf.mxu0
      %v7212 = vadd.f32 0.0, %v7211
      %v7213 = vpop.f32.mrf.mxu0
      %v7214 = vadd.f32 0.0, %v7213
      %7215 = vmatmul.bf16.gmra.mxu0 %v7154
      %v7216 = vpop.f32.mrf.mxu0
      %v7217 = vadd.f32 0.0, %v7216
      %v7218 = vpop.f32.mrf.mxu0
      %v7219 = vadd.f32 0.0, %v7218
      %7220 = vmatmul.bf16.gmra.mxu0 %v7157
      %v7221 = vpop.f32.mrf.mxu0
      %v7222 = vadd.f32 0.0, %v7221
      %v7223 = vpop.f32.mrf.mxu0
      %v7224 = vadd.f32 0.0, %v7223
      %7225 = vmatmul.bf16.gmra.mxu0 %v7160
      %v7226 = vpop.f32.mrf.mxu0
      %v7227 = vadd.f32 0.0, %v7226
      %v7228 = vpop.f32.mrf.mxu0
      %v7229 = vadd.f32 0.0, %v7228
      %7230 = vmatmul.bf16.gmra.mxu0 %v7163
      %v7231 = vpop.f32.mrf.mxu0
      %v7232 = vadd.f32 0.0, %v7231
      %v7233 = vpop.f32.mrf.mxu0
      %v7234 = vadd.f32 0.0, %v7233
      %7235 = vmatmul.bf16.gmra.mxu0 %v7166
      %v7236 = vpop.f32.mrf.mxu0
      %v7237 = vadd.f32 0.0, %v7236
      %v7238 = vpop.f32.mrf.mxu0
      %v7239 = vadd.f32 0.0, %v7238
      %7240 = vmatmul.bf16.gmra.mxu0 %v7169
      %v7241 = vpop.f32.mrf.mxu0
      %v7242 = vadd.f32 0.0, %v7241
      %v7243 = vpop.f32.mrf.mxu0
      %v7244 = vadd.f32 0.0, %v7243
      %7245 = vmatmul.bf16.gmra.mxu0 %v7172
      %v7246 = vpop.f32.mrf.mxu0
      %v7247 = vadd.f32 0.0, %v7246
      %v7248 = vpop.f32.mrf.mxu0
      %v7249 = vadd.f32 0.0, %v7248
      %7250 = vmatmul.bf16.gmra.mxu0 %v7175
      %v7251 = vpop.f32.mrf.mxu0
      %v7252 = vadd.f32 0.0, %v7251
      %v7253 = vpop.f32.mrf.mxu0
      %v7254 = vadd.f32 0.0, %v7253
      %7255 = vmatmul.bf16.gmra.mxu0 %v7178
      %v7256 = vpop.f32.mrf.mxu0
      %v7257 = vadd.f32 0.0, %v7256
      %v7258 = vpop.f32.mrf.mxu0
      %v7259 = vadd.f32 0.0, %v7258
      %7260 = vmatmul.bf16.gmra.mxu0 %v7181
      %v7261 = vpop.f32.mrf.mxu0
      %v7262 = vadd.f32 0.0, %v7261
      %v7263 = vpop.f32.mrf.mxu0
      %v7264 = vadd.f32 0.0, %v7263
      %7265 = vmatmul.bf16.gmra.mxu0 %v7184
      %v7266 = vpop.f32.mrf.mxu0
      %v7267 = vadd.f32 0.0, %v7266
      %v7268 = vpop.f32.mrf.mxu0
      %v7269 = vadd.f32 0.0, %v7268
      %7270 = vmatmul.bf16.gmra.mxu0 %v7187
      %v7271 = vpop.f32.mrf.mxu0
      %v7272 = vadd.f32 0.0, %v7271
      %v7273 = vpop.f32.mrf.mxu0
      %v7274 = vadd.f32 0.0, %v7273
      %7275 = vmatmul.bf16.gmra.mxu0 %v7190
      %v7276 = vpop.f32.mrf.mxu0
      %v7277 = vadd.f32 0.0, %v7276
      %v7278 = vpop.f32.mrf.mxu0
      %v7279 = vadd.f32 0.0, %v7278
      %7280 = vdwg.mxu0
      %7281 = vmatpush.bf16.msra.mxu0 0
      %7282 = vmatpush.bf16.msra.mxu0 0
      %7283 = vmatpush.bf16.msra.mxu0 0
      %7284 = vmatpush.bf16.msra.mxu0 0
      %7285 = vmatpush.bf16.msra.mxu0 %v7135
      %7286 = vmatpush.bf16.msra.mxu0 %v7133
      %7287 = vmatpush.bf16.msra.mxu0 %v7131
      %7288 = vmatpush.bf16.msra.mxu0 %v7129
      %7289 = vmatmul.bf16.gmra.mxu0 %v7145
      %v7290 = vpop.f32.mrf.mxu0
      %v7291 = vadd.f32 0.0, %v7290
      %v7292 = vpop.f32.mrf.mxu0
      %v7293 = vadd.f32 0.0, %v7292
      %7294 = vmatmul.bf16.gmra.mxu0 %v7148
      %v7295 = vpop.f32.mrf.mxu0
      %v7296 = vadd.f32 0.0, %v7295
      %v7297 = vpop.f32.mrf.mxu0
      %v7298 = vadd.f32 0.0, %v7297
      %7299 = vmatmul.bf16.gmra.mxu0 %v7151
      %v7300 = vpop.f32.mrf.mxu0
      %v7301 = vadd.f32 0.0, %v7300
      %v7302 = vpop.f32.mrf.mxu0
      %v7303 = vadd.f32 0.0, %v7302
      %7304 = vmatmul.bf16.gmra.mxu0 %v7154
      %v7305 = vpop.f32.mrf.mxu0
      %v7306 = vadd.f32 0.0, %v7305
      %v7307 = vpop.f32.mrf.mxu0
      %v7308 = vadd.f32 0.0, %v7307
      %7309 = vmatmul.bf16.gmra.mxu0 %v7157
      %v7310 = vpop.f32.mrf.mxu0
      %v7311 = vadd.f32 0.0, %v7310
      %v7312 = vpop.f32.mrf.mxu0
      %v7313 = vadd.f32 0.0, %v7312
      %7314 = vmatmul.bf16.gmra.mxu0 %v7160
      %v7315 = vpop.f32.mrf.mxu0
      %v7316 = vadd.f32 0.0, %v7315
      %v7317 = vpop.f32.mrf.mxu0
      %v7318 = vadd.f32 0.0, %v7317
      %7319 = vmatmul.bf16.gmra.mxu0 %v7163
      %v7320 = vpop.f32.mrf.mxu0
      %v7321 = vadd.f32 0.0, %v7320
      %v7322 = vpop.f32.mrf.mxu0
      %v7323 = vadd.f32 0.0, %v7322
      %7324 = vmatmul.bf16.gmra.mxu0 %v7166
      %v7325 = vpop.f32.mrf.mxu0
      %v7326 = vadd.f32 0.0, %v7325
      %v7327 = vpop.f32.mrf.mxu0
      %v7328 = vadd.f32 0.0, %v7327
      %7329 = vmatmul.bf16.gmra.mxu0 %v7169
      %v7330 = vpop.f32.mrf.mxu0
      %v7331 = vadd.f32 0.0, %v7330
      %v7332 = vpop.f32.mrf.mxu0
      %v7333 = vadd.f32 0.0, %v7332
      %7334 = vmatmul.bf16.gmra.mxu0 %v7172
      %v7335 = vpop.f32.mrf.mxu0
      %v7336 = vadd.f32 0.0, %v7335
      %v7337 = vpop.f32.mrf.mxu0
      %v7338 = vadd.f32 0.0, %v7337
      %7339 = vmatmul.bf16.gmra.mxu0 %v7175
      %v7340 = vpop.f32.mrf.mxu0
      %v7341 = vadd.f32 0.0, %v7340
      %v7342 = vpop.f32.mrf.mxu0
      %v7343 = vadd.f32 0.0, %v7342
      %7344 = vmatmul.bf16.gmra.mxu0 %v7178
      %v7345 = vpop.f32.mrf.mxu0
      %v7346 = vadd.f32 0.0, %v7345
      %v7347 = vpop.f32.mrf.mxu0
      %v7348 = vadd.f32 0.0, %v7347
      %7349 = vmatmul.bf16.gmra.mxu0 %v7181
      %v7350 = vpop.f32.mrf.mxu0
      %v7351 = vadd.f32 0.0, %v7350
      %v7352 = vpop.f32.mrf.mxu0
      %v7353 = vadd.f32 0.0, %v7352
      %7354 = vmatmul.bf16.gmra.mxu0 %v7184
      %v7355 = vpop.f32.mrf.mxu0
      %v7356 = vadd.f32 0.0, %v7355
      %v7357 = vpop.f32.mrf.mxu0
      %v7358 = vadd.f32 0.0, %v7357
      %7359 = vmatmul.bf16.gmra.mxu0 %v7187
      %v7360 = vpop.f32.mrf.mxu0
      %v7361 = vadd.f32 0.0, %v7360
      %v7362 = vpop.f32.mrf.mxu0
      %v7363 = vadd.f32 0.0, %v7362
      %7364 = vmatmul.bf16.gmra.mxu0 %v7190
      %v7365 = vpop.f32.mrf.mxu0
      %v7366 = vadd.f32 0.0, %v7365
      %v7367 = vpop.f32.mrf.mxu0
      %v7368 = vadd.f32 0.0, %v7367
      %7369 = vdwg.mxu0
      %v7370 = vld [vmem:[%s354] sm:$0xff]
      %v7371 = vld [vmem:[%s354 + $0x8] sm:$0xff]
      %v7372 = vld [vmem:[%s354 + $0x10] sm:$0xff]
      %v7373 = vld [vmem:[%s354 + $0x18] sm:$0xff]
      %v7374 = vld [vmem:[%s354 + $0x20] sm:$0xff]
      %v7375 = vld [vmem:[%s354 + $0x28] sm:$0xff]
      %v7376 = vld [vmem:[%s354 + $0x30] sm:$0xff]
      %v7377 = vld [vmem:[%s354 + $0x38] sm:$0xff]
      %v7378 = vld [vmem:[%s354 + $0x40] sm:$0xff]
      %v7379 = vld [vmem:[%s354 + $0x48] sm:$0xff]
      %v7380 = vld [vmem:[%s354 + $0x50] sm:$0xff]
      %v7381 = vld [vmem:[%s354 + $0x58] sm:$0xff]
      %v7382 = vld [vmem:[%s354 + $0x60] sm:$0xff]
      %v7383 = vld [vmem:[%s354 + $0x68] sm:$0xff]
      %v7384 = vld [vmem:[%s354 + $0x70] sm:$0xff]
      %v7385 = vld [vmem:[%s354 + $0x78] sm:$0xff]
      %v7386 = vld [vmem:[%s354 + $0x80] sm:$0xff]
      %v7387 = vld [vmem:[%s354 + $0x88] sm:$0xff]
      %v7388 = vld [vmem:[%s354 + $0x90] sm:$0xff]
      %v7389 = vld [vmem:[%s354 + $0x98] sm:$0xff]
      %v7390 = vld [vmem:[%s354 + $0xa0] sm:$0xff]
      %v7391 = vld [vmem:[%s354 + $0xa8] sm:$0xff]
      %v7392 = vld [vmem:[%s354 + $0xb0] sm:$0xff]
      %v7393 = vld [vmem:[%s354 + $0xb8] sm:$0xff]
      %v7394 = vld [vmem:[%s354 + $0xc0] sm:$0xff]
      %v7395 = vld [vmem:[%s354 + $0xc8] sm:$0xff]
      %v7396 = vld [vmem:[%s354 + $0xd0] sm:$0xff]
      %v7397 = vld [vmem:[%s354 + $0xd8] sm:$0xff]
      %v7398 = vld [vmem:[%s354 + $0xe0] sm:$0xff]
      %v7399 = vld [vmem:[%s354 + $0xe8] sm:$0xff]
      %v7400 = vld [vmem:[%s354 + $0xf0] sm:$0xff]
      %v7401 = vld [vmem:[%s354 + $0xf8] sm:$0xff]
      %v7402 = vunpack.c.l.bf16 %v7370
      %v7403 = vunpack.c.h.bf16 %v7370
      %v7404 = vunpack.c.l.bf16 %v7371
      %v7405 = vunpack.c.h.bf16 %v7371
      %v7406 = vunpack.c.l.bf16 %v7372
      %v7407 = vunpack.c.h.bf16 %v7372
      %v7408 = vunpack.c.l.bf16 %v7373
      %v7409 = vunpack.c.h.bf16 %v7373
      %v7410 = vunpack.c.l.bf16 %v7374
      %v7411 = vunpack.c.h.bf16 %v7374
      %v7412 = vunpack.c.l.bf16 %v7375
      %v7413 = vunpack.c.h.bf16 %v7375
      %v7414 = vunpack.c.l.bf16 %v7376
      %v7415 = vunpack.c.h.bf16 %v7376
      %v7416 = vunpack.c.l.bf16 %v7377
      %v7417 = vunpack.c.h.bf16 %v7377
      %v7418 = vunpack.c.l.bf16 %v7378
      %v7419 = vunpack.c.h.bf16 %v7378
      %v7420 = vunpack.c.l.bf16 %v7379
      %v7421 = vunpack.c.h.bf16 %v7379
      %v7422 = vunpack.c.l.bf16 %v7380
      %v7423 = vunpack.c.h.bf16 %v7380
      %v7424 = vunpack.c.l.bf16 %v7381
      %v7425 = vunpack.c.h.bf16 %v7381
      %v7426 = vunpack.c.l.bf16 %v7382
      %v7427 = vunpack.c.h.bf16 %v7382
      %v7428 = vunpack.c.l.bf16 %v7383
      %v7429 = vunpack.c.h.bf16 %v7383
      %v7430 = vunpack.c.l.bf16 %v7384
      %v7431 = vunpack.c.h.bf16 %v7384
      %v7432 = vunpack.c.l.bf16 %v7385
      %v7433 = vunpack.c.h.bf16 %v7385
      %v7434 = vunpack.c.l.bf16 %v7386
      %v7435 = vunpack.c.h.bf16 %v7386
      %v7436 = vunpack.c.l.bf16 %v7387
      %v7437 = vunpack.c.h.bf16 %v7387
      %v7438 = vunpack.c.l.bf16 %v7388
      %v7439 = vunpack.c.h.bf16 %v7388
      %v7440 = vunpack.c.l.bf16 %v7389
      %v7441 = vunpack.c.h.bf16 %v7389
      %v7442 = vunpack.c.l.bf16 %v7390
      %v7443 = vunpack.c.h.bf16 %v7390
      %v7444 = vunpack.c.l.bf16 %v7391
      %v7445 = vunpack.c.h.bf16 %v7391
      %v7446 = vunpack.c.l.bf16 %v7392
      %v7447 = vunpack.c.h.bf16 %v7392
      %v7448 = vunpack.c.l.bf16 %v7393
      %v7449 = vunpack.c.h.bf16 %v7393
      %v7450 = vunpack.c.l.bf16 %v7394
      %v7451 = vunpack.c.h.bf16 %v7394
      %v7452 = vunpack.c.l.bf16 %v7395
      %v7453 = vunpack.c.h.bf16 %v7395
      %v7454 = vunpack.c.l.bf16 %v7396
      %v7455 = vunpack.c.h.bf16 %v7396
      %v7456 = vunpack.c.l.bf16 %v7397
      %v7457 = vunpack.c.h.bf16 %v7397
      %v7458 = vunpack.c.l.bf16 %v7398
      %v7459 = vunpack.c.h.bf16 %v7398
      %v7460 = vunpack.c.l.bf16 %v7399
      %v7461 = vunpack.c.h.bf16 %v7399
      %v7462 = vunpack.c.l.bf16 %v7400
      %v7463 = vunpack.c.h.bf16 %v7400
      %v7464 = vunpack.c.l.bf16 %v7401
      %v7465 = vunpack.c.h.bf16 %v7401
      %v7466 = vld [vmem:[%s8] sm:$0x3]
      %v7468 = vperm.slane %v7466, 0
      %v7469 = vperm.slane %v7466, 1
      %v7472 = vmul.f32 %v7202, %v7468
      %v7473 = vmul.f32 %v7291, %v7469
      %v7474 = vmul.f32 %v7204, %v7468
      %v7475 = vmul.f32 %v7293, %v7469
      %v7476 = vmul.f32 %v7207, %v7468
      %v7477 = vmul.f32 %v7296, %v7469
      %v7478 = vmul.f32 %v7209, %v7468
      %v7479 = vmul.f32 %v7298, %v7469
      %v7480 = vmul.f32 %v7212, %v7468
      %v7481 = vmul.f32 %v7301, %v7469
      %v7482 = vmul.f32 %v7214, %v7468
      %v7483 = vmul.f32 %v7303, %v7469
      %v7484 = vmul.f32 %v7217, %v7468
      %v7485 = vmul.f32 %v7306, %v7469
      %v7486 = vmul.f32 %v7219, %v7468
      %v7487 = vmul.f32 %v7308, %v7469
      %v7488 = vmul.f32 %v7222, %v7468
      %v7489 = vmul.f32 %v7311, %v7469
      %v7490 = vmul.f32 %v7224, %v7468
      %v7491 = vmul.f32 %v7313, %v7469
      %v7492 = vmul.f32 %v7227, %v7468
      %v7493 = vmul.f32 %v7316, %v7469
      %v7494 = vmul.f32 %v7229, %v7468
      %v7495 = vmul.f32 %v7318, %v7469
      %v7496 = vmul.f32 %v7232, %v7468
      %v7497 = vmul.f32 %v7321, %v7469
      %v7498 = vmul.f32 %v7234, %v7468
      %v7499 = vmul.f32 %v7323, %v7469
      %v7500 = vmul.f32 %v7237, %v7468
      %v7501 = vmul.f32 %v7326, %v7469
      %v7502 = vmul.f32 %v7239, %v7468
      %v7503 = vmul.f32 %v7328, %v7469
      %v7504 = vmul.f32 %v7242, %v7468
      %v7505 = vmul.f32 %v7331, %v7469
      %v7506 = vmul.f32 %v7244, %v7468
      %v7507 = vmul.f32 %v7333, %v7469
      %v7508 = vmul.f32 %v7247, %v7468
      %v7509 = vmul.f32 %v7336, %v7469
      %v7510 = vmul.f32 %v7249, %v7468
      %v7511 = vmul.f32 %v7338, %v7469
      %v7512 = vmul.f32 %v7252, %v7468
      %v7513 = vmul.f32 %v7341, %v7469
      %v7514 = vmul.f32 %v7254, %v7468
      %v7515 = vmul.f32 %v7343, %v7469
      %v7516 = vmul.f32 %v7257, %v7468
      %v7517 = vmul.f32 %v7346, %v7469
      %v7518 = vmul.f32 %v7259, %v7468
      %v7519 = vmul.f32 %v7348, %v7469
      %v7520 = vmul.f32 %v7262, %v7468
      %v7521 = vmul.f32 %v7351, %v7469
      %v7522 = vmul.f32 %v7264, %v7468
      %v7523 = vmul.f32 %v7353, %v7469
      %v7524 = vmul.f32 %v7267, %v7468
      %v7525 = vmul.f32 %v7356, %v7469
      %v7526 = vmul.f32 %v7269, %v7468
      %v7527 = vmul.f32 %v7358, %v7469
      %v7528 = vmul.f32 %v7272, %v7468
      %v7529 = vmul.f32 %v7361, %v7469
      %v7530 = vmul.f32 %v7274, %v7468
      %v7531 = vmul.f32 %v7363, %v7469
      %v7532 = vmul.f32 %v7277, %v7468
      %v7533 = vmul.f32 %v7366, %v7469
      %v7534 = vmul.f32 %v7279, %v7468
      %v7535 = vmul.f32 %v7368, %v7469
      %v7536 = vld [vmem:[%s9] sm:$0x3]
      %v7538 = vperm.slane %v7536, 0
      %v7539 = vperm.slane %v7536, 1
      %v7542 = vadd.f32 %v7472, %v7538
      %v7543 = vadd.f32 %v7473, %v7539
      %v7544 = vadd.f32 %v7474, %v7538
      %v7545 = vadd.f32 %v7475, %v7539
      %v7546 = vadd.f32 %v7476, %v7538
      %v7547 = vadd.f32 %v7477, %v7539
      %v7548 = vadd.f32 %v7478, %v7538
      %v7549 = vadd.f32 %v7479, %v7539
      %v7550 = vadd.f32 %v7480, %v7538
      %v7551 = vadd.f32 %v7481, %v7539
      %v7552 = vadd.f32 %v7482, %v7538
      %v7553 = vadd.f32 %v7483, %v7539
      %v7554 = vadd.f32 %v7484, %v7538
      %v7555 = vadd.f32 %v7485, %v7539
      %v7556 = vadd.f32 %v7486, %v7538
      %v7557 = vadd.f32 %v7487, %v7539
      %v7558 = vadd.f32 %v7488, %v7538
      %v7559 = vadd.f32 %v7489, %v7539
      %v7560 = vadd.f32 %v7490, %v7538
      %v7561 = vadd.f32 %v7491, %v7539
      %v7562 = vadd.f32 %v7492, %v7538
      %v7563 = vadd.f32 %v7493, %v7539
      %v7564 = vadd.f32 %v7494, %v7538
      %v7565 = vadd.f32 %v7495, %v7539
      %v7566 = vadd.f32 %v7496, %v7538
      %v7567 = vadd.f32 %v7497, %v7539
      %v7568 = vadd.f32 %v7498, %v7538
      %v7569 = vadd.f32 %v7499, %v7539
      %v7570 = vadd.f32 %v7500, %v7538
      %v7571 = vadd.f32 %v7501, %v7539
      %v7572 = vadd.f32 %v7502, %v7538
      %v7573 = vadd.f32 %v7503, %v7539
      %v7574 = vadd.f32 %v7504, %v7538
      %v7575 = vadd.f32 %v7505, %v7539
      %v7576 = vadd.f32 %v7506, %v7538
      %v7577 = vadd.f32 %v7507, %v7539
      %v7578 = vadd.f32 %v7508, %v7538
      %v7579 = vadd.f32 %v7509, %v7539
      %v7580 = vadd.f32 %v7510, %v7538
      %v7581 = vadd.f32 %v7511, %v7539
      %v7582 = vadd.f32 %v7512, %v7538
      %v7583 = vadd.f32 %v7513, %v7539
      %v7584 = vadd.f32 %v7514, %v7538
      %v7585 = vadd.f32 %v7515, %v7539
      %v7586 = vadd.f32 %v7516, %v7538
      %v7587 = vadd.f32 %v7517, %v7539
      %v7588 = vadd.f32 %v7518, %v7538
      %v7589 = vadd.f32 %v7519, %v7539
      %v7590 = vadd.f32 %v7520, %v7538
      %v7591 = vadd.f32 %v7521, %v7539
      %v7592 = vadd.f32 %v7522, %v7538
      %v7593 = vadd.f32 %v7523, %v7539
      %v7594 = vadd.f32 %v7524, %v7538
      %v7595 = vadd.f32 %v7525, %v7539
      %v7596 = vadd.f32 %v7526, %v7538
      %v7597 = vadd.f32 %v7527, %v7539
      %v7598 = vadd.f32 %v7528, %v7538
      %v7599 = vadd.f32 %v7529, %v7539
      %v7600 = vadd.f32 %v7530, %v7538
      %v7601 = vadd.f32 %v7531, %v7539
      %v7602 = vadd.f32 %v7532, %v7538
      %v7603 = vadd.f32 %v7533, %v7539
      %v7604 = vadd.f32 %v7534, %v7538
      %v7605 = vadd.f32 %v7535, %v7539
      %v7606 = vadd.f32 %v7542, %v7402
      %v7607 = vadd.f32 %v7543, %v7403
      %v7608 = vadd.f32 %v7544, %v7404
      %v7609 = vadd.f32 %v7545, %v7405
      %v7610 = vadd.f32 %v7546, %v7406
      %v7611 = vadd.f32 %v7547, %v7407
      %v7612 = vadd.f32 %v7548, %v7408
      %v7613 = vadd.f32 %v7549, %v7409
      %v7614 = vadd.f32 %v7550, %v7410
      %v7615 = vadd.f32 %v7551, %v7411
      %v7616 = vadd.f32 %v7552, %v7412
      %v7617 = vadd.f32 %v7553, %v7413
      %v7618 = vadd.f32 %v7554, %v7414
      %v7619 = vadd.f32 %v7555, %v7415
      %v7620 = vadd.f32 %v7556, %v7416
      %v7621 = vadd.f32 %v7557, %v7417
      %v7622 = vadd.f32 %v7558, %v7418
      %v7623 = vadd.f32 %v7559, %v7419
      %v7624 = vadd.f32 %v7560, %v7420
      %v7625 = vadd.f32 %v7561, %v7421
      %v7626 = vadd.f32 %v7562, %v7422
      %v7627 = vadd.f32 %v7563, %v7423
      %v7628 = vadd.f32 %v7564, %v7424
      %v7629 = vadd.f32 %v7565, %v7425
      %v7630 = vadd.f32 %v7566, %v7426
      %v7631 = vadd.f32 %v7567, %v7427
      %v7632 = vadd.f32 %v7568, %v7428
      %v7633 = vadd.f32 %v7569, %v7429
      %v7634 = vadd.f32 %v7570, %v7430
      %v7635 = vadd.f32 %v7571, %v7431
      %v7636 = vadd.f32 %v7572, %v7432
      %v7637 = vadd.f32 %v7573, %v7433
      %v7638 = vadd.f32 %v7574, %v7434
      %v7639 = vadd.f32 %v7575, %v7435
      %v7640 = vadd.f32 %v7576, %v7436
      %v7641 = vadd.f32 %v7577, %v7437
      %v7642 = vadd.f32 %v7578, %v7438
      %v7643 = vadd.f32 %v7579, %v7439
      %v7644 = vadd.f32 %v7580, %v7440
      %v7645 = vadd.f32 %v7581, %v7441
      %v7646 = vadd.f32 %v7582, %v7442
      %v7647 = vadd.f32 %v7583, %v7443
      %v7648 = vadd.f32 %v7584, %v7444
      %v7649 = vadd.f32 %v7585, %v7445
      %v7650 = vadd.f32 %v7586, %v7446
      %v7651 = vadd.f32 %v7587, %v7447
      %v7652 = vadd.f32 %v7588, %v7448
      %v7653 = vadd.f32 %v7589, %v7449
      %v7654 = vadd.f32 %v7590, %v7450
      %v7655 = vadd.f32 %v7591, %v7451
      %v7656 = vadd.f32 %v7592, %v7452
      %v7657 = vadd.f32 %v7593, %v7453
      %v7658 = vadd.f32 %v7594, %v7454
      %v7659 = vadd.f32 %v7595, %v7455
      %v7660 = vadd.f32 %v7596, %v7456
      %v7661 = vadd.f32 %v7597, %v7457
      %v7662 = vadd.f32 %v7598, %v7458
      %v7663 = vadd.f32 %v7599, %v7459
      %v7664 = vadd.f32 %v7600, %v7460
      %v7665 = vadd.f32 %v7601, %v7461
      %v7666 = vadd.f32 %v7602, %v7462
      %v7667 = vadd.f32 %v7603, %v7463
      %v7668 = vadd.f32 %v7604, %v7464
      %v7669 = vadd.f32 %v7605, %v7465
      %v7670 = vmax.f32 %v7606, 0.0
      %v7671 = vmax.f32 %v7607, 0.0
      %v7672 = vmax.f32 %v7608, 0.0
      %v7673 = vmax.f32 %v7609, 0.0
      %v7674 = vmax.f32 %v7610, 0.0
      %v7675 = vmax.f32 %v7611, 0.0
      %v7676 = vmax.f32 %v7612, 0.0
      %v7677 = vmax.f32 %v7613, 0.0
      %v7678 = vmax.f32 %v7614, 0.0
      %v7679 = vmax.f32 %v7615, 0.0
      %v7680 = vmax.f32 %v7616, 0.0
      %v7681 = vmax.f32 %v7617, 0.0
      %v7682 = vmax.f32 %v7618, 0.0
      %v7683 = vmax.f32 %v7619, 0.0
      %v7684 = vmax.f32 %v7620, 0.0
      %v7685 = vmax.f32 %v7621, 0.0
      %v7686 = vmax.f32 %v7622, 0.0
      %v7687 = vmax.f32 %v7623, 0.0
      %v7688 = vmax.f32 %v7624, 0.0
      %v7689 = vmax.f32 %v7625, 0.0
      %v7690 = vmax.f32 %v7626, 0.0
      %v7691 = vmax.f32 %v7627, 0.0
      %v7692 = vmax.f32 %v7628, 0.0
      %v7693 = vmax.f32 %v7629, 0.0
      %v7694 = vmax.f32 %v7630, 0.0
      %v7695 = vmax.f32 %v7631, 0.0
      %v7696 = vmax.f32 %v7632, 0.0
      %v7697 = vmax.f32 %v7633, 0.0
      %v7698 = vmax.f32 %v7634, 0.0
      %v7699 = vmax.f32 %v7635, 0.0
      %v7700 = vmax.f32 %v7636, 0.0
      %v7701 = vmax.f32 %v7637, 0.0
      %v7702 = vmax.f32 %v7638, 0.0
      %v7703 = vmax.f32 %v7639, 0.0
      %v7704 = vmax.f32 %v7640, 0.0
      %v7705 = vmax.f32 %v7641, 0.0
      %v7706 = vmax.f32 %v7642, 0.0
      %v7707 = vmax.f32 %v7643, 0.0
      %v7708 = vmax.f32 %v7644, 0.0
      %v7709 = vmax.f32 %v7645, 0.0
      %v7710 = vmax.f32 %v7646, 0.0
      %v7711 = vmax.f32 %v7647, 0.0
      %v7712 = vmax.f32 %v7648, 0.0
      %v7713 = vmax.f32 %v7649, 0.0
      %v7714 = vmax.f32 %v7650, 0.0
      %v7715 = vmax.f32 %v7651, 0.0
      %v7716 = vmax.f32 %v7652, 0.0
      %v7717 = vmax.f32 %v7653, 0.0
      %v7718 = vmax.f32 %v7654, 0.0
      %v7719 = vmax.f32 %v7655, 0.0
      %v7720 = vmax.f32 %v7656, 0.0
      %v7721 = vmax.f32 %v7657, 0.0
      %v7722 = vmax.f32 %v7658, 0.0
      %v7723 = vmax.f32 %v7659, 0.0
      %v7724 = vmax.f32 %v7660, 0.0
      %v7725 = vmax.f32 %v7661, 0.0
      %v7726 = vmax.f32 %v7662, 0.0
      %v7727 = vmax.f32 %v7663, 0.0
      %v7728 = vmax.f32 %v7664, 0.0
      %v7729 = vmax.f32 %v7665, 0.0
      %v7730 = vmax.f32 %v7666, 0.0
      %v7731 = vmax.f32 %v7667, 0.0
      %v7732 = vmax.f32 %v7668, 0.0
      %v7733 = vmax.f32 %v7669, 0.0
      %v7734 = vpack.c.bf16 %v7671, %v7670
      %v7735 = vpack.c.bf16 %v7673, %v7672
      %v7736 = vpack.c.bf16 %v7675, %v7674
      %v7737 = vpack.c.bf16 %v7677, %v7676
      %v7738 = vpack.c.bf16 %v7679, %v7678
      %v7739 = vpack.c.bf16 %v7681, %v7680
      %v7740 = vpack.c.bf16 %v7683, %v7682
      %v7741 = vpack.c.bf16 %v7685, %v7684
      %v7742 = vpack.c.bf16 %v7687, %v7686
      %v7743 = vpack.c.bf16 %v7689, %v7688
      %v7744 = vpack.c.bf16 %v7691, %v7690
      %v7745 = vpack.c.bf16 %v7693, %v7692
      %v7746 = vpack.c.bf16 %v7695, %v7694
      %v7747 = vpack.c.bf16 %v7697, %v7696
      %v7748 = vpack.c.bf16 %v7699, %v7698
      %v7749 = vpack.c.bf16 %v7701, %v7700
      %v7750 = vpack.c.bf16 %v7703, %v7702
      %v7751 = vpack.c.bf16 %v7705, %v7704
      %v7752 = vpack.c.bf16 %v7707, %v7706
      %v7753 = vpack.c.bf16 %v7709, %v7708
      %v7754 = vpack.c.bf16 %v7711, %v7710
      %v7755 = vpack.c.bf16 %v7713, %v7712
      %v7756 = vpack.c.bf16 %v7715, %v7714
      %v7757 = vpack.c.bf16 %v7717, %v7716
      %v7758 = vpack.c.bf16 %v7719, %v7718
      %v7759 = vpack.c.bf16 %v7721, %v7720
      %v7760 = vpack.c.bf16 %v7723, %v7722
      %v7761 = vpack.c.bf16 %v7725, %v7724
      %v7762 = vpack.c.bf16 %v7727, %v7726
      %v7763 = vpack.c.bf16 %v7729, %v7728
      %v7764 = vpack.c.bf16 %v7731, %v7730
      %v7765 = vpack.c.bf16 %v7733, %v7732
      %7766 = vst [vmem:[%s359] sm:$0xff] %v7734
      %7767 = vst [vmem:[%s359 + $0x8] sm:$0xff] %v7735
      %7768 = vst [vmem:[%s359 + $0x10] sm:$0xff] %v7736
      %7769 = vst [vmem:[%s359 + $0x18] sm:$0xff] %v7737
      %7770 = vst [vmem:[%s359 + $0x20] sm:$0xff] %v7738
      %7771 = vst [vmem:[%s359 + $0x28] sm:$0xff] %v7739
      %7772 = vst [vmem:[%s359 + $0x30] sm:$0xff] %v7740
      %7773 = vst [vmem:[%s359 + $0x38] sm:$0xff] %v7741
      %7774 = vst [vmem:[%s359 + $0x40] sm:$0xff] %v7742
      %7775 = vst [vmem:[%s359 + $0x48] sm:$0xff] %v7743
      %7776 = vst [vmem:[%s359 + $0x50] sm:$0xff] %v7744
      %7777 = vst [vmem:[%s359 + $0x58] sm:$0xff] %v7745
      %7778 = vst [vmem:[%s359 + $0x60] sm:$0xff] %v7746
      %7779 = vst [vmem:[%s359 + $0x68] sm:$0xff] %v7747
      %7780 = vst [vmem:[%s359 + $0x70] sm:$0xff] %v7748
      %7781 = vst [vmem:[%s359 + $0x78] sm:$0xff] %v7749
      %7782 = vst [vmem:[%s359 + $0x80] sm:$0xff] %v7750
      %7783 = vst [vmem:[%s359 + $0x88] sm:$0xff] %v7751
      %7784 = vst [vmem:[%s359 + $0x90] sm:$0xff] %v7752
      %7785 = vst [vmem:[%s359 + $0x98] sm:$0xff] %v7753
      %7786 = vst [vmem:[%s359 + $0xa0] sm:$0xff] %v7754
      %7787 = vst [vmem:[%s359 + $0xa8] sm:$0xff] %v7755
      %7788 = vst [vmem:[%s359 + $0xb0] sm:$0xff] %v7756
      %7789 = vst [vmem:[%s359 + $0xb8] sm:$0xff] %v7757
      %7790 = vst [vmem:[%s359 + $0xc0] sm:$0xff] %v7758
      %7791 = vst [vmem:[%s359 + $0xc8] sm:$0xff] %v7759
      %7792 = vst [vmem:[%s359 + $0xd0] sm:$0xff] %v7760
      %7793 = vst [vmem:[%s359 + $0xd8] sm:$0xff] %v7761
      %7794 = vst [vmem:[%s359 + $0xe0] sm:$0xff] %v7762
      %7795 = vst [vmem:[%s359 + $0xe8] sm:$0xff] %v7763
      %7796 = vst [vmem:[%s359 + $0xf0] sm:$0xff] %v7764
      %7797 = vst [vmem:[%s359 + $0xf8] sm:$0xff] %v7765
      %p7798 = scmp.lt.s32.totalorder %s21, 1
      %s7799 = scalar_select %p7798, %s21, 1
      %s7800 = smul.addr %s7799, 64
      %s7801 = smul.addr %s7800, 4
      %s7802 = scalar_lea.vmem %s10, %s7801
      // Predicated region
      $region61: #{bottleneck_forward.1} parent=59 // pred_check
        %p7803 = pneg %p254
      $region62: #{bottleneck_forward.1} parent=59 // pred_check_branch
        %7805 = sbr.rel (%p7803) target = $region64
      $region63: #{bottleneck_forward.1} parent=59 // pred_region
        _
      $region64: #{bottleneck_forward.1} parent=59 // pred_fallthru
        _
    $region60: #{bottleneck_forward.1} parent=5 // pred_fallthru
      _
    %p7806 = scmp.le.s32.totalorder 2, %s16
    // Predicated region
    $region65: #{bottleneck_forward.1} parent=5 // pred_check
      %p7807 = pneg %p7806
    $region66: #{bottleneck_forward.1} parent=5 // pred_check_branch
      %7809 = sbr.rel (%p7807) target = $region68
    $region67: #{bottleneck_forward.1} parent=5 // pred_region
      %s7810 = ssub.s32 %s16, 2
      // Predicated region
      $region69: #{bottleneck_forward.1} parent=67 // pred_check
        %p7811 = pneg %p260
      $region70: #{bottleneck_forward.1} parent=67 // pred_check_branch
        %7813 = sbr.rel (%p7811) target = $region72
      $region71: #{bottleneck_forward.1} parent=67 // pred_region
        %p7814 = scmp.lt.s32.totalorder %s22, 1
        %s7815 = scalar_select %p7814, %s22, 1
        %s7816 = smul.addr %s7815, 64
        %s7817 = smul.addr %s7816, 4
        %s7818 = scalar_lea.vmem %s10, %s7817
      $region72: #{bottleneck_forward.1} parent=67 // pred_fallthru
        _
    $region68: #{bottleneck_forward.1} parent=5 // pred_fallthru
      _
  $region6: #{bottleneck_forward.1} parent=0 // loop_footer
    %s20 = sadd.s32 1, %s16
  $region7: #{bottleneck_forward.1} parent=0 // loop_footer_branch
    %15 = sbr.rel target = $region3
  $region8: #{bottleneck_forward.1} parent=0 // loop_exit
    _

</llo_original>
